<compile_context>
chip_gen: v5e
topology: v5e:2x2
jax: 0.10.0
libtpu: 0.0.40
codegen_flags: <defaults>
</compile_context>

<pallas_src>
import functools

import jax
import jax.numpy as jnp
from jax.experimental import pallas as pl
from jax.experimental.pallas import tpu as pltpu


def _round_up(x, m):
    return (x + m - 1) // m * m


def _conv_seg_head_kernel(x_ref, w1_ref, b1_ref, scale_ref, shift_ref,
                          mask_ref, w2_ref, b2_ref, o_ref, *, H, Wp):
    # x_ref    : (1, (H+8)*Wp, Ci) bf16 -- zero-padded image, rows flattened with stride Wp,
    #            top/left pad = 3 so conv1 tap offsets are simply kh*Wp + kw.
    # w1_ref   : (5, 5*Ci, C1) bf16   -- conv1 weights, kw folded into K.
    # b1_ref   : (1, C1) f32          -- conv1 bias.
    # scale_ref/shift_ref : (1, C1) f32 -- folded eval-mode BatchNorm2d (after ReLU).
    # mask_ref : (M1, 1) f32          -- zeroes the 3x3-conv pad ring of the intermediate.
    # w2_ref   : (9*C1, Co_p) bf16    -- conv2 weights, all 9 taps folded into K.
    # b2_ref   : (1, Co_p) f32
    # o_ref    : (1, H*Wp, Co_p)      -- contiguous output slab (padding stripped in wrapper).
    M1 = (H + 3) * Wp          # conv1 output rows, in the conv2 zero-pad geometry (+1 spare row)
    M2 = H * Wp                # conv2 output rows
    nrows = M1 + 4 * Wp        # rows of the kw-folded input needed for kh = 0..4

    # ---- Conv2d(Ci -> C1, 5x5, pad=2): kw folded into K (K = 5*Ci), 5 MXU matmuls ----
    xcat = jnp.concatenate([x_ref[0, kw:kw + nrows, :] for kw in range(5)], axis=1)
    acc1 = jnp.zeros((M1, w1_ref.shape[-1]), jnp.float32)
    for kh in range(5):
        acc1 = acc1 + jnp.dot(xcat[kh * Wp:kh * Wp + M1, :], w1_ref[kh],
                              preferred_element_type=jnp.float32)

    # bias -> ReLU -> folded eval-mode BatchNorm, all on the f32 accumulator.
    z = jnp.maximum(acc1 + b1_ref[...], 0.0) * scale_ref[...] + shift_ref[...]
    # One multiplicative mask zeroes the 3x3 conv's zero-pad ring (replaces the old
    # per-row scatter into a per-step-zeroed scratch buffer).  Cast to bf16 for the MXU.
    z = (z * mask_ref[...]).astype(xcat.dtype)

    # ---- Conv2d(C1 -> Co, 3x3, pad=1): all 9 taps folded into K (K = 9*C1), ONE matmul ----
    ycat = jnp.concatenate(
        [z[kh * Wp + kw:kh * Wp + kw + M2, :] for kh in range(3) for kw in range(3)],
        axis=1)
    acc2 = jnp.dot(ycat, w2_ref[...], preferred_element_type=jnp.float32)

    # Single contiguous slab store (Wp / Co_p padding stripped in the wrapper).
    o_ref[0, :, :] = (acc2 + b2_ref[...]).astype(o_ref.dtype)


@functools.partial(jax.jit, static_argnames=("eps",))
def conv_seg_head(x, w1, b1, bn_gamma, bn_beta, bn_mean, bn_var, w2, b2, eps=1e-5):
    """Pallas TPU forward of ConvSegHead.

    x : (N, 64, H, W) NCHW (PyTorch layout), w1: (16, 64, 5, 5) OIHW, b1: (16,),
    bn_*: (16,), w2: (Co, 16, 3, 3) OIHW, b2: (Co,).   Returns (N, Co, H, W).
    """
    N, Ci, H, W = x.shape
    C1 = w1.shape[0]
    Co = w2.shape[0]
    assert w1.shape == (C1, Ci, 5, 5), w1.shape
    assert w2.shape == (Co, C1, 3, 3), w2.shape
    for p in (b1, bn_gamma, bn_beta, bn_mean, bn_var):
        assert p.shape == (C1,), p.shape
    assert b2.shape == (Co,), b2.shape

    out_dtype = x.dtype

    # Row stride of the flattened padded image: >= W+5 (so no 5x5 tap wraps across rows for
    # valid outputs) and a multiple of 8 (sublane-friendly slices).
    Wp = _round_up(W + 5, 8)
    Hx = H + 8                       # top pad 3, bottom pad 5 (keeps the last tap slice in-bounds)
    M1 = (H + 3) * Wp                # conv1 output rows (conv2 zero-pad geometry + spare row)
    M2 = H * Wp                      # conv2 output rows
    Co_p = _round_up(Co, 8)          # padded conv2 output width (extra cols are zero)

    # NCHW -> NHWC, bf16, zero pad: the single wrapper-side input copy (layout plumbing).
    # bf16 halves the dominant HBM->VMEM DMA and feeds the MXU at its fast (bf16) rate.
    x_nhwc = jnp.transpose(x, (0, 2, 3, 1)).astype(jnp.bfloat16)
    x_pad = jnp.pad(x_nhwc, ((0, 0), (3, Hx - H - 3), (3, Wp - W - 3), (0, 0)))
    x_flat = x_pad.reshape(N, Hx * Wp, Ci)           # contiguous -> free reshape

    # Matmul-ready weights (K-folded), bf16.
    #   w1f[kh][kw*Ci + ci, c1] = w1[c1, ci, kh, kw]
    #   w2f[(kh*3 + kw)*C1 + c1, co] = w2[co, c1, kh, kw]
    w1f = jnp.transpose(w1, (2, 3, 1, 0)).reshape(5, 5 * Ci, C1).astype(jnp.bfloat16)
    w2f = jnp.transpose(w2, (2, 3, 1, 0)).reshape(9 * C1, Co)
    w2f = jnp.pad(w2f, ((0, 0), (0, Co_p - Co))).astype(jnp.bfloat16)

    # Fold eval-mode BatchNorm2d into a per-channel scale/shift (applied after ReLU).
    inv_std = jax.lax.rsqrt(bn_var.astype(jnp.float32) + jnp.float32(eps))
    scale = (bn_gamma.astype(jnp.float32) * inv_std).reshape(1, C1)
    shift = (bn_beta.astype(jnp.float32)
             - bn_mean.astype(jnp.float32) * bn_gamma.astype(jnp.float32) * inv_std
             ).reshape(1, C1)
    b1r = b1.astype(jnp.float32).reshape(1, C1)
    b2r = jnp.pad(b2.astype(jnp.float32).reshape(1, Co), ((0, 0), (0, Co_p - Co)))

    # Precomputed (hoisted) multiplicative mask: 1 on valid intermediate pixels, 0 on the
    # 3x3 conv's zero-pad ring / alignment padding.  Valid pixel (h, w) lives at flattened
    # row (h+1)*Wp + (w+1) of the intermediate.
    ridx = jnp.arange(M1, dtype=jnp.int32)
    hp = ridx // Wp
    wp = ridx % Wp
    mask = (((hp >= 1) & (hp <= H) & (wp >= 1) & (wp <= W))
            .astype(jnp.float32).reshape(M1, 1))

    itemsize_out = jnp.dtype(out_dtype).itemsize
    cost = pl.CostEstimate(
        flops=N * (2 * M1 * (25 * Ci) * C1 + 2 * M2 * (9 * C1) * Co_p),
        transcendentals=0,
        bytes_accessed=(N * Hx * Wp * Ci * 2                      # bf16 input
                        + 2 * (w1f.size + w2f.size)               # bf16 weights
                        + 4 * (4 * C1 + Co_p + M1)                 # f32 scalars + mask
                        + N * M2 * Co_p * itemsize_out),           # output slab
    )

    # Capacity-aware VMEM limit: lift the default scoped limit on v5e/v6e (128 MiB physical)
    # while staying well inside v7x's 64 MiB per-TC VMEM.
    cp_kwargs = dict(dimension_semantics=("parallel",))
    try:  # TODO(synk): drop the guard once get_tpu_info is available everywhere.
        cap = pltpu.get_tpu_info().vmem_capacity_bytes
        cp_kwargs["vmem_limit_bytes"] = int(min(96 << 20, max(cap - (16 << 20), 32 << 20)))
    except Exception:
        pass

    kernel = functools.partial(_conv_seg_head_kernel, H=H, Wp=Wp)

    out_flat = pl.pallas_call(
        kernel,
        out_shape=jax.ShapeDtypeStruct((N, M2, Co_p), out_dtype),
        grid_spec=pltpu.PrefetchScalarGridSpec(
            num_scalar_prefetch=0,
            grid=(N,),
            in_specs=[
                pl.BlockSpec((1, Hx * Wp, Ci), lambda n: (n, 0, 0)),   # image (bf16)
                pl.BlockSpec((5, 5 * Ci, C1), lambda n: (0, 0, 0)),    # conv1 weights (resident)
                pl.BlockSpec((1, C1), lambda n: (0, 0)),               # conv1 bias
                pl.BlockSpec((1, C1), lambda n: (0, 0)),               # BN scale
                pl.BlockSpec((1, C1), lambda n: (0, 0)),               # BN shift
                pl.BlockSpec((M1, 1), lambda n: (0, 0)),               # pad-ring mask (resident)
                pl.BlockSpec((9 * C1, Co_p), lambda n: (0, 0)),        # conv2 weights (resident)
                pl.BlockSpec((1, Co_p), lambda n: (0, 0)),             # conv2 bias
            ],
            out_specs=pl.BlockSpec((1, M2, Co_p), lambda n: (n, 0, 0)),
        ),
        compiler_params=pltpu.CompilerParams(**cp_kwargs),
        cost_estimate=cost,
    )(x_flat, w1f, b1r, scale, shift, mask, w2f, b2r)

    # Strip row-stride / channel padding and go back to NCHW (cheap XLA slice + transpose).
    out = out_flat.reshape(N, H, Wp, Co_p)[:, :, :W, :Co]
    return jnp.transpose(out, (0, 3, 1, 2))


def _conv_seg_head_ref(x, w1, b1, bn_gamma, bn_beta, bn_mean, bn_var, w2, b2, eps=1e-5):
    """Pure-JAX f32 reference mirroring the PyTorch module (eval-mode BatchNorm)."""
    xf = x.astype(jnp.float32)
    y = jax.lax.conv_general_dilated(
        xf, w1.astype(jnp.float32), window_strides=(1, 1),
        padding=((2, 2), (2, 2)), dimension_numbers=("NCHW", "OIHW", "NCHW"))
    y = y + b1.reshape(1, -1, 1, 1)
    y = jnp.maximum(y, 0.0)
    inv_std = jax.lax.rsqrt(bn_var.astype(jnp.float32) + eps)
    y = ((y - bn_mean.reshape(1, -1, 1, 1))
         * (bn_gamma * inv_std).reshape(1, -1, 1, 1)
         + bn_beta.reshape(1, -1, 1, 1))
    y = jax.lax.conv_general_dilated(
        y, w2.astype(jnp.float32), window_strides=(1, 1),
        padding=((1, 1), (1, 1)), dimension_numbers=("NCHW", "OIHW", "NCHW"))
    y = y + b2.reshape(1, -1, 1, 1)
    return y.astype(x.dtype)


if __name__ == "__main__":
    key = jax.random.PRNGKey(0)
    ks = jax.random.split(key, 9)

    # Small shapes consistent with the module (Conv2d expects 64 input channels).
    N, Ci, H, W = 2, 64, 16, 16
    C1, Co = 16, 1

    x = jax.random.normal(ks[0], (N, Ci, H, W), dtype=jnp.float32)
    w1 = 0.05 * jax.random.normal(ks[1], (C1, Ci, 5, 5), dtype=jnp.float32)
    b1 = 0.1 * jax.random.normal(ks[2], (C1,), dtype=jnp.float32)
    bn_gamma = 1.0 + 0.1 * jax.random.normal(ks[3], (C1,), dtype=jnp.float32)
    bn_beta = 0.1 * jax.random.normal(ks[4], (C1,), dtype=jnp.float32)
    bn_mean = 0.1 * jax.random.normal(ks[5], (C1,), dtype=jnp.float32)
    bn_var = jax.random.uniform(ks[6], (C1,), dtype=jnp.float32, minval=0.5, maxval=1.5)
    w2 = 0.1 * jax.random.normal(ks[7], (Co, C1, 3, 3), dtype=jnp.float32)
    b2 = 0.1 * jax.random.normal(ks[8], (Co,), dtype=jnp.float32)

    out = jax.block_until_ready(
        conv_seg_head(x, w1, b1, bn_gamma, bn_beta, bn_mean, bn_var, w2, b2))
    ref = jax.block_until_ready(
        _conv_seg_head_ref(x, w1, b1, bn_gamma, bn_beta, bn_mean, bn_var, w2, b2))

    assert out.shape == (N, Co, H, W), out.shape
    max_err = float(jnp.max(jnp.abs(out - ref)))
    # Tolerance reflects bf16 MXU operands (f32 accumulation) vs. the f32 reference.
    assert jnp.allclose(out, ref, atol=3e-2, rtol=3e-2), ("max_abs_err", max_err)
    print("KERNEL_OK")
</pallas_src>

<mosaic_0001>
module attributes {stable_mosaic.version = 11 : i64} {
  func.func @_conv_seg_head_kernel(%arg0: i32, %arg1: memref<1x576x64xbf16, #tpu.memory_space<vmem>>, %arg2: memref<5x320x16xbf16, #tpu.memory_space<vmem>>, %arg3: memref<1x16xf32, #tpu.memory_space<vmem>>, %arg4: memref<1x16xf32, #tpu.memory_space<vmem>>, %arg5: memref<1x16xf32, #tpu.memory_space<vmem>>, %arg6: memref<456x1xf32, #tpu.memory_space<vmem>>, %arg7: memref<144x8xbf16, #tpu.memory_space<vmem>>, %arg8: memref<1x8xf32, #tpu.memory_space<vmem>>, %arg9: memref<1x384x8xf32, #tpu.memory_space<vmem>>) attributes {dimension_semantics = [#tpu.dimension_semantics<parallel>], iteration_bounds = array<i64: 2>, scalar_prefetch = 0 : i64, scratch_operands = 0 : i64, tpu.core_type = #tpu.core_type<tc>, window_params = [{transform_indices = @transform_0, window_bounds = array<i64: 1, 576, 64>}, {pipeline_mode = #tpu.pipeline_mode<synchronous>, transform_indices = @transform_1, window_bounds = array<i64: 5, 320, 16>}, {pipeline_mode = #tpu.pipeline_mode<synchronous>, transform_indices = @transform_2, window_bounds = array<i64: 1, 16>}, {pipeline_mode = #tpu.pipeline_mode<synchronous>, transform_indices = @transform_3, window_bounds = array<i64: 1, 16>}, {pipeline_mode = #tpu.pipeline_mode<synchronous>, transform_indices = @transform_4, window_bounds = array<i64: 1, 16>}, {pipeline_mode = #tpu.pipeline_mode<synchronous>, transform_indices = @transform_5, window_bounds = array<i64: 456, 1>}, {pipeline_mode = #tpu.pipeline_mode<synchronous>, transform_indices = @transform_6, window_bounds = array<i64: 144, 8>}, {pipeline_mode = #tpu.pipeline_mode<synchronous>, transform_indices = @transform_7, window_bounds = array<i64: 1, 8>}, {transform_indices = @transform_8, window_bounds = array<i64: 1, 384, 8>}]} {
    %c0 = arith.constant 0 : index
    %c0_0 = arith.constant 0 : index
    %c0_1 = arith.constant 0 : index
    %0 = vector.load %arg1[%c0, %c0_0, %c0_1] : memref<1x576x64xbf16, #tpu.memory_space<vmem>>, vector<1x552x64xbf16>
    %1 = vector.shape_cast %0 : vector<1x552x64xbf16> to vector<552x64xbf16>
    %c0_2 = arith.constant 0 : index
    %c1 = arith.constant 1 : index
    %c0_3 = arith.constant 0 : index
    %2 = vector.load %arg1[%c0_2, %c1, %c0_3] : memref<1x576x64xbf16, #tpu.memory_space<vmem>>, vector<1x552x64xbf16>
    %3 = vector.shape_cast %2 : vector<1x552x64xbf16> to vector<552x64xbf16>
    %c0_4 = arith.constant 0 : index
    %c2 = arith.constant 2 : index
    %c0_5 = arith.constant 0 : index
    %4 = vector.load %arg1[%c0_4, %c2, %c0_5] : memref<1x576x64xbf16, #tpu.memory_space<vmem>>, vector<1x552x64xbf16>
    %5 = vector.shape_cast %4 : vector<1x552x64xbf16> to vector<552x64xbf16>
    %c0_6 = arith.constant 0 : index
    %c3 = arith.constant 3 : index
    %c0_7 = arith.constant 0 : index
    %6 = vector.load %arg1[%c0_6, %c3, %c0_7] : memref<1x576x64xbf16, #tpu.memory_space<vmem>>, vector<1x552x64xbf16>
    %7 = vector.shape_cast %6 : vector<1x552x64xbf16> to vector<552x64xbf16>
    %c0_8 = arith.constant 0 : index
    %c4 = arith.constant 4 : index
    %c0_9 = arith.constant 0 : index
    %8 = vector.load %arg1[%c0_8, %c4, %c0_9] : memref<1x576x64xbf16, #tpu.memory_space<vmem>>, vector<1x552x64xbf16>
    %9 = vector.shape_cast %8 : vector<1x552x64xbf16> to vector<552x64xbf16>
    %10 = tpu.concatenate %1, %3, %5, %7, %9 in 1 : vector<552x64xbf16>, vector<552x64xbf16>, vector<552x64xbf16>, vector<552x64xbf16>, vector<552x64xbf16> -> vector<552x320xbf16>
    %cst = arith.constant 0.000000e+00 : f32
    %11 = vector.broadcast %cst : f32 to vector<456x16xf32>
    %12 = vector.extract_strided_slice %10 {offsets = [0, 0], sizes = [456, 320], strides = [1, 1]} : vector<552x320xbf16> to vector<456x320xbf16>
    %c0_10 = arith.constant 0 : index
    %c0_11 = arith.constant 0 : index
    %c0_12 = arith.constant 0 : index
    %13 = vector.load %arg2[%c0_10, %c0_11, %c0_12] : memref<5x320x16xbf16, #tpu.memory_space<vmem>>, vector<1x320x16xbf16>
    %14 = vector.shape_cast %13 : vector<1x320x16xbf16> to vector<320x16xbf16>
    %cst_13 = arith.constant dense<0.000000e+00> : vector<456x16xf32>
    %15 = tpu.matmul %12, %14, %cst_13 {dimension_numbers = #tpu.dot_dimension_numbers<[1], [0], [0], [1], [0, 0, 1, 1], [], []>} : vector<456x320xbf16>, vector<320x16xbf16>, vector<456x16xf32> -> vector<456x16xf32>
    %16 = arith.addf %11, %15 : vector<456x16xf32>
    %17 = vector.extract_strided_slice %10 {offsets = [24, 0], sizes = [456, 320], strides = [1, 1]} : vector<552x320xbf16> to vector<456x320xbf16>
    %c1_14 = arith.constant 1 : index
    %c0_15 = arith.constant 0 : index
    %c0_16 = arith.constant 0 : index
    %18 = vector.load %arg2[%c1_14, %c0_15, %c0_16] : memref<5x320x16xbf16, #tpu.memory_space<vmem>>, vector<1x320x16xbf16>
    %19 = vector.shape_cast %18 : vector<1x320x16xbf16> to vector<320x16xbf16>
    %cst_17 = arith.constant dense<0.000000e+00> : vector<456x16xf32>
    %20 = tpu.matmul %17, %19, %cst_17 {dimension_numbers = #tpu.dot_dimension_numbers<[1], [0], [0], [1], [0, 0, 1, 1], [], []>} : vector<456x320xbf16>, vector<320x16xbf16>, vector<456x16xf32> -> vector<456x16xf32>
    %21 = arith.addf %16, %20 : vector<456x16xf32>
    %22 = vector.extract_strided_slice %10 {offsets = [48, 0], sizes = [456, 320], strides = [1, 1]} : vector<552x320xbf16> to vector<456x320xbf16>
    %c2_18 = arith.constant 2 : index
    %c0_19 = arith.constant 0 : index
    %c0_20 = arith.constant 0 : index
    %23 = vector.load %arg2[%c2_18, %c0_19, %c0_20] : memref<5x320x16xbf16, #tpu.memory_space<vmem>>, vector<1x320x16xbf16>
    %24 = vector.shape_cast %23 : vector<1x320x16xbf16> to vector<320x16xbf16>
    %cst_21 = arith.constant dense<0.000000e+00> : vector<456x16xf32>
    %25 = tpu.matmul %22, %24, %cst_21 {dimension_numbers = #tpu.dot_dimension_numbers<[1], [0], [0], [1], [0, 0, 1, 1], [], []>} : vector<456x320xbf16>, vector<320x16xbf16>, vector<456x16xf32> -> vector<456x16xf32>
    %26 = arith.addf %21, %25 : vector<456x16xf32>
    %27 = vector.extract_strided_slice %10 {offsets = [72, 0], sizes = [456, 320], strides = [1, 1]} : vector<552x320xbf16> to vector<456x320xbf16>
    %c3_22 = arith.constant 3 : index
    %c0_23 = arith.constant 0 : index
    %c0_24 = arith.constant 0 : index
    %28 = vector.load %arg2[%c3_22, %c0_23, %c0_24] : memref<5x320x16xbf16, #tpu.memory_space<vmem>>, vector<1x320x16xbf16>
    %29 = vector.shape_cast %28 : vector<1x320x16xbf16> to vector<320x16xbf16>
    %cst_25 = arith.constant dense<0.000000e+00> : vector<456x16xf32>
    %30 = tpu.matmul %27, %29, %cst_25 {dimension_numbers = #tpu.dot_dimension_numbers<[1], [0], [0], [1], [0, 0, 1, 1], [], []>} : vector<456x320xbf16>, vector<320x16xbf16>, vector<456x16xf32> -> vector<456x16xf32>
    %31 = arith.addf %26, %30 : vector<456x16xf32>
    %32 = vector.extract_strided_slice %10 {offsets = [96, 0], sizes = [456, 320], strides = [1, 1]} : vector<552x320xbf16> to vector<456x320xbf16>
    %c4_26 = arith.constant 4 : index
    %c0_27 = arith.constant 0 : index
    %c0_28 = arith.constant 0 : index
    %33 = vector.load %arg2[%c4_26, %c0_27, %c0_28] : memref<5x320x16xbf16, #tpu.memory_space<vmem>>, vector<1x320x16xbf16>
    %34 = vector.shape_cast %33 : vector<1x320x16xbf16> to vector<320x16xbf16>
    %cst_29 = arith.constant dense<0.000000e+00> : vector<456x16xf32>
    %35 = tpu.matmul %32, %34, %cst_29 {dimension_numbers = #tpu.dot_dimension_numbers<[1], [0], [0], [1], [0, 0, 1, 1], [], []>} : vector<456x320xbf16>, vector<320x16xbf16>, vector<456x16xf32> -> vector<456x16xf32>
    %36 = arith.addf %31, %35 : vector<456x16xf32>
    %c0_30 = arith.constant 0 : index
    %c0_31 = arith.constant 0 : index
    %37 = vector.load %arg3[%c0_30, %c0_31] : memref<1x16xf32, #tpu.memory_space<vmem>>, vector<1x16xf32>
    %38 = vector.broadcast %37 : vector<1x16xf32> to vector<456x16xf32>
    %39 = arith.addf %36, %38 : vector<456x16xf32>
    %cst_32 = arith.constant 0.000000e+00 : f32
    %40 = vector.broadcast %cst_32 : f32 to vector<456x16xf32>
    %41 = arith.maximumf %39, %40 : vector<456x16xf32>
    %c0_33 = arith.constant 0 : index
    %c0_34 = arith.constant 0 : index
    %42 = vector.load %arg4[%c0_33, %c0_34] : memref<1x16xf32, #tpu.memory_space<vmem>>, vector<1x16xf32>
    %43 = vector.broadcast %42 : vector<1x16xf32> to vector<456x16xf32>
    %44 = arith.mulf %41, %43 : vector<456x16xf32>
    %c0_35 = arith.constant 0 : index
    %c0_36 = arith.constant 0 : index
    %45 = vector.load %arg5[%c0_35, %c0_36] : memref<1x16xf32, #tpu.memory_space<vmem>>, vector<1x16xf32>
    %46 = vector.broadcast %45 : vector<1x16xf32> to vector<456x16xf32>
    %47 = arith.addf %44, %46 : vector<456x16xf32>
    %c0_37 = arith.constant 0 : index
    %c0_38 = arith.constant 0 : index
    %48 = vector.load %arg6[%c0_37, %c0_38] : memref<456x1xf32, #tpu.memory_space<vmem>>, vector<456x1xf32>
    %49 = vector.broadcast %48 : vector<456x1xf32> to vector<456x16xf32>
    %50 = arith.mulf %47, %49 : vector<456x16xf32>
    %51 = arith.truncf %50 : vector<456x16xf32> to vector<456x16xbf16>
    %52 = vector.extract_strided_slice %51 {offsets = [0, 0], sizes = [384, 16], strides = [1, 1]} : vector<456x16xbf16> to vector<384x16xbf16>
    %53 = vector.extract_strided_slice %51 {offsets = [1, 0], sizes = [384, 16], strides = [1, 1]} : vector<456x16xbf16> to vector<384x16xbf16>
    %54 = vector.extract_strided_slice %51 {offsets = [2, 0], sizes = [384, 16], strides = [1, 1]} : vector<456x16xbf16> to vector<384x16xbf16>
    %55 = vector.extract_strided_slice %51 {offsets = [24, 0], sizes = [384, 16], strides = [1, 1]} : vector<456x16xbf16> to vector<384x16xbf16>
    %56 = vector.extract_strided_slice %51 {offsets = [25, 0], sizes = [384, 16], strides = [1, 1]} : vector<456x16xbf16> to vector<384x16xbf16>
    %57 = vector.extract_strided_slice %51 {offsets = [26, 0], sizes = [384, 16], strides = [1, 1]} : vector<456x16xbf16> to vector<384x16xbf16>
    %58 = vector.extract_strided_slice %51 {offsets = [48, 0], sizes = [384, 16], strides = [1, 1]} : vector<456x16xbf16> to vector<384x16xbf16>
    %59 = vector.extract_strided_slice %51 {offsets = [49, 0], sizes = [384, 16], strides = [1, 1]} : vector<456x16xbf16> to vector<384x16xbf16>
    %60 = vector.extract_strided_slice %51 {offsets = [50, 0], sizes = [384, 16], strides = [1, 1]} : vector<456x16xbf16> to vector<384x16xbf16>
    %61 = tpu.concatenate %52, %53, %54, %55, %56, %57, %58, %59, %60 in 1 : vector<384x16xbf16>, vector<384x16xbf16>, vector<384x16xbf16>, vector<384x16xbf16>, vector<384x16xbf16>, vector<384x16xbf16>, vector<384x16xbf16>, vector<384x16xbf16>, vector<384x16xbf16> -> vector<384x144xbf16>
    %c0_39 = arith.constant 0 : index
    %c0_40 = arith.constant 0 : index
    %62 = vector.load %arg7[%c0_39, %c0_40] : memref<144x8xbf16, #tpu.memory_space<vmem>>, vector<144x8xbf16>
    %cst_41 = arith.constant dense<0.000000e+00> : vector<384x8xf32>
    %63 = tpu.matmul %61, %62, %cst_41 {dimension_numbers = #tpu.dot_dimension_numbers<[1], [0], [0], [1], [0, 0, 1, 1], [], []>} : vector<384x144xbf16>, vector<144x8xbf16>, vector<384x8xf32> -> vector<384x8xf32>
    %c0_42 = arith.constant 0 : index
    %c0_43 = arith.constant 0 : index
    %64 = vector.load %arg8[%c0_42, %c0_43] : memref<1x8xf32, #tpu.memory_space<vmem>>, vector<1x8xf32>
    %65 = vector.broadcast %64 : vector<1x8xf32> to vector<384x8xf32>
    %66 = arith.addf %63, %65 : vector<384x8xf32>
    %c0_44 = arith.constant 0 : index
    %c0_45 = arith.constant 0 : index
    %c0_46 = arith.constant 0 : index
    %67 = vector.load %arg9[%c0_44, %c0_45, %c0_46] : memref<1x384x8xf32, #tpu.memory_space<vmem>>, vector<1x384x8xf32>
    %68 = vector.shape_cast %67 : vector<1x384x8xf32> to vector<384x8xf32>
    %69 = vector.shape_cast %66 : vector<384x8xf32> to vector<1x384x8xf32>
    tpu.vector_store %arg9[%c0_44, %c0_45, %c0_46], %69 {strides = array<i32>} : memref<1x384x8xf32, #tpu.memory_space<vmem>>, vector<1x384x8xf32>,
    return
  }
  func.func @transform_0(%arg0: i32) -> (i32, i32, i32) {
    %c0_i32 = arith.constant 0 : i32
    %c0_i32_0 = arith.constant 0 : i32
    %c0_i32_1 = arith.constant 0 : i32
    return %arg0, %c0_i32, %c0_i32_0 : i32, i32, i32
  }
  func.func @transform_1(%arg0: i32) -> (i32, i32, i32) {
    %c0_i32 = arith.constant 0 : i32
    %c0_i32_0 = arith.constant 0 : i32
    %c0_i32_1 = arith.constant 0 : i32
    %c0_i32_2 = arith.constant 0 : i32
    return %c0_i32, %c0_i32_0, %c0_i32_1 : i32, i32, i32
  }
  func.func @transform_2(%arg0: i32) -> (i32, i32) {
    %c0_i32 = arith.constant 0 : i32
    %c0_i32_0 = arith.constant 0 : i32
    %c0_i32_1 = arith.constant 0 : i32
    return %c0_i32, %c0_i32_0 : i32, i32
  }
  func.func @transform_3(%arg0: i32) -> (i32, i32) {
    %c0_i32 = arith.constant 0 : i32
    %c0_i32_0 = arith.constant 0 : i32
    %c0_i32_1 = arith.constant 0 : i32
    return %c0_i32, %c0_i32_0 : i32, i32
  }
  func.func @transform_4(%arg0: i32) -> (i32, i32) {
    %c0_i32 = arith.constant 0 : i32
    %c0_i32_0 = arith.constant 0 : i32
    %c0_i32_1 = arith.constant 0 : i32
    return %c0_i32, %c0_i32_0 : i32, i32
  }
  func.func @transform_5(%arg0: i32) -> (i32, i32) {
    %c0_i32 = arith.constant 0 : i32
    %c0_i32_0 = arith.constant 0 : i32
    %c0_i32_1 = arith.constant 0 : i32
    return %c0_i32, %c0_i32_0 : i32, i32
  }
  func.func @transform_6(%arg0: i32) -> (i32, i32) {
    %c0_i32 = arith.constant 0 : i32
    %c0_i32_0 = arith.constant 0 : i32
    %c0_i32_1 = arith.constant 0 : i32
    return %c0_i32, %c0_i32_0 : i32, i32
  }
  func.func @transform_7(%arg0: i32) -> (i32, i32) {
    %c0_i32 = arith.constant 0 : i32
    %c0_i32_0 = arith.constant 0 : i32
    %c0_i32_1 = arith.constant 0 : i32
    return %c0_i32, %c0_i32_0 : i32, i32
  }
  func.func @transform_8(%arg0: i32) -> (i32, i32, i32) {
    %c0_i32 = arith.constant 0 : i32
    %c0_i32_0 = arith.constant 0 : i32
    %c0_i32_1 = arith.constant 0 : i32
    return %arg0, %c0_i32, %c0_i32_0 : i32, i32, i32
  }
}

</mosaic_0001>

<llo_original>
// kernel: conv_seg_head.1
$region0: #{conv_seg_head.1}
  #allocation0 [shape = 'u32[]', space=smem, size = 0x4, offset = 0x4, fixed_abs, tag = 'smem constant byte address 0x4 - core index']
  #allocation1 [shape = 'u32[72,128]{1,0:T(1,128)}', space=vmem, size = 0x9000, scoped, tag = 'internal scratch']
  %s0 = inlined_call_operand.vmem [shape: bf16[2,576,64], index: 0, kind: input, shape index: {}]
  %s1 = inlined_call_operand.vmem [shape: bf16[5,320,16], index: 1, kind: input, shape index: {}]
  %s2 = inlined_call_operand.vmem [shape: f32[1,16], index: 2, kind: input, shape index: {}]
  %s3 = inlined_call_operand.vmem [shape: f32[1,16], index: 3, kind: input, shape index: {}]
  %s4 = inlined_call_operand.vmem [shape: f32[1,16], index: 4, kind: input, shape index: {}]
  %s5 = inlined_call_operand.vmem [shape: f32[456,1], index: 5, kind: input, shape index: {}]
  %s6 = inlined_call_operand.vmem [shape: bf16[144,8], index: 6, kind: input, shape index: {}]
  %s7 = inlined_call_operand.vmem [shape: f32[1,8], index: 7, kind: input, shape index: {}]
  %s8 = inlined_call_operand.vmem [shape: f32[2,384,8], index: 8, kind: output, shape index: {}]
  %s9 = sld [smem:[#allocation0]]
  $region65: #{conv_seg_head.1} parent=0
    _
  %s11 = ssub.s32 1, %s9
  %s12 = scalar_select 0, %s11, %s9
  loop: start=0, step=1, limit=4
  $region2: #{conv_seg_head.1} parent=0 // loop_pre_header
    _
  $region3: #{conv_seg_head.1} parent=0 // loop_header
    %s14 = sphi 0, %s18
    %p15 = scmp.ge.s32.totalorder %s14, 4
    %s24 = sphi 0, %s26
    %s27 = sphi 0, %s24
    %s28 = sphi 0, %s27
    %s44 = sphi 0, %s28
    %s48 = sphi 0, %s48
    %s50 = sphi 0, %s48
    %s51 = sphi 0, %s50
    %s65 = sphi 0, %s51
    %s69 = sphi 0, %s69
    %s71 = sphi 0, %s69
    %s72 = sphi 0, %s71
    %s86 = sphi 0, %s72
    %s90 = sphi 0, %s90
    %s92 = sphi 0, %s90
    %s93 = sphi 0, %s92
    %s107 = sphi 0, %s93
    %s111 = sphi 0, %s111
    %s113 = sphi 0, %s111
    %s114 = sphi 0, %s113
    %s128 = sphi 0, %s114
    %s132 = sphi 0, %s132
    %s134 = sphi 0, %s132
    %s135 = sphi 0, %s134
    %s149 = sphi 0, %s135
    %s153 = sphi 0, %s153
    %s155 = sphi 0, %s153
    %s156 = sphi 0, %s155
    %s170 = sphi 0, %s156
    %s174 = sphi 0, %s174
    %s176 = sphi 0, %s174
    %s177 = sphi 0, %s176
    %s191 = sphi 0, %s177
    %s197 = sphi 0, %s199
    %s200 = sphi 0, %s197
    %s201 = sphi 0, %s200
    %s217 = sphi 0, %s201
  $region4: #{conv_seg_head.1} parent=0 // loop_header_branch
    %17 = sbr.rel (%p15) target = $region8
  $region5: #{conv_seg_head.1} parent=0 // loop_body
    %s19 = ssub.s32 %s14, 1
    %s20 = ssub.s32 %s14, 2
    %s21 = sadd.s32 %s14, 1
    %s22 = ssub.s32 %s14, %s21
    %p23 = scmp.eq.s32.totalorder %s22, 0
    %s25 = sadd.s32 %s24, 1
    %s26 = scalar_select %p23, %s24, %s25
    %p29 = pneg %p23
    %p30 = scmp.eq.s32.totalorder %s14, 1
    %p31 = por %p29, %p30
    %p32 = scmp.ne.s32.totalorder %s24, %s27
    %p33 = scmp.eq.s32.totalorder %s14, 0
    %p34 = por %p32, %p33
    %p35 = scmp.ne.s32.totalorder %s24, %s27
    %p36 = scmp.eq.s32.totalorder %s19, 1
    %p37 = por %p35, %p36
    %p38 = scmp.ne.s32.totalorder %s27, %s28
    %p39 = scmp.eq.s32.totalorder %s19, 0
    %p40 = por %p38, %p39
    %p41 = scmp.ne.s32.totalorder %s27, %s28
    %p42 = scmp.eq.s32.totalorder %s20, 1
    %p43 = por %p41, %p42
    %p45 = scmp.ne.s32.totalorder %s28, %s44
    %p46 = scmp.eq.s32.totalorder %s20, 0
    %p47 = por %p45, %p46
    %s49 = sadd.s32 %s48, 1
    %p52 = scmp.eq.s32.totalorder %s14, 1
    %p53 = scmp.ne.s32.totalorder %s48, %s50
    %p54 = scmp.eq.s32.totalorder %s14, 0
    %p55 = por %p53, %p54
    %p56 = scmp.ne.s32.totalorder %s48, %s50
    %p57 = scmp.eq.s32.totalorder %s19, 1
    %p58 = por %p56, %p57
    %p59 = scmp.ne.s32.totalorder %s50, %s51
    %p60 = scmp.eq.s32.totalorder %s19, 0
    %p61 = por %p59, %p60
    %p62 = scmp.ne.s32.totalorder %s50, %s51
    %p63 = scmp.eq.s32.totalorder %s20, 1
    %p64 = por %p62, %p63
    %p66 = scmp.ne.s32.totalorder %s51, %s65
    %p67 = scmp.eq.s32.totalorder %s20, 0
    %p68 = por %p66, %p67
    %s70 = sadd.s32 %s69, 1
    %p73 = scmp.eq.s32.totalorder %s14, 1
    %p74 = scmp.ne.s32.totalorder %s69, %s71
    %p75 = scmp.eq.s32.totalorder %s14, 0
    %p76 = por %p74, %p75
    %p77 = scmp.ne.s32.totalorder %s69, %s71
    %p78 = scmp.eq.s32.totalorder %s19, 1
    %p79 = por %p77, %p78
    %p80 = scmp.ne.s32.totalorder %s71, %s72
    %p81 = scmp.eq.s32.totalorder %s19, 0
    %p82 = por %p80, %p81
    %p83 = scmp.ne.s32.totalorder %s71, %s72
    %p84 = scmp.eq.s32.totalorder %s20, 1
    %p85 = por %p83, %p84
    %p87 = scmp.ne.s32.totalorder %s72, %s86
    %p88 = scmp.eq.s32.totalorder %s20, 0
    %p89 = por %p87, %p88
    %s91 = sadd.s32 %s90, 1
    %p94 = scmp.eq.s32.totalorder %s14, 1
    %p95 = scmp.ne.s32.totalorder %s90, %s92
    %p96 = scmp.eq.s32.totalorder %s14, 0
    %p97 = por %p95, %p96
    %p98 = scmp.ne.s32.totalorder %s90, %s92
    %p99 = scmp.eq.s32.totalorder %s19, 1
    %p100 = por %p98, %p99
    %p101 = scmp.ne.s32.totalorder %s92, %s93
    %p102 = scmp.eq.s32.totalorder %s19, 0
    %p103 = por %p101, %p102
    %p104 = scmp.ne.s32.totalorder %s92, %s93
    %p105 = scmp.eq.s32.totalorder %s20, 1
    %p106 = por %p104, %p105
    %p108 = scmp.ne.s32.totalorder %s93, %s107
    %p109 = scmp.eq.s32.totalorder %s20, 0
    %p110 = por %p108, %p109
    %s112 = sadd.s32 %s111, 1
    %p115 = scmp.eq.s32.totalorder %s14, 1
    %p116 = scmp.ne.s32.totalorder %s111, %s113
    %p117 = scmp.eq.s32.totalorder %s14, 0
    %p118 = por %p116, %p117
    %p119 = scmp.ne.s32.totalorder %s111, %s113
    %p120 = scmp.eq.s32.totalorder %s19, 1
    %p121 = por %p119, %p120
    %p122 = scmp.ne.s32.totalorder %s113, %s114
    %p123 = scmp.eq.s32.totalorder %s19, 0
    %p124 = por %p122, %p123
    %p125 = scmp.ne.s32.totalorder %s113, %s114
    %p126 = scmp.eq.s32.totalorder %s20, 1
    %p127 = por %p125, %p126
    %p129 = scmp.ne.s32.totalorder %s114, %s128
    %p130 = scmp.eq.s32.totalorder %s20, 0
    %p131 = por %p129, %p130
    %s133 = sadd.s32 %s132, 1
    %p136 = scmp.eq.s32.totalorder %s14, 1
    %p137 = scmp.ne.s32.totalorder %s132, %s134
    %p138 = scmp.eq.s32.totalorder %s14, 0
    %p139 = por %p137, %p138
    %p140 = scmp.ne.s32.totalorder %s132, %s134
    %p141 = scmp.eq.s32.totalorder %s19, 1
    %p142 = por %p140, %p141
    %p143 = scmp.ne.s32.totalorder %s134, %s135
    %p144 = scmp.eq.s32.totalorder %s19, 0
    %p145 = por %p143, %p144
    %p146 = scmp.ne.s32.totalorder %s134, %s135
    %p147 = scmp.eq.s32.totalorder %s20, 1
    %p148 = por %p146, %p147
    %p150 = scmp.ne.s32.totalorder %s135, %s149
    %p151 = scmp.eq.s32.totalorder %s20, 0
    %p152 = por %p150, %p151
    %s154 = sadd.s32 %s153, 1
    %p157 = scmp.eq.s32.totalorder %s14, 1
    %p158 = scmp.ne.s32.totalorder %s153, %s155
    %p159 = scmp.eq.s32.totalorder %s14, 0
    %p160 = por %p158, %p159
    %p161 = scmp.ne.s32.totalorder %s153, %s155
    %p162 = scmp.eq.s32.totalorder %s19, 1
    %p163 = por %p161, %p162
    %p164 = scmp.ne.s32.totalorder %s155, %s156
    %p165 = scmp.eq.s32.totalorder %s19, 0
    %p166 = por %p164, %p165
    %p167 = scmp.ne.s32.totalorder %s155, %s156
    %p168 = scmp.eq.s32.totalorder %s20, 1
    %p169 = por %p167, %p168
    %p171 = scmp.ne.s32.totalorder %s156, %s170
    %p172 = scmp.eq.s32.totalorder %s20, 0
    %p173 = por %p171, %p172
    %s175 = sadd.s32 %s174, 1
    %p178 = scmp.eq.s32.totalorder %s14, 1
    %p179 = scmp.ne.s32.totalorder %s174, %s176
    %p180 = scmp.eq.s32.totalorder %s14, 0
    %p181 = por %p179, %p180
    %p182 = scmp.ne.s32.totalorder %s174, %s176
    %p183 = scmp.eq.s32.totalorder %s19, 1
    %p184 = por %p182, %p183
    %p185 = scmp.ne.s32.totalorder %s176, %s177
    %p186 = scmp.eq.s32.totalorder %s19, 0
    %p187 = por %p185, %p186
    %p188 = scmp.ne.s32.totalorder %s176, %s177
    %p189 = scmp.eq.s32.totalorder %s20, 1
    %p190 = por %p188, %p189
    %p192 = scmp.ne.s32.totalorder %s177, %s191
    %p193 = scmp.eq.s32.totalorder %s20, 0
    %p194 = por %p192, %p193
    %s195 = ssub.s32 %s14, %s21
    %p196 = scmp.eq.s32.totalorder %s195, 0
    %s198 = sadd.s32 %s197, 1
    %s199 = scalar_select %p196, %s197, %s198
    %p202 = pneg %p196
    %p203 = scmp.eq.s32.totalorder %s14, 1
    %p204 = por %p202, %p203
    %p205 = scmp.ne.s32.totalorder %s197, %s200
    %p206 = scmp.eq.s32.totalorder %s14, 0
    %p207 = por %p205, %p206
    %p208 = scmp.ne.s32.totalorder %s197, %s200
    %p209 = scmp.eq.s32.totalorder %s19, 1
    %p210 = por %p208, %p209
    %p211 = scmp.ne.s32.totalorder %s200, %s201
    %p212 = scmp.eq.s32.totalorder %s19, 0
    %p213 = por %p211, %p212
    %p214 = scmp.ne.s32.totalorder %s200, %s201
    %p215 = scmp.eq.s32.totalorder %s20, 1
    %p216 = por %p214, %p215
    %p218 = scmp.ne.s32.totalorder %s201, %s217
    %p219 = scmp.eq.s32.totalorder %s20, 0
    %p220 = por %p218, %p219
    %p221 = scmp.le.s32.totalorder 1, %s14
    %p222 = scmp.lt.s32.totalorder %s14, 3
    %p223 = pnand %p221, %p222
    %p224 = pneg %p223
    // Predicated region
    $region9: #{conv_seg_head.1} parent=5 // pred_check
      _
    $region10: #{conv_seg_head.1} parent=5 // pred_check_branch
      %226 = sbr.rel (%p223) target = $region12
    $region11: #{conv_seg_head.1} parent=5 // pred_region
      %s227 = ssub.s32 %s14, 1
      // Predicated region
      $region13: #{conv_seg_head.1} parent=11 // pred_check
        %p228 = pneg %p61
      $region14: #{conv_seg_head.1} parent=11 // pred_check_branch
        %230 = sbr.rel (%p228) target = $region16
      $region15: #{conv_seg_head.1} parent=11 // pred_region
        _
      $region16: #{conv_seg_head.1} parent=11 // pred_fallthru
        _
      // Predicated region
      $region17: #{conv_seg_head.1} parent=11 // pred_check
        %p231 = pneg %p82
      $region18: #{conv_seg_head.1} parent=11 // pred_check_branch
        %233 = sbr.rel (%p231) target = $region20
      $region19: #{conv_seg_head.1} parent=11 // pred_region
        _
      $region20: #{conv_seg_head.1} parent=11 // pred_fallthru
        _
      // Predicated region
      $region21: #{conv_seg_head.1} parent=11 // pred_check
        %p234 = pneg %p103
      $region22: #{conv_seg_head.1} parent=11 // pred_check_branch
        %236 = sbr.rel (%p234) target = $region24
      $region23: #{conv_seg_head.1} parent=11 // pred_region
        _
      $region24: #{conv_seg_head.1} parent=11 // pred_fallthru
        _
      // Predicated region
      $region25: #{conv_seg_head.1} parent=11 // pred_check
        %p237 = pneg %p124
      $region26: #{conv_seg_head.1} parent=11 // pred_check_branch
        %239 = sbr.rel (%p237) target = $region28
      $region27: #{conv_seg_head.1} parent=11 // pred_region
        _
      $region28: #{conv_seg_head.1} parent=11 // pred_fallthru
        _
      // Predicated region
      $region29: #{conv_seg_head.1} parent=11 // pred_check
        %p240 = pneg %p145
      $region30: #{conv_seg_head.1} parent=11 // pred_check_branch
        %242 = sbr.rel (%p240) target = $region32
      $region31: #{conv_seg_head.1} parent=11 // pred_region
        _
      $region32: #{conv_seg_head.1} parent=11 // pred_fallthru
        _
      // Predicated region
      $region33: #{conv_seg_head.1} parent=11 // pred_check
        %p243 = pneg %p166
      $region34: #{conv_seg_head.1} parent=11 // pred_check_branch
        %245 = sbr.rel (%p243) target = $region36
      $region35: #{conv_seg_head.1} parent=11 // pred_region
        _
      $region36: #{conv_seg_head.1} parent=11 // pred_fallthru
        _
      // Predicated region
      $region37: #{conv_seg_head.1} parent=11 // pred_check
        %p246 = pneg %p187
      $region38: #{conv_seg_head.1} parent=11 // pred_check_branch
        %248 = sbr.rel (%p246) target = $region40
      $region39: #{conv_seg_head.1} parent=11 // pred_region
        _
      $region40: #{conv_seg_head.1} parent=11 // pred_fallthru
        _
    $region12: #{conv_seg_head.1} parent=5 // pred_fallthru
      _
    %p249 = scmp.lt.s32.totalorder %s14, 2
    // Predicated region
    $region41: #{conv_seg_head.1} parent=5 // pred_check
      %p250 = pneg %p249
    $region42: #{conv_seg_head.1} parent=5 // pred_check_branch
      %252 = sbr.rel (%p250) target = $region44
    $region43: #{conv_seg_head.1} parent=5 // pred_region
      // Predicated region
      $region45: #{conv_seg_head.1} parent=43 // pred_check
        %p253 = pneg %p34
      $region46: #{conv_seg_head.1} parent=43 // pred_check_branch
        %255 = sbr.rel (%p253) target = $region48
      $region47: #{conv_seg_head.1} parent=43 // pred_region
        %p256 = scmp.lt.s32.totalorder %s14, 1
        %s257 = scalar_select %p256, %s14, 1
        %s258 = smul.addr %s257, 72
        %s259 = smul.addr %s258, 4
        %s260 = scalar_lea.vmem %s0, %s259
      $region48: #{conv_seg_head.1} parent=43 // pred_fallthru
        _
    $region44: #{conv_seg_head.1} parent=5 // pred_fallthru
      _
    %p261 = scmp.le.s32.totalorder 1, %s14
    %p262 = scmp.lt.s32.totalorder %s14, 3
    %p263 = pnand %p261, %p262
    %p264 = pneg %p263
    // Predicated region
    $region49: #{conv_seg_head.1} parent=5 // pred_check
      _
    $region50: #{conv_seg_head.1} parent=5 // pred_check_branch
      %266 = sbr.rel (%p263) target = $region52
    $region51: #{conv_seg_head.1} parent=5 // pred_region
      %s267 = ssub.s32 %s14, 1
      %p268 = scmp.lt.s32.totalorder %s19, 1
      %s269 = scalar_select %p268, %s19, 1
      %s270 = smul.addr %s269, 72
      %s271 = smul.addr %s270, 4
      %s272 = scalar_lea.vmem %s0, %s271
      %p273 = pneg %p40
      %p274 = pneg %p37
      %p275 = pneg %p61
      %p276 = pneg %p58
      %p277 = pneg %p82
      %p278 = pneg %p79
      %p279 = pneg %p103
      %p280 = pneg %p100
      %p281 = pneg %p124
      %p282 = pneg %p121
      %p283 = pneg %p145
      %p284 = pneg %p142
      %p285 = pneg %p166
      %p286 = pneg %p163
      %p287 = pneg %p187
      %p288 = pneg %p184
      %p289 = pneg %p213
      %p290 = pneg %p210
      %p291 = scmp.lt.s32.totalorder %s19, 1
      %s292 = scalar_select %p291, %s19, 1
      %s293 = smul.addr %s292, 48
      %s294 = smul.addr %s293, 8
      %s295 = scalar_lea.vmem %s8, %s294
      %p296 = scmp.lt.s32.totalorder %s19, 1
      %s297 = scalar_select %p296, %s19, 1
      %s298 = smul.addr %s297, 72
      %s299 = smul.addr %s298, 4
      %s300 = scalar_lea.vmem %s0, %s299
      %p301 = scmp.lt.s32.totalorder %s19, 1
      %s302 = scalar_select %p301, %s19, 1
      %s303 = smul.addr %s302, 48
      %s304 = smul.addr %s303, 8
      %s305 = scalar_lea.vmem %s8, %s304
      %v307 = vld [vmem:[%s300] sm:$0xf]
      %v308 = vld [vmem:[%s300 + $0x4] sm:$0xf]
      %v309 = vld [vmem:[%s300 + $0x8] sm:$0xf]
      %v310 = vld [vmem:[%s300 + $0xc] sm:$0xf]
      %v311 = vld [vmem:[%s300 + $0x10] sm:$0xf]
      %v312 = vld [vmem:[%s300 + $0x14] sm:$0xf]
      %v313 = vld [vmem:[%s300 + $0x18] sm:$0xf]
      %v314 = vld [vmem:[%s300 + $0x1c] sm:$0xf]
      %v315 = vld [vmem:[%s300 + $0x20] sm:$0xf]
      %v316 = vld [vmem:[%s300 + $0x24] sm:$0xf]
      %v317 = vld [vmem:[%s300 + $0x28] sm:$0xf]
      %v318 = vld [vmem:[%s300 + $0x2c] sm:$0xf]
      %v319 = vld [vmem:[%s300 + $0x30] sm:$0xf]
      %v320 = vld [vmem:[%s300 + $0x34] sm:$0xf]
      %v321 = vld [vmem:[%s300 + $0x38] sm:$0xf]
      %v322 = vld [vmem:[%s300 + $0x3c] sm:$0xf]
      %v323 = vld [vmem:[%s300 + $0x40] sm:$0xf]
      %v324 = vld [vmem:[%s300 + $0x44] sm:$0xf]
      %v325 = vld [vmem:[%s300 + $0x48] sm:$0xf]
      %v326 = vld [vmem:[%s300 + $0x4c] sm:$0xf]
      %v327 = vld [vmem:[%s300 + $0x50] sm:$0xf]
      %v328 = vld [vmem:[%s300 + $0x54] sm:$0xf]
      %v329 = vld [vmem:[%s300 + $0x58] sm:$0xf]
      %v330 = vld [vmem:[%s300 + $0x5c] sm:$0xf]
      %v331 = vld [vmem:[%s300 + $0x60] sm:$0xf]
      %v332 = vld [vmem:[%s300 + $0x64] sm:$0xf]
      %v333 = vld [vmem:[%s300 + $0x68] sm:$0xf]
      %v334 = vld [vmem:[%s300 + $0x6c] sm:$0xf]
      %v335 = vld [vmem:[%s300 + $0x70] sm:$0xf]
      %v336 = vld [vmem:[%s300 + $0x74] sm:$0xf]
      %v337 = vld [vmem:[%s300 + $0x78] sm:$0xf]
      %v338 = vld [vmem:[%s300 + $0x7c] sm:$0xf]
      %v339 = vld [vmem:[%s300 + $0x80] sm:$0xf]
      %v340 = vld [vmem:[%s300 + $0x84] sm:$0xf]
      %v341 = vld [vmem:[%s300 + $0x88] sm:$0xf]
      %v342 = vld [vmem:[%s300 + $0x8c] sm:$0xf]
      %v343 = vld [vmem:[%s300 + $0x90] sm:$0xf]
      %v344 = vld [vmem:[%s300 + $0x94] sm:$0xf]
      %v345 = vld [vmem:[%s300 + $0x98] sm:$0xf]
      %v346 = vld [vmem:[%s300 + $0x9c] sm:$0xf]
      %v347 = vld [vmem:[%s300 + $0xa0] sm:$0xf]
      %v348 = vld [vmem:[%s300 + $0xa4] sm:$0xf]
      %v349 = vld [vmem:[%s300 + $0xa8] sm:$0xf]
      %v350 = vld [vmem:[%s300 + $0xac] sm:$0xf]
      %v351 = vld [vmem:[%s300 + $0xb0] sm:$0xf]
      %v352 = vld [vmem:[%s300 + $0xb4] sm:$0xf]
      %v353 = vld [vmem:[%s300 + $0xb8] sm:$0xf]
      %v354 = vld [vmem:[%s300 + $0xbc] sm:$0xf]
      %v355 = vld [vmem:[%s300 + $0xc0] sm:$0xf]
      %v356 = vld [vmem:[%s300 + $0xc4] sm:$0xf]
      %v357 = vld [vmem:[%s300 + $0xc8] sm:$0xf]
      %v358 = vld [vmem:[%s300 + $0xcc] sm:$0xf]
      %v359 = vld [vmem:[%s300 + $0xd0] sm:$0xf]
      %v360 = vld [vmem:[%s300 + $0xd4] sm:$0xf]
      %v361 = vld [vmem:[%s300 + $0xd8] sm:$0xf]
      %v362 = vld [vmem:[%s300 + $0xdc] sm:$0xf]
      %v363 = vld [vmem:[%s300 + $0xe0] sm:$0xf]
      %v364 = vld [vmem:[%s300 + $0xe4] sm:$0xf]
      %v365 = vld [vmem:[%s300 + $0xe8] sm:$0xf]
      %v366 = vld [vmem:[%s300 + $0xec] sm:$0xf]
      %v367 = vld [vmem:[%s300 + $0xf0] sm:$0xf]
      %v368 = vld [vmem:[%s300 + $0xf4] sm:$0xf]
      %v369 = vld [vmem:[%s300 + $0xf8] sm:$0xf]
      %v370 = vld [vmem:[%s300 + $0xfc] sm:$0xf]
      %v371 = vld [vmem:[%s300 + $0x100] sm:$0xf]
      %v372 = vld [vmem:[%s300 + $0x104] sm:$0xf]
      %v373 = vld [vmem:[%s300 + $0x108] sm:$0xf]
      %v374 = vld [vmem:[%s300 + $0x10c] sm:$0xf]
      %v375 = vld [vmem:[%s300 + $0x110] sm:$0xf]
      %v376 = vld [vmem:[%s300 + $0x114] sm:$0x1]
      %v377 = vld [vmem:[%s300] sm:$0xe]
      %v378 = vld [vmem:[%s300 + $0x114] sm:$0x3]
      %v379 = vld [vmem:[%s300] sm:$0xc]
      %v449 = vunpack.c.l.b16 %v307
      %v450 = vunpack.c.l.b16 %v308
      %v451 = vunpack.c.l.b16 %v309
      %v452 = vunpack.c.l.b16 %v310
      %v453 = vunpack.c.l.b16 %v311
      %v454 = vunpack.c.l.b16 %v312
      %v455 = vunpack.c.l.b16 %v313
      %v456 = vunpack.c.l.b16 %v314
      %v457 = vunpack.c.l.b16 %v315
      %v458 = vunpack.c.l.b16 %v316
      %v459 = vunpack.c.l.b16 %v317
      %v460 = vunpack.c.l.b16 %v318
      %v461 = vunpack.c.l.b16 %v319
      %v462 = vunpack.c.l.b16 %v320
      %v463 = vunpack.c.l.b16 %v321
      %v464 = vunpack.c.l.b16 %v322
      %v465 = vunpack.c.l.b16 %v323
      %v466 = vunpack.c.l.b16 %v324
      %v467 = vunpack.c.l.b16 %v325
      %v468 = vunpack.c.l.b16 %v326
      %v469 = vunpack.c.l.b16 %v327
      %v470 = vunpack.c.l.b16 %v328
      %v471 = vunpack.c.l.b16 %v329
      %v472 = vunpack.c.l.b16 %v330
      %v473 = vunpack.c.l.b16 %v331
      %v474 = vunpack.c.l.b16 %v332
      %v475 = vunpack.c.l.b16 %v333
      %v476 = vunpack.c.l.b16 %v334
      %v477 = vunpack.c.l.b16 %v335
      %v478 = vunpack.c.l.b16 %v336
      %v479 = vunpack.c.l.b16 %v337
      %v480 = vunpack.c.l.b16 %v338
      %v481 = vunpack.c.l.b16 %v339
      %v482 = vunpack.c.l.b16 %v340
      %v483 = vunpack.c.l.b16 %v341
      %v484 = vunpack.c.l.b16 %v342
      %v485 = vunpack.c.l.b16 %v343
      %v486 = vunpack.c.l.b16 %v344
      %v487 = vunpack.c.l.b16 %v345
      %v488 = vunpack.c.l.b16 %v346
      %v489 = vunpack.c.l.b16 %v347
      %v490 = vunpack.c.l.b16 %v348
      %v491 = vunpack.c.l.b16 %v349
      %v492 = vunpack.c.l.b16 %v350
      %v493 = vunpack.c.l.b16 %v351
      %v494 = vunpack.c.l.b16 %v352
      %v495 = vunpack.c.l.b16 %v353
      %v496 = vunpack.c.l.b16 %v354
      %v497 = vunpack.c.l.b16 %v355
      %v498 = vunpack.c.l.b16 %v356
      %v499 = vunpack.c.l.b16 %v357
      %v500 = vunpack.c.l.b16 %v358
      %v501 = vunpack.c.l.b16 %v359
      %v502 = vunpack.c.l.b16 %v360
      %v503 = vunpack.c.l.b16 %v361
      %v504 = vunpack.c.l.b16 %v362
      %v505 = vunpack.c.l.b16 %v363
      %v506 = vunpack.c.l.b16 %v364
      %v507 = vunpack.c.l.b16 %v365
      %v508 = vunpack.c.l.b16 %v366
      %v509 = vunpack.c.l.b16 %v367
      %v510 = vunpack.c.l.b16 %v368
      %v511 = vunpack.c.l.b16 %v369
      %v512 = vunpack.c.l.b16 %v370
      %v513 = vunpack.c.l.b16 %v371
      %v514 = vunpack.c.l.b16 %v372
      %v515 = vunpack.c.l.b16 %v373
      %v516 = vunpack.c.l.b16 %v374
      %v517 = vunpack.c.l.b16 %v375
      %v518 = vpack.c.b16 %v450, %v449
      %v519 = vpack.c.b16 %v452, %v451
      %v520 = vpack.c.b16 %v454, %v453
      %v521 = vpack.c.b16 %v456, %v455
      %v522 = vpack.c.b16 %v458, %v457
      %v523 = vpack.c.b16 %v460, %v459
      %v524 = vpack.c.b16 %v462, %v461
      %v525 = vpack.c.b16 %v464, %v463
      %v526 = vpack.c.b16 %v466, %v465
      %v527 = vpack.c.b16 %v468, %v467
      %v528 = vpack.c.b16 %v470, %v469
      %v529 = vpack.c.b16 %v472, %v471
      %v530 = vpack.c.b16 %v474, %v473
      %v531 = vpack.c.b16 %v476, %v475
      %v532 = vpack.c.b16 %v478, %v477
      %v533 = vpack.c.b16 %v480, %v479
      %v534 = vpack.c.b16 %v482, %v481
      %v535 = vpack.c.b16 %v484, %v483
      %v536 = vpack.c.b16 %v486, %v485
      %v537 = vpack.c.b16 %v488, %v487
      %v538 = vpack.c.b16 %v490, %v489
      %v539 = vpack.c.b16 %v492, %v491
      %v540 = vpack.c.b16 %v494, %v493
      %v541 = vpack.c.b16 %v496, %v495
      %v542 = vpack.c.b16 %v498, %v497
      %v543 = vpack.c.b16 %v500, %v499
      %v544 = vpack.c.b16 %v502, %v501
      %v545 = vpack.c.b16 %v504, %v503
      %v546 = vpack.c.b16 %v506, %v505
      %v547 = vpack.c.b16 %v508, %v507
      %v548 = vpack.c.b16 %v510, %v509
      %v549 = vpack.c.b16 %v512, %v511
      %v550 = vpack.c.b16 %v514, %v513
      %v551 = vpack.c.b16 %v516, %v515
      %v552 = vpack.c.b16 %v517, %v517
      %v554 = vunpack.c.l.b16 %v376
      %v555 = vpack.c.b16 %v554, %v517
      %vm556 = vsmask.f32 7424
      %v558 = vshrl.u32 %v518, 16
      %v560 = vshll.u32 %v518, 16
      %v562 = vrot.slane %v560, 1
      %v563 = vor.u32 %v558, %v562
      %v565 = vshll.u32 %v519, 16
      %v567 = vrot.slane %v565, 1
      %v568 = vsel %vm556, %v563, %v567
      %v569 = vshrl.u32 %v519, 16
      %v571 = vor.u32 %v569, %v567
      %v573 = vshll.u32 %v520, 16
      %v575 = vrot.slane %v573, 1
      %v576 = vsel %vm556, %v571, %v575
      %v577 = vshrl.u32 %v520, 16
      %v579 = vor.u32 %v577, %v575
      %v581 = vshll.u32 %v521, 16
      %v583 = vrot.slane %v581, 1
      %v584 = vsel %vm556, %v579, %v583
      %v585 = vshrl.u32 %v521, 16
      %v587 = vor.u32 %v585, %v583
      %v589 = vshll.u32 %v522, 16
      %v591 = vrot.slane %v589, 1
      %v592 = vsel %vm556, %v587, %v591
      %v593 = vshrl.u32 %v522, 16
      %v595 = vor.u32 %v593, %v591
      %v597 = vshll.u32 %v523, 16
      %v599 = vrot.slane %v597, 1
      %v600 = vsel %vm556, %v595, %v599
      %v601 = vshrl.u32 %v523, 16
      %v603 = vor.u32 %v601, %v599
      %v605 = vshll.u32 %v524, 16
      %v607 = vrot.slane %v605, 1
      %v608 = vsel %vm556, %v603, %v607
      %v609 = vshrl.u32 %v524, 16
      %v611 = vor.u32 %v609, %v607
      %v613 = vshll.u32 %v525, 16
      %v615 = vrot.slane %v613, 1
      %v616 = vsel %vm556, %v611, %v615
      %v617 = vshrl.u32 %v525, 16
      %v619 = vor.u32 %v617, %v615
      %v621 = vshll.u32 %v526, 16
      %v623 = vrot.slane %v621, 1
      %v624 = vsel %vm556, %v619, %v623
      %v625 = vshrl.u32 %v526, 16
      %v627 = vor.u32 %v625, %v623
      %v629 = vshll.u32 %v527, 16
      %v631 = vrot.slane %v629, 1
      %v632 = vsel %vm556, %v627, %v631
      %v633 = vshrl.u32 %v527, 16
      %v635 = vor.u32 %v633, %v631
      %v637 = vshll.u32 %v528, 16
      %v639 = vrot.slane %v637, 1
      %v640 = vsel %vm556, %v635, %v639
      %v641 = vshrl.u32 %v528, 16
      %v643 = vor.u32 %v641, %v639
      %v645 = vshll.u32 %v529, 16
      %v647 = vrot.slane %v645, 1
      %v648 = vsel %vm556, %v643, %v647
      %v649 = vshrl.u32 %v529, 16
      %v651 = vor.u32 %v649, %v647
      %v653 = vshll.u32 %v530, 16
      %v655 = vrot.slane %v653, 1
      %v656 = vsel %vm556, %v651, %v655
      %v657 = vshrl.u32 %v530, 16
      %v659 = vor.u32 %v657, %v655
      %v661 = vshll.u32 %v531, 16
      %v663 = vrot.slane %v661, 1
      %v664 = vsel %vm556, %v659, %v663
      %v665 = vshrl.u32 %v531, 16
      %v667 = vor.u32 %v665, %v663
      %v669 = vshll.u32 %v532, 16
      %v671 = vrot.slane %v669, 1
      %v672 = vsel %vm556, %v667, %v671
      %v673 = vshrl.u32 %v532, 16
      %v675 = vor.u32 %v673, %v671
      %v677 = vshll.u32 %v533, 16
      %v679 = vrot.slane %v677, 1
      %v680 = vsel %vm556, %v675, %v679
      %v681 = vshrl.u32 %v533, 16
      %v683 = vor.u32 %v681, %v679
      %v685 = vshll.u32 %v534, 16
      %v687 = vrot.slane %v685, 1
      %v688 = vsel %vm556, %v683, %v687
      %v689 = vshrl.u32 %v534, 16
      %v691 = vor.u32 %v689, %v687
      %v693 = vshll.u32 %v535, 16
      %v695 = vrot.slane %v693, 1
      %v696 = vsel %vm556, %v691, %v695
      %v697 = vshrl.u32 %v535, 16
      %v699 = vor.u32 %v697, %v695
      %v701 = vshll.u32 %v536, 16
      %v703 = vrot.slane %v701, 1
      %v704 = vsel %vm556, %v699, %v703
      %v705 = vshrl.u32 %v536, 16
      %v707 = vor.u32 %v705, %v703
      %v709 = vshll.u32 %v537, 16
      %v711 = vrot.slane %v709, 1
      %v712 = vsel %vm556, %v707, %v711
      %v713 = vshrl.u32 %v537, 16
      %v715 = vor.u32 %v713, %v711
      %v717 = vshll.u32 %v538, 16
      %v719 = vrot.slane %v717, 1
      %v720 = vsel %vm556, %v715, %v719
      %v721 = vshrl.u32 %v538, 16
      %v723 = vor.u32 %v721, %v719
      %v725 = vshll.u32 %v539, 16
      %v727 = vrot.slane %v725, 1
      %v728 = vsel %vm556, %v723, %v727
      %v729 = vshrl.u32 %v539, 16
      %v731 = vor.u32 %v729, %v727
      %v733 = vshll.u32 %v540, 16
      %v735 = vrot.slane %v733, 1
      %v736 = vsel %vm556, %v731, %v735
      %v737 = vshrl.u32 %v540, 16
      %v739 = vor.u32 %v737, %v735
      %v741 = vshll.u32 %v541, 16
      %v743 = vrot.slane %v741, 1
      %v744 = vsel %vm556, %v739, %v743
      %v745 = vshrl.u32 %v541, 16
      %v747 = vor.u32 %v745, %v743
      %v749 = vshll.u32 %v542, 16
      %v751 = vrot.slane %v749, 1
      %v752 = vsel %vm556, %v747, %v751
      %v753 = vshrl.u32 %v542, 16
      %v755 = vor.u32 %v753, %v751
      %v757 = vshll.u32 %v543, 16
      %v759 = vrot.slane %v757, 1
      %v760 = vsel %vm556, %v755, %v759
      %v761 = vshrl.u32 %v543, 16
      %v763 = vor.u32 %v761, %v759
      %v765 = vshll.u32 %v544, 16
      %v767 = vrot.slane %v765, 1
      %v768 = vsel %vm556, %v763, %v767
      %v769 = vshrl.u32 %v544, 16
      %v771 = vor.u32 %v769, %v767
      %v773 = vshll.u32 %v545, 16
      %v775 = vrot.slane %v773, 1
      %v776 = vsel %vm556, %v771, %v775
      %v777 = vshrl.u32 %v545, 16
      %v779 = vor.u32 %v777, %v775
      %v781 = vshll.u32 %v546, 16
      %v783 = vrot.slane %v781, 1
      %v784 = vsel %vm556, %v779, %v783
      %v785 = vshrl.u32 %v546, 16
      %v787 = vor.u32 %v785, %v783
      %v789 = vshll.u32 %v547, 16
      %v791 = vrot.slane %v789, 1
      %v792 = vsel %vm556, %v787, %v791
      %v793 = vshrl.u32 %v547, 16
      %v795 = vor.u32 %v793, %v791
      %v797 = vshll.u32 %v548, 16
      %v799 = vrot.slane %v797, 1
      %v800 = vsel %vm556, %v795, %v799
      %v801 = vshrl.u32 %v548, 16
      %v803 = vor.u32 %v801, %v799
      %v805 = vshll.u32 %v549, 16
      %v807 = vrot.slane %v805, 1
      %v808 = vsel %vm556, %v803, %v807
      %v809 = vshrl.u32 %v549, 16
      %v811 = vor.u32 %v809, %v807
      %v813 = vshll.u32 %v550, 16
      %v815 = vrot.slane %v813, 1
      %v816 = vsel %vm556, %v811, %v815
      %v817 = vshrl.u32 %v550, 16
      %v819 = vor.u32 %v817, %v815
      %v821 = vshll.u32 %v551, 16
      %v823 = vrot.slane %v821, 1
      %v824 = vsel %vm556, %v819, %v823
      %v825 = vshrl.u32 %v551, 16
      %v827 = vor.u32 %v825, %v823
      %v829 = vshll.u32 %v555, 16
      %v831 = vrot.slane %v829, 1
      %v832 = vsel %vm556, %v827, %v831
      %v833 = vshrl.u32 %v555, 16
      %v835 = vor.u32 %v833, %v831
      %836 = vrot.lane.b32.xlu0 %v568, 64
      %v837 = vpop.permute.xlu0 %836
      %838 = vrot.lane.b32.xlu0 %v576, 64
      %v839 = vpop.permute.xlu0 %838
      %840 = vrot.lane.b32.xlu0 %v584, 64
      %v841 = vpop.permute.xlu0 %840
      %842 = vrot.lane.b32.xlu0 %v592, 64
      %v843 = vpop.permute.xlu0 %842
      %844 = vrot.lane.b32.xlu0 %v600, 64
      %v845 = vpop.permute.xlu0 %844
      %846 = vrot.lane.b32.xlu0 %v608, 64
      %v847 = vpop.permute.xlu0 %846
      %848 = vrot.lane.b32.xlu0 %v616, 64
      %v849 = vpop.permute.xlu0 %848
      %850 = vrot.lane.b32.xlu0 %v624, 64
      %v851 = vpop.permute.xlu0 %850
      %852 = vrot.lane.b32.xlu0 %v632, 64
      %v853 = vpop.permute.xlu0 %852
      %854 = vrot.lane.b32.xlu0 %v640, 64
      %v855 = vpop.permute.xlu0 %854
      %856 = vrot.lane.b32.xlu0 %v648, 64
      %v857 = vpop.permute.xlu0 %856
      %858 = vrot.lane.b32.xlu0 %v656, 64
      %v859 = vpop.permute.xlu0 %858
      %860 = vrot.lane.b32.xlu0 %v664, 64
      %v861 = vpop.permute.xlu0 %860
      %862 = vrot.lane.b32.xlu0 %v672, 64
      %v863 = vpop.permute.xlu0 %862
      %864 = vrot.lane.b32.xlu0 %v680, 64
      %v865 = vpop.permute.xlu0 %864
      %866 = vrot.lane.b32.xlu0 %v688, 64
      %v867 = vpop.permute.xlu0 %866
      %868 = vrot.lane.b32.xlu0 %v696, 64
      %v869 = vpop.permute.xlu0 %868
      %870 = vrot.lane.b32.xlu0 %v704, 64
      %v871 = vpop.permute.xlu0 %870
      %872 = vrot.lane.b32.xlu0 %v712, 64
      %v873 = vpop.permute.xlu0 %872
      %874 = vrot.lane.b32.xlu0 %v720, 64
      %v875 = vpop.permute.xlu0 %874
      %876 = vrot.lane.b32.xlu0 %v728, 64
      %v877 = vpop.permute.xlu0 %876
      %878 = vrot.lane.b32.xlu0 %v736, 64
      %v879 = vpop.permute.xlu0 %878
      %880 = vrot.lane.b32.xlu0 %v744, 64
      %v881 = vpop.permute.xlu0 %880
      %882 = vrot.lane.b32.xlu0 %v752, 64
      %v883 = vpop.permute.xlu0 %882
      %884 = vrot.lane.b32.xlu0 %v760, 64
      %v885 = vpop.permute.xlu0 %884
      %886 = vrot.lane.b32.xlu0 %v768, 64
      %v887 = vpop.permute.xlu0 %886
      %888 = vrot.lane.b32.xlu0 %v776, 64
      %v889 = vpop.permute.xlu0 %888
      %890 = vrot.lane.b32.xlu0 %v784, 64
      %v891 = vpop.permute.xlu0 %890
      %892 = vrot.lane.b32.xlu0 %v792, 64
      %v893 = vpop.permute.xlu0 %892
      %894 = vrot.lane.b32.xlu0 %v800, 64
      %v895 = vpop.permute.xlu0 %894
      %896 = vrot.lane.b32.xlu0 %v808, 64
      %v897 = vpop.permute.xlu0 %896
      %898 = vrot.lane.b32.xlu0 %v816, 64
      %v899 = vpop.permute.xlu0 %898
      %900 = vrot.lane.b32.xlu0 %v824, 64
      %v901 = vpop.permute.xlu0 %900
      %902 = vrot.lane.b32.xlu0 %v832, 64
      %v903 = vpop.permute.xlu0 %902
      %904 = vrot.lane.b32.xlu0 %v835, 64
      %v905 = vpop.permute.xlu0 %904
      %v907 = vunpack.c.l.b16 %v377
      %v908 = vpack.c.b16 %v450, %v907
      %vm909 = vcmask 1046528
      %v910 = vrot.slane %v908, 1
      %v911 = vrot.slane %v519, 1
      %v912 = vsel %vm909, %v910, %v911
      %v913 = vrot.slane %v520, 1
      %v914 = vsel %vm909, %v911, %v913
      %v915 = vrot.slane %v521, 1
      %v916 = vsel %vm909, %v913, %v915
      %v917 = vrot.slane %v522, 1
      %v918 = vsel %vm909, %v915, %v917
      %v919 = vrot.slane %v523, 1
      %v920 = vsel %vm909, %v917, %v919
      %v921 = vrot.slane %v524, 1
      %v922 = vsel %vm909, %v919, %v921
      %v923 = vrot.slane %v525, 1
      %v924 = vsel %vm909, %v921, %v923
      %v925 = vrot.slane %v526, 1
      %v926 = vsel %vm909, %v923, %v925
      %v927 = vrot.slane %v527, 1
      %v928 = vsel %vm909, %v925, %v927
      %v929 = vrot.slane %v528, 1
      %v930 = vsel %vm909, %v927, %v929
      %v931 = vrot.slane %v529, 1
      %v932 = vsel %vm909, %v929, %v931
      %v933 = vrot.slane %v530, 1
      %v934 = vsel %vm909, %v931, %v933
      %v935 = vrot.slane %v531, 1
      %v936 = vsel %vm909, %v933, %v935
      %v937 = vrot.slane %v532, 1
      %v938 = vsel %vm909, %v935, %v937
      %v939 = vrot.slane %v533, 1
      %v940 = vsel %vm909, %v937, %v939
      %v941 = vrot.slane %v534, 1
      %v942 = vsel %vm909, %v939, %v941
      %v943 = vrot.slane %v535, 1
      %v944 = vsel %vm909, %v941, %v943
      %v945 = vrot.slane %v536, 1
      %v946 = vsel %vm909, %v943, %v945
      %v947 = vrot.slane %v537, 1
      %v948 = vsel %vm909, %v945, %v947
      %v949 = vrot.slane %v538, 1
      %v950 = vsel %vm909, %v947, %v949
      %v951 = vrot.slane %v539, 1
      %v952 = vsel %vm909, %v949, %v951
      %v953 = vrot.slane %v540, 1
      %v954 = vsel %vm909, %v951, %v953
      %v955 = vrot.slane %v541, 1
      %v956 = vsel %vm909, %v953, %v955
      %v957 = vrot.slane %v542, 1
      %v958 = vsel %vm909, %v955, %v957
      %v959 = vrot.slane %v543, 1
      %v960 = vsel %vm909, %v957, %v959
      %v961 = vrot.slane %v544, 1
      %v962 = vsel %vm909, %v959, %v961
      %v963 = vrot.slane %v545, 1
      %v964 = vsel %vm909, %v961, %v963
      %v965 = vrot.slane %v546, 1
      %v966 = vsel %vm909, %v963, %v965
      %v967 = vrot.slane %v547, 1
      %v968 = vsel %vm909, %v965, %v967
      %v969 = vrot.slane %v548, 1
      %v970 = vsel %vm909, %v967, %v969
      %v971 = vrot.slane %v549, 1
      %v972 = vsel %vm909, %v969, %v971
      %v973 = vrot.slane %v550, 1
      %v974 = vsel %vm909, %v971, %v973
      %v975 = vrot.slane %v551, 1
      %v976 = vsel %vm909, %v973, %v975
      %v977 = vrot.slane %v555, 1
      %v978 = vsel %vm909, %v975, %v977
      %v980 = vunpack.c.l.b16 %v378
      %v981 = vpack.c.b16 %v980, %v517
      %vm982 = vsmask.f32 6400
      %v984 = vshrl.u32 %v908, 16
      %v986 = vrot.slane %v984, 1
      %v987 = vshll.u32 %v908, 16
      %v989 = vrot.slane %v987, 2
      %v990 = vor.u32 %v986, %v989
      %v991 = vrot.slane %v569, 1
      %v992 = vrot.slane %v565, 2
      %v993 = vor.u32 %v991, %v992
      %v994 = vsel %vm982, %v990, %v993
      %v995 = vrot.slane %v577, 1
      %v996 = vrot.slane %v573, 2
      %v997 = vor.u32 %v995, %v996
      %v998 = vsel %vm982, %v993, %v997
      %v999 = vrot.slane %v585, 1
      %v1000 = vrot.slane %v581, 2
      %v1001 = vor.u32 %v999, %v1000
      %v1002 = vsel %vm982, %v997, %v1001
      %v1003 = vrot.slane %v593, 1
      %v1004 = vrot.slane %v589, 2
      %v1005 = vor.u32 %v1003, %v1004
      %v1006 = vsel %vm982, %v1001, %v1005
      %v1007 = vrot.slane %v601, 1
      %v1008 = vrot.slane %v597, 2
      %v1009 = vor.u32 %v1007, %v1008
      %v1010 = vsel %vm982, %v1005, %v1009
      %v1011 = vrot.slane %v609, 1
      %v1012 = vrot.slane %v605, 2
      %v1013 = vor.u32 %v1011, %v1012
      %v1014 = vsel %vm982, %v1009, %v1013
      %v1015 = vrot.slane %v617, 1
      %v1016 = vrot.slane %v613, 2
      %v1017 = vor.u32 %v1015, %v1016
      %v1018 = vsel %vm982, %v1013, %v1017
      %v1019 = vrot.slane %v625, 1
      %v1020 = vrot.slane %v621, 2
      %v1021 = vor.u32 %v1019, %v1020
      %v1022 = vsel %vm982, %v1017, %v1021
      %v1023 = vrot.slane %v633, 1
      %v1024 = vrot.slane %v629, 2
      %v1025 = vor.u32 %v1023, %v1024
      %v1026 = vsel %vm982, %v1021, %v1025
      %v1027 = vrot.slane %v641, 1
      %v1028 = vrot.slane %v637, 2
      %v1029 = vor.u32 %v1027, %v1028
      %v1030 = vsel %vm982, %v1025, %v1029
      %v1031 = vrot.slane %v649, 1
      %v1032 = vrot.slane %v645, 2
      %v1033 = vor.u32 %v1031, %v1032
      %v1034 = vsel %vm982, %v1029, %v1033
      %v1035 = vrot.slane %v657, 1
      %v1036 = vrot.slane %v653, 2
      %v1037 = vor.u32 %v1035, %v1036
      %v1038 = vsel %vm982, %v1033, %v1037
      %v1039 = vrot.slane %v665, 1
      %v1040 = vrot.slane %v661, 2
      %v1041 = vor.u32 %v1039, %v1040
      %v1042 = vsel %vm982, %v1037, %v1041
      %v1043 = vrot.slane %v673, 1
      %v1044 = vrot.slane %v669, 2
      %v1045 = vor.u32 %v1043, %v1044
      %v1046 = vsel %vm982, %v1041, %v1045
      %v1047 = vrot.slane %v681, 1
      %v1048 = vrot.slane %v677, 2
      %v1049 = vor.u32 %v1047, %v1048
      %v1050 = vsel %vm982, %v1045, %v1049
      %v1051 = vrot.slane %v689, 1
      %v1052 = vrot.slane %v685, 2
      %v1053 = vor.u32 %v1051, %v1052
      %v1054 = vsel %vm982, %v1049, %v1053
      %v1055 = vrot.slane %v697, 1
      %v1056 = vrot.slane %v693, 2
      %v1057 = vor.u32 %v1055, %v1056
      %v1058 = vsel %vm982, %v1053, %v1057
      %v1059 = vrot.slane %v705, 1
      %v1060 = vrot.slane %v701, 2
      %v1061 = vor.u32 %v1059, %v1060
      %v1062 = vsel %vm982, %v1057, %v1061
      %v1063 = vrot.slane %v713, 1
      %v1064 = vrot.slane %v709, 2
      %v1065 = vor.u32 %v1063, %v1064
      %v1066 = vsel %vm982, %v1061, %v1065
      %v1067 = vrot.slane %v721, 1
      %v1068 = vrot.slane %v717, 2
      %v1069 = vor.u32 %v1067, %v1068
      %v1070 = vsel %vm982, %v1065, %v1069
      %v1071 = vrot.slane %v729, 1
      %v1072 = vrot.slane %v725, 2
      %v1073 = vor.u32 %v1071, %v1072
      %v1074 = vsel %vm982, %v1069, %v1073
      %v1075 = vrot.slane %v737, 1
      %v1076 = vrot.slane %v733, 2
      %v1077 = vor.u32 %v1075, %v1076
      %v1078 = vsel %vm982, %v1073, %v1077
      %v1079 = vrot.slane %v745, 1
      %v1080 = vrot.slane %v741, 2
      %v1081 = vor.u32 %v1079, %v1080
      %v1082 = vsel %vm982, %v1077, %v1081
      %v1083 = vrot.slane %v753, 1
      %v1084 = vrot.slane %v749, 2
      %v1085 = vor.u32 %v1083, %v1084
      %v1086 = vsel %vm982, %v1081, %v1085
      %v1087 = vrot.slane %v761, 1
      %v1088 = vrot.slane %v757, 2
      %v1089 = vor.u32 %v1087, %v1088
      %v1090 = vsel %vm982, %v1085, %v1089
      %v1091 = vrot.slane %v769, 1
      %v1092 = vrot.slane %v765, 2
      %v1093 = vor.u32 %v1091, %v1092
      %v1094 = vsel %vm982, %v1089, %v1093
      %v1095 = vrot.slane %v777, 1
      %v1096 = vrot.slane %v773, 2
      %v1097 = vor.u32 %v1095, %v1096
      %v1098 = vsel %vm982, %v1093, %v1097
      %v1099 = vrot.slane %v785, 1
      %v1100 = vrot.slane %v781, 2
      %v1101 = vor.u32 %v1099, %v1100
      %v1102 = vsel %vm982, %v1097, %v1101
      %v1103 = vrot.slane %v793, 1
      %v1104 = vrot.slane %v789, 2
      %v1105 = vor.u32 %v1103, %v1104
      %v1106 = vsel %vm982, %v1101, %v1105
      %v1107 = vrot.slane %v801, 1
      %v1108 = vrot.slane %v797, 2
      %v1109 = vor.u32 %v1107, %v1108
      %v1110 = vsel %vm982, %v1105, %v1109
      %v1111 = vrot.slane %v809, 1
      %v1112 = vrot.slane %v805, 2
      %v1113 = vor.u32 %v1111, %v1112
      %v1114 = vsel %vm982, %v1109, %v1113
      %v1115 = vrot.slane %v817, 1
      %v1116 = vrot.slane %v813, 2
      %v1117 = vor.u32 %v1115, %v1116
      %v1118 = vsel %vm982, %v1113, %v1117
      %v1119 = vrot.slane %v825, 1
      %v1120 = vrot.slane %v821, 2
      %v1121 = vor.u32 %v1119, %v1120
      %v1122 = vsel %vm982, %v1117, %v1121
      %v1124 = vshrl.u32 %v981, 16
      %v1126 = vrot.slane %v1124, 1
      %v1127 = vshll.u32 %v981, 16
      %v1129 = vrot.slane %v1127, 2
      %v1130 = vor.u32 %v1126, %v1129
      %v1131 = vsel %vm982, %v1121, %v1130
      %1132 = vrot.lane.b32.xlu0 %v994, 64
      %v1133 = vpop.permute.xlu0 %1132
      %1134 = vrot.lane.b32.xlu0 %v998, 64
      %v1135 = vpop.permute.xlu0 %1134
      %1136 = vrot.lane.b32.xlu0 %v1002, 64
      %v1137 = vpop.permute.xlu0 %1136
      %1138 = vrot.lane.b32.xlu0 %v1006, 64
      %v1139 = vpop.permute.xlu0 %1138
      %1140 = vrot.lane.b32.xlu0 %v1010, 64
      %v1141 = vpop.permute.xlu0 %1140
      %1142 = vrot.lane.b32.xlu0 %v1014, 64
      %v1143 = vpop.permute.xlu0 %1142
      %1144 = vrot.lane.b32.xlu0 %v1018, 64
      %v1145 = vpop.permute.xlu0 %1144
      %1146 = vrot.lane.b32.xlu0 %v1022, 64
      %v1147 = vpop.permute.xlu0 %1146
      %1148 = vrot.lane.b32.xlu0 %v1026, 64
      %v1149 = vpop.permute.xlu0 %1148
      %1150 = vrot.lane.b32.xlu0 %v1030, 64
      %v1151 = vpop.permute.xlu0 %1150
      %1152 = vrot.lane.b32.xlu0 %v1034, 64
      %v1153 = vpop.permute.xlu0 %1152
      %1154 = vrot.lane.b32.xlu0 %v1038, 64
      %v1155 = vpop.permute.xlu0 %1154
      %1156 = vrot.lane.b32.xlu0 %v1042, 64
      %v1157 = vpop.permute.xlu0 %1156
      %1158 = vrot.lane.b32.xlu0 %v1046, 64
      %v1159 = vpop.permute.xlu0 %1158
      %1160 = vrot.lane.b32.xlu0 %v1050, 64
      %v1161 = vpop.permute.xlu0 %1160
      %1162 = vrot.lane.b32.xlu0 %v1054, 64
      %v1163 = vpop.permute.xlu0 %1162
      %1164 = vrot.lane.b32.xlu0 %v1058, 64
      %v1165 = vpop.permute.xlu0 %1164
      %1166 = vrot.lane.b32.xlu0 %v1062, 64
      %v1167 = vpop.permute.xlu0 %1166
      %1168 = vrot.lane.b32.xlu0 %v1066, 64
      %v1169 = vpop.permute.xlu0 %1168
      %1170 = vrot.lane.b32.xlu0 %v1070, 64
      %v1171 = vpop.permute.xlu0 %1170
      %1172 = vrot.lane.b32.xlu0 %v1074, 64
      %v1173 = vpop.permute.xlu0 %1172
      %1174 = vrot.lane.b32.xlu0 %v1078, 64
      %v1175 = vpop.permute.xlu0 %1174
      %1176 = vrot.lane.b32.xlu0 %v1082, 64
      %v1177 = vpop.permute.xlu0 %1176
      %1178 = vrot.lane.b32.xlu0 %v1086, 64
      %v1179 = vpop.permute.xlu0 %1178
      %1180 = vrot.lane.b32.xlu0 %v1090, 64
      %v1181 = vpop.permute.xlu0 %1180
      %1182 = vrot.lane.b32.xlu0 %v1094, 64
      %v1183 = vpop.permute.xlu0 %1182
      %1184 = vrot.lane.b32.xlu0 %v1098, 64
      %v1185 = vpop.permute.xlu0 %1184
      %1186 = vrot.lane.b32.xlu0 %v1102, 64
      %v1187 = vpop.permute.xlu0 %1186
      %1188 = vrot.lane.b32.xlu0 %v1106, 64
      %v1189 = vpop.permute.xlu0 %1188
      %1190 = vrot.lane.b32.xlu0 %v1110, 64
      %v1191 = vpop.permute.xlu0 %1190
      %1192 = vrot.lane.b32.xlu0 %v1114, 64
      %v1193 = vpop.permute.xlu0 %1192
      %1194 = vrot.lane.b32.xlu0 %v1118, 64
      %v1195 = vpop.permute.xlu0 %1194
      %1196 = vrot.lane.b32.xlu0 %v1122, 64
      %v1197 = vpop.permute.xlu0 %1196
      %1198 = vrot.lane.b32.xlu0 %v1131, 64
      %v1199 = vpop.permute.xlu0 %1198
      %1200 = vrot.lane.b32.xlu0 %v1130, 64
      %v1201 = vpop.permute.xlu0 %1200
      %v1203 = vunpack.c.l.b16 %v379
      %v1204 = vpack.c.b16 %v450, %v1203
      %vm1205 = vcmask 1045504
      %v1206 = vrot.slane %v1204, 2
      %v1207 = vrot.slane %v519, 2
      %v1208 = vsel %vm1205, %v1206, %v1207
      %v1209 = vrot.slane %v520, 2
      %v1210 = vsel %vm1205, %v1207, %v1209
      %v1211 = vrot.slane %v521, 2
      %v1212 = vsel %vm1205, %v1209, %v1211
      %v1213 = vrot.slane %v522, 2
      %v1214 = vsel %vm1205, %v1211, %v1213
      %v1215 = vrot.slane %v523, 2
      %v1216 = vsel %vm1205, %v1213, %v1215
      %v1217 = vrot.slane %v524, 2
      %v1218 = vsel %vm1205, %v1215, %v1217
      %v1219 = vrot.slane %v525, 2
      %v1220 = vsel %vm1205, %v1217, %v1219
      %v1221 = vrot.slane %v526, 2
      %v1222 = vsel %vm1205, %v1219, %v1221
      %v1223 = vrot.slane %v527, 2
      %v1224 = vsel %vm1205, %v1221, %v1223
      %v1225 = vrot.slane %v528, 2
      %v1226 = vsel %vm1205, %v1223, %v1225
      %v1227 = vrot.slane %v529, 2
      %v1228 = vsel %vm1205, %v1225, %v1227
      %v1229 = vrot.slane %v530, 2
      %v1230 = vsel %vm1205, %v1227, %v1229
      %v1231 = vrot.slane %v531, 2
      %v1232 = vsel %vm1205, %v1229, %v1231
      %v1233 = vrot.slane %v532, 2
      %v1234 = vsel %vm1205, %v1231, %v1233
      %v1235 = vrot.slane %v533, 2
      %v1236 = vsel %vm1205, %v1233, %v1235
      %v1237 = vrot.slane %v534, 2
      %v1238 = vsel %vm1205, %v1235, %v1237
      %v1239 = vrot.slane %v535, 2
      %v1240 = vsel %vm1205, %v1237, %v1239
      %v1241 = vrot.slane %v536, 2
      %v1242 = vsel %vm1205, %v1239, %v1241
      %v1243 = vrot.slane %v537, 2
      %v1244 = vsel %vm1205, %v1241, %v1243
      %v1245 = vrot.slane %v538, 2
      %v1246 = vsel %vm1205, %v1243, %v1245
      %v1247 = vrot.slane %v539, 2
      %v1248 = vsel %vm1205, %v1245, %v1247
      %v1249 = vrot.slane %v540, 2
      %v1250 = vsel %vm1205, %v1247, %v1249
      %v1251 = vrot.slane %v541, 2
      %v1252 = vsel %vm1205, %v1249, %v1251
      %v1253 = vrot.slane %v542, 2
      %v1254 = vsel %vm1205, %v1251, %v1253
      %v1255 = vrot.slane %v543, 2
      %v1256 = vsel %vm1205, %v1253, %v1255
      %v1257 = vrot.slane %v544, 2
      %v1258 = vsel %vm1205, %v1255, %v1257
      %v1259 = vrot.slane %v545, 2
      %v1260 = vsel %vm1205, %v1257, %v1259
      %v1261 = vrot.slane %v546, 2
      %v1262 = vsel %vm1205, %v1259, %v1261
      %v1263 = vrot.slane %v547, 2
      %v1264 = vsel %vm1205, %v1261, %v1263
      %v1265 = vrot.slane %v548, 2
      %v1266 = vsel %vm1205, %v1263, %v1265
      %v1267 = vrot.slane %v549, 2
      %v1268 = vsel %vm1205, %v1265, %v1267
      %v1269 = vrot.slane %v550, 2
      %v1270 = vsel %vm1205, %v1267, %v1269
      %v1271 = vrot.slane %v551, 2
      %v1272 = vsel %vm1205, %v1269, %v1271
      %v1273 = vrot.slane %v981, 2
      %v1274 = vsel %vm1205, %v1271, %v1273
      %vm1275 = vcmask 523264
      %v1277 = vsel %vm1275, %v518, %v837
      %v1280 = vsel %vm1275, %v519, %v839
      %v1283 = vsel %vm1275, %v520, %v841
      %v1286 = vsel %vm1275, %v521, %v843
      %v1289 = vsel %vm1275, %v522, %v845
      %v1292 = vsel %vm1275, %v523, %v847
      %v1295 = vsel %vm1275, %v524, %v849
      %v1298 = vsel %vm1275, %v525, %v851
      %v1301 = vsel %vm1275, %v526, %v853
      %v1304 = vsel %vm1275, %v527, %v855
      %v1307 = vsel %vm1275, %v528, %v857
      %v1310 = vsel %vm1275, %v529, %v859
      %v1313 = vsel %vm1275, %v530, %v861
      %v1316 = vsel %vm1275, %v531, %v863
      %v1319 = vsel %vm1275, %v532, %v865
      %v1322 = vsel %vm1275, %v533, %v867
      %v1325 = vsel %vm1275, %v534, %v869
      %v1328 = vsel %vm1275, %v535, %v871
      %v1331 = vsel %vm1275, %v536, %v873
      %v1334 = vsel %vm1275, %v537, %v875
      %v1337 = vsel %vm1275, %v538, %v877
      %v1340 = vsel %vm1275, %v539, %v879
      %v1343 = vsel %vm1275, %v540, %v881
      %v1346 = vsel %vm1275, %v541, %v883
      %v1349 = vsel %vm1275, %v542, %v885
      %v1352 = vsel %vm1275, %v543, %v887
      %v1355 = vsel %vm1275, %v544, %v889
      %v1358 = vsel %vm1275, %v545, %v891
      %v1361 = vsel %vm1275, %v546, %v893
      %v1364 = vsel %vm1275, %v547, %v895
      %v1367 = vsel %vm1275, %v548, %v897
      %v1370 = vsel %vm1275, %v549, %v899
      %v1373 = vsel %vm1275, %v550, %v901
      %v1376 = vsel %vm1275, %v551, %v903
      %v1380 = vsel %vm1275, %v552, %v905
      %v1384 = vsel %vm1275, %v912, %v1133
      %v1388 = vsel %vm1275, %v914, %v1135
      %v1392 = vsel %vm1275, %v916, %v1137
      %v1396 = vsel %vm1275, %v918, %v1139
      %v1400 = vsel %vm1275, %v920, %v1141
      %v1404 = vsel %vm1275, %v922, %v1143
      %v1408 = vsel %vm1275, %v924, %v1145
      %v1412 = vsel %vm1275, %v926, %v1147
      %v1416 = vsel %vm1275, %v928, %v1149
      %v1420 = vsel %vm1275, %v930, %v1151
      %v1424 = vsel %vm1275, %v932, %v1153
      %v1428 = vsel %vm1275, %v934, %v1155
      %v1432 = vsel %vm1275, %v936, %v1157
      %v1436 = vsel %vm1275, %v938, %v1159
      %v1440 = vsel %vm1275, %v940, %v1161
      %v1444 = vsel %vm1275, %v942, %v1163
      %v1448 = vsel %vm1275, %v944, %v1165
      %v1452 = vsel %vm1275, %v946, %v1167
      %v1456 = vsel %vm1275, %v948, %v1169
      %v1460 = vsel %vm1275, %v950, %v1171
      %v1464 = vsel %vm1275, %v952, %v1173
      %v1468 = vsel %vm1275, %v954, %v1175
      %v1472 = vsel %vm1275, %v956, %v1177
      %v1476 = vsel %vm1275, %v958, %v1179
      %v1480 = vsel %vm1275, %v960, %v1181
      %v1484 = vsel %vm1275, %v962, %v1183
      %v1488 = vsel %vm1275, %v964, %v1185
      %v1492 = vsel %vm1275, %v966, %v1187
      %v1496 = vsel %vm1275, %v968, %v1189
      %v1500 = vsel %vm1275, %v970, %v1191
      %v1504 = vsel %vm1275, %v972, %v1193
      %v1508 = vsel %vm1275, %v974, %v1195
      %v1512 = vsel %vm1275, %v976, %v1197
      %v1516 = vsel %vm1275, %v978, %v1199
      %v1520 = vsel %vm1275, %v977, %v1201
      %v1522 = vld [vmem:[%s1] sm:$0xf]
      %v1523 = vld [vmem:[%s1 + $0x4] sm:$0xf]
      %v1524 = vld [vmem:[%s1 + $0x8] sm:$0xf]
      %v1525 = vld [vmem:[%s1 + $0xc] sm:$0xf]
      %v1526 = vld [vmem:[%s1 + $0x10] sm:$0xf]
      %v1527 = vld [vmem:[%s1 + $0x14] sm:$0xf]
      %v1528 = vld [vmem:[%s1 + $0x18] sm:$0xf]
      %v1529 = vld [vmem:[%s1 + $0x1c] sm:$0xf]
      %v1530 = vld [vmem:[%s1 + $0x20] sm:$0xf]
      %v1531 = vld [vmem:[%s1 + $0x24] sm:$0xf]
      %v1532 = vld [vmem:[%s1 + $0x28] sm:$0xf]
      %v1533 = vld [vmem:[%s1 + $0x2c] sm:$0xf]
      %v1534 = vld [vmem:[%s1 + $0x30] sm:$0xf]
      %v1535 = vld [vmem:[%s1 + $0x34] sm:$0xf]
      %v1536 = vld [vmem:[%s1 + $0x38] sm:$0xf]
      %v1537 = vld [vmem:[%s1 + $0x3c] sm:$0xf]
      %v1538 = vld [vmem:[%s1 + $0x40] sm:$0xf]
      %v1539 = vld [vmem:[%s1 + $0x44] sm:$0xf]
      %v1540 = vld [vmem:[%s1 + $0x48] sm:$0xf]
      %v1541 = vld [vmem:[%s1 + $0x4c] sm:$0xf]
      %v1542 = vld [vmem:[%s1 + $0x50] sm:$0xf]
      %v1543 = vld [vmem:[%s1 + $0x54] sm:$0xf]
      %v1544 = vld [vmem:[%s1 + $0x58] sm:$0xf]
      %v1545 = vld [vmem:[%s1 + $0x5c] sm:$0xf]
      %v1546 = vld [vmem:[%s1 + $0x60] sm:$0xf]
      %v1547 = vld [vmem:[%s1 + $0x64] sm:$0xf]
      %v1548 = vld [vmem:[%s1 + $0x68] sm:$0xf]
      %v1549 = vld [vmem:[%s1 + $0x6c] sm:$0xf]
      %v1550 = vld [vmem:[%s1 + $0x70] sm:$0xf]
      %v1551 = vld [vmem:[%s1 + $0x74] sm:$0xf]
      %v1552 = vld [vmem:[%s1 + $0x78] sm:$0xf]
      %v1553 = vld [vmem:[%s1 + $0x7c] sm:$0xf]
      %v1554 = vld [vmem:[%s1 + $0x80] sm:$0xf]
      %v1555 = vld [vmem:[%s1 + $0x84] sm:$0xf]
      %v1556 = vld [vmem:[%s1 + $0x88] sm:$0xf]
      %v1557 = vld [vmem:[%s1 + $0x8c] sm:$0xf]
      %v1558 = vld [vmem:[%s1 + $0x90] sm:$0xf]
      %v1559 = vld [vmem:[%s1 + $0x94] sm:$0xf]
      %v1560 = vld [vmem:[%s1 + $0x98] sm:$0xf]
      %v1561 = vld [vmem:[%s1 + $0x9c] sm:$0xf]
      %s1562 = scalar_lea.vmem %s1, 160
      %v1563 = vld [vmem:[%s1562] sm:$0xf]
      %v1564 = vld [vmem:[%s1562 + $0x4] sm:$0xf]
      %v1565 = vld [vmem:[%s1562 + $0x8] sm:$0xf]
      %v1566 = vld [vmem:[%s1562 + $0xc] sm:$0xf]
      %v1567 = vld [vmem:[%s1562 + $0x10] sm:$0xf]
      %v1568 = vld [vmem:[%s1562 + $0x14] sm:$0xf]
      %v1569 = vld [vmem:[%s1562 + $0x18] sm:$0xf]
      %v1570 = vld [vmem:[%s1562 + $0x1c] sm:$0xf]
      %v1571 = vld [vmem:[%s1562 + $0x20] sm:$0xf]
      %v1572 = vld [vmem:[%s1562 + $0x24] sm:$0xf]
      %v1573 = vld [vmem:[%s1562 + $0x28] sm:$0xf]
      %v1574 = vld [vmem:[%s1562 + $0x2c] sm:$0xf]
      %v1575 = vld [vmem:[%s1562 + $0x30] sm:$0xf]
      %v1576 = vld [vmem:[%s1562 + $0x34] sm:$0xf]
      %v1577 = vld [vmem:[%s1562 + $0x38] sm:$0xf]
      %v1578 = vld [vmem:[%s1562 + $0x3c] sm:$0xf]
      %v1579 = vld [vmem:[%s1562 + $0x40] sm:$0xf]
      %v1580 = vld [vmem:[%s1562 + $0x44] sm:$0xf]
      %v1581 = vld [vmem:[%s1562 + $0x48] sm:$0xf]
      %v1582 = vld [vmem:[%s1562 + $0x4c] sm:$0xf]
      %v1583 = vld [vmem:[%s1562 + $0x50] sm:$0xf]
      %v1584 = vld [vmem:[%s1562 + $0x54] sm:$0xf]
      %v1585 = vld [vmem:[%s1562 + $0x58] sm:$0xf]
      %v1586 = vld [vmem:[%s1562 + $0x5c] sm:$0xf]
      %v1587 = vld [vmem:[%s1562 + $0x60] sm:$0xf]
      %v1588 = vld [vmem:[%s1562 + $0x64] sm:$0xf]
      %v1589 = vld [vmem:[%s1562 + $0x68] sm:$0xf]
      %v1590 = vld [vmem:[%s1562 + $0x6c] sm:$0xf]
      %v1591 = vld [vmem:[%s1562 + $0x70] sm:$0xf]
      %v1592 = vld [vmem:[%s1562 + $0x74] sm:$0xf]
      %v1593 = vld [vmem:[%s1562 + $0x78] sm:$0xf]
      %v1594 = vld [vmem:[%s1562 + $0x7c] sm:$0xf]
      %v1595 = vld [vmem:[%s1562 + $0x80] sm:$0xf]
      %v1596 = vld [vmem:[%s1562 + $0x84] sm:$0xf]
      %v1597 = vld [vmem:[%s1562 + $0x88] sm:$0xf]
      %v1598 = vld [vmem:[%s1562 + $0x8c] sm:$0xf]
      %v1599 = vld [vmem:[%s1562 + $0x90] sm:$0xf]
      %v1600 = vld [vmem:[%s1562 + $0x94] sm:$0xf]
      %v1601 = vld [vmem:[%s1562 + $0x98] sm:$0xf]
      %v1602 = vld [vmem:[%s1562 + $0x9c] sm:$0xf]
      %vm1661 = vcmask 1043456
      %v1662 = vrot.slane %v1280, 4
      %v1663 = vrot.slane %v1283, 4
      %v1664 = vsel %vm1661, %v1662, %v1663
      %v1665 = vrot.slane %v1388, 4
      %v1666 = vrot.slane %v1392, 4
      %v1667 = vsel %vm1661, %v1665, %v1666
      %v1668 = vrot.slane %v1210, 4
      %v1669 = vrot.slane %v1212, 4
      %v1670 = vsel %vm1661, %v1668, %v1669
      %v1671 = vrot.slane %v1286, 4
      %v1672 = vsel %vm1661, %v1663, %v1671
      %v1673 = vrot.slane %v1396, 4
      %v1674 = vsel %vm1661, %v1666, %v1673
      %v1675 = vrot.slane %v1214, 4
      %v1676 = vsel %vm1661, %v1669, %v1675
      %v1677 = vrot.slane %v1289, 4
      %v1678 = vsel %vm1661, %v1671, %v1677
      %v1679 = vrot.slane %v1400, 4
      %v1680 = vsel %vm1661, %v1673, %v1679
      %v1681 = vrot.slane %v1216, 4
      %v1682 = vsel %vm1661, %v1675, %v1681
      %v1683 = vrot.slane %v1292, 4
      %v1684 = vsel %vm1661, %v1677, %v1683
      %v1685 = vrot.slane %v1404, 4
      %v1686 = vsel %vm1661, %v1679, %v1685
      %v1687 = vrot.slane %v1218, 4
      %v1688 = vsel %vm1661, %v1681, %v1687
      %v1689 = vrot.slane %v1295, 4
      %v1690 = vsel %vm1661, %v1683, %v1689
      %v1691 = vrot.slane %v1408, 4
      %v1692 = vsel %vm1661, %v1685, %v1691
      %v1693 = vrot.slane %v1220, 4
      %v1694 = vsel %vm1661, %v1687, %v1693
      %v1695 = vrot.slane %v1298, 4
      %v1696 = vsel %vm1661, %v1689, %v1695
      %v1697 = vrot.slane %v1412, 4
      %v1698 = vsel %vm1661, %v1691, %v1697
      %v1699 = vrot.slane %v1222, 4
      %v1700 = vsel %vm1661, %v1693, %v1699
      %v1701 = vrot.slane %v1301, 4
      %v1702 = vsel %vm1661, %v1695, %v1701
      %v1703 = vrot.slane %v1416, 4
      %v1704 = vsel %vm1661, %v1697, %v1703
      %v1705 = vrot.slane %v1224, 4
      %v1706 = vsel %vm1661, %v1699, %v1705
      %v1707 = vrot.slane %v1304, 4
      %v1708 = vsel %vm1661, %v1701, %v1707
      %v1709 = vrot.slane %v1420, 4
      %v1710 = vsel %vm1661, %v1703, %v1709
      %v1711 = vrot.slane %v1226, 4
      %v1712 = vsel %vm1661, %v1705, %v1711
      %v1713 = vrot.slane %v1307, 4
      %v1714 = vsel %vm1661, %v1707, %v1713
      %v1715 = vrot.slane %v1424, 4
      %v1716 = vsel %vm1661, %v1709, %v1715
      %v1717 = vrot.slane %v1228, 4
      %v1718 = vsel %vm1661, %v1711, %v1717
      %v1719 = vrot.slane %v1310, 4
      %v1720 = vsel %vm1661, %v1713, %v1719
      %v1721 = vrot.slane %v1428, 4
      %v1722 = vsel %vm1661, %v1715, %v1721
      %v1723 = vrot.slane %v1230, 4
      %v1724 = vsel %vm1661, %v1717, %v1723
      %v1725 = vrot.slane %v1313, 4
      %v1726 = vsel %vm1661, %v1719, %v1725
      %v1727 = vrot.slane %v1432, 4
      %v1728 = vsel %vm1661, %v1721, %v1727
      %v1729 = vrot.slane %v1232, 4
      %v1730 = vsel %vm1661, %v1723, %v1729
      %v1731 = vrot.slane %v1316, 4
      %v1732 = vsel %vm1661, %v1725, %v1731
      %v1733 = vrot.slane %v1436, 4
      %v1734 = vsel %vm1661, %v1727, %v1733
      %v1735 = vrot.slane %v1234, 4
      %v1736 = vsel %vm1661, %v1729, %v1735
      %v1737 = vrot.slane %v1319, 4
      %v1738 = vsel %vm1661, %v1731, %v1737
      %v1739 = vrot.slane %v1440, 4
      %v1740 = vsel %vm1661, %v1733, %v1739
      %v1741 = vrot.slane %v1236, 4
      %v1742 = vsel %vm1661, %v1735, %v1741
      %v1743 = vrot.slane %v1322, 4
      %v1744 = vsel %vm1661, %v1737, %v1743
      %v1745 = vrot.slane %v1444, 4
      %v1746 = vsel %vm1661, %v1739, %v1745
      %v1747 = vrot.slane %v1238, 4
      %v1748 = vsel %vm1661, %v1741, %v1747
      %v1749 = vrot.slane %v1325, 4
      %v1750 = vsel %vm1661, %v1743, %v1749
      %v1751 = vrot.slane %v1448, 4
      %v1752 = vsel %vm1661, %v1745, %v1751
      %v1753 = vrot.slane %v1240, 4
      %v1754 = vsel %vm1661, %v1747, %v1753
      %v1755 = vrot.slane %v1328, 4
      %v1756 = vsel %vm1661, %v1749, %v1755
      %v1757 = vrot.slane %v1452, 4
      %v1758 = vsel %vm1661, %v1751, %v1757
      %v1759 = vrot.slane %v1242, 4
      %v1760 = vsel %vm1661, %v1753, %v1759
      %v1761 = vrot.slane %v1331, 4
      %v1762 = vsel %vm1661, %v1755, %v1761
      %v1763 = vrot.slane %v1456, 4
      %v1764 = vsel %vm1661, %v1757, %v1763
      %v1765 = vrot.slane %v1244, 4
      %v1766 = vsel %vm1661, %v1759, %v1765
      %v1767 = vrot.slane %v1334, 4
      %v1768 = vsel %vm1661, %v1761, %v1767
      %v1769 = vrot.slane %v1460, 4
      %v1770 = vsel %vm1661, %v1763, %v1769
      %v1771 = vrot.slane %v1246, 4
      %v1772 = vsel %vm1661, %v1765, %v1771
      %v1773 = vrot.slane %v1337, 4
      %v1774 = vsel %vm1661, %v1767, %v1773
      %v1775 = vrot.slane %v1464, 4
      %v1776 = vsel %vm1661, %v1769, %v1775
      %v1777 = vrot.slane %v1248, 4
      %v1778 = vsel %vm1661, %v1771, %v1777
      %v1779 = vrot.slane %v1340, 4
      %v1780 = vsel %vm1661, %v1773, %v1779
      %v1781 = vrot.slane %v1468, 4
      %v1782 = vsel %vm1661, %v1775, %v1781
      %v1783 = vrot.slane %v1250, 4
      %v1784 = vsel %vm1661, %v1777, %v1783
      %v1785 = vrot.slane %v1343, 4
      %v1786 = vsel %vm1661, %v1779, %v1785
      %v1787 = vrot.slane %v1472, 4
      %v1788 = vsel %vm1661, %v1781, %v1787
      %v1789 = vrot.slane %v1252, 4
      %v1790 = vsel %vm1661, %v1783, %v1789
      %v1791 = vrot.slane %v1346, 4
      %v1792 = vsel %vm1661, %v1785, %v1791
      %v1793 = vrot.slane %v1476, 4
      %v1794 = vsel %vm1661, %v1787, %v1793
      %v1795 = vrot.slane %v1254, 4
      %v1796 = vsel %vm1661, %v1789, %v1795
      %v1797 = vrot.slane %v1349, 4
      %v1798 = vsel %vm1661, %v1791, %v1797
      %v1799 = vrot.slane %v1480, 4
      %v1800 = vsel %vm1661, %v1793, %v1799
      %v1801 = vrot.slane %v1256, 4
      %v1802 = vsel %vm1661, %v1795, %v1801
      %v1803 = vrot.slane %v1352, 4
      %v1804 = vsel %vm1661, %v1797, %v1803
      %v1805 = vrot.slane %v1484, 4
      %v1806 = vsel %vm1661, %v1799, %v1805
      %v1807 = vrot.slane %v1258, 4
      %v1808 = vsel %vm1661, %v1801, %v1807
      %v1809 = vrot.slane %v1355, 4
      %v1810 = vsel %vm1661, %v1803, %v1809
      %v1811 = vrot.slane %v1488, 4
      %v1812 = vsel %vm1661, %v1805, %v1811
      %v1813 = vrot.slane %v1260, 4
      %v1814 = vsel %vm1661, %v1807, %v1813
      %v1815 = vrot.slane %v1358, 4
      %v1816 = vsel %vm1661, %v1809, %v1815
      %v1817 = vrot.slane %v1492, 4
      %v1818 = vsel %vm1661, %v1811, %v1817
      %v1819 = vrot.slane %v1262, 4
      %v1820 = vsel %vm1661, %v1813, %v1819
      %v1821 = vrot.slane %v1361, 4
      %v1822 = vsel %vm1661, %v1815, %v1821
      %v1823 = vrot.slane %v1496, 4
      %v1824 = vsel %vm1661, %v1817, %v1823
      %v1825 = vrot.slane %v1264, 4
      %v1826 = vsel %vm1661, %v1819, %v1825
      %v1827 = vrot.slane %v1364, 4
      %v1828 = vsel %vm1661, %v1821, %v1827
      %v1829 = vrot.slane %v1500, 4
      %v1830 = vsel %vm1661, %v1823, %v1829
      %v1831 = vrot.slane %v1266, 4
      %v1832 = vsel %vm1661, %v1825, %v1831
      %v1931 = vunpack.c.l.b16 %v1563
      %v1932 = vunpack.c.l.b16 %v1564
      %v1933 = vunpack.c.l.b16 %v1565
      %v1934 = vunpack.c.l.b16 %v1566
      %v1935 = vunpack.c.l.b16 %v1567
      %v1936 = vunpack.c.l.b16 %v1568
      %v1937 = vunpack.c.l.b16 %v1569
      %v1938 = vunpack.c.l.b16 %v1570
      %v1939 = vunpack.c.l.b16 %v1571
      %v1940 = vunpack.c.l.b16 %v1572
      %v1941 = vunpack.c.l.b16 %v1573
      %v1942 = vunpack.c.l.b16 %v1574
      %v1943 = vunpack.c.l.b16 %v1575
      %v1944 = vunpack.c.l.b16 %v1576
      %v1945 = vunpack.c.l.b16 %v1577
      %v1946 = vunpack.c.l.b16 %v1578
      %v1947 = vunpack.c.l.b16 %v1579
      %v1948 = vunpack.c.l.b16 %v1580
      %v1949 = vunpack.c.l.b16 %v1581
      %v1950 = vunpack.c.l.b16 %v1582
      %v1951 = vunpack.c.l.b16 %v1583
      %v1952 = vunpack.c.l.b16 %v1584
      %v1953 = vunpack.c.l.b16 %v1585
      %v1954 = vunpack.c.l.b16 %v1586
      %v1955 = vunpack.c.l.b16 %v1587
      %v1956 = vunpack.c.l.b16 %v1588
      %v1957 = vunpack.c.l.b16 %v1589
      %v1958 = vunpack.c.l.b16 %v1590
      %v1959 = vunpack.c.l.b16 %v1591
      %v1960 = vunpack.c.l.b16 %v1592
      %v1961 = vunpack.c.l.b16 %v1593
      %v1962 = vunpack.c.l.b16 %v1594
      %v1963 = vunpack.c.l.b16 %v1595
      %v1964 = vunpack.c.l.b16 %v1596
      %v1965 = vunpack.c.l.b16 %v1597
      %v1966 = vunpack.c.l.b16 %v1598
      %v1967 = vunpack.c.l.b16 %v1599
      %v1968 = vunpack.c.l.b16 %v1600
      %v1969 = vunpack.c.l.b16 %v1601
      %v1970 = vunpack.c.l.b16 %v1602
      %v1971 = vpack.c.b16 %v1932, %v1931
      %v1972 = vpack.c.b16 %v1934, %v1933
      %v1973 = vpack.c.b16 %v1936, %v1935
      %v1974 = vpack.c.b16 %v1938, %v1937
      %v1975 = vpack.c.b16 %v1940, %v1939
      %v1976 = vpack.c.b16 %v1942, %v1941
      %v1977 = vpack.c.b16 %v1944, %v1943
      %v1978 = vpack.c.b16 %v1946, %v1945
      %v1979 = vpack.c.b16 %v1948, %v1947
      %v1980 = vpack.c.b16 %v1950, %v1949
      %v1981 = vpack.c.b16 %v1952, %v1951
      %v1982 = vpack.c.b16 %v1954, %v1953
      %v1983 = vpack.c.b16 %v1956, %v1955
      %v1984 = vpack.c.b16 %v1958, %v1957
      %v1985 = vpack.c.b16 %v1960, %v1959
      %v1986 = vpack.c.b16 %v1962, %v1961
      %v1987 = vpack.c.b16 %v1964, %v1963
      %v1988 = vpack.c.b16 %v1966, %v1965
      %v1989 = vpack.c.b16 %v1968, %v1967
      %v1990 = vpack.c.b16 %v1970, %v1969
      %v2012 = vsel %vm1275, %v1670, 0
      %v2015 = vsel %vm1275, %v1676, 0
      %v2018 = vsel %vm1275, %v1682, 0
      %v2021 = vsel %vm1275, %v1688, 0
      %v2024 = vsel %vm1275, %v1694, 0
      %v2027 = vsel %vm1275, %v1700, 0
      %v2030 = vsel %vm1275, %v1706, 0
      %v2033 = vsel %vm1275, %v1712, 0
      %v2036 = vsel %vm1275, %v1718, 0
      %v2039 = vsel %vm1275, %v1724, 0
      %v2042 = vsel %vm1275, %v1730, 0
      %v2045 = vsel %vm1275, %v1736, 0
      %v2048 = vsel %vm1275, %v1742, 0
      %v2051 = vsel %vm1275, %v1748, 0
      %v2054 = vsel %vm1275, %v1754, 0
      %v2057 = vsel %vm1275, %v1760, 0
      %v2060 = vsel %vm1275, %v1766, 0
      %v2063 = vsel %vm1275, %v1772, 0
      %v2066 = vsel %vm1275, %v1778, 0
      %v2069 = vsel %vm1275, %v1784, 0
      %v2072 = vsel %vm1275, %v1790, 0
      %v2075 = vsel %vm1275, %v1796, 0
      %v2078 = vsel %vm1275, %v1802, 0
      %v2081 = vsel %vm1275, %v1808, 0
      %v2084 = vsel %vm1275, %v1814, 0
      %v2087 = vsel %vm1275, %v1820, 0
      %v2090 = vsel %vm1275, %v1826, 0
      %v2093 = vsel %vm1275, %v1832, 0
      %v2096 = vsel %vm1275, %v1831, 0
      %2098 = vmatpush.bf16.msra.mxu0 %v1978
      %2099 = vmatpush.bf16.msra.mxu0 %v1977
      %2100 = vmatpush.bf16.msra.mxu0 %v1976
      %2101 = vmatpush.bf16.msra.mxu0 %v1975
      %2102 = vmatpush.bf16.msra.mxu0 %v1974
      %2103 = vmatpush.bf16.msra.mxu0 %v1973
      %2104 = vmatpush.bf16.msra.mxu0 %v1972
      %2105 = vmatpush.bf16.msra.mxu0 %v1971
      %2106 = vmatmul.bf16.gmra.mxu0 %v1664
      %v2107 = vpop.f32.mrf.mxu0
      %v2108 = vadd.f32 0.0, %v2107
      %v2109 = vpop.f32.mrf.mxu0
      %v2110 = vadd.f32 0.0, %v2109
      %2111 = vmatmul.bf16.gmra.mxu0 %v1672
      %v2112 = vpop.f32.mrf.mxu0
      %v2113 = vadd.f32 0.0, %v2112
      %v2114 = vpop.f32.mrf.mxu0
      %v2115 = vadd.f32 0.0, %v2114
      %2116 = vmatmul.bf16.gmra.mxu0 %v1678
      %v2117 = vpop.f32.mrf.mxu0
      %v2118 = vadd.f32 0.0, %v2117
      %v2119 = vpop.f32.mrf.mxu0
      %v2120 = vadd.f32 0.0, %v2119
      %2121 = vmatmul.bf16.gmra.mxu0 %v1684
      %v2122 = vpop.f32.mrf.mxu0
      %v2123 = vadd.f32 0.0, %v2122
      %v2124 = vpop.f32.mrf.mxu0
      %v2125 = vadd.f32 0.0, %v2124
      %2126 = vmatmul.bf16.gmra.mxu0 %v1690
      %v2127 = vpop.f32.mrf.mxu0
      %v2128 = vadd.f32 0.0, %v2127
      %v2129 = vpop.f32.mrf.mxu0
      %v2130 = vadd.f32 0.0, %v2129
      %2131 = vmatmul.bf16.gmra.mxu0 %v1696
      %v2132 = vpop.f32.mrf.mxu0
      %v2133 = vadd.f32 0.0, %v2132
      %v2134 = vpop.f32.mrf.mxu0
      %v2135 = vadd.f32 0.0, %v2134
      %2136 = vmatmul.bf16.gmra.mxu0 %v1702
      %v2137 = vpop.f32.mrf.mxu0
      %v2138 = vadd.f32 0.0, %v2137
      %v2139 = vpop.f32.mrf.mxu0
      %v2140 = vadd.f32 0.0, %v2139
      %2141 = vmatmul.bf16.gmra.mxu0 %v1708
      %v2142 = vpop.f32.mrf.mxu0
      %v2143 = vadd.f32 0.0, %v2142
      %v2144 = vpop.f32.mrf.mxu0
      %v2145 = vadd.f32 0.0, %v2144
      %2146 = vmatmul.bf16.gmra.mxu0 %v1714
      %v2147 = vpop.f32.mrf.mxu0
      %v2148 = vadd.f32 0.0, %v2147
      %v2149 = vpop.f32.mrf.mxu0
      %v2150 = vadd.f32 0.0, %v2149
      %2151 = vmatmul.bf16.gmra.mxu0 %v1720
      %v2152 = vpop.f32.mrf.mxu0
      %v2153 = vadd.f32 0.0, %v2152
      %v2154 = vpop.f32.mrf.mxu0
      %v2155 = vadd.f32 0.0, %v2154
      %2156 = vmatmul.bf16.gmra.mxu0 %v1726
      %v2157 = vpop.f32.mrf.mxu0
      %v2158 = vadd.f32 0.0, %v2157
      %v2159 = vpop.f32.mrf.mxu0
      %v2160 = vadd.f32 0.0, %v2159
      %2161 = vmatmul.bf16.gmra.mxu0 %v1732
      %v2162 = vpop.f32.mrf.mxu0
      %v2163 = vadd.f32 0.0, %v2162
      %v2164 = vpop.f32.mrf.mxu0
      %v2165 = vadd.f32 0.0, %v2164
      %2166 = vmatmul.bf16.gmra.mxu0 %v1738
      %v2167 = vpop.f32.mrf.mxu0
      %v2168 = vadd.f32 0.0, %v2167
      %v2169 = vpop.f32.mrf.mxu0
      %v2170 = vadd.f32 0.0, %v2169
      %2171 = vmatmul.bf16.gmra.mxu0 %v1744
      %v2172 = vpop.f32.mrf.mxu0
      %v2173 = vadd.f32 0.0, %v2172
      %v2174 = vpop.f32.mrf.mxu0
      %v2175 = vadd.f32 0.0, %v2174
      %2176 = vmatmul.bf16.gmra.mxu0 %v1750
      %v2177 = vpop.f32.mrf.mxu0
      %v2178 = vadd.f32 0.0, %v2177
      %v2179 = vpop.f32.mrf.mxu0
      %v2180 = vadd.f32 0.0, %v2179
      %2181 = vmatmul.bf16.gmra.mxu0 %v1756
      %v2182 = vpop.f32.mrf.mxu0
      %v2183 = vadd.f32 0.0, %v2182
      %v2184 = vpop.f32.mrf.mxu0
      %v2185 = vadd.f32 0.0, %v2184
      %2186 = vmatmul.bf16.gmra.mxu0 %v1762
      %v2187 = vpop.f32.mrf.mxu0
      %v2188 = vadd.f32 0.0, %v2187
      %v2189 = vpop.f32.mrf.mxu0
      %v2190 = vadd.f32 0.0, %v2189
      %2191 = vmatmul.bf16.gmra.mxu0 %v1768
      %v2192 = vpop.f32.mrf.mxu0
      %v2193 = vadd.f32 0.0, %v2192
      %v2194 = vpop.f32.mrf.mxu0
      %v2195 = vadd.f32 0.0, %v2194
      %2196 = vmatmul.bf16.gmra.mxu0 %v1774
      %v2197 = vpop.f32.mrf.mxu0
      %v2198 = vadd.f32 0.0, %v2197
      %v2199 = vpop.f32.mrf.mxu0
      %v2200 = vadd.f32 0.0, %v2199
      %2201 = vmatmul.bf16.gmra.mxu0 %v1780
      %v2202 = vpop.f32.mrf.mxu0
      %v2203 = vadd.f32 0.0, %v2202
      %v2204 = vpop.f32.mrf.mxu0
      %v2205 = vadd.f32 0.0, %v2204
      %2206 = vmatmul.bf16.gmra.mxu0 %v1786
      %v2207 = vpop.f32.mrf.mxu0
      %v2208 = vadd.f32 0.0, %v2207
      %v2209 = vpop.f32.mrf.mxu0
      %v2210 = vadd.f32 0.0, %v2209
      %2211 = vmatmul.bf16.gmra.mxu0 %v1792
      %v2212 = vpop.f32.mrf.mxu0
      %v2213 = vadd.f32 0.0, %v2212
      %v2214 = vpop.f32.mrf.mxu0
      %v2215 = vadd.f32 0.0, %v2214
      %2216 = vmatmul.bf16.gmra.mxu0 %v1798
      %v2217 = vpop.f32.mrf.mxu0
      %v2218 = vadd.f32 0.0, %v2217
      %v2219 = vpop.f32.mrf.mxu0
      %v2220 = vadd.f32 0.0, %v2219
      %2221 = vmatmul.bf16.gmra.mxu0 %v1804
      %v2222 = vpop.f32.mrf.mxu0
      %v2223 = vadd.f32 0.0, %v2222
      %v2224 = vpop.f32.mrf.mxu0
      %v2225 = vadd.f32 0.0, %v2224
      %2226 = vmatmul.bf16.gmra.mxu0 %v1810
      %v2227 = vpop.f32.mrf.mxu0
      %v2228 = vadd.f32 0.0, %v2227
      %v2229 = vpop.f32.mrf.mxu0
      %v2230 = vadd.f32 0.0, %v2229
      %2231 = vmatmul.bf16.gmra.mxu0 %v1816
      %v2232 = vpop.f32.mrf.mxu0
      %v2233 = vadd.f32 0.0, %v2232
      %v2234 = vpop.f32.mrf.mxu0
      %v2235 = vadd.f32 0.0, %v2234
      %2236 = vmatmul.bf16.gmra.mxu0 %v1822
      %v2237 = vpop.f32.mrf.mxu0
      %v2238 = vadd.f32 0.0, %v2237
      %v2239 = vpop.f32.mrf.mxu0
      %v2240 = vadd.f32 0.0, %v2239
      %2241 = vmatmul.bf16.gmra.mxu0 %v1828
      %v2242 = vpop.f32.mrf.mxu0
      %v2243 = vadd.f32 0.0, %v2242
      %v2244 = vpop.f32.mrf.mxu0
      %2245 = vmatmul.bf16.gmra.mxu0 %v1827
      %v2246 = vpop.f32.mrf.mxu0
      %v2247 = vpop.f32.mrf.mxu0
      %2248 = vdwg.mxu0
      %2249 = vmatpush.bf16.msra.mxu0 %v1986
      %2250 = vmatpush.bf16.msra.mxu0 %v1985
      %2251 = vmatpush.bf16.msra.mxu0 %v1984
      %2252 = vmatpush.bf16.msra.mxu0 %v1983
      %2253 = vmatpush.bf16.msra.mxu0 %v1982
      %2254 = vmatpush.bf16.msra.mxu0 %v1981
      %2255 = vmatpush.bf16.msra.mxu0 %v1980
      %2256 = vmatpush.bf16.msra.mxu0 %v1979
      %2257 = vmatmul.bf16.gmra.mxu0 %v1667
      %v2258 = vpop.f32.mrf.mxu0
      %v2259 = vadd.f32 %v2108, %v2258
      %v2260 = vpop.f32.mrf.mxu0
      %v2261 = vadd.f32 %v2110, %v2260
      %2262 = vmatmul.bf16.gmra.mxu0 %v1674
      %v2263 = vpop.f32.mrf.mxu0
      %v2264 = vadd.f32 %v2113, %v2263
      %v2265 = vpop.f32.mrf.mxu0
      %v2266 = vadd.f32 %v2115, %v2265
      %2267 = vmatmul.bf16.gmra.mxu0 %v1680
      %v2268 = vpop.f32.mrf.mxu0
      %v2269 = vadd.f32 %v2118, %v2268
      %v2270 = vpop.f32.mrf.mxu0
      %v2271 = vadd.f32 %v2120, %v2270
      %2272 = vmatmul.bf16.gmra.mxu0 %v1686
      %v2273 = vpop.f32.mrf.mxu0
      %v2274 = vadd.f32 %v2123, %v2273
      %v2275 = vpop.f32.mrf.mxu0
      %v2276 = vadd.f32 %v2125, %v2275
      %2277 = vmatmul.bf16.gmra.mxu0 %v1692
      %v2278 = vpop.f32.mrf.mxu0
      %v2279 = vadd.f32 %v2128, %v2278
      %v2280 = vpop.f32.mrf.mxu0
      %v2281 = vadd.f32 %v2130, %v2280
      %2282 = vmatmul.bf16.gmra.mxu0 %v1698
      %v2283 = vpop.f32.mrf.mxu0
      %v2284 = vadd.f32 %v2133, %v2283
      %v2285 = vpop.f32.mrf.mxu0
      %v2286 = vadd.f32 %v2135, %v2285
      %2287 = vmatmul.bf16.gmra.mxu0 %v1704
      %v2288 = vpop.f32.mrf.mxu0
      %v2289 = vadd.f32 %v2138, %v2288
      %v2290 = vpop.f32.mrf.mxu0
      %v2291 = vadd.f32 %v2140, %v2290
      %2292 = vmatmul.bf16.gmra.mxu0 %v1710
      %v2293 = vpop.f32.mrf.mxu0
      %v2294 = vadd.f32 %v2143, %v2293
      %v2295 = vpop.f32.mrf.mxu0
      %v2296 = vadd.f32 %v2145, %v2295
      %2297 = vmatmul.bf16.gmra.mxu0 %v1716
      %v2298 = vpop.f32.mrf.mxu0
      %v2299 = vadd.f32 %v2148, %v2298
      %v2300 = vpop.f32.mrf.mxu0
      %v2301 = vadd.f32 %v2150, %v2300
      %2302 = vmatmul.bf16.gmra.mxu0 %v1722
      %v2303 = vpop.f32.mrf.mxu0
      %v2304 = vadd.f32 %v2153, %v2303
      %v2305 = vpop.f32.mrf.mxu0
      %v2306 = vadd.f32 %v2155, %v2305
      %2307 = vmatmul.bf16.gmra.mxu0 %v1728
      %v2308 = vpop.f32.mrf.mxu0
      %v2309 = vadd.f32 %v2158, %v2308
      %v2310 = vpop.f32.mrf.mxu0
      %v2311 = vadd.f32 %v2160, %v2310
      %2312 = vmatmul.bf16.gmra.mxu0 %v1734
      %v2313 = vpop.f32.mrf.mxu0
      %v2314 = vadd.f32 %v2163, %v2313
      %v2315 = vpop.f32.mrf.mxu0
      %v2316 = vadd.f32 %v2165, %v2315
      %2317 = vmatmul.bf16.gmra.mxu0 %v1740
      %v2318 = vpop.f32.mrf.mxu0
      %v2319 = vadd.f32 %v2168, %v2318
      %v2320 = vpop.f32.mrf.mxu0
      %v2321 = vadd.f32 %v2170, %v2320
      %2322 = vmatmul.bf16.gmra.mxu0 %v1746
      %v2323 = vpop.f32.mrf.mxu0
      %v2324 = vadd.f32 %v2173, %v2323
      %v2325 = vpop.f32.mrf.mxu0
      %v2326 = vadd.f32 %v2175, %v2325
      %2327 = vmatmul.bf16.gmra.mxu0 %v1752
      %v2328 = vpop.f32.mrf.mxu0
      %v2329 = vadd.f32 %v2178, %v2328
      %v2330 = vpop.f32.mrf.mxu0
      %v2331 = vadd.f32 %v2180, %v2330
      %2332 = vmatmul.bf16.gmra.mxu0 %v1758
      %v2333 = vpop.f32.mrf.mxu0
      %v2334 = vadd.f32 %v2183, %v2333
      %v2335 = vpop.f32.mrf.mxu0
      %v2336 = vadd.f32 %v2185, %v2335
      %2337 = vmatmul.bf16.gmra.mxu0 %v1764
      %v2338 = vpop.f32.mrf.mxu0
      %v2339 = vadd.f32 %v2188, %v2338
      %v2340 = vpop.f32.mrf.mxu0
      %v2341 = vadd.f32 %v2190, %v2340
      %2342 = vmatmul.bf16.gmra.mxu0 %v1770
      %v2343 = vpop.f32.mrf.mxu0
      %v2344 = vadd.f32 %v2193, %v2343
      %v2345 = vpop.f32.mrf.mxu0
      %v2346 = vadd.f32 %v2195, %v2345
      %2347 = vmatmul.bf16.gmra.mxu0 %v1776
      %v2348 = vpop.f32.mrf.mxu0
      %v2349 = vadd.f32 %v2198, %v2348
      %v2350 = vpop.f32.mrf.mxu0
      %v2351 = vadd.f32 %v2200, %v2350
      %2352 = vmatmul.bf16.gmra.mxu0 %v1782
      %v2353 = vpop.f32.mrf.mxu0
      %v2354 = vadd.f32 %v2203, %v2353
      %v2355 = vpop.f32.mrf.mxu0
      %v2356 = vadd.f32 %v2205, %v2355
      %2357 = vmatmul.bf16.gmra.mxu0 %v1788
      %v2358 = vpop.f32.mrf.mxu0
      %v2359 = vadd.f32 %v2208, %v2358
      %v2360 = vpop.f32.mrf.mxu0
      %v2361 = vadd.f32 %v2210, %v2360
      %2362 = vmatmul.bf16.gmra.mxu0 %v1794
      %v2363 = vpop.f32.mrf.mxu0
      %v2364 = vadd.f32 %v2213, %v2363
      %v2365 = vpop.f32.mrf.mxu0
      %v2366 = vadd.f32 %v2215, %v2365
      %2367 = vmatmul.bf16.gmra.mxu0 %v1800
      %v2368 = vpop.f32.mrf.mxu0
      %v2369 = vadd.f32 %v2218, %v2368
      %v2370 = vpop.f32.mrf.mxu0
      %v2371 = vadd.f32 %v2220, %v2370
      %2372 = vmatmul.bf16.gmra.mxu0 %v1806
      %v2373 = vpop.f32.mrf.mxu0
      %v2374 = vadd.f32 %v2223, %v2373
      %v2375 = vpop.f32.mrf.mxu0
      %v2376 = vadd.f32 %v2225, %v2375
      %2377 = vmatmul.bf16.gmra.mxu0 %v1812
      %v2378 = vpop.f32.mrf.mxu0
      %v2379 = vadd.f32 %v2228, %v2378
      %v2380 = vpop.f32.mrf.mxu0
      %v2381 = vadd.f32 %v2230, %v2380
      %2382 = vmatmul.bf16.gmra.mxu0 %v1818
      %v2383 = vpop.f32.mrf.mxu0
      %v2384 = vadd.f32 %v2233, %v2383
      %v2385 = vpop.f32.mrf.mxu0
      %v2386 = vadd.f32 %v2235, %v2385
      %2387 = vmatmul.bf16.gmra.mxu0 %v1824
      %v2388 = vpop.f32.mrf.mxu0
      %v2389 = vadd.f32 %v2238, %v2388
      %v2390 = vpop.f32.mrf.mxu0
      %v2391 = vadd.f32 %v2240, %v2390
      %2392 = vmatmul.bf16.gmra.mxu0 %v1830
      %v2393 = vpop.f32.mrf.mxu0
      %v2394 = vadd.f32 %v2243, %v2393
      %v2395 = vpop.f32.mrf.mxu0
      %2396 = vmatmul.bf16.gmra.mxu0 %v1829
      %v2397 = vpop.f32.mrf.mxu0
      %v2398 = vpop.f32.mrf.mxu0
      %2399 = vdwg.mxu0
      %2400 = vmatpush.bf16.msra.mxu0 0
      %2401 = vmatpush.bf16.msra.mxu0 0
      %2402 = vmatpush.bf16.msra.mxu0 0
      %2403 = vmatpush.bf16.msra.mxu0 0
      %2404 = vmatpush.bf16.msra.mxu0 %v1990
      %2405 = vmatpush.bf16.msra.mxu0 %v1989
      %2406 = vmatpush.bf16.msra.mxu0 %v1988
      %2407 = vmatpush.bf16.msra.mxu0 %v1987
      %2408 = vmatmul.bf16.gmra.mxu0 %v2012
      %v2409 = vpop.f32.mrf.mxu0
      %v2410 = vadd.f32 %v2259, %v2409
      %v2411 = vpop.f32.mrf.mxu0
      %v2412 = vadd.f32 %v2261, %v2411
      %2413 = vmatmul.bf16.gmra.mxu0 %v2015
      %v2414 = vpop.f32.mrf.mxu0
      %v2415 = vadd.f32 %v2264, %v2414
      %v2416 = vpop.f32.mrf.mxu0
      %v2417 = vadd.f32 %v2266, %v2416
      %2418 = vmatmul.bf16.gmra.mxu0 %v2018
      %v2419 = vpop.f32.mrf.mxu0
      %v2420 = vadd.f32 %v2269, %v2419
      %v2421 = vpop.f32.mrf.mxu0
      %v2422 = vadd.f32 %v2271, %v2421
      %2423 = vmatmul.bf16.gmra.mxu0 %v2021
      %v2424 = vpop.f32.mrf.mxu0
      %v2425 = vadd.f32 %v2274, %v2424
      %v2426 = vpop.f32.mrf.mxu0
      %v2427 = vadd.f32 %v2276, %v2426
      %2428 = vmatmul.bf16.gmra.mxu0 %v2024
      %v2429 = vpop.f32.mrf.mxu0
      %v2430 = vadd.f32 %v2279, %v2429
      %v2431 = vpop.f32.mrf.mxu0
      %v2432 = vadd.f32 %v2281, %v2431
      %2433 = vmatmul.bf16.gmra.mxu0 %v2027
      %v2434 = vpop.f32.mrf.mxu0
      %v2435 = vadd.f32 %v2284, %v2434
      %v2436 = vpop.f32.mrf.mxu0
      %v2437 = vadd.f32 %v2286, %v2436
      %2438 = vmatmul.bf16.gmra.mxu0 %v2030
      %v2439 = vpop.f32.mrf.mxu0
      %v2440 = vadd.f32 %v2289, %v2439
      %v2441 = vpop.f32.mrf.mxu0
      %v2442 = vadd.f32 %v2291, %v2441
      %2443 = vmatmul.bf16.gmra.mxu0 %v2033
      %v2444 = vpop.f32.mrf.mxu0
      %v2445 = vadd.f32 %v2294, %v2444
      %v2446 = vpop.f32.mrf.mxu0
      %v2447 = vadd.f32 %v2296, %v2446
      %2448 = vmatmul.bf16.gmra.mxu0 %v2036
      %v2449 = vpop.f32.mrf.mxu0
      %v2450 = vadd.f32 %v2299, %v2449
      %v2451 = vpop.f32.mrf.mxu0
      %v2452 = vadd.f32 %v2301, %v2451
      %2453 = vmatmul.bf16.gmra.mxu0 %v2039
      %v2454 = vpop.f32.mrf.mxu0
      %v2455 = vadd.f32 %v2304, %v2454
      %v2456 = vpop.f32.mrf.mxu0
      %v2457 = vadd.f32 %v2306, %v2456
      %2458 = vmatmul.bf16.gmra.mxu0 %v2042
      %v2459 = vpop.f32.mrf.mxu0
      %v2460 = vadd.f32 %v2309, %v2459
      %v2461 = vpop.f32.mrf.mxu0
      %v2462 = vadd.f32 %v2311, %v2461
      %2463 = vmatmul.bf16.gmra.mxu0 %v2045
      %v2464 = vpop.f32.mrf.mxu0
      %v2465 = vadd.f32 %v2314, %v2464
      %v2466 = vpop.f32.mrf.mxu0
      %v2467 = vadd.f32 %v2316, %v2466
      %2468 = vmatmul.bf16.gmra.mxu0 %v2048
      %v2469 = vpop.f32.mrf.mxu0
      %v2470 = vadd.f32 %v2319, %v2469
      %v2471 = vpop.f32.mrf.mxu0
      %v2472 = vadd.f32 %v2321, %v2471
      %2473 = vmatmul.bf16.gmra.mxu0 %v2051
      %v2474 = vpop.f32.mrf.mxu0
      %v2475 = vadd.f32 %v2324, %v2474
      %v2476 = vpop.f32.mrf.mxu0
      %v2477 = vadd.f32 %v2326, %v2476
      %2478 = vmatmul.bf16.gmra.mxu0 %v2054
      %v2479 = vpop.f32.mrf.mxu0
      %v2480 = vadd.f32 %v2329, %v2479
      %v2481 = vpop.f32.mrf.mxu0
      %v2482 = vadd.f32 %v2331, %v2481
      %2483 = vmatmul.bf16.gmra.mxu0 %v2057
      %v2484 = vpop.f32.mrf.mxu0
      %v2485 = vadd.f32 %v2334, %v2484
      %v2486 = vpop.f32.mrf.mxu0
      %v2487 = vadd.f32 %v2336, %v2486
      %2488 = vmatmul.bf16.gmra.mxu0 %v2060
      %v2489 = vpop.f32.mrf.mxu0
      %v2490 = vadd.f32 %v2339, %v2489
      %v2491 = vpop.f32.mrf.mxu0
      %v2492 = vadd.f32 %v2341, %v2491
      %2493 = vmatmul.bf16.gmra.mxu0 %v2063
      %v2494 = vpop.f32.mrf.mxu0
      %v2495 = vadd.f32 %v2344, %v2494
      %v2496 = vpop.f32.mrf.mxu0
      %v2497 = vadd.f32 %v2346, %v2496
      %2498 = vmatmul.bf16.gmra.mxu0 %v2066
      %v2499 = vpop.f32.mrf.mxu0
      %v2500 = vadd.f32 %v2349, %v2499
      %v2501 = vpop.f32.mrf.mxu0
      %v2502 = vadd.f32 %v2351, %v2501
      %2503 = vmatmul.bf16.gmra.mxu0 %v2069
      %v2504 = vpop.f32.mrf.mxu0
      %v2505 = vadd.f32 %v2354, %v2504
      %v2506 = vpop.f32.mrf.mxu0
      %v2507 = vadd.f32 %v2356, %v2506
      %2508 = vmatmul.bf16.gmra.mxu0 %v2072
      %v2509 = vpop.f32.mrf.mxu0
      %v2510 = vadd.f32 %v2359, %v2509
      %v2511 = vpop.f32.mrf.mxu0
      %v2512 = vadd.f32 %v2361, %v2511
      %2513 = vmatmul.bf16.gmra.mxu0 %v2075
      %v2514 = vpop.f32.mrf.mxu0
      %v2515 = vadd.f32 %v2364, %v2514
      %v2516 = vpop.f32.mrf.mxu0
      %v2517 = vadd.f32 %v2366, %v2516
      %2518 = vmatmul.bf16.gmra.mxu0 %v2078
      %v2519 = vpop.f32.mrf.mxu0
      %v2520 = vadd.f32 %v2369, %v2519
      %v2521 = vpop.f32.mrf.mxu0
      %v2522 = vadd.f32 %v2371, %v2521
      %2523 = vmatmul.bf16.gmra.mxu0 %v2081
      %v2524 = vpop.f32.mrf.mxu0
      %v2525 = vadd.f32 %v2374, %v2524
      %v2526 = vpop.f32.mrf.mxu0
      %v2527 = vadd.f32 %v2376, %v2526
      %2528 = vmatmul.bf16.gmra.mxu0 %v2084
      %v2529 = vpop.f32.mrf.mxu0
      %v2530 = vadd.f32 %v2379, %v2529
      %v2531 = vpop.f32.mrf.mxu0
      %v2532 = vadd.f32 %v2381, %v2531
      %2533 = vmatmul.bf16.gmra.mxu0 %v2087
      %v2534 = vpop.f32.mrf.mxu0
      %v2535 = vadd.f32 %v2384, %v2534
      %v2536 = vpop.f32.mrf.mxu0
      %v2537 = vadd.f32 %v2386, %v2536
      %2538 = vmatmul.bf16.gmra.mxu0 %v2090
      %v2539 = vpop.f32.mrf.mxu0
      %v2540 = vadd.f32 %v2389, %v2539
      %v2541 = vpop.f32.mrf.mxu0
      %v2542 = vadd.f32 %v2391, %v2541
      %2543 = vmatmul.bf16.gmra.mxu0 %v2093
      %v2544 = vpop.f32.mrf.mxu0
      %v2545 = vadd.f32 %v2394, %v2544
      %v2546 = vpop.f32.mrf.mxu0
      %2547 = vmatmul.bf16.gmra.mxu0 %v2096
      %v2548 = vpop.f32.mrf.mxu0
      %v2549 = vpop.f32.mrf.mxu0
      %2550 = vdwg.mxu0
      %v2591 = vunpack.c.l.b16 %v1522
      %v2592 = vunpack.c.l.b16 %v1523
      %v2593 = vunpack.c.l.b16 %v1524
      %v2594 = vunpack.c.l.b16 %v1525
      %v2595 = vunpack.c.l.b16 %v1526
      %v2596 = vunpack.c.l.b16 %v1527
      %v2597 = vunpack.c.l.b16 %v1528
      %v2598 = vunpack.c.l.b16 %v1529
      %v2599 = vunpack.c.l.b16 %v1530
      %v2600 = vunpack.c.l.b16 %v1531
      %v2601 = vunpack.c.l.b16 %v1532
      %v2602 = vunpack.c.l.b16 %v1533
      %v2603 = vunpack.c.l.b16 %v1534
      %v2604 = vunpack.c.l.b16 %v1535
      %v2605 = vunpack.c.l.b16 %v1536
      %v2606 = vunpack.c.l.b16 %v1537
      %v2607 = vunpack.c.l.b16 %v1538
      %v2608 = vunpack.c.l.b16 %v1539
      %v2609 = vunpack.c.l.b16 %v1540
      %v2610 = vunpack.c.l.b16 %v1541
      %v2611 = vunpack.c.l.b16 %v1542
      %v2612 = vunpack.c.l.b16 %v1543
      %v2613 = vunpack.c.l.b16 %v1544
      %v2614 = vunpack.c.l.b16 %v1545
      %v2615 = vunpack.c.l.b16 %v1546
      %v2616 = vunpack.c.l.b16 %v1547
      %v2617 = vunpack.c.l.b16 %v1548
      %v2618 = vunpack.c.l.b16 %v1549
      %v2619 = vunpack.c.l.b16 %v1550
      %v2620 = vunpack.c.l.b16 %v1551
      %v2621 = vunpack.c.l.b16 %v1552
      %v2622 = vunpack.c.l.b16 %v1553
      %v2623 = vunpack.c.l.b16 %v1554
      %v2624 = vunpack.c.l.b16 %v1555
      %v2625 = vunpack.c.l.b16 %v1556
      %v2626 = vunpack.c.l.b16 %v1557
      %v2627 = vunpack.c.l.b16 %v1558
      %v2628 = vunpack.c.l.b16 %v1559
      %v2629 = vunpack.c.l.b16 %v1560
      %v2630 = vunpack.c.l.b16 %v1561
      %v2631 = vpack.c.b16 %v2592, %v2591
      %v2632 = vpack.c.b16 %v2594, %v2593
      %v2633 = vpack.c.b16 %v2596, %v2595
      %v2634 = vpack.c.b16 %v2598, %v2597
      %v2635 = vpack.c.b16 %v2600, %v2599
      %v2636 = vpack.c.b16 %v2602, %v2601
      %v2637 = vpack.c.b16 %v2604, %v2603
      %v2638 = vpack.c.b16 %v2606, %v2605
      %v2639 = vpack.c.b16 %v2608, %v2607
      %v2640 = vpack.c.b16 %v2610, %v2609
      %v2641 = vpack.c.b16 %v2612, %v2611
      %v2642 = vpack.c.b16 %v2614, %v2613
      %v2643 = vpack.c.b16 %v2616, %v2615
      %v2644 = vpack.c.b16 %v2618, %v2617
      %v2645 = vpack.c.b16 %v2620, %v2619
      %v2646 = vpack.c.b16 %v2622, %v2621
      %v2647 = vpack.c.b16 %v2624, %v2623
      %v2648 = vpack.c.b16 %v2626, %v2625
      %v2649 = vpack.c.b16 %v2628, %v2627
      %v2650 = vpack.c.b16 %v2630, %v2629
      %v2672 = vsel %vm1275, %v1208, 0
      %v2675 = vsel %vm1275, %v1210, 0
      %v2678 = vsel %vm1275, %v1212, 0
      %v2681 = vsel %vm1275, %v1214, 0
      %v2684 = vsel %vm1275, %v1216, 0
      %v2687 = vsel %vm1275, %v1218, 0
      %v2690 = vsel %vm1275, %v1220, 0
      %v2693 = vsel %vm1275, %v1222, 0
      %v2696 = vsel %vm1275, %v1224, 0
      %v2699 = vsel %vm1275, %v1226, 0
      %v2702 = vsel %vm1275, %v1228, 0
      %v2705 = vsel %vm1275, %v1230, 0
      %v2708 = vsel %vm1275, %v1232, 0
      %v2711 = vsel %vm1275, %v1234, 0
      %v2714 = vsel %vm1275, %v1236, 0
      %v2717 = vsel %vm1275, %v1238, 0
      %v2720 = vsel %vm1275, %v1240, 0
      %v2723 = vsel %vm1275, %v1242, 0
      %v2726 = vsel %vm1275, %v1244, 0
      %v2729 = vsel %vm1275, %v1246, 0
      %v2732 = vsel %vm1275, %v1248, 0
      %v2735 = vsel %vm1275, %v1250, 0
      %v2738 = vsel %vm1275, %v1252, 0
      %v2741 = vsel %vm1275, %v1254, 0
      %v2744 = vsel %vm1275, %v1256, 0
      %v2747 = vsel %vm1275, %v1258, 0
      %v2750 = vsel %vm1275, %v1260, 0
      %v2753 = vsel %vm1275, %v1262, 0
      %v2756 = vsel %vm1275, %v1264, 0
      %2758 = vmatpush.bf16.msra.mxu0 %v2638
      %2759 = vmatpush.bf16.msra.mxu0 %v2637
      %2760 = vmatpush.bf16.msra.mxu0 %v2636
      %2761 = vmatpush.bf16.msra.mxu0 %v2635
      %2762 = vmatpush.bf16.msra.mxu0 %v2634
      %2763 = vmatpush.bf16.msra.mxu0 %v2633
      %2764 = vmatpush.bf16.msra.mxu0 %v2632
      %2765 = vmatpush.bf16.msra.mxu0 %v2631
      %2766 = vmatmul.bf16.gmra.mxu0 %v1277
      %v2767 = vpop.f32.mrf.mxu0
      %v2768 = vadd.f32 %v2410, %v2767
      %v2769 = vpop.f32.mrf.mxu0
      %v2770 = vadd.f32 %v2412, %v2769
      %2771 = vmatmul.bf16.gmra.mxu0 %v1280
      %v2772 = vpop.f32.mrf.mxu0
      %v2773 = vadd.f32 %v2415, %v2772
      %v2774 = vpop.f32.mrf.mxu0
      %v2775 = vadd.f32 %v2417, %v2774
      %2776 = vmatmul.bf16.gmra.mxu0 %v1283
      %v2777 = vpop.f32.mrf.mxu0
      %v2778 = vadd.f32 %v2420, %v2777
      %v2779 = vpop.f32.mrf.mxu0
      %v2780 = vadd.f32 %v2422, %v2779
      %2781 = vmatmul.bf16.gmra.mxu0 %v1286
      %v2782 = vpop.f32.mrf.mxu0
      %v2783 = vadd.f32 %v2425, %v2782
      %v2784 = vpop.f32.mrf.mxu0
      %v2785 = vadd.f32 %v2427, %v2784
      %2786 = vmatmul.bf16.gmra.mxu0 %v1289
      %v2787 = vpop.f32.mrf.mxu0
      %v2788 = vadd.f32 %v2430, %v2787
      %v2789 = vpop.f32.mrf.mxu0
      %v2790 = vadd.f32 %v2432, %v2789
      %2791 = vmatmul.bf16.gmra.mxu0 %v1292
      %v2792 = vpop.f32.mrf.mxu0
      %v2793 = vadd.f32 %v2435, %v2792
      %v2794 = vpop.f32.mrf.mxu0
      %v2795 = vadd.f32 %v2437, %v2794
      %2796 = vmatmul.bf16.gmra.mxu0 %v1295
      %v2797 = vpop.f32.mrf.mxu0
      %v2798 = vadd.f32 %v2440, %v2797
      %v2799 = vpop.f32.mrf.mxu0
      %v2800 = vadd.f32 %v2442, %v2799
      %2801 = vmatmul.bf16.gmra.mxu0 %v1298
      %v2802 = vpop.f32.mrf.mxu0
      %v2803 = vadd.f32 %v2445, %v2802
      %v2804 = vpop.f32.mrf.mxu0
      %v2805 = vadd.f32 %v2447, %v2804
      %2806 = vmatmul.bf16.gmra.mxu0 %v1301
      %v2807 = vpop.f32.mrf.mxu0
      %v2808 = vadd.f32 %v2450, %v2807
      %v2809 = vpop.f32.mrf.mxu0
      %v2810 = vadd.f32 %v2452, %v2809
      %2811 = vmatmul.bf16.gmra.mxu0 %v1304
      %v2812 = vpop.f32.mrf.mxu0
      %v2813 = vadd.f32 %v2455, %v2812
      %v2814 = vpop.f32.mrf.mxu0
      %v2815 = vadd.f32 %v2457, %v2814
      %2816 = vmatmul.bf16.gmra.mxu0 %v1307
      %v2817 = vpop.f32.mrf.mxu0
      %v2818 = vadd.f32 %v2460, %v2817
      %v2819 = vpop.f32.mrf.mxu0
      %v2820 = vadd.f32 %v2462, %v2819
      %2821 = vmatmul.bf16.gmra.mxu0 %v1310
      %v2822 = vpop.f32.mrf.mxu0
      %v2823 = vadd.f32 %v2465, %v2822
      %v2824 = vpop.f32.mrf.mxu0
      %v2825 = vadd.f32 %v2467, %v2824
      %2826 = vmatmul.bf16.gmra.mxu0 %v1313
      %v2827 = vpop.f32.mrf.mxu0
      %v2828 = vadd.f32 %v2470, %v2827
      %v2829 = vpop.f32.mrf.mxu0
      %v2830 = vadd.f32 %v2472, %v2829
      %2831 = vmatmul.bf16.gmra.mxu0 %v1316
      %v2832 = vpop.f32.mrf.mxu0
      %v2833 = vadd.f32 %v2475, %v2832
      %v2834 = vpop.f32.mrf.mxu0
      %v2835 = vadd.f32 %v2477, %v2834
      %2836 = vmatmul.bf16.gmra.mxu0 %v1319
      %v2837 = vpop.f32.mrf.mxu0
      %v2838 = vadd.f32 %v2480, %v2837
      %v2839 = vpop.f32.mrf.mxu0
      %v2840 = vadd.f32 %v2482, %v2839
      %2841 = vmatmul.bf16.gmra.mxu0 %v1322
      %v2842 = vpop.f32.mrf.mxu0
      %v2843 = vadd.f32 %v2485, %v2842
      %v2844 = vpop.f32.mrf.mxu0
      %v2845 = vadd.f32 %v2487, %v2844
      %2846 = vmatmul.bf16.gmra.mxu0 %v1325
      %v2847 = vpop.f32.mrf.mxu0
      %v2848 = vadd.f32 %v2490, %v2847
      %v2849 = vpop.f32.mrf.mxu0
      %v2850 = vadd.f32 %v2492, %v2849
      %2851 = vmatmul.bf16.gmra.mxu0 %v1328
      %v2852 = vpop.f32.mrf.mxu0
      %v2853 = vadd.f32 %v2495, %v2852
      %v2854 = vpop.f32.mrf.mxu0
      %v2855 = vadd.f32 %v2497, %v2854
      %2856 = vmatmul.bf16.gmra.mxu0 %v1331
      %v2857 = vpop.f32.mrf.mxu0
      %v2858 = vadd.f32 %v2500, %v2857
      %v2859 = vpop.f32.mrf.mxu0
      %v2860 = vadd.f32 %v2502, %v2859
      %2861 = vmatmul.bf16.gmra.mxu0 %v1334
      %v2862 = vpop.f32.mrf.mxu0
      %v2863 = vadd.f32 %v2505, %v2862
      %v2864 = vpop.f32.mrf.mxu0
      %v2865 = vadd.f32 %v2507, %v2864
      %2866 = vmatmul.bf16.gmra.mxu0 %v1337
      %v2867 = vpop.f32.mrf.mxu0
      %v2868 = vadd.f32 %v2510, %v2867
      %v2869 = vpop.f32.mrf.mxu0
      %v2870 = vadd.f32 %v2512, %v2869
      %2871 = vmatmul.bf16.gmra.mxu0 %v1340
      %v2872 = vpop.f32.mrf.mxu0
      %v2873 = vadd.f32 %v2515, %v2872
      %v2874 = vpop.f32.mrf.mxu0
      %v2875 = vadd.f32 %v2517, %v2874
      %2876 = vmatmul.bf16.gmra.mxu0 %v1343
      %v2877 = vpop.f32.mrf.mxu0
      %v2878 = vadd.f32 %v2520, %v2877
      %v2879 = vpop.f32.mrf.mxu0
      %v2880 = vadd.f32 %v2522, %v2879
      %2881 = vmatmul.bf16.gmra.mxu0 %v1346
      %v2882 = vpop.f32.mrf.mxu0
      %v2883 = vadd.f32 %v2525, %v2882
      %v2884 = vpop.f32.mrf.mxu0
      %v2885 = vadd.f32 %v2527, %v2884
      %2886 = vmatmul.bf16.gmra.mxu0 %v1349
      %v2887 = vpop.f32.mrf.mxu0
      %v2888 = vadd.f32 %v2530, %v2887
      %v2889 = vpop.f32.mrf.mxu0
      %v2890 = vadd.f32 %v2532, %v2889
      %2891 = vmatmul.bf16.gmra.mxu0 %v1352
      %v2892 = vpop.f32.mrf.mxu0
      %v2893 = vadd.f32 %v2535, %v2892
      %v2894 = vpop.f32.mrf.mxu0
      %v2895 = vadd.f32 %v2537, %v2894
      %2896 = vmatmul.bf16.gmra.mxu0 %v1355
      %v2897 = vpop.f32.mrf.mxu0
      %v2898 = vadd.f32 %v2540, %v2897
      %v2899 = vpop.f32.mrf.mxu0
      %v2900 = vadd.f32 %v2542, %v2899
      %2901 = vmatmul.bf16.gmra.mxu0 %v1358
      %v2902 = vpop.f32.mrf.mxu0
      %v2903 = vadd.f32 %v2545, %v2902
      %v2904 = vpop.f32.mrf.mxu0
      %2905 = vmatmul.bf16.gmra.mxu0 %v1361
      %v2906 = vpop.f32.mrf.mxu0
      %v2907 = vpop.f32.mrf.mxu0
      %2908 = vdwg.mxu0
      %2909 = vmatpush.bf16.msra.mxu0 %v2646
      %2910 = vmatpush.bf16.msra.mxu0 %v2645
      %2911 = vmatpush.bf16.msra.mxu0 %v2644
      %2912 = vmatpush.bf16.msra.mxu0 %v2643
      %2913 = vmatpush.bf16.msra.mxu0 %v2642
      %2914 = vmatpush.bf16.msra.mxu0 %v2641
      %2915 = vmatpush.bf16.msra.mxu0 %v2640
      %2916 = vmatpush.bf16.msra.mxu0 %v2639
      %2917 = vmatmul.bf16.gmra.mxu0 %v1384
      %v2918 = vpop.f32.mrf.mxu0
      %v2919 = vadd.f32 %v2768, %v2918
      %v2920 = vpop.f32.mrf.mxu0
      %v2921 = vadd.f32 %v2770, %v2920
      %2922 = vmatmul.bf16.gmra.mxu0 %v1388
      %v2923 = vpop.f32.mrf.mxu0
      %v2924 = vadd.f32 %v2773, %v2923
      %v2925 = vpop.f32.mrf.mxu0
      %v2926 = vadd.f32 %v2775, %v2925
      %2927 = vmatmul.bf16.gmra.mxu0 %v1392
      %v2928 = vpop.f32.mrf.mxu0
      %v2929 = vadd.f32 %v2778, %v2928
      %v2930 = vpop.f32.mrf.mxu0
      %v2931 = vadd.f32 %v2780, %v2930
      %2932 = vmatmul.bf16.gmra.mxu0 %v1396
      %v2933 = vpop.f32.mrf.mxu0
      %v2934 = vadd.f32 %v2783, %v2933
      %v2935 = vpop.f32.mrf.mxu0
      %v2936 = vadd.f32 %v2785, %v2935
      %2937 = vmatmul.bf16.gmra.mxu0 %v1400
      %v2938 = vpop.f32.mrf.mxu0
      %v2939 = vadd.f32 %v2788, %v2938
      %v2940 = vpop.f32.mrf.mxu0
      %v2941 = vadd.f32 %v2790, %v2940
      %2942 = vmatmul.bf16.gmra.mxu0 %v1404
      %v2943 = vpop.f32.mrf.mxu0
      %v2944 = vadd.f32 %v2793, %v2943
      %v2945 = vpop.f32.mrf.mxu0
      %v2946 = vadd.f32 %v2795, %v2945
      %2947 = vmatmul.bf16.gmra.mxu0 %v1408
      %v2948 = vpop.f32.mrf.mxu0
      %v2949 = vadd.f32 %v2798, %v2948
      %v2950 = vpop.f32.mrf.mxu0
      %v2951 = vadd.f32 %v2800, %v2950
      %2952 = vmatmul.bf16.gmra.mxu0 %v1412
      %v2953 = vpop.f32.mrf.mxu0
      %v2954 = vadd.f32 %v2803, %v2953
      %v2955 = vpop.f32.mrf.mxu0
      %v2956 = vadd.f32 %v2805, %v2955
      %2957 = vmatmul.bf16.gmra.mxu0 %v1416
      %v2958 = vpop.f32.mrf.mxu0
      %v2959 = vadd.f32 %v2808, %v2958
      %v2960 = vpop.f32.mrf.mxu0
      %v2961 = vadd.f32 %v2810, %v2960
      %2962 = vmatmul.bf16.gmra.mxu0 %v1420
      %v2963 = vpop.f32.mrf.mxu0
      %v2964 = vadd.f32 %v2813, %v2963
      %v2965 = vpop.f32.mrf.mxu0
      %v2966 = vadd.f32 %v2815, %v2965
      %2967 = vmatmul.bf16.gmra.mxu0 %v1424
      %v2968 = vpop.f32.mrf.mxu0
      %v2969 = vadd.f32 %v2818, %v2968
      %v2970 = vpop.f32.mrf.mxu0
      %v2971 = vadd.f32 %v2820, %v2970
      %2972 = vmatmul.bf16.gmra.mxu0 %v1428
      %v2973 = vpop.f32.mrf.mxu0
      %v2974 = vadd.f32 %v2823, %v2973
      %v2975 = vpop.f32.mrf.mxu0
      %v2976 = vadd.f32 %v2825, %v2975
      %2977 = vmatmul.bf16.gmra.mxu0 %v1432
      %v2978 = vpop.f32.mrf.mxu0
      %v2979 = vadd.f32 %v2828, %v2978
      %v2980 = vpop.f32.mrf.mxu0
      %v2981 = vadd.f32 %v2830, %v2980
      %2982 = vmatmul.bf16.gmra.mxu0 %v1436
      %v2983 = vpop.f32.mrf.mxu0
      %v2984 = vadd.f32 %v2833, %v2983
      %v2985 = vpop.f32.mrf.mxu0
      %v2986 = vadd.f32 %v2835, %v2985
      %2987 = vmatmul.bf16.gmra.mxu0 %v1440
      %v2988 = vpop.f32.mrf.mxu0
      %v2989 = vadd.f32 %v2838, %v2988
      %v2990 = vpop.f32.mrf.mxu0
      %v2991 = vadd.f32 %v2840, %v2990
      %2992 = vmatmul.bf16.gmra.mxu0 %v1444
      %v2993 = vpop.f32.mrf.mxu0
      %v2994 = vadd.f32 %v2843, %v2993
      %v2995 = vpop.f32.mrf.mxu0
      %v2996 = vadd.f32 %v2845, %v2995
      %2997 = vmatmul.bf16.gmra.mxu0 %v1448
      %v2998 = vpop.f32.mrf.mxu0
      %v2999 = vadd.f32 %v2848, %v2998
      %v3000 = vpop.f32.mrf.mxu0
      %v3001 = vadd.f32 %v2850, %v3000
      %3002 = vmatmul.bf16.gmra.mxu0 %v1452
      %v3003 = vpop.f32.mrf.mxu0
      %v3004 = vadd.f32 %v2853, %v3003
      %v3005 = vpop.f32.mrf.mxu0
      %v3006 = vadd.f32 %v2855, %v3005
      %3007 = vmatmul.bf16.gmra.mxu0 %v1456
      %v3008 = vpop.f32.mrf.mxu0
      %v3009 = vadd.f32 %v2858, %v3008
      %v3010 = vpop.f32.mrf.mxu0
      %v3011 = vadd.f32 %v2860, %v3010
      %3012 = vmatmul.bf16.gmra.mxu0 %v1460
      %v3013 = vpop.f32.mrf.mxu0
      %v3014 = vadd.f32 %v2863, %v3013
      %v3015 = vpop.f32.mrf.mxu0
      %v3016 = vadd.f32 %v2865, %v3015
      %3017 = vmatmul.bf16.gmra.mxu0 %v1464
      %v3018 = vpop.f32.mrf.mxu0
      %v3019 = vadd.f32 %v2868, %v3018
      %v3020 = vpop.f32.mrf.mxu0
      %v3021 = vadd.f32 %v2870, %v3020
      %3022 = vmatmul.bf16.gmra.mxu0 %v1468
      %v3023 = vpop.f32.mrf.mxu0
      %v3024 = vadd.f32 %v2873, %v3023
      %v3025 = vpop.f32.mrf.mxu0
      %v3026 = vadd.f32 %v2875, %v3025
      %3027 = vmatmul.bf16.gmra.mxu0 %v1472
      %v3028 = vpop.f32.mrf.mxu0
      %v3029 = vadd.f32 %v2878, %v3028
      %v3030 = vpop.f32.mrf.mxu0
      %v3031 = vadd.f32 %v2880, %v3030
      %3032 = vmatmul.bf16.gmra.mxu0 %v1476
      %v3033 = vpop.f32.mrf.mxu0
      %v3034 = vadd.f32 %v2883, %v3033
      %v3035 = vpop.f32.mrf.mxu0
      %v3036 = vadd.f32 %v2885, %v3035
      %3037 = vmatmul.bf16.gmra.mxu0 %v1480
      %v3038 = vpop.f32.mrf.mxu0
      %v3039 = vadd.f32 %v2888, %v3038
      %v3040 = vpop.f32.mrf.mxu0
      %v3041 = vadd.f32 %v2890, %v3040
      %3042 = vmatmul.bf16.gmra.mxu0 %v1484
      %v3043 = vpop.f32.mrf.mxu0
      %v3044 = vadd.f32 %v2893, %v3043
      %v3045 = vpop.f32.mrf.mxu0
      %v3046 = vadd.f32 %v2895, %v3045
      %3047 = vmatmul.bf16.gmra.mxu0 %v1488
      %v3048 = vpop.f32.mrf.mxu0
      %v3049 = vadd.f32 %v2898, %v3048
      %v3050 = vpop.f32.mrf.mxu0
      %v3051 = vadd.f32 %v2900, %v3050
      %3052 = vmatmul.bf16.gmra.mxu0 %v1492
      %v3053 = vpop.f32.mrf.mxu0
      %v3054 = vadd.f32 %v2903, %v3053
      %v3055 = vpop.f32.mrf.mxu0
      %3056 = vmatmul.bf16.gmra.mxu0 %v1496
      %v3057 = vpop.f32.mrf.mxu0
      %v3058 = vpop.f32.mrf.mxu0
      %3059 = vdwg.mxu0
      %3060 = vmatpush.bf16.msra.mxu0 0
      %3061 = vmatpush.bf16.msra.mxu0 0
      %3062 = vmatpush.bf16.msra.mxu0 0
      %3063 = vmatpush.bf16.msra.mxu0 0
      %3064 = vmatpush.bf16.msra.mxu0 %v2650
      %3065 = vmatpush.bf16.msra.mxu0 %v2649
      %3066 = vmatpush.bf16.msra.mxu0 %v2648
      %3067 = vmatpush.bf16.msra.mxu0 %v2647
      %3068 = vmatmul.bf16.gmra.mxu0 %v2672
      %v3069 = vpop.f32.mrf.mxu0
      %v3070 = vadd.f32 %v2919, %v3069
      %v3071 = vpop.f32.mrf.mxu0
      %v3072 = vadd.f32 %v2921, %v3071
      %3073 = vmatmul.bf16.gmra.mxu0 %v2675
      %v3074 = vpop.f32.mrf.mxu0
      %v3075 = vadd.f32 %v2924, %v3074
      %v3076 = vpop.f32.mrf.mxu0
      %v3077 = vadd.f32 %v2926, %v3076
      %3078 = vmatmul.bf16.gmra.mxu0 %v2678
      %v3079 = vpop.f32.mrf.mxu0
      %v3080 = vadd.f32 %v2929, %v3079
      %v3081 = vpop.f32.mrf.mxu0
      %v3082 = vadd.f32 %v2931, %v3081
      %3083 = vmatmul.bf16.gmra.mxu0 %v2681
      %v3084 = vpop.f32.mrf.mxu0
      %v3085 = vadd.f32 %v2934, %v3084
      %v3086 = vpop.f32.mrf.mxu0
      %v3087 = vadd.f32 %v2936, %v3086
      %3088 = vmatmul.bf16.gmra.mxu0 %v2684
      %v3089 = vpop.f32.mrf.mxu0
      %v3090 = vadd.f32 %v2939, %v3089
      %v3091 = vpop.f32.mrf.mxu0
      %v3092 = vadd.f32 %v2941, %v3091
      %3093 = vmatmul.bf16.gmra.mxu0 %v2687
      %v3094 = vpop.f32.mrf.mxu0
      %v3095 = vadd.f32 %v2944, %v3094
      %v3096 = vpop.f32.mrf.mxu0
      %v3097 = vadd.f32 %v2946, %v3096
      %3098 = vmatmul.bf16.gmra.mxu0 %v2690
      %v3099 = vpop.f32.mrf.mxu0
      %v3100 = vadd.f32 %v2949, %v3099
      %v3101 = vpop.f32.mrf.mxu0
      %v3102 = vadd.f32 %v2951, %v3101
      %3103 = vmatmul.bf16.gmra.mxu0 %v2693
      %v3104 = vpop.f32.mrf.mxu0
      %v3105 = vadd.f32 %v2954, %v3104
      %v3106 = vpop.f32.mrf.mxu0
      %v3107 = vadd.f32 %v2956, %v3106
      %3108 = vmatmul.bf16.gmra.mxu0 %v2696
      %v3109 = vpop.f32.mrf.mxu0
      %v3110 = vadd.f32 %v2959, %v3109
      %v3111 = vpop.f32.mrf.mxu0
      %v3112 = vadd.f32 %v2961, %v3111
      %3113 = vmatmul.bf16.gmra.mxu0 %v2699
      %v3114 = vpop.f32.mrf.mxu0
      %v3115 = vadd.f32 %v2964, %v3114
      %v3116 = vpop.f32.mrf.mxu0
      %v3117 = vadd.f32 %v2966, %v3116
      %3118 = vmatmul.bf16.gmra.mxu0 %v2702
      %v3119 = vpop.f32.mrf.mxu0
      %v3120 = vadd.f32 %v2969, %v3119
      %v3121 = vpop.f32.mrf.mxu0
      %v3122 = vadd.f32 %v2971, %v3121
      %3123 = vmatmul.bf16.gmra.mxu0 %v2705
      %v3124 = vpop.f32.mrf.mxu0
      %v3125 = vadd.f32 %v2974, %v3124
      %v3126 = vpop.f32.mrf.mxu0
      %v3127 = vadd.f32 %v2976, %v3126
      %3128 = vmatmul.bf16.gmra.mxu0 %v2708
      %v3129 = vpop.f32.mrf.mxu0
      %v3130 = vadd.f32 %v2979, %v3129
      %v3131 = vpop.f32.mrf.mxu0
      %v3132 = vadd.f32 %v2981, %v3131
      %3133 = vmatmul.bf16.gmra.mxu0 %v2711
      %v3134 = vpop.f32.mrf.mxu0
      %v3135 = vadd.f32 %v2984, %v3134
      %v3136 = vpop.f32.mrf.mxu0
      %v3137 = vadd.f32 %v2986, %v3136
      %3138 = vmatmul.bf16.gmra.mxu0 %v2714
      %v3139 = vpop.f32.mrf.mxu0
      %v3140 = vadd.f32 %v2989, %v3139
      %v3141 = vpop.f32.mrf.mxu0
      %v3142 = vadd.f32 %v2991, %v3141
      %3143 = vmatmul.bf16.gmra.mxu0 %v2717
      %v3144 = vpop.f32.mrf.mxu0
      %v3145 = vadd.f32 %v2994, %v3144
      %v3146 = vpop.f32.mrf.mxu0
      %v3147 = vadd.f32 %v2996, %v3146
      %3148 = vmatmul.bf16.gmra.mxu0 %v2720
      %v3149 = vpop.f32.mrf.mxu0
      %v3150 = vadd.f32 %v2999, %v3149
      %v3151 = vpop.f32.mrf.mxu0
      %v3152 = vadd.f32 %v3001, %v3151
      %3153 = vmatmul.bf16.gmra.mxu0 %v2723
      %v3154 = vpop.f32.mrf.mxu0
      %v3155 = vadd.f32 %v3004, %v3154
      %v3156 = vpop.f32.mrf.mxu0
      %v3157 = vadd.f32 %v3006, %v3156
      %3158 = vmatmul.bf16.gmra.mxu0 %v2726
      %v3159 = vpop.f32.mrf.mxu0
      %v3160 = vadd.f32 %v3009, %v3159
      %v3161 = vpop.f32.mrf.mxu0
      %v3162 = vadd.f32 %v3011, %v3161
      %3163 = vmatmul.bf16.gmra.mxu0 %v2729
      %v3164 = vpop.f32.mrf.mxu0
      %v3165 = vadd.f32 %v3014, %v3164
      %v3166 = vpop.f32.mrf.mxu0
      %v3167 = vadd.f32 %v3016, %v3166
      %3168 = vmatmul.bf16.gmra.mxu0 %v2732
      %v3169 = vpop.f32.mrf.mxu0
      %v3170 = vadd.f32 %v3019, %v3169
      %v3171 = vpop.f32.mrf.mxu0
      %v3172 = vadd.f32 %v3021, %v3171
      %3173 = vmatmul.bf16.gmra.mxu0 %v2735
      %v3174 = vpop.f32.mrf.mxu0
      %v3175 = vadd.f32 %v3024, %v3174
      %v3176 = vpop.f32.mrf.mxu0
      %v3177 = vadd.f32 %v3026, %v3176
      %3178 = vmatmul.bf16.gmra.mxu0 %v2738
      %v3179 = vpop.f32.mrf.mxu0
      %v3180 = vadd.f32 %v3029, %v3179
      %v3181 = vpop.f32.mrf.mxu0
      %v3182 = vadd.f32 %v3031, %v3181
      %3183 = vmatmul.bf16.gmra.mxu0 %v2741
      %v3184 = vpop.f32.mrf.mxu0
      %v3185 = vadd.f32 %v3034, %v3184
      %v3186 = vpop.f32.mrf.mxu0
      %v3187 = vadd.f32 %v3036, %v3186
      %3188 = vmatmul.bf16.gmra.mxu0 %v2744
      %v3189 = vpop.f32.mrf.mxu0
      %v3190 = vadd.f32 %v3039, %v3189
      %v3191 = vpop.f32.mrf.mxu0
      %v3192 = vadd.f32 %v3041, %v3191
      %3193 = vmatmul.bf16.gmra.mxu0 %v2747
      %v3194 = vpop.f32.mrf.mxu0
      %v3195 = vadd.f32 %v3044, %v3194
      %v3196 = vpop.f32.mrf.mxu0
      %v3197 = vadd.f32 %v3046, %v3196
      %3198 = vmatmul.bf16.gmra.mxu0 %v2750
      %v3199 = vpop.f32.mrf.mxu0
      %v3200 = vadd.f32 %v3049, %v3199
      %v3201 = vpop.f32.mrf.mxu0
      %v3202 = vadd.f32 %v3051, %v3201
      %3203 = vmatmul.bf16.gmra.mxu0 %v2753
      %v3204 = vpop.f32.mrf.mxu0
      %v3205 = vadd.f32 %v3054, %v3204
      %v3206 = vpop.f32.mrf.mxu0
      %3207 = vmatmul.bf16.gmra.mxu0 %v2756
      %v3208 = vpop.f32.mrf.mxu0
      %v3209 = vpop.f32.mrf.mxu0
      %3210 = vdwg.mxu0
      %s3211 = scalar_lea.vmem %s1, 320
      %v3212 = vld [vmem:[%s3211] sm:$0xf]
      %v3213 = vld [vmem:[%s3211 + $0x4] sm:$0xf]
      %v3214 = vld [vmem:[%s3211 + $0x8] sm:$0xf]
      %v3215 = vld [vmem:[%s3211 + $0xc] sm:$0xf]
      %v3216 = vld [vmem:[%s3211 + $0x10] sm:$0xf]
      %v3217 = vld [vmem:[%s3211 + $0x14] sm:$0xf]
      %v3218 = vld [vmem:[%s3211 + $0x18] sm:$0xf]
      %v3219 = vld [vmem:[%s3211 + $0x1c] sm:$0xf]
      %v3220 = vld [vmem:[%s3211 + $0x20] sm:$0xf]
      %v3221 = vld [vmem:[%s3211 + $0x24] sm:$0xf]
      %v3222 = vld [vmem:[%s3211 + $0x28] sm:$0xf]
      %v3223 = vld [vmem:[%s3211 + $0x2c] sm:$0xf]
      %v3224 = vld [vmem:[%s3211 + $0x30] sm:$0xf]
      %v3225 = vld [vmem:[%s3211 + $0x34] sm:$0xf]
      %v3226 = vld [vmem:[%s3211 + $0x38] sm:$0xf]
      %v3227 = vld [vmem:[%s3211 + $0x3c] sm:$0xf]
      %v3228 = vld [vmem:[%s3211 + $0x40] sm:$0xf]
      %v3229 = vld [vmem:[%s3211 + $0x44] sm:$0xf]
      %v3230 = vld [vmem:[%s3211 + $0x48] sm:$0xf]
      %v3231 = vld [vmem:[%s3211 + $0x4c] sm:$0xf]
      %v3232 = vld [vmem:[%s3211 + $0x50] sm:$0xf]
      %v3233 = vld [vmem:[%s3211 + $0x54] sm:$0xf]
      %v3234 = vld [vmem:[%s3211 + $0x58] sm:$0xf]
      %v3235 = vld [vmem:[%s3211 + $0x5c] sm:$0xf]
      %v3236 = vld [vmem:[%s3211 + $0x60] sm:$0xf]
      %v3237 = vld [vmem:[%s3211 + $0x64] sm:$0xf]
      %v3238 = vld [vmem:[%s3211 + $0x68] sm:$0xf]
      %v3239 = vld [vmem:[%s3211 + $0x6c] sm:$0xf]
      %v3240 = vld [vmem:[%s3211 + $0x70] sm:$0xf]
      %v3241 = vld [vmem:[%s3211 + $0x74] sm:$0xf]
      %v3242 = vld [vmem:[%s3211 + $0x78] sm:$0xf]
      %v3243 = vld [vmem:[%s3211 + $0x7c] sm:$0xf]
      %v3244 = vld [vmem:[%s3211 + $0x80] sm:$0xf]
      %v3245 = vld [vmem:[%s3211 + $0x84] sm:$0xf]
      %v3246 = vld [vmem:[%s3211 + $0x88] sm:$0xf]
      %v3247 = vld [vmem:[%s3211 + $0x8c] sm:$0xf]
      %v3248 = vld [vmem:[%s3211 + $0x90] sm:$0xf]
      %v3249 = vld [vmem:[%s3211 + $0x94] sm:$0xf]
      %v3250 = vld [vmem:[%s3211 + $0x98] sm:$0xf]
      %v3251 = vld [vmem:[%s3211 + $0x9c] sm:$0xf]
      %v3292 = vunpack.c.l.b16 %v3212
      %v3293 = vunpack.c.l.b16 %v3213
      %v3294 = vunpack.c.l.b16 %v3214
      %v3295 = vunpack.c.l.b16 %v3215
      %v3296 = vunpack.c.l.b16 %v3216
      %v3297 = vunpack.c.l.b16 %v3217
      %v3298 = vunpack.c.l.b16 %v3218
      %v3299 = vunpack.c.l.b16 %v3219
      %v3300 = vunpack.c.l.b16 %v3220
      %v3301 = vunpack.c.l.b16 %v3221
      %v3302 = vunpack.c.l.b16 %v3222
      %v3303 = vunpack.c.l.b16 %v3223
      %v3304 = vunpack.c.l.b16 %v3224
      %v3305 = vunpack.c.l.b16 %v3225
      %v3306 = vunpack.c.l.b16 %v3226
      %v3307 = vunpack.c.l.b16 %v3227
      %v3308 = vunpack.c.l.b16 %v3228
      %v3309 = vunpack.c.l.b16 %v3229
      %v3310 = vunpack.c.l.b16 %v3230
      %v3311 = vunpack.c.l.b16 %v3231
      %v3312 = vunpack.c.l.b16 %v3232
      %v3313 = vunpack.c.l.b16 %v3233
      %v3314 = vunpack.c.l.b16 %v3234
      %v3315 = vunpack.c.l.b16 %v3235
      %v3316 = vunpack.c.l.b16 %v3236
      %v3317 = vunpack.c.l.b16 %v3237
      %v3318 = vunpack.c.l.b16 %v3238
      %v3319 = vunpack.c.l.b16 %v3239
      %v3320 = vunpack.c.l.b16 %v3240
      %v3321 = vunpack.c.l.b16 %v3241
      %v3322 = vunpack.c.l.b16 %v3242
      %v3323 = vunpack.c.l.b16 %v3243
      %v3324 = vunpack.c.l.b16 %v3244
      %v3325 = vunpack.c.l.b16 %v3245
      %v3326 = vunpack.c.l.b16 %v3246
      %v3327 = vunpack.c.l.b16 %v3247
      %v3328 = vunpack.c.l.b16 %v3248
      %v3329 = vunpack.c.l.b16 %v3249
      %v3330 = vunpack.c.l.b16 %v3250
      %v3331 = vunpack.c.l.b16 %v3251
      %v3332 = vpack.c.b16 %v3293, %v3292
      %v3333 = vpack.c.b16 %v3295, %v3294
      %v3334 = vpack.c.b16 %v3297, %v3296
      %v3335 = vpack.c.b16 %v3299, %v3298
      %v3336 = vpack.c.b16 %v3301, %v3300
      %v3337 = vpack.c.b16 %v3303, %v3302
      %v3338 = vpack.c.b16 %v3305, %v3304
      %v3339 = vpack.c.b16 %v3307, %v3306
      %v3340 = vpack.c.b16 %v3309, %v3308
      %v3341 = vpack.c.b16 %v3311, %v3310
      %v3342 = vpack.c.b16 %v3313, %v3312
      %v3343 = vpack.c.b16 %v3315, %v3314
      %v3344 = vpack.c.b16 %v3317, %v3316
      %v3345 = vpack.c.b16 %v3319, %v3318
      %v3346 = vpack.c.b16 %v3321, %v3320
      %v3347 = vpack.c.b16 %v3323, %v3322
      %v3348 = vpack.c.b16 %v3325, %v3324
      %v3349 = vpack.c.b16 %v3327, %v3326
      %v3350 = vpack.c.b16 %v3329, %v3328
      %v3351 = vpack.c.b16 %v3331, %v3330
      %v3373 = vsel %vm1275, %v1266, 0
      %v3376 = vsel %vm1275, %v1268, 0
      %v3379 = vsel %vm1275, %v1270, 0
      %3381 = vmatpush.bf16.msra.mxu0 %v3339
      %3382 = vmatpush.bf16.msra.mxu0 %v3338
      %3383 = vmatpush.bf16.msra.mxu0 %v3337
      %3384 = vmatpush.bf16.msra.mxu0 %v3336
      %3385 = vmatpush.bf16.msra.mxu0 %v3335
      %3386 = vmatpush.bf16.msra.mxu0 %v3334
      %3387 = vmatpush.bf16.msra.mxu0 %v3333
      %3388 = vmatpush.bf16.msra.mxu0 %v3332
      %3389 = vmatmul.bf16.gmra.mxu0 %v1286
      %v3390 = vpop.f32.mrf.mxu0
      %v3391 = vadd.f32 0.0, %v3390
      %v3392 = vpop.f32.mrf.mxu0
      %v3393 = vadd.f32 0.0, %v3392
      %3394 = vmatmul.bf16.gmra.mxu0 %v1289
      %v3395 = vpop.f32.mrf.mxu0
      %v3396 = vadd.f32 0.0, %v3395
      %v3397 = vpop.f32.mrf.mxu0
      %v3398 = vadd.f32 0.0, %v3397
      %3399 = vmatmul.bf16.gmra.mxu0 %v1292
      %v3400 = vpop.f32.mrf.mxu0
      %v3401 = vadd.f32 0.0, %v3400
      %v3402 = vpop.f32.mrf.mxu0
      %v3403 = vadd.f32 0.0, %v3402
      %3404 = vmatmul.bf16.gmra.mxu0 %v1295
      %v3405 = vpop.f32.mrf.mxu0
      %v3406 = vadd.f32 0.0, %v3405
      %v3407 = vpop.f32.mrf.mxu0
      %v3408 = vadd.f32 0.0, %v3407
      %3409 = vmatmul.bf16.gmra.mxu0 %v1298
      %v3410 = vpop.f32.mrf.mxu0
      %v3411 = vadd.f32 0.0, %v3410
      %v3412 = vpop.f32.mrf.mxu0
      %v3413 = vadd.f32 0.0, %v3412
      %3414 = vmatmul.bf16.gmra.mxu0 %v1301
      %v3415 = vpop.f32.mrf.mxu0
      %v3416 = vadd.f32 0.0, %v3415
      %v3417 = vpop.f32.mrf.mxu0
      %v3418 = vadd.f32 0.0, %v3417
      %3419 = vmatmul.bf16.gmra.mxu0 %v1304
      %v3420 = vpop.f32.mrf.mxu0
      %v3421 = vadd.f32 0.0, %v3420
      %v3422 = vpop.f32.mrf.mxu0
      %v3423 = vadd.f32 0.0, %v3422
      %3424 = vmatmul.bf16.gmra.mxu0 %v1307
      %v3425 = vpop.f32.mrf.mxu0
      %v3426 = vadd.f32 0.0, %v3425
      %v3427 = vpop.f32.mrf.mxu0
      %v3428 = vadd.f32 0.0, %v3427
      %3429 = vmatmul.bf16.gmra.mxu0 %v1310
      %v3430 = vpop.f32.mrf.mxu0
      %v3431 = vadd.f32 0.0, %v3430
      %v3432 = vpop.f32.mrf.mxu0
      %v3433 = vadd.f32 0.0, %v3432
      %3434 = vmatmul.bf16.gmra.mxu0 %v1313
      %v3435 = vpop.f32.mrf.mxu0
      %v3436 = vadd.f32 0.0, %v3435
      %v3437 = vpop.f32.mrf.mxu0
      %v3438 = vadd.f32 0.0, %v3437
      %3439 = vmatmul.bf16.gmra.mxu0 %v1316
      %v3440 = vpop.f32.mrf.mxu0
      %v3441 = vadd.f32 0.0, %v3440
      %v3442 = vpop.f32.mrf.mxu0
      %v3443 = vadd.f32 0.0, %v3442
      %3444 = vmatmul.bf16.gmra.mxu0 %v1319
      %v3445 = vpop.f32.mrf.mxu0
      %v3446 = vadd.f32 0.0, %v3445
      %v3447 = vpop.f32.mrf.mxu0
      %v3448 = vadd.f32 0.0, %v3447
      %3449 = vmatmul.bf16.gmra.mxu0 %v1322
      %v3450 = vpop.f32.mrf.mxu0
      %v3451 = vadd.f32 0.0, %v3450
      %v3452 = vpop.f32.mrf.mxu0
      %v3453 = vadd.f32 0.0, %v3452
      %3454 = vmatmul.bf16.gmra.mxu0 %v1325
      %v3455 = vpop.f32.mrf.mxu0
      %v3456 = vadd.f32 0.0, %v3455
      %v3457 = vpop.f32.mrf.mxu0
      %v3458 = vadd.f32 0.0, %v3457
      %3459 = vmatmul.bf16.gmra.mxu0 %v1328
      %v3460 = vpop.f32.mrf.mxu0
      %v3461 = vadd.f32 0.0, %v3460
      %v3462 = vpop.f32.mrf.mxu0
      %v3463 = vadd.f32 0.0, %v3462
      %3464 = vmatmul.bf16.gmra.mxu0 %v1331
      %v3465 = vpop.f32.mrf.mxu0
      %v3466 = vadd.f32 0.0, %v3465
      %v3467 = vpop.f32.mrf.mxu0
      %v3468 = vadd.f32 0.0, %v3467
      %3469 = vmatmul.bf16.gmra.mxu0 %v1334
      %v3470 = vpop.f32.mrf.mxu0
      %v3471 = vadd.f32 0.0, %v3470
      %v3472 = vpop.f32.mrf.mxu0
      %v3473 = vadd.f32 0.0, %v3472
      %3474 = vmatmul.bf16.gmra.mxu0 %v1337
      %v3475 = vpop.f32.mrf.mxu0
      %v3476 = vadd.f32 0.0, %v3475
      %v3477 = vpop.f32.mrf.mxu0
      %v3478 = vadd.f32 0.0, %v3477
      %3479 = vmatmul.bf16.gmra.mxu0 %v1340
      %v3480 = vpop.f32.mrf.mxu0
      %v3481 = vadd.f32 0.0, %v3480
      %v3482 = vpop.f32.mrf.mxu0
      %v3483 = vadd.f32 0.0, %v3482
      %3484 = vmatmul.bf16.gmra.mxu0 %v1343
      %v3485 = vpop.f32.mrf.mxu0
      %v3486 = vadd.f32 0.0, %v3485
      %v3487 = vpop.f32.mrf.mxu0
      %v3488 = vadd.f32 0.0, %v3487
      %3489 = vmatmul.bf16.gmra.mxu0 %v1346
      %v3490 = vpop.f32.mrf.mxu0
      %v3491 = vadd.f32 0.0, %v3490
      %v3492 = vpop.f32.mrf.mxu0
      %v3493 = vadd.f32 0.0, %v3492
      %3494 = vmatmul.bf16.gmra.mxu0 %v1349
      %v3495 = vpop.f32.mrf.mxu0
      %v3496 = vadd.f32 0.0, %v3495
      %v3497 = vpop.f32.mrf.mxu0
      %v3498 = vadd.f32 0.0, %v3497
      %3499 = vmatmul.bf16.gmra.mxu0 %v1352
      %v3500 = vpop.f32.mrf.mxu0
      %v3501 = vadd.f32 0.0, %v3500
      %v3502 = vpop.f32.mrf.mxu0
      %v3503 = vadd.f32 0.0, %v3502
      %3504 = vmatmul.bf16.gmra.mxu0 %v1355
      %v3505 = vpop.f32.mrf.mxu0
      %v3506 = vadd.f32 0.0, %v3505
      %v3507 = vpop.f32.mrf.mxu0
      %v3508 = vadd.f32 0.0, %v3507
      %3509 = vmatmul.bf16.gmra.mxu0 %v1358
      %v3510 = vpop.f32.mrf.mxu0
      %v3511 = vadd.f32 0.0, %v3510
      %v3512 = vpop.f32.mrf.mxu0
      %v3513 = vadd.f32 0.0, %v3512
      %3514 = vmatmul.bf16.gmra.mxu0 %v1361
      %v3515 = vpop.f32.mrf.mxu0
      %v3516 = vadd.f32 0.0, %v3515
      %v3517 = vpop.f32.mrf.mxu0
      %v3518 = vadd.f32 0.0, %v3517
      %3519 = vmatmul.bf16.gmra.mxu0 %v1364
      %v3520 = vpop.f32.mrf.mxu0
      %v3521 = vadd.f32 0.0, %v3520
      %v3522 = vpop.f32.mrf.mxu0
      %v3523 = vadd.f32 0.0, %v3522
      %3524 = vmatmul.bf16.gmra.mxu0 %v1367
      %v3525 = vpop.f32.mrf.mxu0
      %v3526 = vadd.f32 0.0, %v3525
      %v3527 = vpop.f32.mrf.mxu0
      %3528 = vmatmul.bf16.gmra.mxu0 %v1370
      %v3529 = vpop.f32.mrf.mxu0
      %v3530 = vpop.f32.mrf.mxu0
      %3531 = vdwg.mxu0
      %3532 = vmatpush.bf16.msra.mxu0 %v3347
      %3533 = vmatpush.bf16.msra.mxu0 %v3346
      %3534 = vmatpush.bf16.msra.mxu0 %v3345
      %3535 = vmatpush.bf16.msra.mxu0 %v3344
      %3536 = vmatpush.bf16.msra.mxu0 %v3343
      %3537 = vmatpush.bf16.msra.mxu0 %v3342
      %3538 = vmatpush.bf16.msra.mxu0 %v3341
      %3539 = vmatpush.bf16.msra.mxu0 %v3340
      %3540 = vmatmul.bf16.gmra.mxu0 %v1396
      %v3541 = vpop.f32.mrf.mxu0
      %v3542 = vadd.f32 %v3391, %v3541
      %v3543 = vpop.f32.mrf.mxu0
      %v3544 = vadd.f32 %v3393, %v3543
      %3545 = vmatmul.bf16.gmra.mxu0 %v1400
      %v3546 = vpop.f32.mrf.mxu0
      %v3547 = vadd.f32 %v3396, %v3546
      %v3548 = vpop.f32.mrf.mxu0
      %v3549 = vadd.f32 %v3398, %v3548
      %3550 = vmatmul.bf16.gmra.mxu0 %v1404
      %v3551 = vpop.f32.mrf.mxu0
      %v3552 = vadd.f32 %v3401, %v3551
      %v3553 = vpop.f32.mrf.mxu0
      %v3554 = vadd.f32 %v3403, %v3553
      %3555 = vmatmul.bf16.gmra.mxu0 %v1408
      %v3556 = vpop.f32.mrf.mxu0
      %v3557 = vadd.f32 %v3406, %v3556
      %v3558 = vpop.f32.mrf.mxu0
      %v3559 = vadd.f32 %v3408, %v3558
      %3560 = vmatmul.bf16.gmra.mxu0 %v1412
      %v3561 = vpop.f32.mrf.mxu0
      %v3562 = vadd.f32 %v3411, %v3561
      %v3563 = vpop.f32.mrf.mxu0
      %v3564 = vadd.f32 %v3413, %v3563
      %3565 = vmatmul.bf16.gmra.mxu0 %v1416
      %v3566 = vpop.f32.mrf.mxu0
      %v3567 = vadd.f32 %v3416, %v3566
      %v3568 = vpop.f32.mrf.mxu0
      %v3569 = vadd.f32 %v3418, %v3568
      %3570 = vmatmul.bf16.gmra.mxu0 %v1420
      %v3571 = vpop.f32.mrf.mxu0
      %v3572 = vadd.f32 %v3421, %v3571
      %v3573 = vpop.f32.mrf.mxu0
      %v3574 = vadd.f32 %v3423, %v3573
      %3575 = vmatmul.bf16.gmra.mxu0 %v1424
      %v3576 = vpop.f32.mrf.mxu0
      %v3577 = vadd.f32 %v3426, %v3576
      %v3578 = vpop.f32.mrf.mxu0
      %v3579 = vadd.f32 %v3428, %v3578
      %3580 = vmatmul.bf16.gmra.mxu0 %v1428
      %v3581 = vpop.f32.mrf.mxu0
      %v3582 = vadd.f32 %v3431, %v3581
      %v3583 = vpop.f32.mrf.mxu0
      %v3584 = vadd.f32 %v3433, %v3583
      %3585 = vmatmul.bf16.gmra.mxu0 %v1432
      %v3586 = vpop.f32.mrf.mxu0
      %v3587 = vadd.f32 %v3436, %v3586
      %v3588 = vpop.f32.mrf.mxu0
      %v3589 = vadd.f32 %v3438, %v3588
      %3590 = vmatmul.bf16.gmra.mxu0 %v1436
      %v3591 = vpop.f32.mrf.mxu0
      %v3592 = vadd.f32 %v3441, %v3591
      %v3593 = vpop.f32.mrf.mxu0
      %v3594 = vadd.f32 %v3443, %v3593
      %3595 = vmatmul.bf16.gmra.mxu0 %v1440
      %v3596 = vpop.f32.mrf.mxu0
      %v3597 = vadd.f32 %v3446, %v3596
      %v3598 = vpop.f32.mrf.mxu0
      %v3599 = vadd.f32 %v3448, %v3598
      %3600 = vmatmul.bf16.gmra.mxu0 %v1444
      %v3601 = vpop.f32.mrf.mxu0
      %v3602 = vadd.f32 %v3451, %v3601
      %v3603 = vpop.f32.mrf.mxu0
      %v3604 = vadd.f32 %v3453, %v3603
      %3605 = vmatmul.bf16.gmra.mxu0 %v1448
      %v3606 = vpop.f32.mrf.mxu0
      %v3607 = vadd.f32 %v3456, %v3606
      %v3608 = vpop.f32.mrf.mxu0
      %v3609 = vadd.f32 %v3458, %v3608
      %3610 = vmatmul.bf16.gmra.mxu0 %v1452
      %v3611 = vpop.f32.mrf.mxu0
      %v3612 = vadd.f32 %v3461, %v3611
      %v3613 = vpop.f32.mrf.mxu0
      %v3614 = vadd.f32 %v3463, %v3613
      %3615 = vmatmul.bf16.gmra.mxu0 %v1456
      %v3616 = vpop.f32.mrf.mxu0
      %v3617 = vadd.f32 %v3466, %v3616
      %v3618 = vpop.f32.mrf.mxu0
      %v3619 = vadd.f32 %v3468, %v3618
      %3620 = vmatmul.bf16.gmra.mxu0 %v1460
      %v3621 = vpop.f32.mrf.mxu0
      %v3622 = vadd.f32 %v3471, %v3621
      %v3623 = vpop.f32.mrf.mxu0
      %v3624 = vadd.f32 %v3473, %v3623
      %3625 = vmatmul.bf16.gmra.mxu0 %v1464
      %v3626 = vpop.f32.mrf.mxu0
      %v3627 = vadd.f32 %v3476, %v3626
      %v3628 = vpop.f32.mrf.mxu0
      %v3629 = vadd.f32 %v3478, %v3628
      %3630 = vmatmul.bf16.gmra.mxu0 %v1468
      %v3631 = vpop.f32.mrf.mxu0
      %v3632 = vadd.f32 %v3481, %v3631
      %v3633 = vpop.f32.mrf.mxu0
      %v3634 = vadd.f32 %v3483, %v3633
      %3635 = vmatmul.bf16.gmra.mxu0 %v1472
      %v3636 = vpop.f32.mrf.mxu0
      %v3637 = vadd.f32 %v3486, %v3636
      %v3638 = vpop.f32.mrf.mxu0
      %v3639 = vadd.f32 %v3488, %v3638
      %3640 = vmatmul.bf16.gmra.mxu0 %v1476
      %v3641 = vpop.f32.mrf.mxu0
      %v3642 = vadd.f32 %v3491, %v3641
      %v3643 = vpop.f32.mrf.mxu0
      %v3644 = vadd.f32 %v3493, %v3643
      %3645 = vmatmul.bf16.gmra.mxu0 %v1480
      %v3646 = vpop.f32.mrf.mxu0
      %v3647 = vadd.f32 %v3496, %v3646
      %v3648 = vpop.f32.mrf.mxu0
      %v3649 = vadd.f32 %v3498, %v3648
      %3650 = vmatmul.bf16.gmra.mxu0 %v1484
      %v3651 = vpop.f32.mrf.mxu0
      %v3652 = vadd.f32 %v3501, %v3651
      %v3653 = vpop.f32.mrf.mxu0
      %v3654 = vadd.f32 %v3503, %v3653
      %3655 = vmatmul.bf16.gmra.mxu0 %v1488
      %v3656 = vpop.f32.mrf.mxu0
      %v3657 = vadd.f32 %v3506, %v3656
      %v3658 = vpop.f32.mrf.mxu0
      %v3659 = vadd.f32 %v3508, %v3658
      %3660 = vmatmul.bf16.gmra.mxu0 %v1492
      %v3661 = vpop.f32.mrf.mxu0
      %v3662 = vadd.f32 %v3511, %v3661
      %v3663 = vpop.f32.mrf.mxu0
      %v3664 = vadd.f32 %v3513, %v3663
      %3665 = vmatmul.bf16.gmra.mxu0 %v1496
      %v3666 = vpop.f32.mrf.mxu0
      %v3667 = vadd.f32 %v3516, %v3666
      %v3668 = vpop.f32.mrf.mxu0
      %v3669 = vadd.f32 %v3518, %v3668
      %3670 = vmatmul.bf16.gmra.mxu0 %v1500
      %v3671 = vpop.f32.mrf.mxu0
      %v3672 = vadd.f32 %v3521, %v3671
      %v3673 = vpop.f32.mrf.mxu0
      %v3674 = vadd.f32 %v3523, %v3673
      %3675 = vmatmul.bf16.gmra.mxu0 %v1504
      %v3676 = vpop.f32.mrf.mxu0
      %v3677 = vadd.f32 %v3526, %v3676
      %v3678 = vpop.f32.mrf.mxu0
      %3679 = vmatmul.bf16.gmra.mxu0 %v1508
      %v3680 = vpop.f32.mrf.mxu0
      %v3681 = vpop.f32.mrf.mxu0
      %3682 = vdwg.mxu0
      %3683 = vmatpush.bf16.msra.mxu0 0
      %3684 = vmatpush.bf16.msra.mxu0 0
      %3685 = vmatpush.bf16.msra.mxu0 0
      %3686 = vmatpush.bf16.msra.mxu0 0
      %3687 = vmatpush.bf16.msra.mxu0 %v3351
      %3688 = vmatpush.bf16.msra.mxu0 %v3350
      %3689 = vmatpush.bf16.msra.mxu0 %v3349
      %3690 = vmatpush.bf16.msra.mxu0 %v3348
      %3691 = vmatmul.bf16.gmra.mxu0 %v2681
      %v3692 = vpop.f32.mrf.mxu0
      %v3693 = vadd.f32 %v3542, %v3692
      %v3694 = vpop.f32.mrf.mxu0
      %v3695 = vadd.f32 %v3544, %v3694
      %3696 = vmatmul.bf16.gmra.mxu0 %v2684
      %v3697 = vpop.f32.mrf.mxu0
      %v3698 = vadd.f32 %v3547, %v3697
      %v3699 = vpop.f32.mrf.mxu0
      %v3700 = vadd.f32 %v3549, %v3699
      %3701 = vmatmul.bf16.gmra.mxu0 %v2687
      %v3702 = vpop.f32.mrf.mxu0
      %v3703 = vadd.f32 %v3552, %v3702
      %v3704 = vpop.f32.mrf.mxu0
      %v3705 = vadd.f32 %v3554, %v3704
      %3706 = vmatmul.bf16.gmra.mxu0 %v2690
      %v3707 = vpop.f32.mrf.mxu0
      %v3708 = vadd.f32 %v3557, %v3707
      %v3709 = vpop.f32.mrf.mxu0
      %v3710 = vadd.f32 %v3559, %v3709
      %3711 = vmatmul.bf16.gmra.mxu0 %v2693
      %v3712 = vpop.f32.mrf.mxu0
      %v3713 = vadd.f32 %v3562, %v3712
      %v3714 = vpop.f32.mrf.mxu0
      %v3715 = vadd.f32 %v3564, %v3714
      %3716 = vmatmul.bf16.gmra.mxu0 %v2696
      %v3717 = vpop.f32.mrf.mxu0
      %v3718 = vadd.f32 %v3567, %v3717
      %v3719 = vpop.f32.mrf.mxu0
      %v3720 = vadd.f32 %v3569, %v3719
      %3721 = vmatmul.bf16.gmra.mxu0 %v2699
      %v3722 = vpop.f32.mrf.mxu0
      %v3723 = vadd.f32 %v3572, %v3722
      %v3724 = vpop.f32.mrf.mxu0
      %v3725 = vadd.f32 %v3574, %v3724
      %3726 = vmatmul.bf16.gmra.mxu0 %v2702
      %v3727 = vpop.f32.mrf.mxu0
      %v3728 = vadd.f32 %v3577, %v3727
      %v3729 = vpop.f32.mrf.mxu0
      %v3730 = vadd.f32 %v3579, %v3729
      %3731 = vmatmul.bf16.gmra.mxu0 %v2705
      %v3732 = vpop.f32.mrf.mxu0
      %v3733 = vadd.f32 %v3582, %v3732
      %v3734 = vpop.f32.mrf.mxu0
      %v3735 = vadd.f32 %v3584, %v3734
      %3736 = vmatmul.bf16.gmra.mxu0 %v2708
      %v3737 = vpop.f32.mrf.mxu0
      %v3738 = vadd.f32 %v3587, %v3737
      %v3739 = vpop.f32.mrf.mxu0
      %v3740 = vadd.f32 %v3589, %v3739
      %3741 = vmatmul.bf16.gmra.mxu0 %v2711
      %v3742 = vpop.f32.mrf.mxu0
      %v3743 = vadd.f32 %v3592, %v3742
      %v3744 = vpop.f32.mrf.mxu0
      %v3745 = vadd.f32 %v3594, %v3744
      %3746 = vmatmul.bf16.gmra.mxu0 %v2714
      %v3747 = vpop.f32.mrf.mxu0
      %v3748 = vadd.f32 %v3597, %v3747
      %v3749 = vpop.f32.mrf.mxu0
      %v3750 = vadd.f32 %v3599, %v3749
      %3751 = vmatmul.bf16.gmra.mxu0 %v2717
      %v3752 = vpop.f32.mrf.mxu0
      %v3753 = vadd.f32 %v3602, %v3752
      %v3754 = vpop.f32.mrf.mxu0
      %v3755 = vadd.f32 %v3604, %v3754
      %3756 = vmatmul.bf16.gmra.mxu0 %v2720
      %v3757 = vpop.f32.mrf.mxu0
      %v3758 = vadd.f32 %v3607, %v3757
      %v3759 = vpop.f32.mrf.mxu0
      %v3760 = vadd.f32 %v3609, %v3759
      %3761 = vmatmul.bf16.gmra.mxu0 %v2723
      %v3762 = vpop.f32.mrf.mxu0
      %v3763 = vadd.f32 %v3612, %v3762
      %v3764 = vpop.f32.mrf.mxu0
      %v3765 = vadd.f32 %v3614, %v3764
      %3766 = vmatmul.bf16.gmra.mxu0 %v2726
      %v3767 = vpop.f32.mrf.mxu0
      %v3768 = vadd.f32 %v3617, %v3767
      %v3769 = vpop.f32.mrf.mxu0
      %v3770 = vadd.f32 %v3619, %v3769
      %3771 = vmatmul.bf16.gmra.mxu0 %v2729
      %v3772 = vpop.f32.mrf.mxu0
      %v3773 = vadd.f32 %v3622, %v3772
      %v3774 = vpop.f32.mrf.mxu0
      %v3775 = vadd.f32 %v3624, %v3774
      %3776 = vmatmul.bf16.gmra.mxu0 %v2732
      %v3777 = vpop.f32.mrf.mxu0
      %v3778 = vadd.f32 %v3627, %v3777
      %v3779 = vpop.f32.mrf.mxu0
      %v3780 = vadd.f32 %v3629, %v3779
      %3781 = vmatmul.bf16.gmra.mxu0 %v2735
      %v3782 = vpop.f32.mrf.mxu0
      %v3783 = vadd.f32 %v3632, %v3782
      %v3784 = vpop.f32.mrf.mxu0
      %v3785 = vadd.f32 %v3634, %v3784
      %3786 = vmatmul.bf16.gmra.mxu0 %v2738
      %v3787 = vpop.f32.mrf.mxu0
      %v3788 = vadd.f32 %v3637, %v3787
      %v3789 = vpop.f32.mrf.mxu0
      %v3790 = vadd.f32 %v3639, %v3789
      %3791 = vmatmul.bf16.gmra.mxu0 %v2741
      %v3792 = vpop.f32.mrf.mxu0
      %v3793 = vadd.f32 %v3642, %v3792
      %v3794 = vpop.f32.mrf.mxu0
      %v3795 = vadd.f32 %v3644, %v3794
      %3796 = vmatmul.bf16.gmra.mxu0 %v2744
      %v3797 = vpop.f32.mrf.mxu0
      %v3798 = vadd.f32 %v3647, %v3797
      %v3799 = vpop.f32.mrf.mxu0
      %v3800 = vadd.f32 %v3649, %v3799
      %3801 = vmatmul.bf16.gmra.mxu0 %v2747
      %v3802 = vpop.f32.mrf.mxu0
      %v3803 = vadd.f32 %v3652, %v3802
      %v3804 = vpop.f32.mrf.mxu0
      %v3805 = vadd.f32 %v3654, %v3804
      %3806 = vmatmul.bf16.gmra.mxu0 %v2750
      %v3807 = vpop.f32.mrf.mxu0
      %v3808 = vadd.f32 %v3657, %v3807
      %v3809 = vpop.f32.mrf.mxu0
      %v3810 = vadd.f32 %v3659, %v3809
      %3811 = vmatmul.bf16.gmra.mxu0 %v2753
      %v3812 = vpop.f32.mrf.mxu0
      %v3813 = vadd.f32 %v3662, %v3812
      %v3814 = vpop.f32.mrf.mxu0
      %v3815 = vadd.f32 %v3664, %v3814
      %3816 = vmatmul.bf16.gmra.mxu0 %v2756
      %v3817 = vpop.f32.mrf.mxu0
      %v3818 = vadd.f32 %v3667, %v3817
      %v3819 = vpop.f32.mrf.mxu0
      %v3820 = vadd.f32 %v3669, %v3819
      %3821 = vmatmul.bf16.gmra.mxu0 %v3373
      %v3822 = vpop.f32.mrf.mxu0
      %v3823 = vadd.f32 %v3672, %v3822
      %v3824 = vpop.f32.mrf.mxu0
      %v3825 = vadd.f32 %v3674, %v3824
      %3826 = vmatmul.bf16.gmra.mxu0 %v3376
      %v3827 = vpop.f32.mrf.mxu0
      %v3828 = vadd.f32 %v3677, %v3827
      %v3829 = vpop.f32.mrf.mxu0
      %3830 = vmatmul.bf16.gmra.mxu0 %v3379
      %v3831 = vpop.f32.mrf.mxu0
      %v3832 = vpop.f32.mrf.mxu0
      %3833 = vdwg.mxu0
      %v3834 = vadd.f32 %v3070, %v3693
      %v3835 = vadd.f32 %v3072, %v3695
      %v3836 = vadd.f32 %v3075, %v3698
      %v3837 = vadd.f32 %v3077, %v3700
      %v3838 = vadd.f32 %v3080, %v3703
      %v3839 = vadd.f32 %v3082, %v3705
      %v3840 = vadd.f32 %v3085, %v3708
      %v3841 = vadd.f32 %v3087, %v3710
      %v3842 = vadd.f32 %v3090, %v3713
      %v3843 = vadd.f32 %v3092, %v3715
      %v3844 = vadd.f32 %v3095, %v3718
      %v3845 = vadd.f32 %v3097, %v3720
      %v3846 = vadd.f32 %v3100, %v3723
      %v3847 = vadd.f32 %v3102, %v3725
      %v3848 = vadd.f32 %v3105, %v3728
      %v3849 = vadd.f32 %v3107, %v3730
      %v3850 = vadd.f32 %v3110, %v3733
      %v3851 = vadd.f32 %v3112, %v3735
      %v3852 = vadd.f32 %v3115, %v3738
      %v3853 = vadd.f32 %v3117, %v3740
      %v3854 = vadd.f32 %v3120, %v3743
      %v3855 = vadd.f32 %v3122, %v3745
      %v3856 = vadd.f32 %v3125, %v3748
      %v3857 = vadd.f32 %v3127, %v3750
      %v3858 = vadd.f32 %v3130, %v3753
      %v3859 = vadd.f32 %v3132, %v3755
      %v3860 = vadd.f32 %v3135, %v3758
      %v3861 = vadd.f32 %v3137, %v3760
      %v3862 = vadd.f32 %v3140, %v3763
      %v3863 = vadd.f32 %v3142, %v3765
      %v3864 = vadd.f32 %v3145, %v3768
      %v3865 = vadd.f32 %v3147, %v3770
      %v3866 = vadd.f32 %v3150, %v3773
      %v3867 = vadd.f32 %v3152, %v3775
      %v3868 = vadd.f32 %v3155, %v3778
      %v3869 = vadd.f32 %v3157, %v3780
      %v3870 = vadd.f32 %v3160, %v3783
      %v3871 = vadd.f32 %v3162, %v3785
      %v3872 = vadd.f32 %v3165, %v3788
      %v3873 = vadd.f32 %v3167, %v3790
      %v3874 = vadd.f32 %v3170, %v3793
      %v3875 = vadd.f32 %v3172, %v3795
      %v3876 = vadd.f32 %v3175, %v3798
      %v3877 = vadd.f32 %v3177, %v3800
      %v3878 = vadd.f32 %v3180, %v3803
      %v3879 = vadd.f32 %v3182, %v3805
      %v3880 = vadd.f32 %v3185, %v3808
      %v3881 = vadd.f32 %v3187, %v3810
      %v3882 = vadd.f32 %v3190, %v3813
      %v3883 = vadd.f32 %v3192, %v3815
      %v3884 = vadd.f32 %v3195, %v3818
      %v3885 = vadd.f32 %v3197, %v3820
      %v3886 = vadd.f32 %v3200, %v3823
      %v3887 = vadd.f32 %v3202, %v3825
      %v3888 = vadd.f32 %v3205, %v3828
      %s3889 = scalar_lea.vmem %s1, 480
      %v3890 = vld [vmem:[%s3889] sm:$0xf]
      %v3891 = vld [vmem:[%s3889 + $0x4] sm:$0xf]
      %v3892 = vld [vmem:[%s3889 + $0x8] sm:$0xf]
      %v3893 = vld [vmem:[%s3889 + $0xc] sm:$0xf]
      %v3894 = vld [vmem:[%s3889 + $0x10] sm:$0xf]
      %v3895 = vld [vmem:[%s3889 + $0x14] sm:$0xf]
      %v3896 = vld [vmem:[%s3889 + $0x18] sm:$0xf]
      %v3897 = vld [vmem:[%s3889 + $0x1c] sm:$0xf]
      %v3898 = vld [vmem:[%s3889 + $0x20] sm:$0xf]
      %v3899 = vld [vmem:[%s3889 + $0x24] sm:$0xf]
      %v3900 = vld [vmem:[%s3889 + $0x28] sm:$0xf]
      %v3901 = vld [vmem:[%s3889 + $0x2c] sm:$0xf]
      %v3902 = vld [vmem:[%s3889 + $0x30] sm:$0xf]
      %v3903 = vld [vmem:[%s3889 + $0x34] sm:$0xf]
      %v3904 = vld [vmem:[%s3889 + $0x38] sm:$0xf]
      %v3905 = vld [vmem:[%s3889 + $0x3c] sm:$0xf]
      %v3906 = vld [vmem:[%s3889 + $0x40] sm:$0xf]
      %v3907 = vld [vmem:[%s3889 + $0x44] sm:$0xf]
      %v3908 = vld [vmem:[%s3889 + $0x48] sm:$0xf]
      %v3909 = vld [vmem:[%s3889 + $0x4c] sm:$0xf]
      %v3910 = vld [vmem:[%s3889 + $0x50] sm:$0xf]
      %v3911 = vld [vmem:[%s3889 + $0x54] sm:$0xf]
      %v3912 = vld [vmem:[%s3889 + $0x58] sm:$0xf]
      %v3913 = vld [vmem:[%s3889 + $0x5c] sm:$0xf]
      %v3914 = vld [vmem:[%s3889 + $0x60] sm:$0xf]
      %v3915 = vld [vmem:[%s3889 + $0x64] sm:$0xf]
      %v3916 = vld [vmem:[%s3889 + $0x68] sm:$0xf]
      %v3917 = vld [vmem:[%s3889 + $0x6c] sm:$0xf]
      %v3918 = vld [vmem:[%s3889 + $0x70] sm:$0xf]
      %v3919 = vld [vmem:[%s3889 + $0x74] sm:$0xf]
      %v3920 = vld [vmem:[%s3889 + $0x78] sm:$0xf]
      %v3921 = vld [vmem:[%s3889 + $0x7c] sm:$0xf]
      %v3922 = vld [vmem:[%s3889 + $0x80] sm:$0xf]
      %v3923 = vld [vmem:[%s3889 + $0x84] sm:$0xf]
      %v3924 = vld [vmem:[%s3889 + $0x88] sm:$0xf]
      %v3925 = vld [vmem:[%s3889 + $0x8c] sm:$0xf]
      %v3926 = vld [vmem:[%s3889 + $0x90] sm:$0xf]
      %v3927 = vld [vmem:[%s3889 + $0x94] sm:$0xf]
      %v3928 = vld [vmem:[%s3889 + $0x98] sm:$0xf]
      %v3929 = vld [vmem:[%s3889 + $0x9c] sm:$0xf]
      %v3936 = vrot.slane %v1367, 4
      %v3937 = vsel %vm1661, %v1827, %v3936
      %v3938 = vrot.slane %v1504, 4
      %v3939 = vsel %vm1661, %v1829, %v3938
      %v3940 = vrot.slane %v1268, 4
      %v3941 = vsel %vm1661, %v1831, %v3940
      %v3942 = vrot.slane %v1370, 4
      %v3943 = vsel %vm1661, %v3936, %v3942
      %v3944 = vrot.slane %v1508, 4
      %v3945 = vsel %vm1661, %v3938, %v3944
      %v3946 = vrot.slane %v1270, 4
      %v3947 = vsel %vm1661, %v3940, %v3946
      %v3948 = vrot.slane %v1373, 4
      %v3949 = vsel %vm1661, %v3942, %v3948
      %v3950 = vrot.slane %v1512, 4
      %v3951 = vsel %vm1661, %v3944, %v3950
      %v3952 = vrot.slane %v1272, 4
      %v3953 = vsel %vm1661, %v3946, %v3952
      %v4002 = vunpack.c.l.b16 %v3890
      %v4003 = vunpack.c.l.b16 %v3891
      %v4004 = vunpack.c.l.b16 %v3892
      %v4005 = vunpack.c.l.b16 %v3893
      %v4006 = vunpack.c.l.b16 %v3894
      %v4007 = vunpack.c.l.b16 %v3895
      %v4008 = vunpack.c.l.b16 %v3896
      %v4009 = vunpack.c.l.b16 %v3897
      %v4010 = vunpack.c.l.b16 %v3898
      %v4011 = vunpack.c.l.b16 %v3899
      %v4012 = vunpack.c.l.b16 %v3900
      %v4013 = vunpack.c.l.b16 %v3901
      %v4014 = vunpack.c.l.b16 %v3902
      %v4015 = vunpack.c.l.b16 %v3903
      %v4016 = vunpack.c.l.b16 %v3904
      %v4017 = vunpack.c.l.b16 %v3905
      %v4018 = vunpack.c.l.b16 %v3906
      %v4019 = vunpack.c.l.b16 %v3907
      %v4020 = vunpack.c.l.b16 %v3908
      %v4021 = vunpack.c.l.b16 %v3909
      %v4022 = vunpack.c.l.b16 %v3910
      %v4023 = vunpack.c.l.b16 %v3911
      %v4024 = vunpack.c.l.b16 %v3912
      %v4025 = vunpack.c.l.b16 %v3913
      %v4026 = vunpack.c.l.b16 %v3914
      %v4027 = vunpack.c.l.b16 %v3915
      %v4028 = vunpack.c.l.b16 %v3916
      %v4029 = vunpack.c.l.b16 %v3917
      %v4030 = vunpack.c.l.b16 %v3918
      %v4031 = vunpack.c.l.b16 %v3919
      %v4032 = vunpack.c.l.b16 %v3920
      %v4033 = vunpack.c.l.b16 %v3921
      %v4034 = vunpack.c.l.b16 %v3922
      %v4035 = vunpack.c.l.b16 %v3923
      %v4036 = vunpack.c.l.b16 %v3924
      %v4037 = vunpack.c.l.b16 %v3925
      %v4038 = vunpack.c.l.b16 %v3926
      %v4039 = vunpack.c.l.b16 %v3927
      %v4040 = vunpack.c.l.b16 %v3928
      %v4041 = vunpack.c.l.b16 %v3929
      %v4042 = vpack.c.b16 %v4003, %v4002
      %v4043 = vpack.c.b16 %v4005, %v4004
      %v4044 = vpack.c.b16 %v4007, %v4006
      %v4045 = vpack.c.b16 %v4009, %v4008
      %v4046 = vpack.c.b16 %v4011, %v4010
      %v4047 = vpack.c.b16 %v4013, %v4012
      %v4048 = vpack.c.b16 %v4015, %v4014
      %v4049 = vpack.c.b16 %v4017, %v4016
      %v4050 = vpack.c.b16 %v4019, %v4018
      %v4051 = vpack.c.b16 %v4021, %v4020
      %v4052 = vpack.c.b16 %v4023, %v4022
      %v4053 = vpack.c.b16 %v4025, %v4024
      %v4054 = vpack.c.b16 %v4027, %v4026
      %v4055 = vpack.c.b16 %v4029, %v4028
      %v4056 = vpack.c.b16 %v4031, %v4030
      %v4057 = vpack.c.b16 %v4033, %v4032
      %v4058 = vpack.c.b16 %v4035, %v4034
      %v4059 = vpack.c.b16 %v4037, %v4036
      %v4060 = vpack.c.b16 %v4039, %v4038
      %v4061 = vpack.c.b16 %v4041, %v4040
      %v4083 = vsel %vm1275, %v3941, 0
      %v4086 = vsel %vm1275, %v3947, 0
      %v4089 = vsel %vm1275, %v3953, 0
      %v4092 = vsel %vm1275, %v3952, 0
      %4094 = vmatpush.bf16.msra.mxu0 %v4049
      %4095 = vmatpush.bf16.msra.mxu0 %v4048
      %4096 = vmatpush.bf16.msra.mxu0 %v4047
      %4097 = vmatpush.bf16.msra.mxu0 %v4046
      %4098 = vmatpush.bf16.msra.mxu0 %v4045
      %4099 = vmatpush.bf16.msra.mxu0 %v4044
      %4100 = vmatpush.bf16.msra.mxu0 %v4043
      %4101 = vmatpush.bf16.msra.mxu0 %v4042
      %4102 = vmatmul.bf16.gmra.mxu0 %v1684
      %v4103 = vpop.f32.mrf.mxu0
      %v4104 = vadd.f32 0.0, %v4103
      %v4105 = vpop.f32.mrf.mxu0
      %v4106 = vadd.f32 0.0, %v4105
      %4107 = vmatmul.bf16.gmra.mxu0 %v1690
      %v4108 = vpop.f32.mrf.mxu0
      %v4109 = vadd.f32 0.0, %v4108
      %v4110 = vpop.f32.mrf.mxu0
      %v4111 = vadd.f32 0.0, %v4110
      %4112 = vmatmul.bf16.gmra.mxu0 %v1696
      %v4113 = vpop.f32.mrf.mxu0
      %v4114 = vadd.f32 0.0, %v4113
      %v4115 = vpop.f32.mrf.mxu0
      %v4116 = vadd.f32 0.0, %v4115
      %4117 = vmatmul.bf16.gmra.mxu0 %v1702
      %v4118 = vpop.f32.mrf.mxu0
      %v4119 = vadd.f32 0.0, %v4118
      %v4120 = vpop.f32.mrf.mxu0
      %v4121 = vadd.f32 0.0, %v4120
      %4122 = vmatmul.bf16.gmra.mxu0 %v1708
      %v4123 = vpop.f32.mrf.mxu0
      %v4124 = vadd.f32 0.0, %v4123
      %v4125 = vpop.f32.mrf.mxu0
      %v4126 = vadd.f32 0.0, %v4125
      %4127 = vmatmul.bf16.gmra.mxu0 %v1714
      %v4128 = vpop.f32.mrf.mxu0
      %v4129 = vadd.f32 0.0, %v4128
      %v4130 = vpop.f32.mrf.mxu0
      %v4131 = vadd.f32 0.0, %v4130
      %4132 = vmatmul.bf16.gmra.mxu0 %v1720
      %v4133 = vpop.f32.mrf.mxu0
      %v4134 = vadd.f32 0.0, %v4133
      %v4135 = vpop.f32.mrf.mxu0
      %v4136 = vadd.f32 0.0, %v4135
      %4137 = vmatmul.bf16.gmra.mxu0 %v1726
      %v4138 = vpop.f32.mrf.mxu0
      %v4139 = vadd.f32 0.0, %v4138
      %v4140 = vpop.f32.mrf.mxu0
      %v4141 = vadd.f32 0.0, %v4140
      %4142 = vmatmul.bf16.gmra.mxu0 %v1732
      %v4143 = vpop.f32.mrf.mxu0
      %v4144 = vadd.f32 0.0, %v4143
      %v4145 = vpop.f32.mrf.mxu0
      %v4146 = vadd.f32 0.0, %v4145
      %4147 = vmatmul.bf16.gmra.mxu0 %v1738
      %v4148 = vpop.f32.mrf.mxu0
      %v4149 = vadd.f32 0.0, %v4148
      %v4150 = vpop.f32.mrf.mxu0
      %v4151 = vadd.f32 0.0, %v4150
      %4152 = vmatmul.bf16.gmra.mxu0 %v1744
      %v4153 = vpop.f32.mrf.mxu0
      %v4154 = vadd.f32 0.0, %v4153
      %v4155 = vpop.f32.mrf.mxu0
      %v4156 = vadd.f32 0.0, %v4155
      %4157 = vmatmul.bf16.gmra.mxu0 %v1750
      %v4158 = vpop.f32.mrf.mxu0
      %v4159 = vadd.f32 0.0, %v4158
      %v4160 = vpop.f32.mrf.mxu0
      %v4161 = vadd.f32 0.0, %v4160
      %4162 = vmatmul.bf16.gmra.mxu0 %v1756
      %v4163 = vpop.f32.mrf.mxu0
      %v4164 = vadd.f32 0.0, %v4163
      %v4165 = vpop.f32.mrf.mxu0
      %v4166 = vadd.f32 0.0, %v4165
      %4167 = vmatmul.bf16.gmra.mxu0 %v1762
      %v4168 = vpop.f32.mrf.mxu0
      %v4169 = vadd.f32 0.0, %v4168
      %v4170 = vpop.f32.mrf.mxu0
      %v4171 = vadd.f32 0.0, %v4170
      %4172 = vmatmul.bf16.gmra.mxu0 %v1768
      %v4173 = vpop.f32.mrf.mxu0
      %v4174 = vadd.f32 0.0, %v4173
      %v4175 = vpop.f32.mrf.mxu0
      %v4176 = vadd.f32 0.0, %v4175
      %4177 = vmatmul.bf16.gmra.mxu0 %v1774
      %v4178 = vpop.f32.mrf.mxu0
      %v4179 = vadd.f32 0.0, %v4178
      %v4180 = vpop.f32.mrf.mxu0
      %v4181 = vadd.f32 0.0, %v4180
      %4182 = vmatmul.bf16.gmra.mxu0 %v1780
      %v4183 = vpop.f32.mrf.mxu0
      %v4184 = vadd.f32 0.0, %v4183
      %v4185 = vpop.f32.mrf.mxu0
      %v4186 = vadd.f32 0.0, %v4185
      %4187 = vmatmul.bf16.gmra.mxu0 %v1786
      %v4188 = vpop.f32.mrf.mxu0
      %v4189 = vadd.f32 0.0, %v4188
      %v4190 = vpop.f32.mrf.mxu0
      %v4191 = vadd.f32 0.0, %v4190
      %4192 = vmatmul.bf16.gmra.mxu0 %v1792
      %v4193 = vpop.f32.mrf.mxu0
      %v4194 = vadd.f32 0.0, %v4193
      %v4195 = vpop.f32.mrf.mxu0
      %v4196 = vadd.f32 0.0, %v4195
      %4197 = vmatmul.bf16.gmra.mxu0 %v1798
      %v4198 = vpop.f32.mrf.mxu0
      %v4199 = vadd.f32 0.0, %v4198
      %v4200 = vpop.f32.mrf.mxu0
      %v4201 = vadd.f32 0.0, %v4200
      %4202 = vmatmul.bf16.gmra.mxu0 %v1804
      %v4203 = vpop.f32.mrf.mxu0
      %v4204 = vadd.f32 0.0, %v4203
      %v4205 = vpop.f32.mrf.mxu0
      %v4206 = vadd.f32 0.0, %v4205
      %4207 = vmatmul.bf16.gmra.mxu0 %v1810
      %v4208 = vpop.f32.mrf.mxu0
      %v4209 = vadd.f32 0.0, %v4208
      %v4210 = vpop.f32.mrf.mxu0
      %v4211 = vadd.f32 0.0, %v4210
      %4212 = vmatmul.bf16.gmra.mxu0 %v1816
      %v4213 = vpop.f32.mrf.mxu0
      %v4214 = vadd.f32 0.0, %v4213
      %v4215 = vpop.f32.mrf.mxu0
      %v4216 = vadd.f32 0.0, %v4215
      %4217 = vmatmul.bf16.gmra.mxu0 %v1822
      %v4218 = vpop.f32.mrf.mxu0
      %v4219 = vadd.f32 0.0, %v4218
      %v4220 = vpop.f32.mrf.mxu0
      %v4221 = vadd.f32 0.0, %v4220
      %4222 = vmatmul.bf16.gmra.mxu0 %v1828
      %v4223 = vpop.f32.mrf.mxu0
      %v4224 = vadd.f32 0.0, %v4223
      %v4225 = vpop.f32.mrf.mxu0
      %v4226 = vadd.f32 0.0, %v4225
      %4227 = vmatmul.bf16.gmra.mxu0 %v3937
      %v4228 = vpop.f32.mrf.mxu0
      %v4229 = vadd.f32 0.0, %v4228
      %v4230 = vpop.f32.mrf.mxu0
      %v4231 = vadd.f32 0.0, %v4230
      %4232 = vmatmul.bf16.gmra.mxu0 %v3943
      %v4233 = vpop.f32.mrf.mxu0
      %v4234 = vadd.f32 0.0, %v4233
      %v4235 = vpop.f32.mrf.mxu0
      %v4236 = vadd.f32 0.0, %v4235
      %4237 = vmatmul.bf16.gmra.mxu0 %v3949
      %v4238 = vpop.f32.mrf.mxu0
      %v4239 = vadd.f32 0.0, %v4238
      %v4240 = vpop.f32.mrf.mxu0
      %4241 = vmatmul.bf16.gmra.mxu0 %v3948
      %v4242 = vpop.f32.mrf.mxu0
      %v4243 = vpop.f32.mrf.mxu0
      %4244 = vdwg.mxu0
      %4245 = vmatpush.bf16.msra.mxu0 %v4057
      %4246 = vmatpush.bf16.msra.mxu0 %v4056
      %4247 = vmatpush.bf16.msra.mxu0 %v4055
      %4248 = vmatpush.bf16.msra.mxu0 %v4054
      %4249 = vmatpush.bf16.msra.mxu0 %v4053
      %4250 = vmatpush.bf16.msra.mxu0 %v4052
      %4251 = vmatpush.bf16.msra.mxu0 %v4051
      %4252 = vmatpush.bf16.msra.mxu0 %v4050
      %4253 = vmatmul.bf16.gmra.mxu0 %v1686
      %v4254 = vpop.f32.mrf.mxu0
      %v4255 = vadd.f32 %v4104, %v4254
      %v4256 = vpop.f32.mrf.mxu0
      %v4257 = vadd.f32 %v4106, %v4256
      %4258 = vmatmul.bf16.gmra.mxu0 %v1692
      %v4259 = vpop.f32.mrf.mxu0
      %v4260 = vadd.f32 %v4109, %v4259
      %v4261 = vpop.f32.mrf.mxu0
      %v4262 = vadd.f32 %v4111, %v4261
      %4263 = vmatmul.bf16.gmra.mxu0 %v1698
      %v4264 = vpop.f32.mrf.mxu0
      %v4265 = vadd.f32 %v4114, %v4264
      %v4266 = vpop.f32.mrf.mxu0
      %v4267 = vadd.f32 %v4116, %v4266
      %4268 = vmatmul.bf16.gmra.mxu0 %v1704
      %v4269 = vpop.f32.mrf.mxu0
      %v4270 = vadd.f32 %v4119, %v4269
      %v4271 = vpop.f32.mrf.mxu0
      %v4272 = vadd.f32 %v4121, %v4271
      %4273 = vmatmul.bf16.gmra.mxu0 %v1710
      %v4274 = vpop.f32.mrf.mxu0
      %v4275 = vadd.f32 %v4124, %v4274
      %v4276 = vpop.f32.mrf.mxu0
      %v4277 = vadd.f32 %v4126, %v4276
      %4278 = vmatmul.bf16.gmra.mxu0 %v1716
      %v4279 = vpop.f32.mrf.mxu0
      %v4280 = vadd.f32 %v4129, %v4279
      %v4281 = vpop.f32.mrf.mxu0
      %v4282 = vadd.f32 %v4131, %v4281
      %4283 = vmatmul.bf16.gmra.mxu0 %v1722
      %v4284 = vpop.f32.mrf.mxu0
      %v4285 = vadd.f32 %v4134, %v4284
      %v4286 = vpop.f32.mrf.mxu0
      %v4287 = vadd.f32 %v4136, %v4286
      %4288 = vmatmul.bf16.gmra.mxu0 %v1728
      %v4289 = vpop.f32.mrf.mxu0
      %v4290 = vadd.f32 %v4139, %v4289
      %v4291 = vpop.f32.mrf.mxu0
      %v4292 = vadd.f32 %v4141, %v4291
      %4293 = vmatmul.bf16.gmra.mxu0 %v1734
      %v4294 = vpop.f32.mrf.mxu0
      %v4295 = vadd.f32 %v4144, %v4294
      %v4296 = vpop.f32.mrf.mxu0
      %v4297 = vadd.f32 %v4146, %v4296
      %4298 = vmatmul.bf16.gmra.mxu0 %v1740
      %v4299 = vpop.f32.mrf.mxu0
      %v4300 = vadd.f32 %v4149, %v4299
      %v4301 = vpop.f32.mrf.mxu0
      %v4302 = vadd.f32 %v4151, %v4301
      %4303 = vmatmul.bf16.gmra.mxu0 %v1746
      %v4304 = vpop.f32.mrf.mxu0
      %v4305 = vadd.f32 %v4154, %v4304
      %v4306 = vpop.f32.mrf.mxu0
      %v4307 = vadd.f32 %v4156, %v4306
      %4308 = vmatmul.bf16.gmra.mxu0 %v1752
      %v4309 = vpop.f32.mrf.mxu0
      %v4310 = vadd.f32 %v4159, %v4309
      %v4311 = vpop.f32.mrf.mxu0
      %v4312 = vadd.f32 %v4161, %v4311
      %4313 = vmatmul.bf16.gmra.mxu0 %v1758
      %v4314 = vpop.f32.mrf.mxu0
      %v4315 = vadd.f32 %v4164, %v4314
      %v4316 = vpop.f32.mrf.mxu0
      %v4317 = vadd.f32 %v4166, %v4316
      %4318 = vmatmul.bf16.gmra.mxu0 %v1764
      %v4319 = vpop.f32.mrf.mxu0
      %v4320 = vadd.f32 %v4169, %v4319
      %v4321 = vpop.f32.mrf.mxu0
      %v4322 = vadd.f32 %v4171, %v4321
      %4323 = vmatmul.bf16.gmra.mxu0 %v1770
      %v4324 = vpop.f32.mrf.mxu0
      %v4325 = vadd.f32 %v4174, %v4324
      %v4326 = vpop.f32.mrf.mxu0
      %v4327 = vadd.f32 %v4176, %v4326
      %4328 = vmatmul.bf16.gmra.mxu0 %v1776
      %v4329 = vpop.f32.mrf.mxu0
      %v4330 = vadd.f32 %v4179, %v4329
      %v4331 = vpop.f32.mrf.mxu0
      %v4332 = vadd.f32 %v4181, %v4331
      %4333 = vmatmul.bf16.gmra.mxu0 %v1782
      %v4334 = vpop.f32.mrf.mxu0
      %v4335 = vadd.f32 %v4184, %v4334
      %v4336 = vpop.f32.mrf.mxu0
      %v4337 = vadd.f32 %v4186, %v4336
      %4338 = vmatmul.bf16.gmra.mxu0 %v1788
      %v4339 = vpop.f32.mrf.mxu0
      %v4340 = vadd.f32 %v4189, %v4339
      %v4341 = vpop.f32.mrf.mxu0
      %v4342 = vadd.f32 %v4191, %v4341
      %4343 = vmatmul.bf16.gmra.mxu0 %v1794
      %v4344 = vpop.f32.mrf.mxu0
      %v4345 = vadd.f32 %v4194, %v4344
      %v4346 = vpop.f32.mrf.mxu0
      %v4347 = vadd.f32 %v4196, %v4346
      %4348 = vmatmul.bf16.gmra.mxu0 %v1800
      %v4349 = vpop.f32.mrf.mxu0
      %v4350 = vadd.f32 %v4199, %v4349
      %v4351 = vpop.f32.mrf.mxu0
      %v4352 = vadd.f32 %v4201, %v4351
      %4353 = vmatmul.bf16.gmra.mxu0 %v1806
      %v4354 = vpop.f32.mrf.mxu0
      %v4355 = vadd.f32 %v4204, %v4354
      %v4356 = vpop.f32.mrf.mxu0
      %v4357 = vadd.f32 %v4206, %v4356
      %4358 = vmatmul.bf16.gmra.mxu0 %v1812
      %v4359 = vpop.f32.mrf.mxu0
      %v4360 = vadd.f32 %v4209, %v4359
      %v4361 = vpop.f32.mrf.mxu0
      %v4362 = vadd.f32 %v4211, %v4361
      %4363 = vmatmul.bf16.gmra.mxu0 %v1818
      %v4364 = vpop.f32.mrf.mxu0
      %v4365 = vadd.f32 %v4214, %v4364
      %v4366 = vpop.f32.mrf.mxu0
      %v4367 = vadd.f32 %v4216, %v4366
      %4368 = vmatmul.bf16.gmra.mxu0 %v1824
      %v4369 = vpop.f32.mrf.mxu0
      %v4370 = vadd.f32 %v4219, %v4369
      %v4371 = vpop.f32.mrf.mxu0
      %v4372 = vadd.f32 %v4221, %v4371
      %4373 = vmatmul.bf16.gmra.mxu0 %v1830
      %v4374 = vpop.f32.mrf.mxu0
      %v4375 = vadd.f32 %v4224, %v4374
      %v4376 = vpop.f32.mrf.mxu0
      %v4377 = vadd.f32 %v4226, %v4376
      %4378 = vmatmul.bf16.gmra.mxu0 %v3939
      %v4379 = vpop.f32.mrf.mxu0
      %v4380 = vadd.f32 %v4229, %v4379
      %v4381 = vpop.f32.mrf.mxu0
      %v4382 = vadd.f32 %v4231, %v4381
      %4383 = vmatmul.bf16.gmra.mxu0 %v3945
      %v4384 = vpop.f32.mrf.mxu0
      %v4385 = vadd.f32 %v4234, %v4384
      %v4386 = vpop.f32.mrf.mxu0
      %v4387 = vadd.f32 %v4236, %v4386
      %4388 = vmatmul.bf16.gmra.mxu0 %v3951
      %v4389 = vpop.f32.mrf.mxu0
      %v4390 = vadd.f32 %v4239, %v4389
      %v4391 = vpop.f32.mrf.mxu0
      %4392 = vmatmul.bf16.gmra.mxu0 %v3950
      %v4393 = vpop.f32.mrf.mxu0
      %v4394 = vpop.f32.mrf.mxu0
      %4395 = vdwg.mxu0
      %4396 = vmatpush.bf16.msra.mxu0 0
      %4397 = vmatpush.bf16.msra.mxu0 0
      %4398 = vmatpush.bf16.msra.mxu0 0
      %4399 = vmatpush.bf16.msra.mxu0 0
      %4400 = vmatpush.bf16.msra.mxu0 %v4061
      %4401 = vmatpush.bf16.msra.mxu0 %v4060
      %4402 = vmatpush.bf16.msra.mxu0 %v4059
      %4403 = vmatpush.bf16.msra.mxu0 %v4058
      %4404 = vmatmul.bf16.gmra.mxu0 %v2021
      %v4405 = vpop.f32.mrf.mxu0
      %v4406 = vadd.f32 %v4255, %v4405
      %v4407 = vpop.f32.mrf.mxu0
      %v4408 = vadd.f32 %v4257, %v4407
      %4409 = vmatmul.bf16.gmra.mxu0 %v2024
      %v4410 = vpop.f32.mrf.mxu0
      %v4411 = vadd.f32 %v4260, %v4410
      %v4412 = vpop.f32.mrf.mxu0
      %v4413 = vadd.f32 %v4262, %v4412
      %4414 = vmatmul.bf16.gmra.mxu0 %v2027
      %v4415 = vpop.f32.mrf.mxu0
      %v4416 = vadd.f32 %v4265, %v4415
      %v4417 = vpop.f32.mrf.mxu0
      %v4418 = vadd.f32 %v4267, %v4417
      %4419 = vmatmul.bf16.gmra.mxu0 %v2030
      %v4420 = vpop.f32.mrf.mxu0
      %v4421 = vadd.f32 %v4270, %v4420
      %v4422 = vpop.f32.mrf.mxu0
      %v4423 = vadd.f32 %v4272, %v4422
      %4424 = vmatmul.bf16.gmra.mxu0 %v2033
      %v4425 = vpop.f32.mrf.mxu0
      %v4426 = vadd.f32 %v4275, %v4425
      %v4427 = vpop.f32.mrf.mxu0
      %v4428 = vadd.f32 %v4277, %v4427
      %4429 = vmatmul.bf16.gmra.mxu0 %v2036
      %v4430 = vpop.f32.mrf.mxu0
      %v4431 = vadd.f32 %v4280, %v4430
      %v4432 = vpop.f32.mrf.mxu0
      %v4433 = vadd.f32 %v4282, %v4432
      %4434 = vmatmul.bf16.gmra.mxu0 %v2039
      %v4435 = vpop.f32.mrf.mxu0
      %v4436 = vadd.f32 %v4285, %v4435
      %v4437 = vpop.f32.mrf.mxu0
      %v4438 = vadd.f32 %v4287, %v4437
      %4439 = vmatmul.bf16.gmra.mxu0 %v2042
      %v4440 = vpop.f32.mrf.mxu0
      %v4441 = vadd.f32 %v4290, %v4440
      %v4442 = vpop.f32.mrf.mxu0
      %v4443 = vadd.f32 %v4292, %v4442
      %4444 = vmatmul.bf16.gmra.mxu0 %v2045
      %v4445 = vpop.f32.mrf.mxu0
      %v4446 = vadd.f32 %v4295, %v4445
      %v4447 = vpop.f32.mrf.mxu0
      %v4448 = vadd.f32 %v4297, %v4447
      %4449 = vmatmul.bf16.gmra.mxu0 %v2048
      %v4450 = vpop.f32.mrf.mxu0
      %v4451 = vadd.f32 %v4300, %v4450
      %v4452 = vpop.f32.mrf.mxu0
      %v4453 = vadd.f32 %v4302, %v4452
      %4454 = vmatmul.bf16.gmra.mxu0 %v2051
      %v4455 = vpop.f32.mrf.mxu0
      %v4456 = vadd.f32 %v4305, %v4455
      %v4457 = vpop.f32.mrf.mxu0
      %v4458 = vadd.f32 %v4307, %v4457
      %4459 = vmatmul.bf16.gmra.mxu0 %v2054
      %v4460 = vpop.f32.mrf.mxu0
      %v4461 = vadd.f32 %v4310, %v4460
      %v4462 = vpop.f32.mrf.mxu0
      %v4463 = vadd.f32 %v4312, %v4462
      %4464 = vmatmul.bf16.gmra.mxu0 %v2057
      %v4465 = vpop.f32.mrf.mxu0
      %v4466 = vadd.f32 %v4315, %v4465
      %v4467 = vpop.f32.mrf.mxu0
      %v4468 = vadd.f32 %v4317, %v4467
      %4469 = vmatmul.bf16.gmra.mxu0 %v2060
      %v4470 = vpop.f32.mrf.mxu0
      %v4471 = vadd.f32 %v4320, %v4470
      %v4472 = vpop.f32.mrf.mxu0
      %v4473 = vadd.f32 %v4322, %v4472
      %4474 = vmatmul.bf16.gmra.mxu0 %v2063
      %v4475 = vpop.f32.mrf.mxu0
      %v4476 = vadd.f32 %v4325, %v4475
      %v4477 = vpop.f32.mrf.mxu0
      %v4478 = vadd.f32 %v4327, %v4477
      %4479 = vmatmul.bf16.gmra.mxu0 %v2066
      %v4480 = vpop.f32.mrf.mxu0
      %v4481 = vadd.f32 %v4330, %v4480
      %v4482 = vpop.f32.mrf.mxu0
      %v4483 = vadd.f32 %v4332, %v4482
      %4484 = vmatmul.bf16.gmra.mxu0 %v2069
      %v4485 = vpop.f32.mrf.mxu0
      %v4486 = vadd.f32 %v4335, %v4485
      %v4487 = vpop.f32.mrf.mxu0
      %v4488 = vadd.f32 %v4337, %v4487
      %4489 = vmatmul.bf16.gmra.mxu0 %v2072
      %v4490 = vpop.f32.mrf.mxu0
      %v4491 = vadd.f32 %v4340, %v4490
      %v4492 = vpop.f32.mrf.mxu0
      %v4493 = vadd.f32 %v4342, %v4492
      %4494 = vmatmul.bf16.gmra.mxu0 %v2075
      %v4495 = vpop.f32.mrf.mxu0
      %v4496 = vadd.f32 %v4345, %v4495
      %v4497 = vpop.f32.mrf.mxu0
      %v4498 = vadd.f32 %v4347, %v4497
      %4499 = vmatmul.bf16.gmra.mxu0 %v2078
      %v4500 = vpop.f32.mrf.mxu0
      %v4501 = vadd.f32 %v4350, %v4500
      %v4502 = vpop.f32.mrf.mxu0
      %v4503 = vadd.f32 %v4352, %v4502
      %4504 = vmatmul.bf16.gmra.mxu0 %v2081
      %v4505 = vpop.f32.mrf.mxu0
      %v4506 = vadd.f32 %v4355, %v4505
      %v4507 = vpop.f32.mrf.mxu0
      %v4508 = vadd.f32 %v4357, %v4507
      %4509 = vmatmul.bf16.gmra.mxu0 %v2084
      %v4510 = vpop.f32.mrf.mxu0
      %v4511 = vadd.f32 %v4360, %v4510
      %v4512 = vpop.f32.mrf.mxu0
      %v4513 = vadd.f32 %v4362, %v4512
      %4514 = vmatmul.bf16.gmra.mxu0 %v2087
      %v4515 = vpop.f32.mrf.mxu0
      %v4516 = vadd.f32 %v4365, %v4515
      %v4517 = vpop.f32.mrf.mxu0
      %v4518 = vadd.f32 %v4367, %v4517
      %4519 = vmatmul.bf16.gmra.mxu0 %v2090
      %v4520 = vpop.f32.mrf.mxu0
      %v4521 = vadd.f32 %v4370, %v4520
      %v4522 = vpop.f32.mrf.mxu0
      %v4523 = vadd.f32 %v4372, %v4522
      %4524 = vmatmul.bf16.gmra.mxu0 %v2093
      %v4525 = vpop.f32.mrf.mxu0
      %v4526 = vadd.f32 %v4375, %v4525
      %v4527 = vpop.f32.mrf.mxu0
      %v4528 = vadd.f32 %v4377, %v4527
      %4529 = vmatmul.bf16.gmra.mxu0 %v4083
      %v4530 = vpop.f32.mrf.mxu0
      %v4531 = vadd.f32 %v4380, %v4530
      %v4532 = vpop.f32.mrf.mxu0
      %v4533 = vadd.f32 %v4382, %v4532
      %4534 = vmatmul.bf16.gmra.mxu0 %v4086
      %v4535 = vpop.f32.mrf.mxu0
      %v4536 = vadd.f32 %v4385, %v4535
      %v4537 = vpop.f32.mrf.mxu0
      %v4538 = vadd.f32 %v4387, %v4537
      %4539 = vmatmul.bf16.gmra.mxu0 %v4089
      %v4540 = vpop.f32.mrf.mxu0
      %v4541 = vadd.f32 %v4390, %v4540
      %v4542 = vpop.f32.mrf.mxu0
      %4543 = vmatmul.bf16.gmra.mxu0 %v4092
      %v4544 = vpop.f32.mrf.mxu0
      %v4545 = vpop.f32.mrf.mxu0
      %4546 = vdwg.mxu0
      %v4547 = vadd.f32 %v3834, %v4406
      %v4548 = vadd.f32 %v3835, %v4408
      %v4549 = vadd.f32 %v3836, %v4411
      %v4550 = vadd.f32 %v3837, %v4413
      %v4551 = vadd.f32 %v3838, %v4416
      %v4552 = vadd.f32 %v3839, %v4418
      %v4553 = vadd.f32 %v3840, %v4421
      %v4554 = vadd.f32 %v3841, %v4423
      %v4555 = vadd.f32 %v3842, %v4426
      %v4556 = vadd.f32 %v3843, %v4428
      %v4557 = vadd.f32 %v3844, %v4431
      %v4558 = vadd.f32 %v3845, %v4433
      %v4559 = vadd.f32 %v3846, %v4436
      %v4560 = vadd.f32 %v3847, %v4438
      %v4561 = vadd.f32 %v3848, %v4441
      %v4562 = vadd.f32 %v3849, %v4443
      %v4563 = vadd.f32 %v3850, %v4446
      %v4564 = vadd.f32 %v3851, %v4448
      %v4565 = vadd.f32 %v3852, %v4451
      %v4566 = vadd.f32 %v3853, %v4453
      %v4567 = vadd.f32 %v3854, %v4456
      %v4568 = vadd.f32 %v3855, %v4458
      %v4569 = vadd.f32 %v3856, %v4461
      %v4570 = vadd.f32 %v3857, %v4463
      %v4571 = vadd.f32 %v3858, %v4466
      %v4572 = vadd.f32 %v3859, %v4468
      %v4573 = vadd.f32 %v3860, %v4471
      %v4574 = vadd.f32 %v3861, %v4473
      %v4575 = vadd.f32 %v3862, %v4476
      %v4576 = vadd.f32 %v3863, %v4478
      %v4577 = vadd.f32 %v3864, %v4481
      %v4578 = vadd.f32 %v3865, %v4483
      %v4579 = vadd.f32 %v3866, %v4486
      %v4580 = vadd.f32 %v3867, %v4488
      %v4581 = vadd.f32 %v3868, %v4491
      %v4582 = vadd.f32 %v3869, %v4493
      %v4583 = vadd.f32 %v3870, %v4496
      %v4584 = vadd.f32 %v3871, %v4498
      %v4585 = vadd.f32 %v3872, %v4501
      %v4586 = vadd.f32 %v3873, %v4503
      %v4587 = vadd.f32 %v3874, %v4506
      %v4588 = vadd.f32 %v3875, %v4508
      %v4589 = vadd.f32 %v3876, %v4511
      %v4590 = vadd.f32 %v3877, %v4513
      %v4591 = vadd.f32 %v3878, %v4516
      %v4592 = vadd.f32 %v3879, %v4518
      %v4593 = vadd.f32 %v3880, %v4521
      %v4594 = vadd.f32 %v3881, %v4523
      %v4595 = vadd.f32 %v3882, %v4526
      %v4596 = vadd.f32 %v3883, %v4528
      %v4597 = vadd.f32 %v3884, %v4531
      %v4598 = vadd.f32 %v3885, %v4533
      %v4599 = vadd.f32 %v3886, %v4536
      %v4600 = vadd.f32 %v3887, %v4538
      %v4601 = vadd.f32 %v3888, %v4541
      %s4602 = scalar_lea.vmem %s1, 640
      %v4603 = vld [vmem:[%s4602] sm:$0xf]
      %v4604 = vld [vmem:[%s4602 + $0x4] sm:$0xf]
      %v4605 = vld [vmem:[%s4602 + $0x8] sm:$0xf]
      %v4606 = vld [vmem:[%s4602 + $0xc] sm:$0xf]
      %v4607 = vld [vmem:[%s4602 + $0x10] sm:$0xf]
      %v4608 = vld [vmem:[%s4602 + $0x14] sm:$0xf]
      %v4609 = vld [vmem:[%s4602 + $0x18] sm:$0xf]
      %v4610 = vld [vmem:[%s4602 + $0x1c] sm:$0xf]
      %v4611 = vld [vmem:[%s4602 + $0x20] sm:$0xf]
      %v4612 = vld [vmem:[%s4602 + $0x24] sm:$0xf]
      %v4613 = vld [vmem:[%s4602 + $0x28] sm:$0xf]
      %v4614 = vld [vmem:[%s4602 + $0x2c] sm:$0xf]
      %v4615 = vld [vmem:[%s4602 + $0x30] sm:$0xf]
      %v4616 = vld [vmem:[%s4602 + $0x34] sm:$0xf]
      %v4617 = vld [vmem:[%s4602 + $0x38] sm:$0xf]
      %v4618 = vld [vmem:[%s4602 + $0x3c] sm:$0xf]
      %v4619 = vld [vmem:[%s4602 + $0x40] sm:$0xf]
      %v4620 = vld [vmem:[%s4602 + $0x44] sm:$0xf]
      %v4621 = vld [vmem:[%s4602 + $0x48] sm:$0xf]
      %v4622 = vld [vmem:[%s4602 + $0x4c] sm:$0xf]
      %v4623 = vld [vmem:[%s4602 + $0x50] sm:$0xf]
      %v4624 = vld [vmem:[%s4602 + $0x54] sm:$0xf]
      %v4625 = vld [vmem:[%s4602 + $0x58] sm:$0xf]
      %v4626 = vld [vmem:[%s4602 + $0x5c] sm:$0xf]
      %v4627 = vld [vmem:[%s4602 + $0x60] sm:$0xf]
      %v4628 = vld [vmem:[%s4602 + $0x64] sm:$0xf]
      %v4629 = vld [vmem:[%s4602 + $0x68] sm:$0xf]
      %v4630 = vld [vmem:[%s4602 + $0x6c] sm:$0xf]
      %v4631 = vld [vmem:[%s4602 + $0x70] sm:$0xf]
      %v4632 = vld [vmem:[%s4602 + $0x74] sm:$0xf]
      %v4633 = vld [vmem:[%s4602 + $0x78] sm:$0xf]
      %v4634 = vld [vmem:[%s4602 + $0x7c] sm:$0xf]
      %v4635 = vld [vmem:[%s4602 + $0x80] sm:$0xf]
      %v4636 = vld [vmem:[%s4602 + $0x84] sm:$0xf]
      %v4637 = vld [vmem:[%s4602 + $0x88] sm:$0xf]
      %v4638 = vld [vmem:[%s4602 + $0x8c] sm:$0xf]
      %v4639 = vld [vmem:[%s4602 + $0x90] sm:$0xf]
      %v4640 = vld [vmem:[%s4602 + $0x94] sm:$0xf]
      %v4641 = vld [vmem:[%s4602 + $0x98] sm:$0xf]
      %v4642 = vld [vmem:[%s4602 + $0x9c] sm:$0xf]
      %v4683 = vunpack.c.l.b16 %v4603
      %v4684 = vunpack.c.l.b16 %v4604
      %v4685 = vunpack.c.l.b16 %v4605
      %v4686 = vunpack.c.l.b16 %v4606
      %v4687 = vunpack.c.l.b16 %v4607
      %v4688 = vunpack.c.l.b16 %v4608
      %v4689 = vunpack.c.l.b16 %v4609
      %v4690 = vunpack.c.l.b16 %v4610
      %v4691 = vunpack.c.l.b16 %v4611
      %v4692 = vunpack.c.l.b16 %v4612
      %v4693 = vunpack.c.l.b16 %v4613
      %v4694 = vunpack.c.l.b16 %v4614
      %v4695 = vunpack.c.l.b16 %v4615
      %v4696 = vunpack.c.l.b16 %v4616
      %v4697 = vunpack.c.l.b16 %v4617
      %v4698 = vunpack.c.l.b16 %v4618
      %v4699 = vunpack.c.l.b16 %v4619
      %v4700 = vunpack.c.l.b16 %v4620
      %v4701 = vunpack.c.l.b16 %v4621
      %v4702 = vunpack.c.l.b16 %v4622
      %v4703 = vunpack.c.l.b16 %v4623
      %v4704 = vunpack.c.l.b16 %v4624
      %v4705 = vunpack.c.l.b16 %v4625
      %v4706 = vunpack.c.l.b16 %v4626
      %v4707 = vunpack.c.l.b16 %v4627
      %v4708 = vunpack.c.l.b16 %v4628
      %v4709 = vunpack.c.l.b16 %v4629
      %v4710 = vunpack.c.l.b16 %v4630
      %v4711 = vunpack.c.l.b16 %v4631
      %v4712 = vunpack.c.l.b16 %v4632
      %v4713 = vunpack.c.l.b16 %v4633
      %v4714 = vunpack.c.l.b16 %v4634
      %v4715 = vunpack.c.l.b16 %v4635
      %v4716 = vunpack.c.l.b16 %v4636
      %v4717 = vunpack.c.l.b16 %v4637
      %v4718 = vunpack.c.l.b16 %v4638
      %v4719 = vunpack.c.l.b16 %v4639
      %v4720 = vunpack.c.l.b16 %v4640
      %v4721 = vunpack.c.l.b16 %v4641
      %v4722 = vunpack.c.l.b16 %v4642
      %v4723 = vpack.c.b16 %v4684, %v4683
      %v4724 = vpack.c.b16 %v4686, %v4685
      %v4725 = vpack.c.b16 %v4688, %v4687
      %v4726 = vpack.c.b16 %v4690, %v4689
      %v4727 = vpack.c.b16 %v4692, %v4691
      %v4728 = vpack.c.b16 %v4694, %v4693
      %v4729 = vpack.c.b16 %v4696, %v4695
      %v4730 = vpack.c.b16 %v4698, %v4697
      %v4731 = vpack.c.b16 %v4700, %v4699
      %v4732 = vpack.c.b16 %v4702, %v4701
      %v4733 = vpack.c.b16 %v4704, %v4703
      %v4734 = vpack.c.b16 %v4706, %v4705
      %v4735 = vpack.c.b16 %v4708, %v4707
      %v4736 = vpack.c.b16 %v4710, %v4709
      %v4737 = vpack.c.b16 %v4712, %v4711
      %v4738 = vpack.c.b16 %v4714, %v4713
      %v4739 = vpack.c.b16 %v4716, %v4715
      %v4740 = vpack.c.b16 %v4718, %v4717
      %v4741 = vpack.c.b16 %v4720, %v4719
      %v4742 = vpack.c.b16 %v4722, %v4721
      %v4764 = vsel %vm1275, %v1272, 0
      %v4767 = vsel %vm1275, %v1274, 0
      %v4770 = vsel %vm1275, %v1273, 0
      %4772 = vmatpush.bf16.msra.mxu0 %v4730
      %4773 = vmatpush.bf16.msra.mxu0 %v4729
      %4774 = vmatpush.bf16.msra.mxu0 %v4728
      %4775 = vmatpush.bf16.msra.mxu0 %v4727
      %4776 = vmatpush.bf16.msra.mxu0 %v4726
      %4777 = vmatpush.bf16.msra.mxu0 %v4725
      %4778 = vmatpush.bf16.msra.mxu0 %v4724
      %4779 = vmatpush.bf16.msra.mxu0 %v4723
      %4780 = vmatmul.bf16.gmra.mxu0 %v1295
      %v4781 = vpop.f32.mrf.mxu0
      %v4782 = vadd.f32 0.0, %v4781
      %v4783 = vpop.f32.mrf.mxu0
      %v4784 = vadd.f32 0.0, %v4783
      %4785 = vmatmul.bf16.gmra.mxu0 %v1298
      %v4786 = vpop.f32.mrf.mxu0
      %v4787 = vadd.f32 0.0, %v4786
      %v4788 = vpop.f32.mrf.mxu0
      %v4789 = vadd.f32 0.0, %v4788
      %4790 = vmatmul.bf16.gmra.mxu0 %v1301
      %v4791 = vpop.f32.mrf.mxu0
      %v4792 = vadd.f32 0.0, %v4791
      %v4793 = vpop.f32.mrf.mxu0
      %v4794 = vadd.f32 0.0, %v4793
      %4795 = vmatmul.bf16.gmra.mxu0 %v1304
      %v4796 = vpop.f32.mrf.mxu0
      %v4797 = vadd.f32 0.0, %v4796
      %v4798 = vpop.f32.mrf.mxu0
      %v4799 = vadd.f32 0.0, %v4798
      %4800 = vmatmul.bf16.gmra.mxu0 %v1307
      %v4801 = vpop.f32.mrf.mxu0
      %v4802 = vadd.f32 0.0, %v4801
      %v4803 = vpop.f32.mrf.mxu0
      %v4804 = vadd.f32 0.0, %v4803
      %4805 = vmatmul.bf16.gmra.mxu0 %v1310
      %v4806 = vpop.f32.mrf.mxu0
      %v4807 = vadd.f32 0.0, %v4806
      %v4808 = vpop.f32.mrf.mxu0
      %v4809 = vadd.f32 0.0, %v4808
      %4810 = vmatmul.bf16.gmra.mxu0 %v1313
      %v4811 = vpop.f32.mrf.mxu0
      %v4812 = vadd.f32 0.0, %v4811
      %v4813 = vpop.f32.mrf.mxu0
      %v4814 = vadd.f32 0.0, %v4813
      %4815 = vmatmul.bf16.gmra.mxu0 %v1316
      %v4816 = vpop.f32.mrf.mxu0
      %v4817 = vadd.f32 0.0, %v4816
      %v4818 = vpop.f32.mrf.mxu0
      %v4819 = vadd.f32 0.0, %v4818
      %4820 = vmatmul.bf16.gmra.mxu0 %v1319
      %v4821 = vpop.f32.mrf.mxu0
      %v4822 = vadd.f32 0.0, %v4821
      %v4823 = vpop.f32.mrf.mxu0
      %v4824 = vadd.f32 0.0, %v4823
      %4825 = vmatmul.bf16.gmra.mxu0 %v1322
      %v4826 = vpop.f32.mrf.mxu0
      %v4827 = vadd.f32 0.0, %v4826
      %v4828 = vpop.f32.mrf.mxu0
      %v4829 = vadd.f32 0.0, %v4828
      %4830 = vmatmul.bf16.gmra.mxu0 %v1325
      %v4831 = vpop.f32.mrf.mxu0
      %v4832 = vadd.f32 0.0, %v4831
      %v4833 = vpop.f32.mrf.mxu0
      %v4834 = vadd.f32 0.0, %v4833
      %4835 = vmatmul.bf16.gmra.mxu0 %v1328
      %v4836 = vpop.f32.mrf.mxu0
      %v4837 = vadd.f32 0.0, %v4836
      %v4838 = vpop.f32.mrf.mxu0
      %v4839 = vadd.f32 0.0, %v4838
      %4840 = vmatmul.bf16.gmra.mxu0 %v1331
      %v4841 = vpop.f32.mrf.mxu0
      %v4842 = vadd.f32 0.0, %v4841
      %v4843 = vpop.f32.mrf.mxu0
      %v4844 = vadd.f32 0.0, %v4843
      %4845 = vmatmul.bf16.gmra.mxu0 %v1334
      %v4846 = vpop.f32.mrf.mxu0
      %v4847 = vadd.f32 0.0, %v4846
      %v4848 = vpop.f32.mrf.mxu0
      %v4849 = vadd.f32 0.0, %v4848
      %4850 = vmatmul.bf16.gmra.mxu0 %v1337
      %v4851 = vpop.f32.mrf.mxu0
      %v4852 = vadd.f32 0.0, %v4851
      %v4853 = vpop.f32.mrf.mxu0
      %v4854 = vadd.f32 0.0, %v4853
      %4855 = vmatmul.bf16.gmra.mxu0 %v1340
      %v4856 = vpop.f32.mrf.mxu0
      %v4857 = vadd.f32 0.0, %v4856
      %v4858 = vpop.f32.mrf.mxu0
      %v4859 = vadd.f32 0.0, %v4858
      %4860 = vmatmul.bf16.gmra.mxu0 %v1343
      %v4861 = vpop.f32.mrf.mxu0
      %v4862 = vadd.f32 0.0, %v4861
      %v4863 = vpop.f32.mrf.mxu0
      %v4864 = vadd.f32 0.0, %v4863
      %4865 = vmatmul.bf16.gmra.mxu0 %v1346
      %v4866 = vpop.f32.mrf.mxu0
      %v4867 = vadd.f32 0.0, %v4866
      %v4868 = vpop.f32.mrf.mxu0
      %v4869 = vadd.f32 0.0, %v4868
      %4870 = vmatmul.bf16.gmra.mxu0 %v1349
      %v4871 = vpop.f32.mrf.mxu0
      %v4872 = vadd.f32 0.0, %v4871
      %v4873 = vpop.f32.mrf.mxu0
      %v4874 = vadd.f32 0.0, %v4873
      %4875 = vmatmul.bf16.gmra.mxu0 %v1352
      %v4876 = vpop.f32.mrf.mxu0
      %v4877 = vadd.f32 0.0, %v4876
      %v4878 = vpop.f32.mrf.mxu0
      %v4879 = vadd.f32 0.0, %v4878
      %4880 = vmatmul.bf16.gmra.mxu0 %v1355
      %v4881 = vpop.f32.mrf.mxu0
      %v4882 = vadd.f32 0.0, %v4881
      %v4883 = vpop.f32.mrf.mxu0
      %v4884 = vadd.f32 0.0, %v4883
      %4885 = vmatmul.bf16.gmra.mxu0 %v1358
      %v4886 = vpop.f32.mrf.mxu0
      %v4887 = vadd.f32 0.0, %v4886
      %v4888 = vpop.f32.mrf.mxu0
      %v4889 = vadd.f32 0.0, %v4888
      %4890 = vmatmul.bf16.gmra.mxu0 %v1361
      %v4891 = vpop.f32.mrf.mxu0
      %v4892 = vadd.f32 0.0, %v4891
      %v4893 = vpop.f32.mrf.mxu0
      %v4894 = vadd.f32 0.0, %v4893
      %4895 = vmatmul.bf16.gmra.mxu0 %v1364
      %v4896 = vpop.f32.mrf.mxu0
      %v4897 = vadd.f32 0.0, %v4896
      %v4898 = vpop.f32.mrf.mxu0
      %v4899 = vadd.f32 0.0, %v4898
      %4900 = vmatmul.bf16.gmra.mxu0 %v1367
      %v4901 = vpop.f32.mrf.mxu0
      %v4902 = vadd.f32 0.0, %v4901
      %v4903 = vpop.f32.mrf.mxu0
      %v4904 = vadd.f32 0.0, %v4903
      %4905 = vmatmul.bf16.gmra.mxu0 %v1370
      %v4906 = vpop.f32.mrf.mxu0
      %v4907 = vadd.f32 0.0, %v4906
      %v4908 = vpop.f32.mrf.mxu0
      %v4909 = vadd.f32 0.0, %v4908
      %4910 = vmatmul.bf16.gmra.mxu0 %v1373
      %v4911 = vpop.f32.mrf.mxu0
      %v4912 = vadd.f32 0.0, %v4911
      %v4913 = vpop.f32.mrf.mxu0
      %v4914 = vadd.f32 0.0, %v4913
      %4915 = vmatmul.bf16.gmra.mxu0 %v1376
      %v4916 = vpop.f32.mrf.mxu0
      %v4917 = vadd.f32 0.0, %v4916
      %v4918 = vpop.f32.mrf.mxu0
      %4919 = vmatmul.bf16.gmra.mxu0 %v1380
      %v4920 = vpop.f32.mrf.mxu0
      %v4921 = vpop.f32.mrf.mxu0
      %4922 = vdwg.mxu0
      %4923 = vmatpush.bf16.msra.mxu0 %v4738
      %4924 = vmatpush.bf16.msra.mxu0 %v4737
      %4925 = vmatpush.bf16.msra.mxu0 %v4736
      %4926 = vmatpush.bf16.msra.mxu0 %v4735
      %4927 = vmatpush.bf16.msra.mxu0 %v4734
      %4928 = vmatpush.bf16.msra.mxu0 %v4733
      %4929 = vmatpush.bf16.msra.mxu0 %v4732
      %4930 = vmatpush.bf16.msra.mxu0 %v4731
      %4931 = vmatmul.bf16.gmra.mxu0 %v1408
      %v4932 = vpop.f32.mrf.mxu0
      %v4933 = vadd.f32 %v4782, %v4932
      %v4934 = vpop.f32.mrf.mxu0
      %v4935 = vadd.f32 %v4784, %v4934
      %4936 = vmatmul.bf16.gmra.mxu0 %v1412
      %v4937 = vpop.f32.mrf.mxu0
      %v4938 = vadd.f32 %v4787, %v4937
      %v4939 = vpop.f32.mrf.mxu0
      %v4940 = vadd.f32 %v4789, %v4939
      %4941 = vmatmul.bf16.gmra.mxu0 %v1416
      %v4942 = vpop.f32.mrf.mxu0
      %v4943 = vadd.f32 %v4792, %v4942
      %v4944 = vpop.f32.mrf.mxu0
      %v4945 = vadd.f32 %v4794, %v4944
      %4946 = vmatmul.bf16.gmra.mxu0 %v1420
      %v4947 = vpop.f32.mrf.mxu0
      %v4948 = vadd.f32 %v4797, %v4947
      %v4949 = vpop.f32.mrf.mxu0
      %v4950 = vadd.f32 %v4799, %v4949
      %4951 = vmatmul.bf16.gmra.mxu0 %v1424
      %v4952 = vpop.f32.mrf.mxu0
      %v4953 = vadd.f32 %v4802, %v4952
      %v4954 = vpop.f32.mrf.mxu0
      %v4955 = vadd.f32 %v4804, %v4954
      %4956 = vmatmul.bf16.gmra.mxu0 %v1428
      %v4957 = vpop.f32.mrf.mxu0
      %v4958 = vadd.f32 %v4807, %v4957
      %v4959 = vpop.f32.mrf.mxu0
      %v4960 = vadd.f32 %v4809, %v4959
      %4961 = vmatmul.bf16.gmra.mxu0 %v1432
      %v4962 = vpop.f32.mrf.mxu0
      %v4963 = vadd.f32 %v4812, %v4962
      %v4964 = vpop.f32.mrf.mxu0
      %v4965 = vadd.f32 %v4814, %v4964
      %4966 = vmatmul.bf16.gmra.mxu0 %v1436
      %v4967 = vpop.f32.mrf.mxu0
      %v4968 = vadd.f32 %v4817, %v4967
      %v4969 = vpop.f32.mrf.mxu0
      %v4970 = vadd.f32 %v4819, %v4969
      %4971 = vmatmul.bf16.gmra.mxu0 %v1440
      %v4972 = vpop.f32.mrf.mxu0
      %v4973 = vadd.f32 %v4822, %v4972
      %v4974 = vpop.f32.mrf.mxu0
      %v4975 = vadd.f32 %v4824, %v4974
      %4976 = vmatmul.bf16.gmra.mxu0 %v1444
      %v4977 = vpop.f32.mrf.mxu0
      %v4978 = vadd.f32 %v4827, %v4977
      %v4979 = vpop.f32.mrf.mxu0
      %v4980 = vadd.f32 %v4829, %v4979
      %4981 = vmatmul.bf16.gmra.mxu0 %v1448
      %v4982 = vpop.f32.mrf.mxu0
      %v4983 = vadd.f32 %v4832, %v4982
      %v4984 = vpop.f32.mrf.mxu0
      %v4985 = vadd.f32 %v4834, %v4984
      %4986 = vmatmul.bf16.gmra.mxu0 %v1452
      %v4987 = vpop.f32.mrf.mxu0
      %v4988 = vadd.f32 %v4837, %v4987
      %v4989 = vpop.f32.mrf.mxu0
      %v4990 = vadd.f32 %v4839, %v4989
      %4991 = vmatmul.bf16.gmra.mxu0 %v1456
      %v4992 = vpop.f32.mrf.mxu0
      %v4993 = vadd.f32 %v4842, %v4992
      %v4994 = vpop.f32.mrf.mxu0
      %v4995 = vadd.f32 %v4844, %v4994
      %4996 = vmatmul.bf16.gmra.mxu0 %v1460
      %v4997 = vpop.f32.mrf.mxu0
      %v4998 = vadd.f32 %v4847, %v4997
      %v4999 = vpop.f32.mrf.mxu0
      %v5000 = vadd.f32 %v4849, %v4999
      %5001 = vmatmul.bf16.gmra.mxu0 %v1464
      %v5002 = vpop.f32.mrf.mxu0
      %v5003 = vadd.f32 %v4852, %v5002
      %v5004 = vpop.f32.mrf.mxu0
      %v5005 = vadd.f32 %v4854, %v5004
      %5006 = vmatmul.bf16.gmra.mxu0 %v1468
      %v5007 = vpop.f32.mrf.mxu0
      %v5008 = vadd.f32 %v4857, %v5007
      %v5009 = vpop.f32.mrf.mxu0
      %v5010 = vadd.f32 %v4859, %v5009
      %5011 = vmatmul.bf16.gmra.mxu0 %v1472
      %v5012 = vpop.f32.mrf.mxu0
      %v5013 = vadd.f32 %v4862, %v5012
      %v5014 = vpop.f32.mrf.mxu0
      %v5015 = vadd.f32 %v4864, %v5014
      %5016 = vmatmul.bf16.gmra.mxu0 %v1476
      %v5017 = vpop.f32.mrf.mxu0
      %v5018 = vadd.f32 %v4867, %v5017
      %v5019 = vpop.f32.mrf.mxu0
      %v5020 = vadd.f32 %v4869, %v5019
      %5021 = vmatmul.bf16.gmra.mxu0 %v1480
      %v5022 = vpop.f32.mrf.mxu0
      %v5023 = vadd.f32 %v4872, %v5022
      %v5024 = vpop.f32.mrf.mxu0
      %v5025 = vadd.f32 %v4874, %v5024
      %5026 = vmatmul.bf16.gmra.mxu0 %v1484
      %v5027 = vpop.f32.mrf.mxu0
      %v5028 = vadd.f32 %v4877, %v5027
      %v5029 = vpop.f32.mrf.mxu0
      %v5030 = vadd.f32 %v4879, %v5029
      %5031 = vmatmul.bf16.gmra.mxu0 %v1488
      %v5032 = vpop.f32.mrf.mxu0
      %v5033 = vadd.f32 %v4882, %v5032
      %v5034 = vpop.f32.mrf.mxu0
      %v5035 = vadd.f32 %v4884, %v5034
      %5036 = vmatmul.bf16.gmra.mxu0 %v1492
      %v5037 = vpop.f32.mrf.mxu0
      %v5038 = vadd.f32 %v4887, %v5037
      %v5039 = vpop.f32.mrf.mxu0
      %v5040 = vadd.f32 %v4889, %v5039
      %5041 = vmatmul.bf16.gmra.mxu0 %v1496
      %v5042 = vpop.f32.mrf.mxu0
      %v5043 = vadd.f32 %v4892, %v5042
      %v5044 = vpop.f32.mrf.mxu0
      %v5045 = vadd.f32 %v4894, %v5044
      %5046 = vmatmul.bf16.gmra.mxu0 %v1500
      %v5047 = vpop.f32.mrf.mxu0
      %v5048 = vadd.f32 %v4897, %v5047
      %v5049 = vpop.f32.mrf.mxu0
      %v5050 = vadd.f32 %v4899, %v5049
      %5051 = vmatmul.bf16.gmra.mxu0 %v1504
      %v5052 = vpop.f32.mrf.mxu0
      %v5053 = vadd.f32 %v4902, %v5052
      %v5054 = vpop.f32.mrf.mxu0
      %v5055 = vadd.f32 %v4904, %v5054
      %5056 = vmatmul.bf16.gmra.mxu0 %v1508
      %v5057 = vpop.f32.mrf.mxu0
      %v5058 = vadd.f32 %v4907, %v5057
      %v5059 = vpop.f32.mrf.mxu0
      %v5060 = vadd.f32 %v4909, %v5059
      %5061 = vmatmul.bf16.gmra.mxu0 %v1512
      %v5062 = vpop.f32.mrf.mxu0
      %v5063 = vadd.f32 %v4912, %v5062
      %v5064 = vpop.f32.mrf.mxu0
      %v5065 = vadd.f32 %v4914, %v5064
      %5066 = vmatmul.bf16.gmra.mxu0 %v1516
      %v5067 = vpop.f32.mrf.mxu0
      %v5068 = vadd.f32 %v4917, %v5067
      %v5069 = vpop.f32.mrf.mxu0
      %5070 = vmatmul.bf16.gmra.mxu0 %v1520
      %v5071 = vpop.f32.mrf.mxu0
      %v5072 = vpop.f32.mrf.mxu0
      %5073 = vdwg.mxu0
      %5074 = vmatpush.bf16.msra.mxu0 0
      %5075 = vmatpush.bf16.msra.mxu0 0
      %5076 = vmatpush.bf16.msra.mxu0 0
      %5077 = vmatpush.bf16.msra.mxu0 0
      %5078 = vmatpush.bf16.msra.mxu0 %v4742
      %5079 = vmatpush.bf16.msra.mxu0 %v4741
      %5080 = vmatpush.bf16.msra.mxu0 %v4740
      %5081 = vmatpush.bf16.msra.mxu0 %v4739
      %5082 = vmatmul.bf16.gmra.mxu0 %v2690
      %v5083 = vpop.f32.mrf.mxu0
      %v5084 = vadd.f32 %v4933, %v5083
      %v5085 = vpop.f32.mrf.mxu0
      %v5086 = vadd.f32 %v4935, %v5085
      %5087 = vmatmul.bf16.gmra.mxu0 %v2693
      %v5088 = vpop.f32.mrf.mxu0
      %v5089 = vadd.f32 %v4938, %v5088
      %v5090 = vpop.f32.mrf.mxu0
      %v5091 = vadd.f32 %v4940, %v5090
      %5092 = vmatmul.bf16.gmra.mxu0 %v2696
      %v5093 = vpop.f32.mrf.mxu0
      %v5094 = vadd.f32 %v4943, %v5093
      %v5095 = vpop.f32.mrf.mxu0
      %v5096 = vadd.f32 %v4945, %v5095
      %5097 = vmatmul.bf16.gmra.mxu0 %v2699
      %v5098 = vpop.f32.mrf.mxu0
      %v5099 = vadd.f32 %v4948, %v5098
      %v5100 = vpop.f32.mrf.mxu0
      %v5101 = vadd.f32 %v4950, %v5100
      %5102 = vmatmul.bf16.gmra.mxu0 %v2702
      %v5103 = vpop.f32.mrf.mxu0
      %v5104 = vadd.f32 %v4953, %v5103
      %v5105 = vpop.f32.mrf.mxu0
      %v5106 = vadd.f32 %v4955, %v5105
      %5107 = vmatmul.bf16.gmra.mxu0 %v2705
      %v5108 = vpop.f32.mrf.mxu0
      %v5109 = vadd.f32 %v4958, %v5108
      %v5110 = vpop.f32.mrf.mxu0
      %v5111 = vadd.f32 %v4960, %v5110
      %5112 = vmatmul.bf16.gmra.mxu0 %v2708
      %v5113 = vpop.f32.mrf.mxu0
      %v5114 = vadd.f32 %v4963, %v5113
      %v5115 = vpop.f32.mrf.mxu0
      %v5116 = vadd.f32 %v4965, %v5115
      %5117 = vmatmul.bf16.gmra.mxu0 %v2711
      %v5118 = vpop.f32.mrf.mxu0
      %v5119 = vadd.f32 %v4968, %v5118
      %v5120 = vpop.f32.mrf.mxu0
      %v5121 = vadd.f32 %v4970, %v5120
      %5122 = vmatmul.bf16.gmra.mxu0 %v2714
      %v5123 = vpop.f32.mrf.mxu0
      %v5124 = vadd.f32 %v4973, %v5123
      %v5125 = vpop.f32.mrf.mxu0
      %v5126 = vadd.f32 %v4975, %v5125
      %5127 = vmatmul.bf16.gmra.mxu0 %v2717
      %v5128 = vpop.f32.mrf.mxu0
      %v5129 = vadd.f32 %v4978, %v5128
      %v5130 = vpop.f32.mrf.mxu0
      %v5131 = vadd.f32 %v4980, %v5130
      %5132 = vmatmul.bf16.gmra.mxu0 %v2720
      %v5133 = vpop.f32.mrf.mxu0
      %v5134 = vadd.f32 %v4983, %v5133
      %v5135 = vpop.f32.mrf.mxu0
      %v5136 = vadd.f32 %v4985, %v5135
      %5137 = vmatmul.bf16.gmra.mxu0 %v2723
      %v5138 = vpop.f32.mrf.mxu0
      %v5139 = vadd.f32 %v4988, %v5138
      %v5140 = vpop.f32.mrf.mxu0
      %v5141 = vadd.f32 %v4990, %v5140
      %5142 = vmatmul.bf16.gmra.mxu0 %v2726
      %v5143 = vpop.f32.mrf.mxu0
      %v5144 = vadd.f32 %v4993, %v5143
      %v5145 = vpop.f32.mrf.mxu0
      %v5146 = vadd.f32 %v4995, %v5145
      %5147 = vmatmul.bf16.gmra.mxu0 %v2729
      %v5148 = vpop.f32.mrf.mxu0
      %v5149 = vadd.f32 %v4998, %v5148
      %v5150 = vpop.f32.mrf.mxu0
      %v5151 = vadd.f32 %v5000, %v5150
      %5152 = vmatmul.bf16.gmra.mxu0 %v2732
      %v5153 = vpop.f32.mrf.mxu0
      %v5154 = vadd.f32 %v5003, %v5153
      %v5155 = vpop.f32.mrf.mxu0
      %v5156 = vadd.f32 %v5005, %v5155
      %5157 = vmatmul.bf16.gmra.mxu0 %v2735
      %v5158 = vpop.f32.mrf.mxu0
      %v5159 = vadd.f32 %v5008, %v5158
      %v5160 = vpop.f32.mrf.mxu0
      %v5161 = vadd.f32 %v5010, %v5160
      %5162 = vmatmul.bf16.gmra.mxu0 %v2738
      %v5163 = vpop.f32.mrf.mxu0
      %v5164 = vadd.f32 %v5013, %v5163
      %v5165 = vpop.f32.mrf.mxu0
      %v5166 = vadd.f32 %v5015, %v5165
      %5167 = vmatmul.bf16.gmra.mxu0 %v2741
      %v5168 = vpop.f32.mrf.mxu0
      %v5169 = vadd.f32 %v5018, %v5168
      %v5170 = vpop.f32.mrf.mxu0
      %v5171 = vadd.f32 %v5020, %v5170
      %5172 = vmatmul.bf16.gmra.mxu0 %v2744
      %v5173 = vpop.f32.mrf.mxu0
      %v5174 = vadd.f32 %v5023, %v5173
      %v5175 = vpop.f32.mrf.mxu0
      %v5176 = vadd.f32 %v5025, %v5175
      %5177 = vmatmul.bf16.gmra.mxu0 %v2747
      %v5178 = vpop.f32.mrf.mxu0
      %v5179 = vadd.f32 %v5028, %v5178
      %v5180 = vpop.f32.mrf.mxu0
      %v5181 = vadd.f32 %v5030, %v5180
      %5182 = vmatmul.bf16.gmra.mxu0 %v2750
      %v5183 = vpop.f32.mrf.mxu0
      %v5184 = vadd.f32 %v5033, %v5183
      %v5185 = vpop.f32.mrf.mxu0
      %v5186 = vadd.f32 %v5035, %v5185
      %5187 = vmatmul.bf16.gmra.mxu0 %v2753
      %v5188 = vpop.f32.mrf.mxu0
      %v5189 = vadd.f32 %v5038, %v5188
      %v5190 = vpop.f32.mrf.mxu0
      %v5191 = vadd.f32 %v5040, %v5190
      %5192 = vmatmul.bf16.gmra.mxu0 %v2756
      %v5193 = vpop.f32.mrf.mxu0
      %v5194 = vadd.f32 %v5043, %v5193
      %v5195 = vpop.f32.mrf.mxu0
      %v5196 = vadd.f32 %v5045, %v5195
      %5197 = vmatmul.bf16.gmra.mxu0 %v3373
      %v5198 = vpop.f32.mrf.mxu0
      %v5199 = vadd.f32 %v5048, %v5198
      %v5200 = vpop.f32.mrf.mxu0
      %v5201 = vadd.f32 %v5050, %v5200
      %5202 = vmatmul.bf16.gmra.mxu0 %v3376
      %v5203 = vpop.f32.mrf.mxu0
      %v5204 = vadd.f32 %v5053, %v5203
      %v5205 = vpop.f32.mrf.mxu0
      %v5206 = vadd.f32 %v5055, %v5205
      %5207 = vmatmul.bf16.gmra.mxu0 %v3379
      %v5208 = vpop.f32.mrf.mxu0
      %v5209 = vadd.f32 %v5058, %v5208
      %v5210 = vpop.f32.mrf.mxu0
      %v5211 = vadd.f32 %v5060, %v5210
      %5212 = vmatmul.bf16.gmra.mxu0 %v4764
      %v5213 = vpop.f32.mrf.mxu0
      %v5214 = vadd.f32 %v5063, %v5213
      %v5215 = vpop.f32.mrf.mxu0
      %v5216 = vadd.f32 %v5065, %v5215
      %5217 = vmatmul.bf16.gmra.mxu0 %v4767
      %v5218 = vpop.f32.mrf.mxu0
      %v5219 = vadd.f32 %v5068, %v5218
      %v5220 = vpop.f32.mrf.mxu0
      %5221 = vmatmul.bf16.gmra.mxu0 %v4770
      %v5222 = vpop.f32.mrf.mxu0
      %v5223 = vpop.f32.mrf.mxu0
      %5224 = vdwg.mxu0
      %v5225 = vadd.f32 %v4547, %v5084
      %v5226 = vadd.f32 %v4548, %v5086
      %v5227 = vadd.f32 %v4549, %v5089
      %v5228 = vadd.f32 %v4550, %v5091
      %v5229 = vadd.f32 %v4551, %v5094
      %v5230 = vadd.f32 %v4552, %v5096
      %v5231 = vadd.f32 %v4553, %v5099
      %v5232 = vadd.f32 %v4554, %v5101
      %v5233 = vadd.f32 %v4555, %v5104
      %v5234 = vadd.f32 %v4556, %v5106
      %v5235 = vadd.f32 %v4557, %v5109
      %v5236 = vadd.f32 %v4558, %v5111
      %v5237 = vadd.f32 %v4559, %v5114
      %v5238 = vadd.f32 %v4560, %v5116
      %v5239 = vadd.f32 %v4561, %v5119
      %v5240 = vadd.f32 %v4562, %v5121
      %v5241 = vadd.f32 %v4563, %v5124
      %v5242 = vadd.f32 %v4564, %v5126
      %v5243 = vadd.f32 %v4565, %v5129
      %v5244 = vadd.f32 %v4566, %v5131
      %v5245 = vadd.f32 %v4567, %v5134
      %v5246 = vadd.f32 %v4568, %v5136
      %v5247 = vadd.f32 %v4569, %v5139
      %v5248 = vadd.f32 %v4570, %v5141
      %v5249 = vadd.f32 %v4571, %v5144
      %v5250 = vadd.f32 %v4572, %v5146
      %v5251 = vadd.f32 %v4573, %v5149
      %v5252 = vadd.f32 %v4574, %v5151
      %v5253 = vadd.f32 %v4575, %v5154
      %v5254 = vadd.f32 %v4576, %v5156
      %v5255 = vadd.f32 %v4577, %v5159
      %v5256 = vadd.f32 %v4578, %v5161
      %v5257 = vadd.f32 %v4579, %v5164
      %v5258 = vadd.f32 %v4580, %v5166
      %v5259 = vadd.f32 %v4581, %v5169
      %v5260 = vadd.f32 %v4582, %v5171
      %v5261 = vadd.f32 %v4583, %v5174
      %v5262 = vadd.f32 %v4584, %v5176
      %v5263 = vadd.f32 %v4585, %v5179
      %v5264 = vadd.f32 %v4586, %v5181
      %v5265 = vadd.f32 %v4587, %v5184
      %v5266 = vadd.f32 %v4588, %v5186
      %v5267 = vadd.f32 %v4589, %v5189
      %v5268 = vadd.f32 %v4590, %v5191
      %v5269 = vadd.f32 %v4591, %v5194
      %v5270 = vadd.f32 %v4592, %v5196
      %v5271 = vadd.f32 %v4593, %v5199
      %v5272 = vadd.f32 %v4594, %v5201
      %v5273 = vadd.f32 %v4595, %v5204
      %v5274 = vadd.f32 %v4596, %v5206
      %v5275 = vadd.f32 %v4597, %v5209
      %v5276 = vadd.f32 %v4598, %v5211
      %v5277 = vadd.f32 %v4599, %v5214
      %v5278 = vadd.f32 %v4600, %v5216
      %v5279 = vadd.f32 %v4601, %v5219
      %v5280 = vld [vmem:[%s2] sm:$0x1]
      %v5282 = vperm.slane %v5280, 0
      %v5284 = vadd.f32 %v5225, %v5282
      %v5285 = vadd.f32 %v5226, %v5282
      %v5286 = vadd.f32 %v5227, %v5282
      %v5287 = vadd.f32 %v5228, %v5282
      %v5288 = vadd.f32 %v5229, %v5282
      %v5289 = vadd.f32 %v5230, %v5282
      %v5290 = vadd.f32 %v5231, %v5282
      %v5291 = vadd.f32 %v5232, %v5282
      %v5292 = vadd.f32 %v5233, %v5282
      %v5293 = vadd.f32 %v5234, %v5282
      %v5294 = vadd.f32 %v5235, %v5282
      %v5295 = vadd.f32 %v5236, %v5282
      %v5296 = vadd.f32 %v5237, %v5282
      %v5297 = vadd.f32 %v5238, %v5282
      %v5298 = vadd.f32 %v5239, %v5282
      %v5299 = vadd.f32 %v5240, %v5282
      %v5300 = vadd.f32 %v5241, %v5282
      %v5301 = vadd.f32 %v5242, %v5282
      %v5302 = vadd.f32 %v5243, %v5282
      %v5303 = vadd.f32 %v5244, %v5282
      %v5304 = vadd.f32 %v5245, %v5282
      %v5305 = vadd.f32 %v5246, %v5282
      %v5306 = vadd.f32 %v5247, %v5282
      %v5307 = vadd.f32 %v5248, %v5282
      %v5308 = vadd.f32 %v5249, %v5282
      %v5309 = vadd.f32 %v5250, %v5282
      %v5310 = vadd.f32 %v5251, %v5282
      %v5311 = vadd.f32 %v5252, %v5282
      %v5312 = vadd.f32 %v5253, %v5282
      %v5313 = vadd.f32 %v5254, %v5282
      %v5314 = vadd.f32 %v5255, %v5282
      %v5315 = vadd.f32 %v5256, %v5282
      %v5316 = vadd.f32 %v5257, %v5282
      %v5317 = vadd.f32 %v5258, %v5282
      %v5318 = vadd.f32 %v5259, %v5282
      %v5319 = vadd.f32 %v5260, %v5282
      %v5320 = vadd.f32 %v5261, %v5282
      %v5321 = vadd.f32 %v5262, %v5282
      %v5322 = vadd.f32 %v5263, %v5282
      %v5323 = vadd.f32 %v5264, %v5282
      %v5324 = vadd.f32 %v5265, %v5282
      %v5325 = vadd.f32 %v5266, %v5282
      %v5326 = vadd.f32 %v5267, %v5282
      %v5327 = vadd.f32 %v5268, %v5282
      %v5328 = vadd.f32 %v5269, %v5282
      %v5329 = vadd.f32 %v5270, %v5282
      %v5330 = vadd.f32 %v5271, %v5282
      %v5331 = vadd.f32 %v5272, %v5282
      %v5332 = vadd.f32 %v5273, %v5282
      %v5333 = vadd.f32 %v5274, %v5282
      %v5334 = vadd.f32 %v5275, %v5282
      %v5335 = vadd.f32 %v5276, %v5282
      %v5336 = vadd.f32 %v5277, %v5282
      %v5337 = vadd.f32 %v5278, %v5282
      %v5338 = vadd.f32 %v5279, %v5282
      %v5339 = vmax.f32 %v5284, 0.0
      %v5340 = vmax.f32 %v5285, 0.0
      %v5341 = vmax.f32 %v5286, 0.0
      %v5342 = vmax.f32 %v5287, 0.0
      %v5343 = vmax.f32 %v5288, 0.0
      %v5344 = vmax.f32 %v5289, 0.0
      %v5345 = vmax.f32 %v5290, 0.0
      %v5346 = vmax.f32 %v5291, 0.0
      %v5347 = vmax.f32 %v5292, 0.0
      %v5348 = vmax.f32 %v5293, 0.0
      %v5349 = vmax.f32 %v5294, 0.0
      %v5350 = vmax.f32 %v5295, 0.0
      %v5351 = vmax.f32 %v5296, 0.0
      %v5352 = vmax.f32 %v5297, 0.0
      %v5353 = vmax.f32 %v5298, 0.0
      %v5354 = vmax.f32 %v5299, 0.0
      %v5355 = vmax.f32 %v5300, 0.0
      %v5356 = vmax.f32 %v5301, 0.0
      %v5357 = vmax.f32 %v5302, 0.0
      %v5358 = vmax.f32 %v5303, 0.0
      %v5359 = vmax.f32 %v5304, 0.0
      %v5360 = vmax.f32 %v5305, 0.0
      %v5361 = vmax.f32 %v5306, 0.0
      %v5362 = vmax.f32 %v5307, 0.0
      %v5363 = vmax.f32 %v5308, 0.0
      %v5364 = vmax.f32 %v5309, 0.0
      %v5365 = vmax.f32 %v5310, 0.0
      %v5366 = vmax.f32 %v5311, 0.0
      %v5367 = vmax.f32 %v5312, 0.0
      %v5368 = vmax.f32 %v5313, 0.0
      %v5369 = vmax.f32 %v5314, 0.0
      %v5370 = vmax.f32 %v5315, 0.0
      %v5371 = vmax.f32 %v5316, 0.0
      %v5372 = vmax.f32 %v5317, 0.0
      %v5373 = vmax.f32 %v5318, 0.0
      %v5374 = vmax.f32 %v5319, 0.0
      %v5375 = vmax.f32 %v5320, 0.0
      %v5376 = vmax.f32 %v5321, 0.0
      %v5377 = vmax.f32 %v5322, 0.0
      %v5378 = vmax.f32 %v5323, 0.0
      %v5379 = vmax.f32 %v5324, 0.0
      %v5380 = vmax.f32 %v5325, 0.0
      %v5381 = vmax.f32 %v5326, 0.0
      %v5382 = vmax.f32 %v5327, 0.0
      %v5383 = vmax.f32 %v5328, 0.0
      %v5384 = vmax.f32 %v5329, 0.0
      %v5385 = vmax.f32 %v5330, 0.0
      %v5386 = vmax.f32 %v5331, 0.0
      %v5387 = vmax.f32 %v5332, 0.0
      %v5388 = vmax.f32 %v5333, 0.0
      %v5389 = vmax.f32 %v5334, 0.0
      %v5390 = vmax.f32 %v5335, 0.0
      %v5391 = vmax.f32 %v5336, 0.0
      %v5392 = vmax.f32 %v5337, 0.0
      %v5393 = vmax.f32 %v5338, 0.0
      %v5394 = vld [vmem:[%s3] sm:$0x1]
      %v5396 = vperm.slane %v5394, 0
      %v5398 = vmul.f32 %v5339, %v5396
      %v5399 = vmul.f32 %v5340, %v5396
      %v5400 = vmul.f32 %v5341, %v5396
      %v5401 = vmul.f32 %v5342, %v5396
      %v5402 = vmul.f32 %v5343, %v5396
      %v5403 = vmul.f32 %v5344, %v5396
      %v5404 = vmul.f32 %v5345, %v5396
      %v5405 = vmul.f32 %v5346, %v5396
      %v5406 = vmul.f32 %v5347, %v5396
      %v5407 = vmul.f32 %v5348, %v5396
      %v5408 = vmul.f32 %v5349, %v5396
      %v5409 = vmul.f32 %v5350, %v5396
      %v5410 = vmul.f32 %v5351, %v5396
      %v5411 = vmul.f32 %v5352, %v5396
      %v5412 = vmul.f32 %v5353, %v5396
      %v5413 = vmul.f32 %v5354, %v5396
      %v5414 = vmul.f32 %v5355, %v5396
      %v5415 = vmul.f32 %v5356, %v5396
      %v5416 = vmul.f32 %v5357, %v5396
      %v5417 = vmul.f32 %v5358, %v5396
      %v5418 = vmul.f32 %v5359, %v5396
      %v5419 = vmul.f32 %v5360, %v5396
      %v5420 = vmul.f32 %v5361, %v5396
      %v5421 = vmul.f32 %v5362, %v5396
      %v5422 = vmul.f32 %v5363, %v5396
      %v5423 = vmul.f32 %v5364, %v5396
      %v5424 = vmul.f32 %v5365, %v5396
      %v5425 = vmul.f32 %v5366, %v5396
      %v5426 = vmul.f32 %v5367, %v5396
      %v5427 = vmul.f32 %v5368, %v5396
      %v5428 = vmul.f32 %v5369, %v5396
      %v5429 = vmul.f32 %v5370, %v5396
      %v5430 = vmul.f32 %v5371, %v5396
      %v5431 = vmul.f32 %v5372, %v5396
      %v5432 = vmul.f32 %v5373, %v5396
      %v5433 = vmul.f32 %v5374, %v5396
      %v5434 = vmul.f32 %v5375, %v5396
      %v5435 = vmul.f32 %v5376, %v5396
      %v5436 = vmul.f32 %v5377, %v5396
      %v5437 = vmul.f32 %v5378, %v5396
      %v5438 = vmul.f32 %v5379, %v5396
      %v5439 = vmul.f32 %v5380, %v5396
      %v5440 = vmul.f32 %v5381, %v5396
      %v5441 = vmul.f32 %v5382, %v5396
      %v5442 = vmul.f32 %v5383, %v5396
      %v5443 = vmul.f32 %v5384, %v5396
      %v5444 = vmul.f32 %v5385, %v5396
      %v5445 = vmul.f32 %v5386, %v5396
      %v5446 = vmul.f32 %v5387, %v5396
      %v5447 = vmul.f32 %v5388, %v5396
      %v5448 = vmul.f32 %v5389, %v5396
      %v5449 = vmul.f32 %v5390, %v5396
      %v5450 = vmul.f32 %v5391, %v5396
      %v5451 = vmul.f32 %v5392, %v5396
      %v5452 = vmul.f32 %v5393, %v5396
      %v5453 = vld [vmem:[%s4] sm:$0x1]
      %v5455 = vperm.slane %v5453, 0
      %v5457 = vadd.f32 %v5398, %v5455
      %v5458 = vadd.f32 %v5399, %v5455
      %v5459 = vadd.f32 %v5400, %v5455
      %v5460 = vadd.f32 %v5401, %v5455
      %v5461 = vadd.f32 %v5402, %v5455
      %v5462 = vadd.f32 %v5403, %v5455
      %v5463 = vadd.f32 %v5404, %v5455
      %v5464 = vadd.f32 %v5405, %v5455
      %v5465 = vadd.f32 %v5406, %v5455
      %v5466 = vadd.f32 %v5407, %v5455
      %v5467 = vadd.f32 %v5408, %v5455
      %v5468 = vadd.f32 %v5409, %v5455
      %v5469 = vadd.f32 %v5410, %v5455
      %v5470 = vadd.f32 %v5411, %v5455
      %v5471 = vadd.f32 %v5412, %v5455
      %v5472 = vadd.f32 %v5413, %v5455
      %v5473 = vadd.f32 %v5414, %v5455
      %v5474 = vadd.f32 %v5415, %v5455
      %v5475 = vadd.f32 %v5416, %v5455
      %v5476 = vadd.f32 %v5417, %v5455
      %v5477 = vadd.f32 %v5418, %v5455
      %v5478 = vadd.f32 %v5419, %v5455
      %v5479 = vadd.f32 %v5420, %v5455
      %v5480 = vadd.f32 %v5421, %v5455
      %v5481 = vadd.f32 %v5422, %v5455
      %v5482 = vadd.f32 %v5423, %v5455
      %v5483 = vadd.f32 %v5424, %v5455
      %v5484 = vadd.f32 %v5425, %v5455
      %v5485 = vadd.f32 %v5426, %v5455
      %v5486 = vadd.f32 %v5427, %v5455
      %v5487 = vadd.f32 %v5428, %v5455
      %v5488 = vadd.f32 %v5429, %v5455
      %v5489 = vadd.f32 %v5430, %v5455
      %v5490 = vadd.f32 %v5431, %v5455
      %v5491 = vadd.f32 %v5432, %v5455
      %v5492 = vadd.f32 %v5433, %v5455
      %v5493 = vadd.f32 %v5434, %v5455
      %v5494 = vadd.f32 %v5435, %v5455
      %v5495 = vadd.f32 %v5436, %v5455
      %v5496 = vadd.f32 %v5437, %v5455
      %v5497 = vadd.f32 %v5438, %v5455
      %v5498 = vadd.f32 %v5439, %v5455
      %v5499 = vadd.f32 %v5440, %v5455
      %v5500 = vadd.f32 %v5441, %v5455
      %v5501 = vadd.f32 %v5442, %v5455
      %v5502 = vadd.f32 %v5443, %v5455
      %v5503 = vadd.f32 %v5444, %v5455
      %v5504 = vadd.f32 %v5445, %v5455
      %v5505 = vadd.f32 %v5446, %v5455
      %v5506 = vadd.f32 %v5447, %v5455
      %v5507 = vadd.f32 %v5448, %v5455
      %v5508 = vadd.f32 %v5449, %v5455
      %v5509 = vadd.f32 %v5450, %v5455
      %v5510 = vadd.f32 %v5451, %v5455
      %v5511 = vadd.f32 %v5452, %v5455
      %v5512 = vld [vmem:[%s5] sm:$0xff]
      %v5513 = vld [vmem:[%s5 + $0x8] sm:$0xff]
      %v5514 = vld [vmem:[%s5 + $0x10] sm:$0xff]
      %v5515 = vld [vmem:[%s5 + $0x18] sm:$0xff]
      %v5516 = vld [vmem:[%s5 + $0x20] sm:$0xff]
      %v5517 = vld [vmem:[%s5 + $0x28] sm:$0xff]
      %v5518 = vld [vmem:[%s5 + $0x30] sm:$0xff]
      %v5519 = vld [vmem:[%s5 + $0x38] sm:$0xff]
      %v5520 = vld [vmem:[%s5 + $0x40] sm:$0xff]
      %v5521 = vld [vmem:[%s5 + $0x48] sm:$0xff]
      %v5522 = vld [vmem:[%s5 + $0x50] sm:$0xff]
      %v5523 = vld [vmem:[%s5 + $0x58] sm:$0xff]
      %v5524 = vld [vmem:[%s5 + $0x60] sm:$0xff]
      %v5525 = vld [vmem:[%s5 + $0x68] sm:$0xff]
      %v5526 = vld [vmem:[%s5 + $0x70] sm:$0xff]
      %v5527 = vld [vmem:[%s5 + $0x78] sm:$0xff]
      %v5528 = vld [vmem:[%s5 + $0x80] sm:$0xff]
      %v5529 = vld [vmem:[%s5 + $0x88] sm:$0xff]
      %v5530 = vld [vmem:[%s5 + $0x90] sm:$0xff]
      %v5531 = vld [vmem:[%s5 + $0x98] sm:$0xff]
      %v5532 = vld [vmem:[%s5 + $0xa0] sm:$0xff]
      %v5533 = vld [vmem:[%s5 + $0xa8] sm:$0xff]
      %v5534 = vld [vmem:[%s5 + $0xb0] sm:$0xff]
      %v5535 = vld [vmem:[%s5 + $0xb8] sm:$0xff]
      %v5536 = vld [vmem:[%s5 + $0xc0] sm:$0xff]
      %v5537 = vld [vmem:[%s5 + $0xc8] sm:$0xff]
      %v5538 = vld [vmem:[%s5 + $0xd0] sm:$0xff]
      %v5539 = vld [vmem:[%s5 + $0xd8] sm:$0xff]
      %v5540 = vld [vmem:[%s5 + $0xe0] sm:$0xff]
      %v5541 = vld [vmem:[%s5 + $0xe8] sm:$0xff]
      %v5542 = vld [vmem:[%s5 + $0xf0] sm:$0xff]
      %v5543 = vld [vmem:[%s5 + $0xf8] sm:$0xff]
      %v5544 = vld [vmem:[%s5 + $0x100] sm:$0xff]
      %v5545 = vld [vmem:[%s5 + $0x108] sm:$0xff]
      %v5546 = vld [vmem:[%s5 + $0x110] sm:$0xff]
      %v5547 = vld [vmem:[%s5 + $0x118] sm:$0xff]
      %v5548 = vld [vmem:[%s5 + $0x120] sm:$0xff]
      %v5549 = vld [vmem:[%s5 + $0x128] sm:$0xff]
      %v5550 = vld [vmem:[%s5 + $0x130] sm:$0xff]
      %v5551 = vld [vmem:[%s5 + $0x138] sm:$0xff]
      %v5552 = vld [vmem:[%s5 + $0x140] sm:$0xff]
      %v5553 = vld [vmem:[%s5 + $0x148] sm:$0xff]
      %v5554 = vld [vmem:[%s5 + $0x150] sm:$0xff]
      %v5555 = vld [vmem:[%s5 + $0x158] sm:$0xff]
      %v5556 = vld [vmem:[%s5 + $0x160] sm:$0xff]
      %v5557 = vld [vmem:[%s5 + $0x168] sm:$0xff]
      %v5558 = vld [vmem:[%s5 + $0x170] sm:$0xff]
      %v5559 = vld [vmem:[%s5 + $0x178] sm:$0xff]
      %v5560 = vld [vmem:[%s5 + $0x180] sm:$0xff]
      %v5561 = vld [vmem:[%s5 + $0x188] sm:$0xff]
      %v5562 = vld [vmem:[%s5 + $0x190] sm:$0xff]
      %v5563 = vld [vmem:[%s5 + $0x198] sm:$0xff]
      %v5564 = vld [vmem:[%s5 + $0x1a0] sm:$0xff]
      %v5565 = vld [vmem:[%s5 + $0x1a8] sm:$0xff]
      %v5566 = vld [vmem:[%s5 + $0x1b0] sm:$0xff]
      %5568 = vset.pattern.permute.xlu0 0
      %5569 = vperm.xlu0 %5568, %v5512
      %v5570 = vpop.permute.xlu0 %5569
      %5573 = vset.pattern.permute.xlu0 0
      %5574 = vperm.xlu0 %5573, %v5513
      %v5575 = vpop.permute.xlu0 %5574
      %5578 = vset.pattern.permute.xlu0 0
      %5579 = vperm.xlu0 %5578, %v5514
      %v5580 = vpop.permute.xlu0 %5579
      %5583 = vset.pattern.permute.xlu0 0
      %5584 = vperm.xlu0 %5583, %v5515
      %v5585 = vpop.permute.xlu0 %5584
      %5588 = vset.pattern.permute.xlu0 0
      %5589 = vperm.xlu0 %5588, %v5516
      %v5590 = vpop.permute.xlu0 %5589
      %5593 = vset.pattern.permute.xlu0 0
      %5594 = vperm.xlu0 %5593, %v5517
      %v5595 = vpop.permute.xlu0 %5594
      %5598 = vset.pattern.permute.xlu0 0
      %5599 = vperm.xlu0 %5598, %v5518
      %v5600 = vpop.permute.xlu0 %5599
      %5603 = vset.pattern.permute.xlu0 0
      %5604 = vperm.xlu0 %5603, %v5519
      %v5605 = vpop.permute.xlu0 %5604
      %5608 = vset.pattern.permute.xlu0 0
      %5609 = vperm.xlu0 %5608, %v5520
      %v5610 = vpop.permute.xlu0 %5609
      %5613 = vset.pattern.permute.xlu0 0
      %5614 = vperm.xlu0 %5613, %v5521
      %v5615 = vpop.permute.xlu0 %5614
      %5618 = vset.pattern.permute.xlu0 0
      %5619 = vperm.xlu0 %5618, %v5522
      %v5620 = vpop.permute.xlu0 %5619
      %5623 = vset.pattern.permute.xlu0 0
      %5624 = vperm.xlu0 %5623, %v5523
      %v5625 = vpop.permute.xlu0 %5624
      %5628 = vset.pattern.permute.xlu0 0
      %5629 = vperm.xlu0 %5628, %v5524
      %v5630 = vpop.permute.xlu0 %5629
      %5633 = vset.pattern.permute.xlu0 0
      %5634 = vperm.xlu0 %5633, %v5525
      %v5635 = vpop.permute.xlu0 %5634
      %5638 = vset.pattern.permute.xlu0 0
      %5639 = vperm.xlu0 %5638, %v5526
      %v5640 = vpop.permute.xlu0 %5639
      %5643 = vset.pattern.permute.xlu0 0
      %5644 = vperm.xlu0 %5643, %v5527
      %v5645 = vpop.permute.xlu0 %5644
      %5648 = vset.pattern.permute.xlu0 0
      %5649 = vperm.xlu0 %5648, %v5528
      %v5650 = vpop.permute.xlu0 %5649
      %5653 = vset.pattern.permute.xlu0 0
      %5654 = vperm.xlu0 %5653, %v5529
      %v5655 = vpop.permute.xlu0 %5654
      %5658 = vset.pattern.permute.xlu0 0
      %5659 = vperm.xlu0 %5658, %v5530
      %v5660 = vpop.permute.xlu0 %5659
      %5663 = vset.pattern.permute.xlu0 0
      %5664 = vperm.xlu0 %5663, %v5531
      %v5665 = vpop.permute.xlu0 %5664
      %5668 = vset.pattern.permute.xlu0 0
      %5669 = vperm.xlu0 %5668, %v5532
      %v5670 = vpop.permute.xlu0 %5669
      %5673 = vset.pattern.permute.xlu0 0
      %5674 = vperm.xlu0 %5673, %v5533
      %v5675 = vpop.permute.xlu0 %5674
      %5678 = vset.pattern.permute.xlu0 0
      %5679 = vperm.xlu0 %5678, %v5534
      %v5680 = vpop.permute.xlu0 %5679
      %5683 = vset.pattern.permute.xlu0 0
      %5684 = vperm.xlu0 %5683, %v5535
      %v5685 = vpop.permute.xlu0 %5684
      %5688 = vset.pattern.permute.xlu0 0
      %5689 = vperm.xlu0 %5688, %v5536
      %v5690 = vpop.permute.xlu0 %5689
      %5693 = vset.pattern.permute.xlu0 0
      %5694 = vperm.xlu0 %5693, %v5537
      %v5695 = vpop.permute.xlu0 %5694
      %5698 = vset.pattern.permute.xlu0 0
      %5699 = vperm.xlu0 %5698, %v5538
      %v5700 = vpop.permute.xlu0 %5699
      %5703 = vset.pattern.permute.xlu0 0
      %5704 = vperm.xlu0 %5703, %v5539
      %v5705 = vpop.permute.xlu0 %5704
      %5708 = vset.pattern.permute.xlu0 0
      %5709 = vperm.xlu0 %5708, %v5540
      %v5710 = vpop.permute.xlu0 %5709
      %5713 = vset.pattern.permute.xlu0 0
      %5714 = vperm.xlu0 %5713, %v5541
      %v5715 = vpop.permute.xlu0 %5714
      %5718 = vset.pattern.permute.xlu0 0
      %5719 = vperm.xlu0 %5718, %v5542
      %v5720 = vpop.permute.xlu0 %5719
      %5723 = vset.pattern.permute.xlu0 0
      %5724 = vperm.xlu0 %5723, %v5543
      %v5725 = vpop.permute.xlu0 %5724
      %5728 = vset.pattern.permute.xlu0 0
      %5729 = vperm.xlu0 %5728, %v5544
      %v5730 = vpop.permute.xlu0 %5729
      %5733 = vset.pattern.permute.xlu0 0
      %5734 = vperm.xlu0 %5733, %v5545
      %v5735 = vpop.permute.xlu0 %5734
      %5738 = vset.pattern.permute.xlu0 0
      %5739 = vperm.xlu0 %5738, %v5546
      %v5740 = vpop.permute.xlu0 %5739
      %5743 = vset.pattern.permute.xlu0 0
      %5744 = vperm.xlu0 %5743, %v5547
      %v5745 = vpop.permute.xlu0 %5744
      %5748 = vset.pattern.permute.xlu0 0
      %5749 = vperm.xlu0 %5748, %v5548
      %v5750 = vpop.permute.xlu0 %5749
      %5753 = vset.pattern.permute.xlu0 0
      %5754 = vperm.xlu0 %5753, %v5549
      %v5755 = vpop.permute.xlu0 %5754
      %5758 = vset.pattern.permute.xlu0 0
      %5759 = vperm.xlu0 %5758, %v5550
      %v5760 = vpop.permute.xlu0 %5759
      %5763 = vset.pattern.permute.xlu0 0
      %5764 = vperm.xlu0 %5763, %v5551
      %v5765 = vpop.permute.xlu0 %5764
      %5768 = vset.pattern.permute.xlu0 0
      %5769 = vperm.xlu0 %5768, %v5552
      %v5770 = vpop.permute.xlu0 %5769
      %5773 = vset.pattern.permute.xlu0 0
      %5774 = vperm.xlu0 %5773, %v5553
      %v5775 = vpop.permute.xlu0 %5774
      %5778 = vset.pattern.permute.xlu0 0
      %5779 = vperm.xlu0 %5778, %v5554
      %v5780 = vpop.permute.xlu0 %5779
      %5783 = vset.pattern.permute.xlu0 0
      %5784 = vperm.xlu0 %5783, %v5555
      %v5785 = vpop.permute.xlu0 %5784
      %5788 = vset.pattern.permute.xlu0 0
      %5789 = vperm.xlu0 %5788, %v5556
      %v5790 = vpop.permute.xlu0 %5789
      %5793 = vset.pattern.permute.xlu0 0
      %5794 = vperm.xlu0 %5793, %v5557
      %v5795 = vpop.permute.xlu0 %5794
      %5798 = vset.pattern.permute.xlu0 0
      %5799 = vperm.xlu0 %5798, %v5558
      %v5800 = vpop.permute.xlu0 %5799
      %5803 = vset.pattern.permute.xlu0 0
      %5804 = vperm.xlu0 %5803, %v5559
      %v5805 = vpop.permute.xlu0 %5804
      %5808 = vset.pattern.permute.xlu0 0
      %5809 = vperm.xlu0 %5808, %v5560
      %v5810 = vpop.permute.xlu0 %5809
      %5813 = vset.pattern.permute.xlu0 0
      %5814 = vperm.xlu0 %5813, %v5561
      %v5815 = vpop.permute.xlu0 %5814
      %5818 = vset.pattern.permute.xlu0 0
      %5819 = vperm.xlu0 %5818, %v5562
      %v5820 = vpop.permute.xlu0 %5819
      %5823 = vset.pattern.permute.xlu0 0
      %5824 = vperm.xlu0 %5823, %v5563
      %v5825 = vpop.permute.xlu0 %5824
      %5828 = vset.pattern.permute.xlu0 0
      %5829 = vperm.xlu0 %5828, %v5564
      %v5830 = vpop.permute.xlu0 %5829
      %5833 = vset.pattern.permute.xlu0 0
      %5834 = vperm.xlu0 %5833, %v5565
      %v5835 = vpop.permute.xlu0 %5834
      %5838 = vset.pattern.permute.xlu0 0
      %5839 = vperm.xlu0 %5838, %v5566
      %v5840 = vpop.permute.xlu0 %5839
      %v5842 = vmul.f32 %v5457, %v5570
      %v5843 = vmul.f32 %v5458, %v5575
      %v5844 = vmul.f32 %v5459, %v5580
      %v5845 = vmul.f32 %v5460, %v5585
      %v5846 = vmul.f32 %v5461, %v5590
      %v5847 = vmul.f32 %v5462, %v5595
      %v5848 = vmul.f32 %v5463, %v5600
      %v5849 = vmul.f32 %v5464, %v5605
      %v5850 = vmul.f32 %v5465, %v5610
      %v5851 = vmul.f32 %v5466, %v5615
      %v5852 = vmul.f32 %v5467, %v5620
      %v5853 = vmul.f32 %v5468, %v5625
      %v5854 = vmul.f32 %v5469, %v5630
      %v5855 = vmul.f32 %v5470, %v5635
      %v5856 = vmul.f32 %v5471, %v5640
      %v5857 = vmul.f32 %v5472, %v5645
      %v5858 = vmul.f32 %v5473, %v5650
      %v5859 = vmul.f32 %v5474, %v5655
      %v5860 = vmul.f32 %v5475, %v5660
      %v5861 = vmul.f32 %v5476, %v5665
      %v5862 = vmul.f32 %v5477, %v5670
      %v5863 = vmul.f32 %v5478, %v5675
      %v5864 = vmul.f32 %v5479, %v5680
      %v5865 = vmul.f32 %v5480, %v5685
      %v5866 = vmul.f32 %v5481, %v5690
      %v5867 = vmul.f32 %v5482, %v5695
      %v5868 = vmul.f32 %v5483, %v5700
      %v5869 = vmul.f32 %v5484, %v5705
      %v5870 = vmul.f32 %v5485, %v5710
      %v5871 = vmul.f32 %v5486, %v5715
      %v5872 = vmul.f32 %v5487, %v5720
      %v5873 = vmul.f32 %v5488, %v5725
      %v5874 = vmul.f32 %v5489, %v5730
      %v5875 = vmul.f32 %v5490, %v5735
      %v5876 = vmul.f32 %v5491, %v5740
      %v5877 = vmul.f32 %v5492, %v5745
      %v5878 = vmul.f32 %v5493, %v5750
      %v5879 = vmul.f32 %v5494, %v5755
      %v5880 = vmul.f32 %v5495, %v5760
      %v5881 = vmul.f32 %v5496, %v5765
      %v5882 = vmul.f32 %v5497, %v5770
      %v5883 = vmul.f32 %v5498, %v5775
      %v5884 = vmul.f32 %v5499, %v5780
      %v5885 = vmul.f32 %v5500, %v5785
      %v5886 = vmul.f32 %v5501, %v5790
      %v5887 = vmul.f32 %v5502, %v5795
      %v5888 = vmul.f32 %v5503, %v5800
      %v5889 = vmul.f32 %v5504, %v5805
      %v5890 = vmul.f32 %v5505, %v5810
      %v5891 = vmul.f32 %v5506, %v5815
      %v5892 = vmul.f32 %v5507, %v5820
      %v5893 = vmul.f32 %v5508, %v5825
      %v5894 = vmul.f32 %v5509, %v5830
      %v5895 = vmul.f32 %v5510, %v5835
      %v5896 = vmul.f32 %v5511, %v5840
      %v5897 = vpack.c.bf16 %v5842, %v5842
      %v5898 = vpack.c.bf16 %v5843, %v5843
      %v5899 = vpack.c.bf16 %v5844, %v5844
      %v5900 = vpack.c.bf16 %v5845, %v5845
      %v5901 = vpack.c.bf16 %v5846, %v5846
      %v5902 = vpack.c.bf16 %v5847, %v5847
      %v5903 = vpack.c.bf16 %v5848, %v5848
      %v5904 = vpack.c.bf16 %v5849, %v5849
      %v5905 = vpack.c.bf16 %v5850, %v5850
      %v5906 = vpack.c.bf16 %v5851, %v5851
      %v5907 = vpack.c.bf16 %v5852, %v5852
      %v5908 = vpack.c.bf16 %v5853, %v5853
      %v5909 = vpack.c.bf16 %v5854, %v5854
      %v5910 = vpack.c.bf16 %v5855, %v5855
      %v5911 = vpack.c.bf16 %v5856, %v5856
      %v5912 = vpack.c.bf16 %v5857, %v5857
      %v5913 = vpack.c.bf16 %v5858, %v5858
      %v5914 = vpack.c.bf16 %v5859, %v5859
      %v5915 = vpack.c.bf16 %v5860, %v5860
      %v5916 = vpack.c.bf16 %v5861, %v5861
      %v5917 = vpack.c.bf16 %v5862, %v5862
      %v5918 = vpack.c.bf16 %v5863, %v5863
      %v5919 = vpack.c.bf16 %v5864, %v5864
      %v5920 = vpack.c.bf16 %v5865, %v5865
      %v5921 = vpack.c.bf16 %v5866, %v5866
      %v5922 = vpack.c.bf16 %v5867, %v5867
      %v5923 = vpack.c.bf16 %v5868, %v5868
      %v5924 = vpack.c.bf16 %v5869, %v5869
      %v5925 = vpack.c.bf16 %v5870, %v5870
      %v5926 = vpack.c.bf16 %v5871, %v5871
      %v5927 = vpack.c.bf16 %v5872, %v5872
      %v5928 = vpack.c.bf16 %v5873, %v5873
      %v5929 = vpack.c.bf16 %v5874, %v5874
      %v5930 = vpack.c.bf16 %v5875, %v5875
      %v5931 = vpack.c.bf16 %v5876, %v5876
      %v5932 = vpack.c.bf16 %v5877, %v5877
      %v5933 = vpack.c.bf16 %v5878, %v5878
      %v5934 = vpack.c.bf16 %v5879, %v5879
      %v5935 = vpack.c.bf16 %v5880, %v5880
      %v5936 = vpack.c.bf16 %v5881, %v5881
      %v5937 = vpack.c.bf16 %v5882, %v5882
      %v5938 = vpack.c.bf16 %v5883, %v5883
      %v5939 = vpack.c.bf16 %v5884, %v5884
      %v5940 = vpack.c.bf16 %v5885, %v5885
      %v5941 = vpack.c.bf16 %v5886, %v5886
      %v5942 = vpack.c.bf16 %v5887, %v5887
      %v5943 = vpack.c.bf16 %v5888, %v5888
      %v5944 = vpack.c.bf16 %v5889, %v5889
      %v5945 = vpack.c.bf16 %v5890, %v5890
      %v5946 = vpack.c.bf16 %v5891, %v5891
      %v5947 = vpack.c.bf16 %v5892, %v5892
      %v5948 = vpack.c.bf16 %v5893, %v5893
      %v5949 = vpack.c.bf16 %v5894, %v5894
      %v5950 = vpack.c.bf16 %v5895, %v5895
      %v5951 = vpack.c.bf16 %v5896, %v5896
      %v6000 = vunpack.c.l.b16 %v5897
      %v6001 = vunpack.c.l.b16 %v5898
      %v6002 = vunpack.c.l.b16 %v5899
      %v6003 = vunpack.c.l.b16 %v5900
      %v6004 = vunpack.c.l.b16 %v5901
      %v6005 = vunpack.c.l.b16 %v5902
      %v6006 = vunpack.c.l.b16 %v5903
      %v6007 = vunpack.c.l.b16 %v5904
      %v6008 = vunpack.c.l.b16 %v5905
      %v6009 = vunpack.c.l.b16 %v5906
      %v6010 = vunpack.c.l.b16 %v5907
      %v6011 = vunpack.c.l.b16 %v5908
      %v6012 = vunpack.c.l.b16 %v5909
      %v6013 = vunpack.c.l.b16 %v5910
      %v6014 = vunpack.c.l.b16 %v5911
      %v6015 = vunpack.c.l.b16 %v5912
      %v6016 = vunpack.c.l.b16 %v5913
      %v6017 = vunpack.c.l.b16 %v5914
      %v6018 = vunpack.c.l.b16 %v5915
      %v6019 = vunpack.c.l.b16 %v5916
      %v6020 = vunpack.c.l.b16 %v5917
      %v6021 = vunpack.c.l.b16 %v5918
      %v6022 = vunpack.c.l.b16 %v5919
      %v6023 = vunpack.c.l.b16 %v5920
      %v6024 = vunpack.c.l.b16 %v5921
      %v6025 = vunpack.c.l.b16 %v5922
      %v6026 = vunpack.c.l.b16 %v5923
      %v6027 = vunpack.c.l.b16 %v5924
      %v6028 = vunpack.c.l.b16 %v5925
      %v6029 = vunpack.c.l.b16 %v5926
      %v6030 = vunpack.c.l.b16 %v5927
      %v6031 = vunpack.c.l.b16 %v5928
      %v6032 = vunpack.c.l.b16 %v5929
      %v6033 = vunpack.c.l.b16 %v5930
      %v6034 = vunpack.c.l.b16 %v5931
      %v6035 = vunpack.c.l.b16 %v5932
      %v6036 = vunpack.c.l.b16 %v5933
      %v6037 = vunpack.c.l.b16 %v5934
      %v6038 = vunpack.c.l.b16 %v5935
      %v6039 = vunpack.c.l.b16 %v5936
      %v6040 = vunpack.c.l.b16 %v5937
      %v6041 = vunpack.c.l.b16 %v5938
      %v6042 = vunpack.c.l.b16 %v5939
      %v6043 = vunpack.c.l.b16 %v5940
      %v6044 = vunpack.c.l.b16 %v5941
      %v6045 = vunpack.c.l.b16 %v5942
      %v6046 = vunpack.c.l.b16 %v5943
      %v6047 = vunpack.c.l.b16 %v5944
      %v6048 = vpack.c.b16 %v6001, %v6000
      %v6049 = vpack.c.b16 %v6003, %v6002
      %v6050 = vpack.c.b16 %v6005, %v6004
      %v6051 = vpack.c.b16 %v6007, %v6006
      %v6052 = vpack.c.b16 %v6009, %v6008
      %v6053 = vpack.c.b16 %v6011, %v6010
      %v6054 = vpack.c.b16 %v6013, %v6012
      %v6055 = vpack.c.b16 %v6015, %v6014
      %v6056 = vpack.c.b16 %v6017, %v6016
      %v6057 = vpack.c.b16 %v6019, %v6018
      %v6058 = vpack.c.b16 %v6021, %v6020
      %v6059 = vpack.c.b16 %v6023, %v6022
      %v6060 = vpack.c.b16 %v6025, %v6024
      %v6061 = vpack.c.b16 %v6027, %v6026
      %v6062 = vpack.c.b16 %v6029, %v6028
      %v6063 = vpack.c.b16 %v6031, %v6030
      %v6064 = vpack.c.b16 %v6033, %v6032
      %v6065 = vpack.c.b16 %v6035, %v6034
      %v6066 = vpack.c.b16 %v6037, %v6036
      %v6067 = vpack.c.b16 %v6039, %v6038
      %v6068 = vpack.c.b16 %v6041, %v6040
      %v6069 = vpack.c.b16 %v6043, %v6042
      %v6070 = vpack.c.b16 %v6045, %v6044
      %v6071 = vpack.c.b16 %v6047, %v6046
      %v6073 = vunpack.c.l.b16 %v5945
      %v6074 = vpack.c.b16 %v6073, %v6073
      %v6076 = vshrl.u32 %v6048, 16
      %v6078 = vshll.u32 %v6048, 16
      %v6080 = vrot.slane %v6078, 1
      %v6081 = vor.u32 %v6076, %v6080
      %v6083 = vshll.u32 %v6049, 16
      %v6085 = vrot.slane %v6083, 1
      %v6086 = vsel %vm556, %v6081, %v6085
      %v6087 = vshrl.u32 %v6049, 16
      %v6089 = vor.u32 %v6087, %v6085
      %v6091 = vshll.u32 %v6050, 16
      %v6093 = vrot.slane %v6091, 1
      %v6094 = vsel %vm556, %v6089, %v6093
      %v6095 = vshrl.u32 %v6050, 16
      %v6097 = vor.u32 %v6095, %v6093
      %v6099 = vshll.u32 %v6051, 16
      %v6101 = vrot.slane %v6099, 1
      %v6102 = vsel %vm556, %v6097, %v6101
      %v6103 = vshrl.u32 %v6051, 16
      %v6105 = vor.u32 %v6103, %v6101
      %v6107 = vshll.u32 %v6052, 16
      %v6109 = vrot.slane %v6107, 1
      %v6110 = vsel %vm556, %v6105, %v6109
      %v6111 = vshrl.u32 %v6052, 16
      %v6113 = vor.u32 %v6111, %v6109
      %v6115 = vshll.u32 %v6053, 16
      %v6117 = vrot.slane %v6115, 1
      %v6118 = vsel %vm556, %v6113, %v6117
      %v6119 = vshrl.u32 %v6053, 16
      %v6121 = vor.u32 %v6119, %v6117
      %v6123 = vshll.u32 %v6054, 16
      %v6125 = vrot.slane %v6123, 1
      %v6126 = vsel %vm556, %v6121, %v6125
      %v6127 = vshrl.u32 %v6054, 16
      %v6129 = vor.u32 %v6127, %v6125
      %v6131 = vshll.u32 %v6055, 16
      %v6133 = vrot.slane %v6131, 1
      %v6134 = vsel %vm556, %v6129, %v6133
      %v6135 = vshrl.u32 %v6055, 16
      %v6137 = vor.u32 %v6135, %v6133
      %v6139 = vshll.u32 %v6056, 16
      %v6141 = vrot.slane %v6139, 1
      %v6142 = vsel %vm556, %v6137, %v6141
      %v6143 = vshrl.u32 %v6056, 16
      %v6145 = vor.u32 %v6143, %v6141
      %v6147 = vshll.u32 %v6057, 16
      %v6149 = vrot.slane %v6147, 1
      %v6150 = vsel %vm556, %v6145, %v6149
      %v6151 = vshrl.u32 %v6057, 16
      %v6153 = vor.u32 %v6151, %v6149
      %v6155 = vshll.u32 %v6058, 16
      %v6157 = vrot.slane %v6155, 1
      %v6158 = vsel %vm556, %v6153, %v6157
      %v6159 = vshrl.u32 %v6058, 16
      %v6161 = vor.u32 %v6159, %v6157
      %v6163 = vshll.u32 %v6059, 16
      %v6165 = vrot.slane %v6163, 1
      %v6166 = vsel %vm556, %v6161, %v6165
      %v6167 = vshrl.u32 %v6059, 16
      %v6169 = vor.u32 %v6167, %v6165
      %v6171 = vshll.u32 %v6060, 16
      %v6173 = vrot.slane %v6171, 1
      %v6174 = vsel %vm556, %v6169, %v6173
      %v6175 = vshrl.u32 %v6060, 16
      %v6177 = vor.u32 %v6175, %v6173
      %v6179 = vshll.u32 %v6061, 16
      %v6181 = vrot.slane %v6179, 1
      %v6182 = vsel %vm556, %v6177, %v6181
      %v6183 = vshrl.u32 %v6061, 16
      %v6185 = vor.u32 %v6183, %v6181
      %v6187 = vshll.u32 %v6062, 16
      %v6189 = vrot.slane %v6187, 1
      %v6190 = vsel %vm556, %v6185, %v6189
      %v6191 = vshrl.u32 %v6062, 16
      %v6193 = vor.u32 %v6191, %v6189
      %v6195 = vshll.u32 %v6063, 16
      %v6197 = vrot.slane %v6195, 1
      %v6198 = vsel %vm556, %v6193, %v6197
      %v6199 = vshrl.u32 %v6063, 16
      %v6201 = vor.u32 %v6199, %v6197
      %v6203 = vshll.u32 %v6064, 16
      %v6205 = vrot.slane %v6203, 1
      %v6206 = vsel %vm556, %v6201, %v6205
      %v6207 = vshrl.u32 %v6064, 16
      %v6209 = vor.u32 %v6207, %v6205
      %v6211 = vshll.u32 %v6065, 16
      %v6213 = vrot.slane %v6211, 1
      %v6214 = vsel %vm556, %v6209, %v6213
      %v6215 = vshrl.u32 %v6065, 16
      %v6217 = vor.u32 %v6215, %v6213
      %v6219 = vshll.u32 %v6066, 16
      %v6221 = vrot.slane %v6219, 1
      %v6222 = vsel %vm556, %v6217, %v6221
      %v6223 = vshrl.u32 %v6066, 16
      %v6225 = vor.u32 %v6223, %v6221
      %v6227 = vshll.u32 %v6067, 16
      %v6229 = vrot.slane %v6227, 1
      %v6230 = vsel %vm556, %v6225, %v6229
      %v6231 = vshrl.u32 %v6067, 16
      %v6233 = vor.u32 %v6231, %v6229
      %v6235 = vshll.u32 %v6068, 16
      %v6237 = vrot.slane %v6235, 1
      %v6238 = vsel %vm556, %v6233, %v6237
      %v6239 = vshrl.u32 %v6068, 16
      %v6241 = vor.u32 %v6239, %v6237
      %v6243 = vshll.u32 %v6069, 16
      %v6245 = vrot.slane %v6243, 1
      %v6246 = vsel %vm556, %v6241, %v6245
      %v6247 = vshrl.u32 %v6069, 16
      %v6249 = vor.u32 %v6247, %v6245
      %v6251 = vshll.u32 %v6070, 16
      %v6253 = vrot.slane %v6251, 1
      %v6254 = vsel %vm556, %v6249, %v6253
      %v6255 = vshrl.u32 %v6070, 16
      %v6257 = vor.u32 %v6255, %v6253
      %v6259 = vshll.u32 %v6071, 16
      %v6261 = vrot.slane %v6259, 1
      %v6262 = vsel %vm556, %v6257, %v6261
      %v6263 = vshrl.u32 %v6071, 16
      %v6265 = vor.u32 %v6263, %v6261
      %v6267 = vshll.u32 %v6074, 16
      %v6269 = vrot.slane %v6267, 1
      %v6270 = vsel %vm556, %v6265, %v6269
      %6271 = vrot.lane.b32.xlu0 %v6086, 16
      %v6272 = vpop.permute.xlu0 %6271
      %6273 = vrot.lane.b32.xlu0 %v6094, 16
      %v6274 = vpop.permute.xlu0 %6273
      %6275 = vrot.lane.b32.xlu0 %v6102, 16
      %v6276 = vpop.permute.xlu0 %6275
      %6277 = vrot.lane.b32.xlu0 %v6110, 16
      %v6278 = vpop.permute.xlu0 %6277
      %6279 = vrot.lane.b32.xlu0 %v6118, 16
      %v6280 = vpop.permute.xlu0 %6279
      %6281 = vrot.lane.b32.xlu0 %v6126, 16
      %v6282 = vpop.permute.xlu0 %6281
      %6283 = vrot.lane.b32.xlu0 %v6134, 16
      %v6284 = vpop.permute.xlu0 %6283
      %6285 = vrot.lane.b32.xlu0 %v6142, 16
      %v6286 = vpop.permute.xlu0 %6285
      %6287 = vrot.lane.b32.xlu0 %v6150, 16
      %v6288 = vpop.permute.xlu0 %6287
      %6289 = vrot.lane.b32.xlu0 %v6158, 16
      %v6290 = vpop.permute.xlu0 %6289
      %6291 = vrot.lane.b32.xlu0 %v6166, 16
      %v6292 = vpop.permute.xlu0 %6291
      %6293 = vrot.lane.b32.xlu0 %v6174, 16
      %v6294 = vpop.permute.xlu0 %6293
      %6295 = vrot.lane.b32.xlu0 %v6182, 16
      %v6296 = vpop.permute.xlu0 %6295
      %6297 = vrot.lane.b32.xlu0 %v6190, 16
      %v6298 = vpop.permute.xlu0 %6297
      %6299 = vrot.lane.b32.xlu0 %v6198, 16
      %v6300 = vpop.permute.xlu0 %6299
      %6301 = vrot.lane.b32.xlu0 %v6206, 16
      %v6302 = vpop.permute.xlu0 %6301
      %6303 = vrot.lane.b32.xlu0 %v6214, 16
      %v6304 = vpop.permute.xlu0 %6303
      %6305 = vrot.lane.b32.xlu0 %v6222, 16
      %v6306 = vpop.permute.xlu0 %6305
      %6307 = vrot.lane.b32.xlu0 %v6230, 16
      %v6308 = vpop.permute.xlu0 %6307
      %6309 = vrot.lane.b32.xlu0 %v6238, 16
      %v6310 = vpop.permute.xlu0 %6309
      %6311 = vrot.lane.b32.xlu0 %v6246, 16
      %v6312 = vpop.permute.xlu0 %6311
      %6313 = vrot.lane.b32.xlu0 %v6254, 16
      %v6314 = vpop.permute.xlu0 %6313
      %6315 = vrot.lane.b32.xlu0 %v6262, 16
      %v6316 = vpop.permute.xlu0 %6315
      %6317 = vrot.lane.b32.xlu0 %v6270, 16
      %v6318 = vpop.permute.xlu0 %6317
      %v6319 = vrot.slane %v6048, 1
      %v6320 = vrot.slane %v6049, 1
      %v6321 = vsel %vm909, %v6319, %v6320
      %v6322 = vrot.slane %v6050, 1
      %v6323 = vsel %vm909, %v6320, %v6322
      %v6324 = vrot.slane %v6051, 1
      %v6325 = vsel %vm909, %v6322, %v6324
      %v6326 = vrot.slane %v6052, 1
      %v6327 = vsel %vm909, %v6324, %v6326
      %v6328 = vrot.slane %v6053, 1
      %v6329 = vsel %vm909, %v6326, %v6328
      %v6330 = vrot.slane %v6054, 1
      %v6331 = vsel %vm909, %v6328, %v6330
      %v6332 = vrot.slane %v6055, 1
      %v6333 = vsel %vm909, %v6330, %v6332
      %v6334 = vrot.slane %v6056, 1
      %v6335 = vsel %vm909, %v6332, %v6334
      %v6336 = vrot.slane %v6057, 1
      %v6337 = vsel %vm909, %v6334, %v6336
      %v6338 = vrot.slane %v6058, 1
      %v6339 = vsel %vm909, %v6336, %v6338
      %v6340 = vrot.slane %v6059, 1
      %v6341 = vsel %vm909, %v6338, %v6340
      %v6342 = vrot.slane %v6060, 1
      %v6343 = vsel %vm909, %v6340, %v6342
      %v6344 = vrot.slane %v6061, 1
      %v6345 = vsel %vm909, %v6342, %v6344
      %v6346 = vrot.slane %v6062, 1
      %v6347 = vsel %vm909, %v6344, %v6346
      %v6348 = vrot.slane %v6063, 1
      %v6349 = vsel %vm909, %v6346, %v6348
      %v6350 = vrot.slane %v6064, 1
      %v6351 = vsel %vm909, %v6348, %v6350
      %v6352 = vrot.slane %v6065, 1
      %v6353 = vsel %vm909, %v6350, %v6352
      %v6354 = vrot.slane %v6066, 1
      %v6355 = vsel %vm909, %v6352, %v6354
      %v6356 = vrot.slane %v6067, 1
      %v6357 = vsel %vm909, %v6354, %v6356
      %v6358 = vrot.slane %v6068, 1
      %v6359 = vsel %vm909, %v6356, %v6358
      %v6360 = vrot.slane %v6069, 1
      %v6361 = vsel %vm909, %v6358, %v6360
      %v6362 = vrot.slane %v6070, 1
      %v6363 = vsel %vm909, %v6360, %v6362
      %v6364 = vrot.slane %v6071, 1
      %v6365 = vsel %vm909, %v6362, %v6364
      %v6366 = vrot.slane %v6074, 1
      %v6367 = vsel %vm909, %v6364, %v6366
      %6368 = vrot.lane.b32.xlu0 %v6321, 32
      %v6369 = vpop.permute.xlu0 %6368
      %6370 = vrot.lane.b32.xlu0 %v6323, 32
      %v6371 = vpop.permute.xlu0 %6370
      %6372 = vrot.lane.b32.xlu0 %v6325, 32
      %v6373 = vpop.permute.xlu0 %6372
      %6374 = vrot.lane.b32.xlu0 %v6327, 32
      %v6375 = vpop.permute.xlu0 %6374
      %6376 = vrot.lane.b32.xlu0 %v6329, 32
      %v6377 = vpop.permute.xlu0 %6376
      %6378 = vrot.lane.b32.xlu0 %v6331, 32
      %v6379 = vpop.permute.xlu0 %6378
      %6380 = vrot.lane.b32.xlu0 %v6333, 32
      %v6381 = vpop.permute.xlu0 %6380
      %6382 = vrot.lane.b32.xlu0 %v6335, 32
      %v6383 = vpop.permute.xlu0 %6382
      %6384 = vrot.lane.b32.xlu0 %v6337, 32
      %v6385 = vpop.permute.xlu0 %6384
      %6386 = vrot.lane.b32.xlu0 %v6339, 32
      %v6387 = vpop.permute.xlu0 %6386
      %6388 = vrot.lane.b32.xlu0 %v6341, 32
      %v6389 = vpop.permute.xlu0 %6388
      %6390 = vrot.lane.b32.xlu0 %v6343, 32
      %v6391 = vpop.permute.xlu0 %6390
      %6392 = vrot.lane.b32.xlu0 %v6345, 32
      %v6393 = vpop.permute.xlu0 %6392
      %6394 = vrot.lane.b32.xlu0 %v6347, 32
      %v6395 = vpop.permute.xlu0 %6394
      %6396 = vrot.lane.b32.xlu0 %v6349, 32
      %v6397 = vpop.permute.xlu0 %6396
      %6398 = vrot.lane.b32.xlu0 %v6351, 32
      %v6399 = vpop.permute.xlu0 %6398
      %6400 = vrot.lane.b32.xlu0 %v6353, 32
      %v6401 = vpop.permute.xlu0 %6400
      %6402 = vrot.lane.b32.xlu0 %v6355, 32
      %v6403 = vpop.permute.xlu0 %6402
      %6404 = vrot.lane.b32.xlu0 %v6357, 32
      %v6405 = vpop.permute.xlu0 %6404
      %6406 = vrot.lane.b32.xlu0 %v6359, 32
      %v6407 = vpop.permute.xlu0 %6406
      %6408 = vrot.lane.b32.xlu0 %v6361, 32
      %v6409 = vpop.permute.xlu0 %6408
      %6410 = vrot.lane.b32.xlu0 %v6363, 32
      %v6411 = vpop.permute.xlu0 %6410
      %6412 = vrot.lane.b32.xlu0 %v6365, 32
      %v6413 = vpop.permute.xlu0 %6412
      %6414 = vrot.lane.b32.xlu0 %v6367, 32
      %v6415 = vpop.permute.xlu0 %6414
      %v6418 = vunpack.c.l.b16 %v5946
      %v6419 = vunpack.c.l.b16 %v5947
      %v6420 = vpack.c.b16 %v6004, %v6003
      %v6421 = vpack.c.b16 %v6006, %v6005
      %v6422 = vpack.c.b16 %v6008, %v6007
      %v6423 = vpack.c.b16 %v6010, %v6009
      %v6424 = vpack.c.b16 %v6012, %v6011
      %v6425 = vpack.c.b16 %v6014, %v6013
      %v6426 = vpack.c.b16 %v6016, %v6015
      %v6427 = vpack.c.b16 %v6018, %v6017
      %v6428 = vpack.c.b16 %v6020, %v6019
      %v6429 = vpack.c.b16 %v6022, %v6021
      %v6430 = vpack.c.b16 %v6024, %v6023
      %v6431 = vpack.c.b16 %v6026, %v6025
      %v6432 = vpack.c.b16 %v6028, %v6027
      %v6433 = vpack.c.b16 %v6030, %v6029
      %v6434 = vpack.c.b16 %v6032, %v6031
      %v6435 = vpack.c.b16 %v6034, %v6033
      %v6436 = vpack.c.b16 %v6036, %v6035
      %v6437 = vpack.c.b16 %v6038, %v6037
      %v6438 = vpack.c.b16 %v6040, %v6039
      %v6439 = vpack.c.b16 %v6042, %v6041
      %v6440 = vpack.c.b16 %v6044, %v6043
      %v6441 = vpack.c.b16 %v6046, %v6045
      %v6442 = vpack.c.b16 %v6073, %v6047
      %v6443 = vpack.c.b16 %v6419, %v6418
      %6444 = vrot.lane.b32.xlu0 %v6420, 48
      %v6445 = vpop.permute.xlu0 %6444
      %6446 = vrot.lane.b32.xlu0 %v6421, 48
      %v6447 = vpop.permute.xlu0 %6446
      %6448 = vrot.lane.b32.xlu0 %v6422, 48
      %v6449 = vpop.permute.xlu0 %6448
      %6450 = vrot.lane.b32.xlu0 %v6423, 48
      %v6451 = vpop.permute.xlu0 %6450
      %6452 = vrot.lane.b32.xlu0 %v6424, 48
      %v6453 = vpop.permute.xlu0 %6452
      %6454 = vrot.lane.b32.xlu0 %v6425, 48
      %v6455 = vpop.permute.xlu0 %6454
      %6456 = vrot.lane.b32.xlu0 %v6426, 48
      %v6457 = vpop.permute.xlu0 %6456
      %6458 = vrot.lane.b32.xlu0 %v6427, 48
      %v6459 = vpop.permute.xlu0 %6458
      %6460 = vrot.lane.b32.xlu0 %v6428, 48
      %v6461 = vpop.permute.xlu0 %6460
      %6462 = vrot.lane.b32.xlu0 %v6429, 48
      %v6463 = vpop.permute.xlu0 %6462
      %6464 = vrot.lane.b32.xlu0 %v6430, 48
      %v6465 = vpop.permute.xlu0 %6464
      %6466 = vrot.lane.b32.xlu0 %v6431, 48
      %v6467 = vpop.permute.xlu0 %6466
      %6468 = vrot.lane.b32.xlu0 %v6432, 48
      %v6469 = vpop.permute.xlu0 %6468
      %6470 = vrot.lane.b32.xlu0 %v6433, 48
      %v6471 = vpop.permute.xlu0 %6470
      %6472 = vrot.lane.b32.xlu0 %v6434, 48
      %v6473 = vpop.permute.xlu0 %6472
      %6474 = vrot.lane.b32.xlu0 %v6435, 48
      %v6475 = vpop.permute.xlu0 %6474
      %6476 = vrot.lane.b32.xlu0 %v6436, 48
      %v6477 = vpop.permute.xlu0 %6476
      %6478 = vrot.lane.b32.xlu0 %v6437, 48
      %v6479 = vpop.permute.xlu0 %6478
      %6480 = vrot.lane.b32.xlu0 %v6438, 48
      %v6481 = vpop.permute.xlu0 %6480
      %6482 = vrot.lane.b32.xlu0 %v6439, 48
      %v6483 = vpop.permute.xlu0 %6482
      %6484 = vrot.lane.b32.xlu0 %v6440, 48
      %v6485 = vpop.permute.xlu0 %6484
      %6486 = vrot.lane.b32.xlu0 %v6441, 48
      %v6487 = vpop.permute.xlu0 %6486
      %6488 = vrot.lane.b32.xlu0 %v6442, 48
      %v6489 = vpop.permute.xlu0 %6488
      %6490 = vrot.lane.b32.xlu0 %v6443, 48
      %v6491 = vpop.permute.xlu0 %6490
      %v6493 = vunpack.c.l.b16 %v5948
      %v6494 = vpack.c.b16 %v6493, %v6493
      %v6496 = vshrl.u32 %v6420, 16
      %v6498 = vshll.u32 %v6420, 16
      %v6500 = vrot.slane %v6498, 1
      %v6501 = vor.u32 %v6496, %v6500
      %v6503 = vshll.u32 %v6421, 16
      %v6505 = vrot.slane %v6503, 1
      %v6506 = vsel %vm556, %v6501, %v6505
      %v6507 = vshrl.u32 %v6421, 16
      %v6509 = vor.u32 %v6507, %v6505
      %v6511 = vshll.u32 %v6422, 16
      %v6513 = vrot.slane %v6511, 1
      %v6514 = vsel %vm556, %v6509, %v6513
      %v6515 = vshrl.u32 %v6422, 16
      %v6517 = vor.u32 %v6515, %v6513
      %v6519 = vshll.u32 %v6423, 16
      %v6521 = vrot.slane %v6519, 1
      %v6522 = vsel %vm556, %v6517, %v6521
      %v6523 = vshrl.u32 %v6423, 16
      %v6525 = vor.u32 %v6523, %v6521
      %v6527 = vshll.u32 %v6424, 16
      %v6529 = vrot.slane %v6527, 1
      %v6530 = vsel %vm556, %v6525, %v6529
      %v6531 = vshrl.u32 %v6424, 16
      %v6533 = vor.u32 %v6531, %v6529
      %v6535 = vshll.u32 %v6425, 16
      %v6537 = vrot.slane %v6535, 1
      %v6538 = vsel %vm556, %v6533, %v6537
      %v6539 = vshrl.u32 %v6425, 16
      %v6541 = vor.u32 %v6539, %v6537
      %v6543 = vshll.u32 %v6426, 16
      %v6545 = vrot.slane %v6543, 1
      %v6546 = vsel %vm556, %v6541, %v6545
      %v6547 = vshrl.u32 %v6426, 16
      %v6549 = vor.u32 %v6547, %v6545
      %v6551 = vshll.u32 %v6427, 16
      %v6553 = vrot.slane %v6551, 1
      %v6554 = vsel %vm556, %v6549, %v6553
      %v6555 = vshrl.u32 %v6427, 16
      %v6557 = vor.u32 %v6555, %v6553
      %v6559 = vshll.u32 %v6428, 16
      %v6561 = vrot.slane %v6559, 1
      %v6562 = vsel %vm556, %v6557, %v6561
      %v6563 = vshrl.u32 %v6428, 16
      %v6565 = vor.u32 %v6563, %v6561
      %v6567 = vshll.u32 %v6429, 16
      %v6569 = vrot.slane %v6567, 1
      %v6570 = vsel %vm556, %v6565, %v6569
      %v6571 = vshrl.u32 %v6429, 16
      %v6573 = vor.u32 %v6571, %v6569
      %v6575 = vshll.u32 %v6430, 16
      %v6577 = vrot.slane %v6575, 1
      %v6578 = vsel %vm556, %v6573, %v6577
      %v6579 = vshrl.u32 %v6430, 16
      %v6581 = vor.u32 %v6579, %v6577
      %v6583 = vshll.u32 %v6431, 16
      %v6585 = vrot.slane %v6583, 1
      %v6586 = vsel %vm556, %v6581, %v6585
      %v6587 = vshrl.u32 %v6431, 16
      %v6589 = vor.u32 %v6587, %v6585
      %v6591 = vshll.u32 %v6432, 16
      %v6593 = vrot.slane %v6591, 1
      %v6594 = vsel %vm556, %v6589, %v6593
      %v6595 = vshrl.u32 %v6432, 16
      %v6597 = vor.u32 %v6595, %v6593
      %v6599 = vshll.u32 %v6433, 16
      %v6601 = vrot.slane %v6599, 1
      %v6602 = vsel %vm556, %v6597, %v6601
      %v6603 = vshrl.u32 %v6433, 16
      %v6605 = vor.u32 %v6603, %v6601
      %v6607 = vshll.u32 %v6434, 16
      %v6609 = vrot.slane %v6607, 1
      %v6610 = vsel %vm556, %v6605, %v6609
      %v6611 = vshrl.u32 %v6434, 16
      %v6613 = vor.u32 %v6611, %v6609
      %v6615 = vshll.u32 %v6435, 16
      %v6617 = vrot.slane %v6615, 1
      %v6618 = vsel %vm556, %v6613, %v6617
      %v6619 = vshrl.u32 %v6435, 16
      %v6621 = vor.u32 %v6619, %v6617
      %v6623 = vshll.u32 %v6436, 16
      %v6625 = vrot.slane %v6623, 1
      %v6626 = vsel %vm556, %v6621, %v6625
      %v6627 = vshrl.u32 %v6436, 16
      %v6629 = vor.u32 %v6627, %v6625
      %v6631 = vshll.u32 %v6437, 16
      %v6633 = vrot.slane %v6631, 1
      %v6634 = vsel %vm556, %v6629, %v6633
      %v6635 = vshrl.u32 %v6437, 16
      %v6637 = vor.u32 %v6635, %v6633
      %v6639 = vshll.u32 %v6438, 16
      %v6641 = vrot.slane %v6639, 1
      %v6642 = vsel %vm556, %v6637, %v6641
      %v6643 = vshrl.u32 %v6438, 16
      %v6645 = vor.u32 %v6643, %v6641
      %v6647 = vshll.u32 %v6439, 16
      %v6649 = vrot.slane %v6647, 1
      %v6650 = vsel %vm556, %v6645, %v6649
      %v6651 = vshrl.u32 %v6439, 16
      %v6653 = vor.u32 %v6651, %v6649
      %v6655 = vshll.u32 %v6440, 16
      %v6657 = vrot.slane %v6655, 1
      %v6658 = vsel %vm556, %v6653, %v6657
      %v6659 = vshrl.u32 %v6440, 16
      %v6661 = vor.u32 %v6659, %v6657
      %v6663 = vshll.u32 %v6441, 16
      %v6665 = vrot.slane %v6663, 1
      %v6666 = vsel %vm556, %v6661, %v6665
      %v6667 = vshrl.u32 %v6441, 16
      %v6669 = vor.u32 %v6667, %v6665
      %v6671 = vshll.u32 %v6442, 16
      %v6673 = vrot.slane %v6671, 1
      %v6674 = vsel %vm556, %v6669, %v6673
      %v6675 = vshrl.u32 %v6442, 16
      %v6677 = vor.u32 %v6675, %v6673
      %v6679 = vshll.u32 %v6443, 16
      %v6681 = vrot.slane %v6679, 1
      %v6682 = vsel %vm556, %v6677, %v6681
      %v6683 = vshrl.u32 %v6443, 16
      %v6685 = vor.u32 %v6683, %v6681
      %v6687 = vshll.u32 %v6494, 16
      %v6689 = vrot.slane %v6687, 1
      %v6690 = vsel %vm556, %v6685, %v6689
      %6691 = vrot.lane.b32.xlu0 %v6506, 64
      %v6692 = vpop.permute.xlu0 %6691
      %6693 = vrot.lane.b32.xlu0 %v6514, 64
      %v6694 = vpop.permute.xlu0 %6693
      %6695 = vrot.lane.b32.xlu0 %v6522, 64
      %v6696 = vpop.permute.xlu0 %6695
      %6697 = vrot.lane.b32.xlu0 %v6530, 64
      %v6698 = vpop.permute.xlu0 %6697
      %6699 = vrot.lane.b32.xlu0 %v6538, 64
      %v6700 = vpop.permute.xlu0 %6699
      %6701 = vrot.lane.b32.xlu0 %v6546, 64
      %v6702 = vpop.permute.xlu0 %6701
      %6703 = vrot.lane.b32.xlu0 %v6554, 64
      %v6704 = vpop.permute.xlu0 %6703
      %6705 = vrot.lane.b32.xlu0 %v6562, 64
      %v6706 = vpop.permute.xlu0 %6705
      %6707 = vrot.lane.b32.xlu0 %v6570, 64
      %v6708 = vpop.permute.xlu0 %6707
      %6709 = vrot.lane.b32.xlu0 %v6578, 64
      %v6710 = vpop.permute.xlu0 %6709
      %6711 = vrot.lane.b32.xlu0 %v6586, 64
      %v6712 = vpop.permute.xlu0 %6711
      %6713 = vrot.lane.b32.xlu0 %v6594, 64
      %v6714 = vpop.permute.xlu0 %6713
      %6715 = vrot.lane.b32.xlu0 %v6602, 64
      %v6716 = vpop.permute.xlu0 %6715
      %6717 = vrot.lane.b32.xlu0 %v6610, 64
      %v6718 = vpop.permute.xlu0 %6717
      %6719 = vrot.lane.b32.xlu0 %v6618, 64
      %v6720 = vpop.permute.xlu0 %6719
      %6721 = vrot.lane.b32.xlu0 %v6626, 64
      %v6722 = vpop.permute.xlu0 %6721
      %6723 = vrot.lane.b32.xlu0 %v6634, 64
      %v6724 = vpop.permute.xlu0 %6723
      %6725 = vrot.lane.b32.xlu0 %v6642, 64
      %v6726 = vpop.permute.xlu0 %6725
      %6727 = vrot.lane.b32.xlu0 %v6650, 64
      %v6728 = vpop.permute.xlu0 %6727
      %6729 = vrot.lane.b32.xlu0 %v6658, 64
      %v6730 = vpop.permute.xlu0 %6729
      %6731 = vrot.lane.b32.xlu0 %v6666, 64
      %v6732 = vpop.permute.xlu0 %6731
      %6733 = vrot.lane.b32.xlu0 %v6674, 64
      %v6734 = vpop.permute.xlu0 %6733
      %6735 = vrot.lane.b32.xlu0 %v6682, 64
      %v6736 = vpop.permute.xlu0 %6735
      %6737 = vrot.lane.b32.xlu0 %v6690, 64
      %v6738 = vpop.permute.xlu0 %6737
      %v6739 = vrot.slane %v6420, 1
      %v6740 = vrot.slane %v6421, 1
      %v6741 = vsel %vm909, %v6739, %v6740
      %v6742 = vrot.slane %v6422, 1
      %v6743 = vsel %vm909, %v6740, %v6742
      %v6744 = vrot.slane %v6423, 1
      %v6745 = vsel %vm909, %v6742, %v6744
      %v6746 = vrot.slane %v6424, 1
      %v6747 = vsel %vm909, %v6744, %v6746
      %v6748 = vrot.slane %v6425, 1
      %v6749 = vsel %vm909, %v6746, %v6748
      %v6750 = vrot.slane %v6426, 1
      %v6751 = vsel %vm909, %v6748, %v6750
      %v6752 = vrot.slane %v6427, 1
      %v6753 = vsel %vm909, %v6750, %v6752
      %v6754 = vrot.slane %v6428, 1
      %v6755 = vsel %vm909, %v6752, %v6754
      %v6756 = vrot.slane %v6429, 1
      %v6757 = vsel %vm909, %v6754, %v6756
      %v6758 = vrot.slane %v6430, 1
      %v6759 = vsel %vm909, %v6756, %v6758
      %v6760 = vrot.slane %v6431, 1
      %v6761 = vsel %vm909, %v6758, %v6760
      %v6762 = vrot.slane %v6432, 1
      %v6763 = vsel %vm909, %v6760, %v6762
      %v6764 = vrot.slane %v6433, 1
      %v6765 = vsel %vm909, %v6762, %v6764
      %v6766 = vrot.slane %v6434, 1
      %v6767 = vsel %vm909, %v6764, %v6766
      %v6768 = vrot.slane %v6435, 1
      %v6769 = vsel %vm909, %v6766, %v6768
      %v6770 = vrot.slane %v6436, 1
      %v6771 = vsel %vm909, %v6768, %v6770
      %v6772 = vrot.slane %v6437, 1
      %v6773 = vsel %vm909, %v6770, %v6772
      %v6774 = vrot.slane %v6438, 1
      %v6775 = vsel %vm909, %v6772, %v6774
      %v6776 = vrot.slane %v6439, 1
      %v6777 = vsel %vm909, %v6774, %v6776
      %v6778 = vrot.slane %v6440, 1
      %v6779 = vsel %vm909, %v6776, %v6778
      %v6780 = vrot.slane %v6441, 1
      %v6781 = vsel %vm909, %v6778, %v6780
      %v6782 = vrot.slane %v6442, 1
      %v6783 = vsel %vm909, %v6780, %v6782
      %v6784 = vrot.slane %v6443, 1
      %v6785 = vsel %vm909, %v6782, %v6784
      %v6786 = vrot.slane %v6494, 1
      %v6787 = vsel %vm909, %v6784, %v6786
      %6788 = vrot.lane.b32.xlu0 %v6741, 80
      %v6789 = vpop.permute.xlu0 %6788
      %6790 = vrot.lane.b32.xlu0 %v6743, 80
      %v6791 = vpop.permute.xlu0 %6790
      %6792 = vrot.lane.b32.xlu0 %v6745, 80
      %v6793 = vpop.permute.xlu0 %6792
      %6794 = vrot.lane.b32.xlu0 %v6747, 80
      %v6795 = vpop.permute.xlu0 %6794
      %6796 = vrot.lane.b32.xlu0 %v6749, 80
      %v6797 = vpop.permute.xlu0 %6796
      %6798 = vrot.lane.b32.xlu0 %v6751, 80
      %v6799 = vpop.permute.xlu0 %6798
      %6800 = vrot.lane.b32.xlu0 %v6753, 80
      %v6801 = vpop.permute.xlu0 %6800
      %6802 = vrot.lane.b32.xlu0 %v6755, 80
      %v6803 = vpop.permute.xlu0 %6802
      %6804 = vrot.lane.b32.xlu0 %v6757, 80
      %v6805 = vpop.permute.xlu0 %6804
      %6806 = vrot.lane.b32.xlu0 %v6759, 80
      %v6807 = vpop.permute.xlu0 %6806
      %6808 = vrot.lane.b32.xlu0 %v6761, 80
      %v6809 = vpop.permute.xlu0 %6808
      %6810 = vrot.lane.b32.xlu0 %v6763, 80
      %v6811 = vpop.permute.xlu0 %6810
      %6812 = vrot.lane.b32.xlu0 %v6765, 80
      %v6813 = vpop.permute.xlu0 %6812
      %6814 = vrot.lane.b32.xlu0 %v6767, 80
      %v6815 = vpop.permute.xlu0 %6814
      %6816 = vrot.lane.b32.xlu0 %v6769, 80
      %v6817 = vpop.permute.xlu0 %6816
      %6818 = vrot.lane.b32.xlu0 %v6771, 80
      %v6819 = vpop.permute.xlu0 %6818
      %6820 = vrot.lane.b32.xlu0 %v6773, 80
      %v6821 = vpop.permute.xlu0 %6820
      %6822 = vrot.lane.b32.xlu0 %v6775, 80
      %v6823 = vpop.permute.xlu0 %6822
      %6824 = vrot.lane.b32.xlu0 %v6777, 80
      %v6825 = vpop.permute.xlu0 %6824
      %6826 = vrot.lane.b32.xlu0 %v6779, 80
      %v6827 = vpop.permute.xlu0 %6826
      %6828 = vrot.lane.b32.xlu0 %v6781, 80
      %v6829 = vpop.permute.xlu0 %6828
      %6830 = vrot.lane.b32.xlu0 %v6783, 80
      %v6831 = vpop.permute.xlu0 %6830
      %6832 = vrot.lane.b32.xlu0 %v6785, 80
      %v6833 = vpop.permute.xlu0 %6832
      %6834 = vrot.lane.b32.xlu0 %v6787, 80
      %v6835 = vpop.permute.xlu0 %6834
      %v6838 = vunpack.c.l.b16 %v5949
      %v6839 = vunpack.c.l.b16 %v5950
      %v6840 = vpack.c.b16 %v6418, %v6073
      %v6841 = vpack.c.b16 %v6493, %v6419
      %v6842 = vpack.c.b16 %v6839, %v6838
      %6843 = vrot.lane.b32.xlu0 %v6051, 96
      %v6844 = vpop.permute.xlu0 %6843
      %6845 = vrot.lane.b32.xlu0 %v6052, 96
      %v6846 = vpop.permute.xlu0 %6845
      %6847 = vrot.lane.b32.xlu0 %v6053, 96
      %v6848 = vpop.permute.xlu0 %6847
      %6849 = vrot.lane.b32.xlu0 %v6054, 96
      %v6850 = vpop.permute.xlu0 %6849
      %6851 = vrot.lane.b32.xlu0 %v6055, 96
      %v6852 = vpop.permute.xlu0 %6851
      %6853 = vrot.lane.b32.xlu0 %v6056, 96
      %v6854 = vpop.permute.xlu0 %6853
      %6855 = vrot.lane.b32.xlu0 %v6057, 96
      %v6856 = vpop.permute.xlu0 %6855
      %6857 = vrot.lane.b32.xlu0 %v6058, 96
      %v6858 = vpop.permute.xlu0 %6857
      %6859 = vrot.lane.b32.xlu0 %v6059, 96
      %v6860 = vpop.permute.xlu0 %6859
      %6861 = vrot.lane.b32.xlu0 %v6060, 96
      %v6862 = vpop.permute.xlu0 %6861
      %6863 = vrot.lane.b32.xlu0 %v6061, 96
      %v6864 = vpop.permute.xlu0 %6863
      %6865 = vrot.lane.b32.xlu0 %v6062, 96
      %v6866 = vpop.permute.xlu0 %6865
      %6867 = vrot.lane.b32.xlu0 %v6063, 96
      %v6868 = vpop.permute.xlu0 %6867
      %6869 = vrot.lane.b32.xlu0 %v6064, 96
      %v6870 = vpop.permute.xlu0 %6869
      %6871 = vrot.lane.b32.xlu0 %v6065, 96
      %v6872 = vpop.permute.xlu0 %6871
      %6873 = vrot.lane.b32.xlu0 %v6066, 96
      %v6874 = vpop.permute.xlu0 %6873
      %6875 = vrot.lane.b32.xlu0 %v6067, 96
      %v6876 = vpop.permute.xlu0 %6875
      %6877 = vrot.lane.b32.xlu0 %v6068, 96
      %v6878 = vpop.permute.xlu0 %6877
      %6879 = vrot.lane.b32.xlu0 %v6069, 96
      %v6880 = vpop.permute.xlu0 %6879
      %6881 = vrot.lane.b32.xlu0 %v6070, 96
      %v6882 = vpop.permute.xlu0 %6881
      %6883 = vrot.lane.b32.xlu0 %v6071, 96
      %v6884 = vpop.permute.xlu0 %6883
      %6885 = vrot.lane.b32.xlu0 %v6840, 96
      %v6886 = vpop.permute.xlu0 %6885
      %6887 = vrot.lane.b32.xlu0 %v6841, 96
      %v6888 = vpop.permute.xlu0 %6887
      %6889 = vrot.lane.b32.xlu0 %v6842, 96
      %v6890 = vpop.permute.xlu0 %6889
      %v6892 = vunpack.c.l.b16 %v5951
      %v6893 = vpack.c.b16 %v6892, %v6892
      %v6895 = vshll.u32 %v6840, 16
      %v6897 = vrot.slane %v6895, 1
      %v6898 = vsel %vm556, %v6265, %v6897
      %v6899 = vshrl.u32 %v6840, 16
      %v6901 = vor.u32 %v6899, %v6897
      %v6903 = vshll.u32 %v6841, 16
      %v6905 = vrot.slane %v6903, 1
      %v6906 = vsel %vm556, %v6901, %v6905
      %v6907 = vshrl.u32 %v6841, 16
      %v6909 = vor.u32 %v6907, %v6905
      %v6911 = vshll.u32 %v6842, 16
      %v6913 = vrot.slane %v6911, 1
      %v6914 = vsel %vm556, %v6909, %v6913
      %v6915 = vshrl.u32 %v6842, 16
      %v6917 = vor.u32 %v6915, %v6913
      %v6919 = vshll.u32 %v6893, 16
      %v6921 = vrot.slane %v6919, 1
      %v6922 = vsel %vm556, %v6917, %v6921
      %6923 = vrot.lane.b32.xlu0 %v6110, 112
      %v6924 = vpop.permute.xlu0 %6923
      %6925 = vrot.lane.b32.xlu0 %v6118, 112
      %v6926 = vpop.permute.xlu0 %6925
      %6927 = vrot.lane.b32.xlu0 %v6126, 112
      %v6928 = vpop.permute.xlu0 %6927
      %6929 = vrot.lane.b32.xlu0 %v6134, 112
      %v6930 = vpop.permute.xlu0 %6929
      %6931 = vrot.lane.b32.xlu0 %v6142, 112
      %v6932 = vpop.permute.xlu0 %6931
      %6933 = vrot.lane.b32.xlu0 %v6150, 112
      %v6934 = vpop.permute.xlu0 %6933
      %6935 = vrot.lane.b32.xlu0 %v6158, 112
      %v6936 = vpop.permute.xlu0 %6935
      %6937 = vrot.lane.b32.xlu0 %v6166, 112
      %v6938 = vpop.permute.xlu0 %6937
      %6939 = vrot.lane.b32.xlu0 %v6174, 112
      %v6940 = vpop.permute.xlu0 %6939
      %6941 = vrot.lane.b32.xlu0 %v6182, 112
      %v6942 = vpop.permute.xlu0 %6941
      %6943 = vrot.lane.b32.xlu0 %v6190, 112
      %v6944 = vpop.permute.xlu0 %6943
      %6945 = vrot.lane.b32.xlu0 %v6198, 112
      %v6946 = vpop.permute.xlu0 %6945
      %6947 = vrot.lane.b32.xlu0 %v6206, 112
      %v6948 = vpop.permute.xlu0 %6947
      %6949 = vrot.lane.b32.xlu0 %v6214, 112
      %v6950 = vpop.permute.xlu0 %6949
      %6951 = vrot.lane.b32.xlu0 %v6222, 112
      %v6952 = vpop.permute.xlu0 %6951
      %6953 = vrot.lane.b32.xlu0 %v6230, 112
      %v6954 = vpop.permute.xlu0 %6953
      %6955 = vrot.lane.b32.xlu0 %v6238, 112
      %v6956 = vpop.permute.xlu0 %6955
      %6957 = vrot.lane.b32.xlu0 %v6246, 112
      %v6958 = vpop.permute.xlu0 %6957
      %6959 = vrot.lane.b32.xlu0 %v6254, 112
      %v6960 = vpop.permute.xlu0 %6959
      %6961 = vrot.lane.b32.xlu0 %v6262, 112
      %v6962 = vpop.permute.xlu0 %6961
      %6963 = vrot.lane.b32.xlu0 %v6898, 112
      %v6964 = vpop.permute.xlu0 %6963
      %6965 = vrot.lane.b32.xlu0 %v6906, 112
      %v6966 = vpop.permute.xlu0 %6965
      %6967 = vrot.lane.b32.xlu0 %v6914, 112
      %v6968 = vpop.permute.xlu0 %6967
      %6969 = vrot.lane.b32.xlu0 %v6922, 112
      %v6970 = vpop.permute.xlu0 %6969
      %v6971 = vrot.slane %v6840, 1
      %v6972 = vsel %vm909, %v6364, %v6971
      %v6973 = vrot.slane %v6841, 1
      %v6974 = vsel %vm909, %v6971, %v6973
      %v6975 = vrot.slane %v6842, 1
      %v6976 = vsel %vm909, %v6973, %v6975
      %v6977 = vrot.slane %v6893, 1
      %v6978 = vsel %vm909, %v6975, %v6977
      %vm6979 = vcmask 130048
      %v6981 = vsel %vm6979, %v6048, %v6272
      %v6983 = vsel %vm6979, %v6049, %v6274
      %v6985 = vsel %vm6979, %v6050, %v6276
      %v6987 = vsel %vm6979, %v6051, %v6278
      %v6989 = vsel %vm6979, %v6052, %v6280
      %v6991 = vsel %vm6979, %v6053, %v6282
      %v6993 = vsel %vm6979, %v6054, %v6284
      %v6995 = vsel %vm6979, %v6055, %v6286
      %v6997 = vsel %vm6979, %v6056, %v6288
      %v6999 = vsel %vm6979, %v6057, %v6290
      %v7001 = vsel %vm6979, %v6058, %v6292
      %v7003 = vsel %vm6979, %v6059, %v6294
      %v7005 = vsel %vm6979, %v6060, %v6296
      %v7007 = vsel %vm6979, %v6061, %v6298
      %v7009 = vsel %vm6979, %v6062, %v6300
      %v7011 = vsel %vm6979, %v6063, %v6302
      %v7013 = vsel %vm6979, %v6064, %v6304
      %v7015 = vsel %vm6979, %v6065, %v6306
      %v7017 = vsel %vm6979, %v6066, %v6308
      %v7019 = vsel %vm6979, %v6067, %v6310
      %v7021 = vsel %vm6979, %v6068, %v6312
      %v7023 = vsel %vm6979, %v6069, %v6314
      %v7025 = vsel %vm6979, %v6070, %v6316
      %v7027 = vsel %vm6979, %v6071, %v6318
      %vm7028 = vcmask 261120
      %v7030 = vsel %vm7028, %v6981, %v6369
      %v7032 = vsel %vm7028, %v6983, %v6371
      %v7034 = vsel %vm7028, %v6985, %v6373
      %v7036 = vsel %vm7028, %v6987, %v6375
      %v7038 = vsel %vm7028, %v6989, %v6377
      %v7040 = vsel %vm7028, %v6991, %v6379
      %v7042 = vsel %vm7028, %v6993, %v6381
      %v7044 = vsel %vm7028, %v6995, %v6383
      %v7046 = vsel %vm7028, %v6997, %v6385
      %v7048 = vsel %vm7028, %v6999, %v6387
      %v7050 = vsel %vm7028, %v7001, %v6389
      %v7052 = vsel %vm7028, %v7003, %v6391
      %v7054 = vsel %vm7028, %v7005, %v6393
      %v7056 = vsel %vm7028, %v7007, %v6395
      %v7058 = vsel %vm7028, %v7009, %v6397
      %v7060 = vsel %vm7028, %v7011, %v6399
      %v7062 = vsel %vm7028, %v7013, %v6401
      %v7064 = vsel %vm7028, %v7015, %v6403
      %v7066 = vsel %vm7028, %v7017, %v6405
      %v7068 = vsel %vm7028, %v7019, %v6407
      %v7070 = vsel %vm7028, %v7021, %v6409
      %v7072 = vsel %vm7028, %v7023, %v6411
      %v7074 = vsel %vm7028, %v7025, %v6413
      %v7076 = vsel %vm7028, %v7027, %v6415
      %vm7077 = vcmask 392192
      %v7079 = vsel %vm7077, %v7030, %v6445
      %v7081 = vsel %vm7077, %v7032, %v6447
      %v7083 = vsel %vm7077, %v7034, %v6449
      %v7085 = vsel %vm7077, %v7036, %v6451
      %v7087 = vsel %vm7077, %v7038, %v6453
      %v7089 = vsel %vm7077, %v7040, %v6455
      %v7091 = vsel %vm7077, %v7042, %v6457
      %v7093 = vsel %vm7077, %v7044, %v6459
      %v7095 = vsel %vm7077, %v7046, %v6461
      %v7097 = vsel %vm7077, %v7048, %v6463
      %v7099 = vsel %vm7077, %v7050, %v6465
      %v7101 = vsel %vm7077, %v7052, %v6467
      %v7103 = vsel %vm7077, %v7054, %v6469
      %v7105 = vsel %vm7077, %v7056, %v6471
      %v7107 = vsel %vm7077, %v7058, %v6473
      %v7109 = vsel %vm7077, %v7060, %v6475
      %v7111 = vsel %vm7077, %v7062, %v6477
      %v7113 = vsel %vm7077, %v7064, %v6479
      %v7115 = vsel %vm7077, %v7066, %v6481
      %v7117 = vsel %vm7077, %v7068, %v6483
      %v7119 = vsel %vm7077, %v7070, %v6485
      %v7121 = vsel %vm7077, %v7072, %v6487
      %v7123 = vsel %vm7077, %v7074, %v6489
      %v7125 = vsel %vm7077, %v7076, %v6491
      %v7127 = vsel %vm1275, %v7079, %v6692
      %v7129 = vsel %vm1275, %v7081, %v6694
      %v7131 = vsel %vm1275, %v7083, %v6696
      %v7133 = vsel %vm1275, %v7085, %v6698
      %v7135 = vsel %vm1275, %v7087, %v6700
      %v7137 = vsel %vm1275, %v7089, %v6702
      %v7139 = vsel %vm1275, %v7091, %v6704
      %v7141 = vsel %vm1275, %v7093, %v6706
      %v7143 = vsel %vm1275, %v7095, %v6708
      %v7145 = vsel %vm1275, %v7097, %v6710
      %v7147 = vsel %vm1275, %v7099, %v6712
      %v7149 = vsel %vm1275, %v7101, %v6714
      %v7151 = vsel %vm1275, %v7103, %v6716
      %v7153 = vsel %vm1275, %v7105, %v6718
      %v7155 = vsel %vm1275, %v7107, %v6720
      %v7157 = vsel %vm1275, %v7109, %v6722
      %v7159 = vsel %vm1275, %v7111, %v6724
      %v7161 = vsel %vm1275, %v7113, %v6726
      %v7163 = vsel %vm1275, %v7115, %v6728
      %v7165 = vsel %vm1275, %v7117, %v6730
      %v7167 = vsel %vm1275, %v7119, %v6732
      %v7169 = vsel %vm1275, %v7121, %v6734
      %v7171 = vsel %vm1275, %v7123, %v6736
      %v7173 = vsel %vm1275, %v7125, %v6738
      %vm7174 = vcmask 654336
      %v7176 = vsel %vm7174, %v7127, %v6789
      %v7178 = vsel %vm7174, %v7129, %v6791
      %v7180 = vsel %vm7174, %v7131, %v6793
      %v7182 = vsel %vm7174, %v7133, %v6795
      %v7184 = vsel %vm7174, %v7135, %v6797
      %v7186 = vsel %vm7174, %v7137, %v6799
      %v7188 = vsel %vm7174, %v7139, %v6801
      %v7190 = vsel %vm7174, %v7141, %v6803
      %v7192 = vsel %vm7174, %v7143, %v6805
      %v7194 = vsel %vm7174, %v7145, %v6807
      %v7196 = vsel %vm7174, %v7147, %v6809
      %v7198 = vsel %vm7174, %v7149, %v6811
      %v7200 = vsel %vm7174, %v7151, %v6813
      %v7202 = vsel %vm7174, %v7153, %v6815
      %v7204 = vsel %vm7174, %v7155, %v6817
      %v7206 = vsel %vm7174, %v7157, %v6819
      %v7208 = vsel %vm7174, %v7159, %v6821
      %v7210 = vsel %vm7174, %v7161, %v6823
      %v7212 = vsel %vm7174, %v7163, %v6825
      %v7214 = vsel %vm7174, %v7165, %v6827
      %v7216 = vsel %vm7174, %v7167, %v6829
      %v7218 = vsel %vm7174, %v7169, %v6831
      %v7220 = vsel %vm7174, %v7171, %v6833
      %v7222 = vsel %vm7174, %v7173, %v6835
      %vm7223 = vcmask 785408
      %v7225 = vsel %vm7223, %v7176, %v6844
      %v7227 = vsel %vm7223, %v7178, %v6846
      %v7229 = vsel %vm7223, %v7180, %v6848
      %v7231 = vsel %vm7223, %v7182, %v6850
      %v7233 = vsel %vm7223, %v7184, %v6852
      %v7235 = vsel %vm7223, %v7186, %v6854
      %v7237 = vsel %vm7223, %v7188, %v6856
      %v7239 = vsel %vm7223, %v7190, %v6858
      %v7241 = vsel %vm7223, %v7192, %v6860
      %v7243 = vsel %vm7223, %v7194, %v6862
      %v7245 = vsel %vm7223, %v7196, %v6864
      %v7247 = vsel %vm7223, %v7198, %v6866
      %v7249 = vsel %vm7223, %v7200, %v6868
      %v7251 = vsel %vm7223, %v7202, %v6870
      %v7253 = vsel %vm7223, %v7204, %v6872
      %v7255 = vsel %vm7223, %v7206, %v6874
      %v7257 = vsel %vm7223, %v7208, %v6876
      %v7259 = vsel %vm7223, %v7210, %v6878
      %v7261 = vsel %vm7223, %v7212, %v6880
      %v7263 = vsel %vm7223, %v7214, %v6882
      %v7265 = vsel %vm7223, %v7216, %v6884
      %v7267 = vsel %vm7223, %v7218, %v6886
      %v7269 = vsel %vm7223, %v7220, %v6888
      %v7271 = vsel %vm7223, %v7222, %v6890
      %vm7272 = vcmask 916480
      %v7274 = vsel %vm7272, %v7225, %v6924
      %v7277 = vsel %vm7272, %v7227, %v6926
      %v7280 = vsel %vm7272, %v7229, %v6928
      %v7283 = vsel %vm7272, %v7231, %v6930
      %v7286 = vsel %vm7272, %v7233, %v6932
      %v7289 = vsel %vm7272, %v7235, %v6934
      %v7292 = vsel %vm7272, %v7237, %v6936
      %v7295 = vsel %vm7272, %v7239, %v6938
      %v7298 = vsel %vm7272, %v7241, %v6940
      %v7301 = vsel %vm7272, %v7243, %v6942
      %v7304 = vsel %vm7272, %v7245, %v6944
      %v7307 = vsel %vm7272, %v7247, %v6946
      %v7310 = vsel %vm7272, %v7249, %v6948
      %v7313 = vsel %vm7272, %v7251, %v6950
      %v7316 = vsel %vm7272, %v7253, %v6952
      %v7319 = vsel %vm7272, %v7255, %v6954
      %v7322 = vsel %vm7272, %v7257, %v6956
      %v7325 = vsel %vm7272, %v7259, %v6958
      %v7328 = vsel %vm7272, %v7261, %v6960
      %v7331 = vsel %vm7272, %v7263, %v6962
      %v7334 = vsel %vm7272, %v7265, %v6964
      %v7337 = vsel %vm7272, %v7267, %v6966
      %v7340 = vsel %vm7272, %v7269, %v6968
      %v7343 = vsel %vm7272, %v7271, %v6970
      %v7345 = vld [vmem:[%s6] sm:$0xf]
      %v7346 = vld [vmem:[%s6 + $0x4] sm:$0xf]
      %v7347 = vld [vmem:[%s6 + $0x8] sm:$0xf]
      %v7348 = vld [vmem:[%s6 + $0xc] sm:$0xf]
      %v7349 = vld [vmem:[%s6 + $0x10] sm:$0xf]
      %v7350 = vld [vmem:[%s6 + $0x14] sm:$0xf]
      %v7351 = vld [vmem:[%s6 + $0x18] sm:$0xf]
      %v7352 = vld [vmem:[%s6 + $0x1c] sm:$0xf]
      %v7353 = vld [vmem:[%s6 + $0x20] sm:$0xf]
      %v7354 = vld [vmem:[%s6 + $0x24] sm:$0xf]
      %v7355 = vld [vmem:[%s6 + $0x28] sm:$0xf]
      %v7356 = vld [vmem:[%s6 + $0x2c] sm:$0xf]
      %v7357 = vld [vmem:[%s6 + $0x30] sm:$0xf]
      %v7358 = vld [vmem:[%s6 + $0x34] sm:$0xf]
      %v7359 = vld [vmem:[%s6 + $0x38] sm:$0xf]
      %v7360 = vld [vmem:[%s6 + $0x3c] sm:$0xf]
      %v7361 = vld [vmem:[%s6 + $0x40] sm:$0xf]
      %v7362 = vld [vmem:[%s6 + $0x44] sm:$0xf]
      %v7363 = vld [vmem:[%s7] sm:$0x1]
      %v7365 = vperm.slane %v7363, 0
      %v7385 = vunpack.c.l.b16 %v7345
      %v7386 = vunpack.c.l.b16 %v7346
      %v7387 = vunpack.c.l.b16 %v7347
      %v7388 = vunpack.c.l.b16 %v7348
      %v7389 = vunpack.c.l.b16 %v7349
      %v7390 = vunpack.c.l.b16 %v7350
      %v7391 = vunpack.c.l.b16 %v7351
      %v7392 = vunpack.c.l.b16 %v7352
      %v7393 = vunpack.c.l.b16 %v7353
      %v7394 = vunpack.c.l.b16 %v7354
      %v7395 = vunpack.c.l.b16 %v7355
      %v7396 = vunpack.c.l.b16 %v7356
      %v7397 = vunpack.c.l.b16 %v7357
      %v7398 = vunpack.c.l.b16 %v7358
      %v7399 = vunpack.c.l.b16 %v7359
      %v7400 = vunpack.c.l.b16 %v7360
      %v7401 = vunpack.c.l.b16 %v7361
      %v7402 = vunpack.c.l.b16 %v7362
      %v7403 = vpack.c.b16 %v7386, %v7385
      %v7404 = vpack.c.b16 %v7388, %v7387
      %v7405 = vpack.c.b16 %v7390, %v7389
      %v7406 = vpack.c.b16 %v7392, %v7391
      %v7407 = vpack.c.b16 %v7394, %v7393
      %v7408 = vpack.c.b16 %v7396, %v7395
      %v7409 = vpack.c.b16 %v7398, %v7397
      %v7410 = vpack.c.b16 %v7400, %v7399
      %v7411 = vpack.c.b16 %v7402, %v7401
      %v7422 = vsel %vm6979, %v6327, 0
      %v7425 = vsel %vm6979, %v6329, 0
      %v7428 = vsel %vm6979, %v6331, 0
      %v7431 = vsel %vm6979, %v6333, 0
      %v7434 = vsel %vm6979, %v6335, 0
      %v7437 = vsel %vm6979, %v6337, 0
      %v7440 = vsel %vm6979, %v6339, 0
      %v7443 = vsel %vm6979, %v6341, 0
      %v7446 = vsel %vm6979, %v6343, 0
      %v7449 = vsel %vm6979, %v6345, 0
      %v7452 = vsel %vm6979, %v6347, 0
      %v7455 = vsel %vm6979, %v6349, 0
      %v7458 = vsel %vm6979, %v6351, 0
      %v7461 = vsel %vm6979, %v6353, 0
      %v7464 = vsel %vm6979, %v6355, 0
      %v7467 = vsel %vm6979, %v6357, 0
      %v7470 = vsel %vm6979, %v6359, 0
      %v7473 = vsel %vm6979, %v6361, 0
      %v7476 = vsel %vm6979, %v6363, 0
      %v7479 = vsel %vm6979, %v6365, 0
      %v7482 = vsel %vm6979, %v6972, 0
      %v7485 = vsel %vm6979, %v6974, 0
      %v7488 = vsel %vm6979, %v6976, 0
      %v7491 = vsel %vm6979, %v6978, 0
      %7493 = vmatpush.bf16.msra.mxu0 %v7410
      %7494 = vmatpush.bf16.msra.mxu0 %v7409
      %7495 = vmatpush.bf16.msra.mxu0 %v7408
      %7496 = vmatpush.bf16.msra.mxu0 %v7407
      %7497 = vmatpush.bf16.msra.mxu0 %v7406
      %7498 = vmatpush.bf16.msra.mxu0 %v7405
      %7499 = vmatpush.bf16.msra.mxu0 %v7404
      %7500 = vmatpush.bf16.msra.mxu0 %v7403
      %7501 = vmatmul.bf16.gmra.mxu0 %v7274
      %v7502 = vpop.f32.mrf.mxu0
      %v7503 = vadd.f32 %v7365, %v7502
      %v7504 = vpop.f32.mrf.mxu0
      %v7505 = vadd.f32 %v7365, %v7504
      %7506 = vmatmul.bf16.gmra.mxu0 %v7277
      %v7507 = vpop.f32.mrf.mxu0
      %v7508 = vadd.f32 %v7365, %v7507
      %v7509 = vpop.f32.mrf.mxu0
      %v7510 = vadd.f32 %v7365, %v7509
      %7511 = vmatmul.bf16.gmra.mxu0 %v7280
      %v7512 = vpop.f32.mrf.mxu0
      %v7513 = vadd.f32 %v7365, %v7512
      %v7514 = vpop.f32.mrf.mxu0
      %v7515 = vadd.f32 %v7365, %v7514
      %7516 = vmatmul.bf16.gmra.mxu0 %v7283
      %v7517 = vpop.f32.mrf.mxu0
      %v7518 = vadd.f32 %v7365, %v7517
      %v7519 = vpop.f32.mrf.mxu0
      %v7520 = vadd.f32 %v7365, %v7519
      %7521 = vmatmul.bf16.gmra.mxu0 %v7286
      %v7522 = vpop.f32.mrf.mxu0
      %v7523 = vadd.f32 %v7365, %v7522
      %v7524 = vpop.f32.mrf.mxu0
      %v7525 = vadd.f32 %v7365, %v7524
      %7526 = vmatmul.bf16.gmra.mxu0 %v7289
      %v7527 = vpop.f32.mrf.mxu0
      %v7528 = vadd.f32 %v7365, %v7527
      %v7529 = vpop.f32.mrf.mxu0
      %v7530 = vadd.f32 %v7365, %v7529
      %7531 = vmatmul.bf16.gmra.mxu0 %v7292
      %v7532 = vpop.f32.mrf.mxu0
      %v7533 = vadd.f32 %v7365, %v7532
      %v7534 = vpop.f32.mrf.mxu0
      %v7535 = vadd.f32 %v7365, %v7534
      %7536 = vmatmul.bf16.gmra.mxu0 %v7295
      %v7537 = vpop.f32.mrf.mxu0
      %v7538 = vadd.f32 %v7365, %v7537
      %v7539 = vpop.f32.mrf.mxu0
      %v7540 = vadd.f32 %v7365, %v7539
      %7541 = vmatmul.bf16.gmra.mxu0 %v7298
      %v7542 = vpop.f32.mrf.mxu0
      %v7543 = vadd.f32 %v7365, %v7542
      %v7544 = vpop.f32.mrf.mxu0
      %v7545 = vadd.f32 %v7365, %v7544
      %7546 = vmatmul.bf16.gmra.mxu0 %v7301
      %v7547 = vpop.f32.mrf.mxu0
      %v7548 = vadd.f32 %v7365, %v7547
      %v7549 = vpop.f32.mrf.mxu0
      %v7550 = vadd.f32 %v7365, %v7549
      %7551 = vmatmul.bf16.gmra.mxu0 %v7304
      %v7552 = vpop.f32.mrf.mxu0
      %v7553 = vadd.f32 %v7365, %v7552
      %v7554 = vpop.f32.mrf.mxu0
      %v7555 = vadd.f32 %v7365, %v7554
      %7556 = vmatmul.bf16.gmra.mxu0 %v7307
      %v7557 = vpop.f32.mrf.mxu0
      %v7558 = vadd.f32 %v7365, %v7557
      %v7559 = vpop.f32.mrf.mxu0
      %v7560 = vadd.f32 %v7365, %v7559
      %7561 = vmatmul.bf16.gmra.mxu0 %v7310
      %v7562 = vpop.f32.mrf.mxu0
      %v7563 = vadd.f32 %v7365, %v7562
      %v7564 = vpop.f32.mrf.mxu0
      %v7565 = vadd.f32 %v7365, %v7564
      %7566 = vmatmul.bf16.gmra.mxu0 %v7313
      %v7567 = vpop.f32.mrf.mxu0
      %v7568 = vadd.f32 %v7365, %v7567
      %v7569 = vpop.f32.mrf.mxu0
      %v7570 = vadd.f32 %v7365, %v7569
      %7571 = vmatmul.bf16.gmra.mxu0 %v7316
      %v7572 = vpop.f32.mrf.mxu0
      %v7573 = vadd.f32 %v7365, %v7572
      %v7574 = vpop.f32.mrf.mxu0
      %v7575 = vadd.f32 %v7365, %v7574
      %7576 = vmatmul.bf16.gmra.mxu0 %v7319
      %v7577 = vpop.f32.mrf.mxu0
      %v7578 = vadd.f32 %v7365, %v7577
      %v7579 = vpop.f32.mrf.mxu0
      %v7580 = vadd.f32 %v7365, %v7579
      %7581 = vmatmul.bf16.gmra.mxu0 %v7322
      %v7582 = vpop.f32.mrf.mxu0
      %v7583 = vadd.f32 %v7365, %v7582
      %v7584 = vpop.f32.mrf.mxu0
      %v7585 = vadd.f32 %v7365, %v7584
      %7586 = vmatmul.bf16.gmra.mxu0 %v7325
      %v7587 = vpop.f32.mrf.mxu0
      %v7588 = vadd.f32 %v7365, %v7587
      %v7589 = vpop.f32.mrf.mxu0
      %v7590 = vadd.f32 %v7365, %v7589
      %7591 = vmatmul.bf16.gmra.mxu0 %v7328
      %v7592 = vpop.f32.mrf.mxu0
      %v7593 = vadd.f32 %v7365, %v7592
      %v7594 = vpop.f32.mrf.mxu0
      %v7595 = vadd.f32 %v7365, %v7594
      %7596 = vmatmul.bf16.gmra.mxu0 %v7331
      %v7597 = vpop.f32.mrf.mxu0
      %v7598 = vadd.f32 %v7365, %v7597
      %v7599 = vpop.f32.mrf.mxu0
      %v7600 = vadd.f32 %v7365, %v7599
      %7601 = vmatmul.bf16.gmra.mxu0 %v7334
      %v7602 = vpop.f32.mrf.mxu0
      %v7603 = vadd.f32 %v7365, %v7602
      %v7604 = vpop.f32.mrf.mxu0
      %v7605 = vadd.f32 %v7365, %v7604
      %7606 = vmatmul.bf16.gmra.mxu0 %v7337
      %v7607 = vpop.f32.mrf.mxu0
      %v7608 = vadd.f32 %v7365, %v7607
      %v7609 = vpop.f32.mrf.mxu0
      %v7610 = vadd.f32 %v7365, %v7609
      %7611 = vmatmul.bf16.gmra.mxu0 %v7340
      %v7612 = vpop.f32.mrf.mxu0
      %v7613 = vadd.f32 %v7365, %v7612
      %v7614 = vpop.f32.mrf.mxu0
      %v7615 = vadd.f32 %v7365, %v7614
      %7616 = vmatmul.bf16.gmra.mxu0 %v7343
      %v7617 = vpop.f32.mrf.mxu0
      %v7618 = vadd.f32 %v7365, %v7617
      %v7619 = vpop.f32.mrf.mxu0
      %v7620 = vadd.f32 %v7365, %v7619
      %7621 = vdwg.mxu0
      %7622 = vmatpush.bf16.msra.mxu0 0
      %7623 = vmatpush.bf16.msra.mxu0 0
      %7624 = vmatpush.bf16.msra.mxu0 0
      %7625 = vmatpush.bf16.msra.mxu0 0
      %7626 = vmatpush.bf16.msra.mxu0 0
      %7627 = vmatpush.bf16.msra.mxu0 0
      %7628 = vmatpush.bf16.msra.mxu0 0
      %7629 = vmatpush.bf16.msra.mxu0 %v7411
      %7630 = vmatmul.bf16.gmra.mxu0 %v7422
      %v7631 = vpop.f32.mrf.mxu0
      %v7632 = vadd.f32 %v7503, %v7631
      %v7633 = vpop.f32.mrf.mxu0
      %v7634 = vadd.f32 %v7505, %v7633
      %7635 = vmatmul.bf16.gmra.mxu0 %v7425
      %v7636 = vpop.f32.mrf.mxu0
      %v7637 = vadd.f32 %v7508, %v7636
      %v7638 = vpop.f32.mrf.mxu0
      %v7639 = vadd.f32 %v7510, %v7638
      %7640 = vmatmul.bf16.gmra.mxu0 %v7428
      %v7641 = vpop.f32.mrf.mxu0
      %v7642 = vadd.f32 %v7513, %v7641
      %v7643 = vpop.f32.mrf.mxu0
      %v7644 = vadd.f32 %v7515, %v7643
      %7645 = vmatmul.bf16.gmra.mxu0 %v7431
      %v7646 = vpop.f32.mrf.mxu0
      %v7647 = vadd.f32 %v7518, %v7646
      %v7648 = vpop.f32.mrf.mxu0
      %v7649 = vadd.f32 %v7520, %v7648
      %7650 = vmatmul.bf16.gmra.mxu0 %v7434
      %v7651 = vpop.f32.mrf.mxu0
      %v7652 = vadd.f32 %v7523, %v7651
      %v7653 = vpop.f32.mrf.mxu0
      %v7654 = vadd.f32 %v7525, %v7653
      %7655 = vmatmul.bf16.gmra.mxu0 %v7437
      %v7656 = vpop.f32.mrf.mxu0
      %v7657 = vadd.f32 %v7528, %v7656
      %v7658 = vpop.f32.mrf.mxu0
      %v7659 = vadd.f32 %v7530, %v7658
      %7660 = vmatmul.bf16.gmra.mxu0 %v7440
      %v7661 = vpop.f32.mrf.mxu0
      %v7662 = vadd.f32 %v7533, %v7661
      %v7663 = vpop.f32.mrf.mxu0
      %v7664 = vadd.f32 %v7535, %v7663
      %7665 = vmatmul.bf16.gmra.mxu0 %v7443
      %v7666 = vpop.f32.mrf.mxu0
      %v7667 = vadd.f32 %v7538, %v7666
      %v7668 = vpop.f32.mrf.mxu0
      %v7669 = vadd.f32 %v7540, %v7668
      %7670 = vmatmul.bf16.gmra.mxu0 %v7446
      %v7671 = vpop.f32.mrf.mxu0
      %v7672 = vadd.f32 %v7543, %v7671
      %v7673 = vpop.f32.mrf.mxu0
      %v7674 = vadd.f32 %v7545, %v7673
      %7675 = vmatmul.bf16.gmra.mxu0 %v7449
      %v7676 = vpop.f32.mrf.mxu0
      %v7677 = vadd.f32 %v7548, %v7676
      %v7678 = vpop.f32.mrf.mxu0
      %v7679 = vadd.f32 %v7550, %v7678
      %7680 = vmatmul.bf16.gmra.mxu0 %v7452
      %v7681 = vpop.f32.mrf.mxu0
      %v7682 = vadd.f32 %v7553, %v7681
      %v7683 = vpop.f32.mrf.mxu0
      %v7684 = vadd.f32 %v7555, %v7683
      %7685 = vmatmul.bf16.gmra.mxu0 %v7455
      %v7686 = vpop.f32.mrf.mxu0
      %v7687 = vadd.f32 %v7558, %v7686
      %v7688 = vpop.f32.mrf.mxu0
      %v7689 = vadd.f32 %v7560, %v7688
      %7690 = vmatmul.bf16.gmra.mxu0 %v7458
      %v7691 = vpop.f32.mrf.mxu0
      %v7692 = vadd.f32 %v7563, %v7691
      %v7693 = vpop.f32.mrf.mxu0
      %v7694 = vadd.f32 %v7565, %v7693
      %7695 = vmatmul.bf16.gmra.mxu0 %v7461
      %v7696 = vpop.f32.mrf.mxu0
      %v7697 = vadd.f32 %v7568, %v7696
      %v7698 = vpop.f32.mrf.mxu0
      %v7699 = vadd.f32 %v7570, %v7698
      %7700 = vmatmul.bf16.gmra.mxu0 %v7464
      %v7701 = vpop.f32.mrf.mxu0
      %v7702 = vadd.f32 %v7573, %v7701
      %v7703 = vpop.f32.mrf.mxu0
      %v7704 = vadd.f32 %v7575, %v7703
      %7705 = vmatmul.bf16.gmra.mxu0 %v7467
      %v7706 = vpop.f32.mrf.mxu0
      %v7707 = vadd.f32 %v7578, %v7706
      %v7708 = vpop.f32.mrf.mxu0
      %v7709 = vadd.f32 %v7580, %v7708
      %7710 = vmatmul.bf16.gmra.mxu0 %v7470
      %v7711 = vpop.f32.mrf.mxu0
      %v7712 = vadd.f32 %v7583, %v7711
      %v7713 = vpop.f32.mrf.mxu0
      %v7714 = vadd.f32 %v7585, %v7713
      %7715 = vmatmul.bf16.gmra.mxu0 %v7473
      %v7716 = vpop.f32.mrf.mxu0
      %v7717 = vadd.f32 %v7588, %v7716
      %v7718 = vpop.f32.mrf.mxu0
      %v7719 = vadd.f32 %v7590, %v7718
      %7720 = vmatmul.bf16.gmra.mxu0 %v7476
      %v7721 = vpop.f32.mrf.mxu0
      %v7722 = vadd.f32 %v7593, %v7721
      %v7723 = vpop.f32.mrf.mxu0
      %v7724 = vadd.f32 %v7595, %v7723
      %7725 = vmatmul.bf16.gmra.mxu0 %v7479
      %v7726 = vpop.f32.mrf.mxu0
      %v7727 = vadd.f32 %v7598, %v7726
      %v7728 = vpop.f32.mrf.mxu0
      %v7729 = vadd.f32 %v7600, %v7728
      %7730 = vmatmul.bf16.gmra.mxu0 %v7482
      %v7731 = vpop.f32.mrf.mxu0
      %v7732 = vadd.f32 %v7603, %v7731
      %v7733 = vpop.f32.mrf.mxu0
      %v7734 = vadd.f32 %v7605, %v7733
      %7735 = vmatmul.bf16.gmra.mxu0 %v7485
      %v7736 = vpop.f32.mrf.mxu0
      %v7737 = vadd.f32 %v7608, %v7736
      %v7738 = vpop.f32.mrf.mxu0
      %v7739 = vadd.f32 %v7610, %v7738
      %7740 = vmatmul.bf16.gmra.mxu0 %v7488
      %v7741 = vpop.f32.mrf.mxu0
      %v7742 = vadd.f32 %v7613, %v7741
      %v7743 = vpop.f32.mrf.mxu0
      %v7744 = vadd.f32 %v7615, %v7743
      %7745 = vmatmul.bf16.gmra.mxu0 %v7491
      %v7746 = vpop.f32.mrf.mxu0
      %v7747 = vadd.f32 %v7618, %v7746
      %v7748 = vpop.f32.mrf.mxu0
      %v7749 = vadd.f32 %v7620, %v7748
      %7750 = vdwg.mxu0
      %vm7751 = vcmask 64512
      %7752 = vst.msk [vmem:[%s305] sm:$0xff] %vm7751, %v7632
      %7753 = vst.msk [vmem:[%s305 + $0x8] sm:$0xff] %vm7751, %v7634
      %7754 = vst.msk [vmem:[%s305 + $0x10] sm:$0xff] %vm7751, %v7637
      %7755 = vst.msk [vmem:[%s305 + $0x18] sm:$0xff] %vm7751, %v7639
      %7756 = vst.msk [vmem:[%s305 + $0x20] sm:$0xff] %vm7751, %v7642
      %7757 = vst.msk [vmem:[%s305 + $0x28] sm:$0xff] %vm7751, %v7644
      %7758 = vst.msk [vmem:[%s305 + $0x30] sm:$0xff] %vm7751, %v7647
      %7759 = vst.msk [vmem:[%s305 + $0x38] sm:$0xff] %vm7751, %v7649
      %7760 = vst.msk [vmem:[%s305 + $0x40] sm:$0xff] %vm7751, %v7652
      %7761 = vst.msk [vmem:[%s305 + $0x48] sm:$0xff] %vm7751, %v7654
      %7762 = vst.msk [vmem:[%s305 + $0x50] sm:$0xff] %vm7751, %v7657
      %7763 = vst.msk [vmem:[%s305 + $0x58] sm:$0xff] %vm7751, %v7659
      %7764 = vst.msk [vmem:[%s305 + $0x60] sm:$0xff] %vm7751, %v7662
      %7765 = vst.msk [vmem:[%s305 + $0x68] sm:$0xff] %vm7751, %v7664
      %7766 = vst.msk [vmem:[%s305 + $0x70] sm:$0xff] %vm7751, %v7667
      %7767 = vst.msk [vmem:[%s305 + $0x78] sm:$0xff] %vm7751, %v7669
      %7768 = vst.msk [vmem:[%s305 + $0x80] sm:$0xff] %vm7751, %v7672
      %7769 = vst.msk [vmem:[%s305 + $0x88] sm:$0xff] %vm7751, %v7674
      %7770 = vst.msk [vmem:[%s305 + $0x90] sm:$0xff] %vm7751, %v7677
      %7771 = vst.msk [vmem:[%s305 + $0x98] sm:$0xff] %vm7751, %v7679
      %7772 = vst.msk [vmem:[%s305 + $0xa0] sm:$0xff] %vm7751, %v7682
      %7773 = vst.msk [vmem:[%s305 + $0xa8] sm:$0xff] %vm7751, %v7684
      %7774 = vst.msk [vmem:[%s305 + $0xb0] sm:$0xff] %vm7751, %v7687
      %7775 = vst.msk [vmem:[%s305 + $0xb8] sm:$0xff] %vm7751, %v7689
      %7776 = vst.msk [vmem:[%s305 + $0xc0] sm:$0xff] %vm7751, %v7692
      %7777 = vst.msk [vmem:[%s305 + $0xc8] sm:$0xff] %vm7751, %v7694
      %7778 = vst.msk [vmem:[%s305 + $0xd0] sm:$0xff] %vm7751, %v7697
      %7779 = vst.msk [vmem:[%s305 + $0xd8] sm:$0xff] %vm7751, %v7699
      %7780 = vst.msk [vmem:[%s305 + $0xe0] sm:$0xff] %vm7751, %v7702
      %7781 = vst.msk [vmem:[%s305 + $0xe8] sm:$0xff] %vm7751, %v7704
      %7782 = vst.msk [vmem:[%s305 + $0xf0] sm:$0xff] %vm7751, %v7707
      %7783 = vst.msk [vmem:[%s305 + $0xf8] sm:$0xff] %vm7751, %v7709
      %7784 = vst.msk [vmem:[%s305 + $0x100] sm:$0xff] %vm7751, %v7712
      %7785 = vst.msk [vmem:[%s305 + $0x108] sm:$0xff] %vm7751, %v7714
      %7786 = vst.msk [vmem:[%s305 + $0x110] sm:$0xff] %vm7751, %v7717
      %7787 = vst.msk [vmem:[%s305 + $0x118] sm:$0xff] %vm7751, %v7719
      %7788 = vst.msk [vmem:[%s305 + $0x120] sm:$0xff] %vm7751, %v7722
      %7789 = vst.msk [vmem:[%s305 + $0x128] sm:$0xff] %vm7751, %v7724
      %7790 = vst.msk [vmem:[%s305 + $0x130] sm:$0xff] %vm7751, %v7727
      %7791 = vst.msk [vmem:[%s305 + $0x138] sm:$0xff] %vm7751, %v7729
      %7792 = vst.msk [vmem:[%s305 + $0x140] sm:$0xff] %vm7751, %v7732
      %7793 = vst.msk [vmem:[%s305 + $0x148] sm:$0xff] %vm7751, %v7734
      %7794 = vst.msk [vmem:[%s305 + $0x150] sm:$0xff] %vm7751, %v7737
      %7795 = vst.msk [vmem:[%s305 + $0x158] sm:$0xff] %vm7751, %v7739
      %7796 = vst.msk [vmem:[%s305 + $0x160] sm:$0xff] %vm7751, %v7742
      %7797 = vst.msk [vmem:[%s305 + $0x168] sm:$0xff] %vm7751, %v7744
      %7798 = vst.msk [vmem:[%s305 + $0x170] sm:$0xff] %vm7751, %v7747
      %7799 = vst.msk [vmem:[%s305 + $0x178] sm:$0xff] %vm7751, %v7749
      %p7800 = scmp.lt.s32.totalorder %s19, 1
      %s7801 = scalar_select %p7800, %s19, 1
      %s7802 = smul.addr %s7801, 48
      %s7803 = smul.addr %s7802, 8
      %s7804 = scalar_lea.vmem %s8, %s7803
      // Predicated region
      $region53: #{conv_seg_head.1} parent=51 // pred_check
        %p7805 = pneg %p210
      $region54: #{conv_seg_head.1} parent=51 // pred_check_branch
        %7807 = sbr.rel (%p7805) target = $region56
      $region55: #{conv_seg_head.1} parent=51 // pred_region
        _
      $region56: #{conv_seg_head.1} parent=51 // pred_fallthru
        _
    $region52: #{conv_seg_head.1} parent=5 // pred_fallthru
      _
    %p7808 = scmp.le.s32.totalorder 2, %s14
    // Predicated region
    $region57: #{conv_seg_head.1} parent=5 // pred_check
      %p7809 = pneg %p7808
    $region58: #{conv_seg_head.1} parent=5 // pred_check_branch
      %7811 = sbr.rel (%p7809) target = $region60
    $region59: #{conv_seg_head.1} parent=5 // pred_region
      %s7812 = ssub.s32 %s14, 2
      // Predicated region
      $region61: #{conv_seg_head.1} parent=59 // pred_check
        %p7813 = pneg %p216
      $region62: #{conv_seg_head.1} parent=59 // pred_check_branch
        %7815 = sbr.rel (%p7813) target = $region64
      $region63: #{conv_seg_head.1} parent=59 // pred_region
        %p7816 = scmp.lt.s32.totalorder %s20, 1
        %s7817 = scalar_select %p7816, %s20, 1
        %s7818 = smul.addr %s7817, 48
        %s7819 = smul.addr %s7818, 8
        %s7820 = scalar_lea.vmem %s8, %s7819
      $region64: #{conv_seg_head.1} parent=59 // pred_fallthru
        _
    $region60: #{conv_seg_head.1} parent=5 // pred_fallthru
      _
  $region6: #{conv_seg_head.1} parent=0 // loop_footer
    %s18 = sadd.s32 1, %s14
  $region7: #{conv_seg_head.1} parent=0 // loop_footer_branch
    %13 = sbr.rel target = $region3
  $region8: #{conv_seg_head.1} parent=0 // loop_exit
    _

</llo_original>
